<compile_context>
chip_gen: v5e
topology: v5e:2x2
jax: 0.10.0
libtpu: 0.0.40
codegen_flags: <defaults>
</compile_context>

<pallas_src>
import numpy as np
import jax
import jax.numpy as jnp
from jax.experimental import pallas as pl
from jax.experimental.pallas import tpu as pltpu

# ---------------- model constants ----------------
H, C = 8, 16                 # heads, per-head channels
HC = H * C                   # 128
EMB = 64                     # node_embed output
EPS = 1e-5                   # BatchNorm eps
NEG_SLOPE = 0.2              # GATv2 leaky_relu slope
N_GAT = 4

# ---------------- packed-slab layout ----------------
# vec slab [N_VEC_ROWS, 128]: every per-feature vector, one row each.
ROW_EW0, ROW_EW1, ROW_EB = 0, 1, 2                  # node_embed weight rows + bias
ROW_GAT0 = 3                                        # + 5*l : bl, br, we, scale, shift
ROW_BMG1 = ROW_GAT0 + 5 * N_GAT                     # 23  merged meta/graph bias 1
ROW_BMG2 = ROW_BMG1 + 1                             # 24  merged meta/graph bias 2
ROW_BF1 = ROW_BMG2 + 1                              # 25  fc1 bias
ROW_BF2 = ROW_BF1 + 1                               # 26  fc2 bias (padded 64->128)
ROW_WF3 = ROW_BF2 + 1                               # 27  fc3 weight as a row (64->128)
ROW_BF3 = ROW_WF3 + 1                               # 28  fc3 bias in lane 0
N_VEC_ROWS = 32

# head-weight slab [520, 128]; all section starts are multiples of 8 sublanes.
HR_WMG1 = 0                                         # [8,128]   block-diag(wm1, wg1)
HR_WMG2 = 8                                         # [128,128] block-diag(wm2, wg2)
HR_WF1A = HR_WMG2 + HC                              # 136  wf1[:128]
HR_WF1B = HR_WF1A + HC                              # 264  wf1[128:176] zero-padded
HR_WF2 = HR_WF1B + HC                               # 392  wf2 zero-padded to [128,128]
HR_END = HR_WF2 + HC                                # 520

VMEM_SPEC = pl.BlockSpec(memory_space=pltpu.MemorySpace.VMEM)


# =========================================================================
# In-kernel helpers (parameters are read from the slab Refs near their use)
# =========================================================================
def _gat_layer(h, res, neg_b, ev_b, vec_ref, wlr_ref, att_ref, l):
    """GATv2Conv(Fin->16, heads=8, concat, edge_dim=1) + fused BN(eval)/bias + residual + ReLU."""
    B, N, _ = h.shape
    base = ROW_GAT0 + 5 * l
    hf = h.reshape(B * N, HC)

    # fused lin_l / lin_r: one [B*N,128] x [128,256] MXU matmul, split on the lane axis
    xlr = jnp.dot(hf, wlr_ref[l], preferred_element_type=jnp.float32)      # [B*N, 256]
    xl = (xlr[:, :HC] + vec_ref[base + 0]).reshape(B, N, HC)
    xr = (xlr[:, HC:] + vec_ref[base + 1]).reshape(B, N, HC)

    # s[b, i, j, :] = x_r[i] + x_l[j] + edge_emb[i, j]   (all 8 heads on the lane axis)
    s = xr[:, :, None, :] + xl[:, None, :, :] + ev_b * vec_ref[base + 2]   # [B, N, N, 128]
    s = jnp.where(s >= 0.0, s, NEG_SLOPE * s)                              # leaky_relu

    # per-head logits replicated across each head's 16 lanes (single MXU matmul)
    logits = jnp.dot(s.reshape(B * N * N, HC), att_ref[l],
                     preferred_element_type=jnp.float32).reshape(B, N, N, HC)
    logits = logits + neg_b                                                # additive mask
    m = jnp.max(logits, axis=2, keepdims=True)                             # [B, N, 1, 128]
    p = jnp.exp(logits - m)               # masked entries underflow to exactly 0
    denom = jnp.sum(p, axis=2, keepdims=True)
    alpha = p * pl.reciprocal(jnp.maximum(denom, 1e-20), approx=True)      # softmax over j

    # out[b, i, hc] = sum_j alpha[b, i, j, hc] * x_l[b, j, hc]
    out = jnp.sum(alpha * xl[:, None, :, :], axis=2)                       # [B, N, 128]
    # fused GATv2 bias + BatchNorm(eval):  out*scale + shift  (precomputed host-side)
    out = out * vec_ref[base + 3] + vec_ref[base + 4]
    if res is not None:
        out = out + res
    return jnp.maximum(out, 0.0)                                           # (residual +) ReLU


def _head(h4, gf, vec_ref, head_ref):
    """global_mean_pool + merged meta/graph heads + fc MLP (concat folded into fc1)."""
    pooled = jnp.mean(h4, axis=1)                                          # [B, 128]

    # merged meta/graph heads via block-diagonal weights (lanes 0..15 meta, 16..47 graph)
    mg = jnp.maximum(jnp.dot(gf, head_ref[HR_WMG1:HR_WMG2],
                             preferred_element_type=jnp.float32) + vec_ref[ROW_BMG1], 0.0)
    mg = jnp.maximum(jnp.dot(mg, head_ref[HR_WMG2:HR_WF1A],
                             preferred_element_type=jnp.float32) + vec_ref[ROW_BMG2], 0.0)

    f = (jnp.dot(pooled, head_ref[HR_WF1A:HR_WF1B], preferred_element_type=jnp.float32)
         + jnp.dot(mg, head_ref[HR_WF1B:HR_WF2], preferred_element_type=jnp.float32)
         + vec_ref[ROW_BF1])
    f = jnp.maximum(f, 0.0)
    f = jnp.maximum(jnp.dot(f, head_ref[HR_WF2:HR_END],
                            preferred_element_type=jnp.float32) + vec_ref[ROW_BF2], 0.0)
    out = jnp.sum(f * vec_ref[ROW_WF3], axis=-1, keepdims=True)            # [B, 1]
    return out + vec_ref[ROW_BF3:ROW_BF3 + 1, 0:1]                         # + fc3 bias


# =========================================================================
# The single fused kernel
# =========================================================================
def fused_kernel(x_ref, adj_ref, ev_ref, gf_ref, vec_ref, wlr_ref, att_ref, head_ref, o_ref):
    B, N, _ = x_ref.shape

    # Broadcasts hoisted once and reused by all 4 layers (broadcast_in_dim is not CSE'd).
    neg_b = jnp.broadcast_to(
        jnp.where(adj_ref[...] > 0.0, 0.0, -1e30)[:, :, :, None], (B, N, N, HC))
    ev_b = jnp.broadcast_to(ev_ref[...][:, :, :, None], (B, N, N, HC))

    # node_embed: Linear(2 -> 64) + ReLU, zero-padded to 128 lanes (Dropout = identity)
    x = x_ref[...]
    h = jnp.maximum(x[..., 0:1] * vec_ref[ROW_EW0]
                    + x[..., 1:2] * vec_ref[ROW_EW1] + vec_ref[ROW_EB], 0.0)   # [B, N, 128]

    res = None                                    # no residual into the first block
    for l in range(N_GAT):
        h = _gat_layer(h, res, neg_b, ev_b, vec_ref, wlr_ref, att_ref, l)
        res = h                                   # residual for the next block

    o_ref[...] = _head(h, gf_ref[...], vec_ref, head_ref)


# =========================================================================
# Host-side parameter packing (done once) + wrapper
# =========================================================================
def _build_att_mat(att):
    """att [1, HC] -> [HC, HC] block-diagonal so that s @ att_mat gives the per-head
    logit replicated over that head's 16 lanes."""
    head_id = jnp.arange(HC, dtype=jnp.int32) // C
    same = (head_id[:, None] == head_id[None, :]).astype(jnp.float32)
    return att[0][:, None] * same


def pack_params(params):
    """Collapse all parameters into 4 VMEM-friendly slabs (vec, wlr, att, head)."""
    def pad128(v):
        return jnp.pad(v, (0, HC - v.shape[0]))

    vec = jnp.zeros((N_VEC_ROWS, HC), jnp.float32)
    vec = vec.at[ROW_EW0].set(pad128(params['embed_w'][0]))
    vec = vec.at[ROW_EW1].set(pad128(params['embed_w'][1]))
    vec = vec.at[ROW_EB].set(pad128(params['embed_b'][0]))

    wlr_list, att_list = [], []
    for i, name in enumerate(('gat1', 'gat2', 'gat3', 'gat4')):
        lp = params[name]
        base = ROW_GAT0 + 5 * i
        scale = lp['gamma'][0] * jax.lax.rsqrt(lp['var'][0] + EPS)
        shift = lp['beta'][0] + (lp['bias'][0] - lp['mean'][0]) * scale
        vec = vec.at[base + 0].set(lp['bl'][0])
        vec = vec.at[base + 1].set(lp['br'][0])
        vec = vec.at[base + 2].set(lp['we'][0])
        vec = vec.at[base + 3].set(scale)
        vec = vec.at[base + 4].set(shift)
        fin = lp['wl'].shape[0]
        w = jnp.concatenate([lp['wl'], lp['wr']], axis=1)          # [fin, 256]
        wlr_list.append(jnp.pad(w, ((0, HC - fin), (0, 0))))       # zero-pad Fin -> 128
        att_list.append(_build_att_mat(lp['att']))
    wlr = jnp.stack(wlr_list)                                      # [4, 128, 256]
    att = jnp.stack(att_list)                                      # [4, 128, 128]

    # merged meta/graph heads: block-diagonal weights, concatenated biases
    wmg1 = jnp.zeros((8, HC), jnp.float32)
    wmg1 = wmg1.at[0:2, 0:16].set(params['wm1'])
    wmg1 = wmg1.at[2:6, 16:48].set(params['wg1'])
    wmg2 = jnp.zeros((HC, HC), jnp.float32)
    wmg2 = wmg2.at[0:16, 0:16].set(params['wm2'])
    wmg2 = wmg2.at[16:48, 16:48].set(params['wg2'])
    vec = vec.at[ROW_BMG1].set(pad128(jnp.concatenate([params['bm1'][0], params['bg1'][0]])))
    vec = vec.at[ROW_BMG2].set(pad128(jnp.concatenate([params['bm2'][0], params['bg2'][0]])))
    vec = vec.at[ROW_BF1].set(params['bf1'][0])
    vec = vec.at[ROW_BF2].set(pad128(params['bf2'][0]))
    vec = vec.at[ROW_WF3].set(pad128(params['wf3'][:, 0]))
    vec = vec.at[ROW_BF3, 0].set(params['bf3'][0, 0])

    wf1 = params['wf1']                                            # [176, 128]
    wf1a = wf1[0:HC]                                               # [128, 128]
    wf1b = jnp.pad(wf1[HC:HC + 48], ((0, HC - 48), (0, 0)))        # [128, 128]
    wf2p = jnp.pad(params['wf2'], ((0, 0), (0, HC - 64)))          # [128, 128]
    head = jnp.concatenate([wmg1, wmg2, wf1a, wf1b, wf2p], axis=0)  # [520, 128]
    return vec, wlr, att, head


def forward(packed, x_nodes, adj, ev, gf):
    vec, wlr, att, head = packed
    B_ = x_nodes.shape[0]
    gf_pad = jnp.pad(gf, ((0, 0), (0, 8 - gf.shape[1])))           # [B, 6] -> [B, 8]
    return pl.pallas_call(
        fused_kernel,
        out_shape=jax.ShapeDtypeStruct((B_, 1), jnp.float32),
        in_specs=[VMEM_SPEC] * 8,
        out_specs=VMEM_SPEC,
    )(x_nodes, adj, ev, gf_pad, vec, wlr, att, head)


# =========================================================================
# Pure-JAX reference (same dense math, unpacked params) for a sanity check.
# =========================================================================
def ref_forward(params, x_nodes, adj, ev, gf):
    x = jnp.maximum(jnp.einsum('bni,io->bno', x_nodes, params['embed_w'])
                    + params['embed_b'][0], 0.0)

    def gat_bn_relu(x, res, lp):
        B_, N_, _ = x.shape
        xl = jnp.einsum('bnf,fo->bno', x, lp['wl']) + lp['bl'][0]
        xr = jnp.einsum('bnf,fo->bno', x, lp['wr']) + lp['br'][0]
        xl_h = xl.reshape(B_, N_, H, C)
        xr_h = xr.reshape(B_, N_, H, C)
        we = lp['we'][0].reshape(H, C)
        att = lp['att'][0].reshape(H, C)
        s = (xr_h[:, :, None, :, :] + xl_h[:, None, :, :, :]
             + ev[:, :, :, None, None] * we[None, None, None, :, :])
        s = jnp.where(s >= 0, s, NEG_SLOPE * s)
        logits = jnp.sum(s * att[None, None, None, :, :], axis=-1)   # [B,N,N,H]
        mask = (adj > 0)[:, :, :, None]
        logits = jnp.where(mask, logits, -1e30)
        logits = logits - jnp.max(logits, axis=2, keepdims=True)
        pexp = jnp.where(mask, jnp.exp(logits), 0.0)
        alpha = pexp / jnp.sum(pexp, axis=2, keepdims=True)
        out = jnp.einsum('bijh,bjhc->bihc', alpha, xl_h).reshape(B_, N_, HC)
        out = out + lp['bias'][0]
        out = ((out - lp['mean'][0]) / jnp.sqrt(lp['var'][0] + EPS)
               * lp['gamma'][0] + lp['beta'][0])
        return jnp.maximum(out + res, 0.0)

    z = jnp.zeros((x.shape[0], x.shape[1], HC), jnp.float32)
    x1 = gat_bn_relu(x, z, params['gat1'])
    x2 = gat_bn_relu(x1, x1, params['gat2'])
    x3 = gat_bn_relu(x2, x2, params['gat3'])
    x4 = gat_bn_relu(x3, x3, params['gat4'])
    pooled = x4.mean(axis=1)
    meta = jnp.maximum(gf[:, :2] @ params['wm1'] + params['bm1'][0], 0.0)
    meta = jnp.maximum(meta @ params['wm2'] + params['bm2'][0], 0.0)
    graph = jnp.maximum(gf[:, 2:] @ params['wg1'] + params['bg1'][0], 0.0)
    graph = jnp.maximum(graph @ params['wg2'] + params['bg2'][0], 0.0)
    zcat = jnp.concatenate([pooled, meta, graph], axis=1)
    f = jnp.maximum(zcat @ params['wf1'] + params['bf1'][0], 0.0)
    f = jnp.maximum(f @ params['wf2'] + params['bf2'][0], 0.0)
    return f @ params['wf3'] + params['bf3'][0]


# =========================================================================
# Deterministic parameter init (shapes from the nn.Module __init__)
# =========================================================================
def init_params(key):
    keys = iter(jax.random.split(key, 96))
    nk = lambda: next(keys)

    def dense(fi, fo):
        w = jax.random.normal(nk(), (fi, fo), jnp.float32) / jnp.sqrt(float(fi))
        b = jax.random.normal(nk(), (1, fo), jnp.float32) * 0.1
        return w, b

    def gat(fin):
        wl, bl = dense(fin, HC)
        wr, br = dense(fin, HC)
        return dict(
            wl=wl, bl=bl, wr=wr, br=br,
            we=jax.random.normal(nk(), (1, HC), jnp.float32) * 0.5,       # lin_edge (1 -> HC)
            att=jax.random.normal(nk(), (1, HC), jnp.float32) / jnp.sqrt(float(C)),
            bias=jax.random.normal(nk(), (1, HC), jnp.float32) * 0.1,
            gamma=jax.random.uniform(nk(), (1, HC), jnp.float32, 0.5, 1.5),
            beta=jax.random.normal(nk(), (1, HC), jnp.float32) * 0.1,
            mean=jax.random.normal(nk(), (1, HC), jnp.float32) * 0.1,
            var=jax.random.uniform(nk(), (1, HC), jnp.float32, 0.5, 1.5),
        )

    p = {}
    p['embed_w'], p['embed_b'] = dense(2, EMB)
    p['gat1'] = gat(EMB)
    p['gat2'] = gat(HC)
    p['gat3'] = gat(HC)
    p['gat4'] = gat(HC)
    p['wm1'], p['bm1'] = dense(2, 16)
    p['wm2'], p['bm2'] = dense(16, 16)
    p['wg1'], p['bg1'] = dense(4, 32)
    p['wg2'], p['bg2'] = dense(32, 32)
    p['wf1'], p['bf1'] = dense(HC + 48, 128)
    p['wf2'], p['bf2'] = dense(128, 64)
    p['wf3'], p['bf3'] = dense(64, 1)
    return p


# =========================================================================
if __name__ == "__main__":
    key = jax.random.PRNGKey(0)
    kp, kx, ke1, ke2, kg = jax.random.split(key, 5)
    params = init_params(kp)

    B, N = 2, 16
    x_nodes = jax.random.normal(kx, (B, N, 2), jnp.float32)          # data.x per graph

    # Build dense adjacency / edge-attr per graph (edge_index, edge_attr densified).
    adj_list, ev_list = [], []
    for (o1, o2, kk) in [(1, 5, ke1), (2, 7, ke2)]:
        src = np.concatenate([np.arange(N), np.arange(N)])
        dst = np.concatenate([(np.arange(N) + o1) % N, (np.arange(N) + o2) % N])
        eattr = np.asarray(jax.random.uniform(kk, (src.shape[0],), jnp.float32))
        A = np.zeros((N, N), np.float32)
        E = np.zeros((N, N), np.float32)
        A[dst, src] = 1.0
        E[dst, src] = eattr
        idx = np.arange(N)
        A[idx, idx] = 1.0                    # add_self_loops=True
        E[idx, idx] = eattr.mean()           # fill_value='mean'
        adj_list.append(A)
        ev_list.append(E)
    adj = jnp.asarray(np.stack(adj_list))                           # [B, N, N]
    ev = jnp.asarray(np.stack(ev_list))                             # [B, N, N]

    gf = jax.random.normal(kg, (B, 1, 6), jnp.float32)[:, 0, :]     # global_features.squeeze(1)

    packed = jax.tree_util.tree_map(jax.device_put, pack_params(params))   # pack once, host-side
    fwd = jax.jit(forward)
    out = jax.block_until_ready(fwd(packed, x_nodes, adj, ev, gf))

    ref = ref_forward(params, x_nodes, adj, ev, gf)
    assert out.shape == (B, 1)
    assert jnp.allclose(out, ref, atol=1e-2, rtol=1e-2)

    print("KERNEL_OK")
</pallas_src>

<mosaic_0001>
module attributes {stable_mosaic.version = 11 : i64} {
  func.func @fused_kernel(%arg0: memref<2x16x2xf32, #tpu.memory_space<vmem>>, %arg1: memref<2x16x16xf32, #tpu.memory_space<vmem>>, %arg2: memref<2x16x16xf32, #tpu.memory_space<vmem>>, %arg3: memref<2x8xf32, #tpu.memory_space<vmem>>, %arg4: memref<32x128xf32, #tpu.memory_space<vmem>>, %arg5: memref<4x128x256xf32, #tpu.memory_space<vmem>>, %arg6: memref<4x128x128xf32, #tpu.memory_space<vmem>>, %arg7: memref<520x128xf32, #tpu.memory_space<vmem>>, %arg8: memref<2x1xf32, #tpu.memory_space<vmem>>) attributes {dimension_semantics = [], scalar_prefetch = 0 : i64, scratch_operands = 0 : i64, tpu.core_type = #tpu.core_type<tc>} {
    %c0 = arith.constant 0 : index
    %c0_0 = arith.constant 0 : index
    %c0_1 = arith.constant 0 : index
    %0 = vector.load %arg1[%c0, %c0_0, %c0_1] : memref<2x16x16xf32, #tpu.memory_space<vmem>>, vector<2x16x16xf32>
    %cst = arith.constant 0.000000e+00 : f32
    %1 = vector.broadcast %cst : f32 to vector<2x16x16xf32>
    %2 = arith.cmpf ogt, %0, %1 : vector<2x16x16xf32>
    %cst_2 = arith.constant 0.000000e+00 : f32
    %cst_3 = arith.constant -1.000000e+30 : f32
    %3 = vector.broadcast %cst_2 : f32 to vector<2x16x16xf32>
    %4 = vector.broadcast %cst_3 : f32 to vector<2x16x16xf32>
    %5 = arith.select %2, %3, %4 : vector<2x16x16xi1>, vector<2x16x16xf32>
    %6 = vector.shape_cast %5 : vector<2x16x16xf32> to vector<2x16x16x1xf32>
    %7 = vector.shape_cast %6 : vector<2x16x16x1xf32> to vector<2x16x16x1xf32>
    %8 = vector.broadcast %7 : vector<2x16x16x1xf32> to vector<2x16x16x128xf32>
    %c0_4 = arith.constant 0 : index
    %c0_5 = arith.constant 0 : index
    %c0_6 = arith.constant 0 : index
    %9 = vector.load %arg2[%c0_4, %c0_5, %c0_6] : memref<2x16x16xf32, #tpu.memory_space<vmem>>, vector<2x16x16xf32>
    %10 = vector.shape_cast %9 : vector<2x16x16xf32> to vector<2x16x16x1xf32>
    %11 = vector.shape_cast %10 : vector<2x16x16x1xf32> to vector<2x16x16x1xf32>
    %12 = vector.broadcast %11 : vector<2x16x16x1xf32> to vector<2x16x16x128xf32>
    %c0_7 = arith.constant 0 : index
    %c0_8 = arith.constant 0 : index
    %c0_9 = arith.constant 0 : index
    %13 = vector.load %arg0[%c0_7, %c0_8, %c0_9] : memref<2x16x2xf32, #tpu.memory_space<vmem>>, vector<2x16x2xf32>
    %14 = vector.extract_strided_slice %13 {offsets = [0, 0, 0], sizes = [2, 16, 1], strides = [1, 1, 1]} : vector<2x16x2xf32> to vector<2x16x1xf32>
    %c0_10 = arith.constant 0 : index
    %c0_11 = arith.constant 0 : index
    %15 = vector.load %arg4[%c0_10, %c0_11] : memref<32x128xf32, #tpu.memory_space<vmem>>, vector<1x128xf32>
    %16 = vector.shape_cast %15 : vector<1x128xf32> to vector<128xf32>
    %17 = vector.shape_cast %16 : vector<128xf32> to vector<1x1x128xf32>
    %18 = vector.broadcast %14 : vector<2x16x1xf32> to vector<2x16x128xf32>
    %19 = vector.broadcast %17 : vector<1x1x128xf32> to vector<2x16x128xf32>
    %20 = arith.mulf %18, %19 : vector<2x16x128xf32>
    %21 = vector.extract_strided_slice %13 {offsets = [0, 0, 1], sizes = [2, 16, 1], strides = [1, 1, 1]} : vector<2x16x2xf32> to vector<2x16x1xf32>
    %c1 = arith.constant 1 : index
    %c0_12 = arith.constant 0 : index
    %22 = vector.load %arg4[%c1, %c0_12] : memref<32x128xf32, #tpu.memory_space<vmem>>, vector<1x128xf32>
    %23 = vector.shape_cast %22 : vector<1x128xf32> to vector<128xf32>
    %24 = vector.shape_cast %23 : vector<128xf32> to vector<1x1x128xf32>
    %25 = vector.broadcast %21 : vector<2x16x1xf32> to vector<2x16x128xf32>
    %26 = vector.broadcast %24 : vector<1x1x128xf32> to vector<2x16x128xf32>
    %27 = arith.mulf %25, %26 : vector<2x16x128xf32>
    %28 = arith.addf %20, %27 : vector<2x16x128xf32>
    %c2 = arith.constant 2 : index
    %c0_13 = arith.constant 0 : index
    %29 = vector.load %arg4[%c2, %c0_13] : memref<32x128xf32, #tpu.memory_space<vmem>>, vector<1x128xf32>
    %30 = vector.shape_cast %29 : vector<1x128xf32> to vector<128xf32>
    %31 = vector.shape_cast %30 : vector<128xf32> to vector<1x1x128xf32>
    %32 = vector.broadcast %31 : vector<1x1x128xf32> to vector<2x16x128xf32>
    %33 = arith.addf %28, %32 : vector<2x16x128xf32>
    %cst_14 = arith.constant 0.000000e+00 : f32
    %34 = vector.broadcast %cst_14 : f32 to vector<2x16x128xf32>
    %35 = arith.maximumf %33, %34 : vector<2x16x128xf32>
    %36 = vector.shape_cast %35 : vector<2x16x128xf32> to vector<32x128xf32>
    %c0_15 = arith.constant 0 : index
    %c0_16 = arith.constant 0 : index
    %c0_17 = arith.constant 0 : index
    %37 = vector.load %arg5[%c0_15, %c0_16, %c0_17] : memref<4x128x256xf32, #tpu.memory_space<vmem>>, vector<1x128x256xf32>
    %38 = vector.shape_cast %37 : vector<1x128x256xf32> to vector<128x256xf32>
    %cst_18 = arith.constant dense<0.000000e+00> : vector<32x256xf32>
    %39 = tpu.matmul %36, %38, %cst_18 {dimension_numbers = #tpu.dot_dimension_numbers<[1], [0], [0], [1], [0, 0, 1, 1], [], []>} : vector<32x128xf32>, vector<128x256xf32>, vector<32x256xf32> -> vector<32x256xf32>
    %40 = vector.extract_strided_slice %39 {offsets = [0, 0], sizes = [32, 128], strides = [1, 1]} : vector<32x256xf32> to vector<32x128xf32>
    %c3 = arith.constant 3 : index
    %c0_19 = arith.constant 0 : index
    %41 = vector.load %arg4[%c3, %c0_19] : memref<32x128xf32, #tpu.memory_space<vmem>>, vector<1x128xf32>
    %42 = vector.shape_cast %41 : vector<1x128xf32> to vector<128xf32>
    %43 = vector.shape_cast %42 : vector<128xf32> to vector<1x128xf32>
    %44 = vector.broadcast %43 : vector<1x128xf32> to vector<32x128xf32>
    %45 = arith.addf %40, %44 : vector<32x128xf32>
    %46 = vector.shape_cast %45 : vector<32x128xf32> to vector<2x16x128xf32>
    %47 = vector.extract_strided_slice %39 {offsets = [0, 128], sizes = [32, 128], strides = [1, 1]} : vector<32x256xf32> to vector<32x128xf32>
    %c4 = arith.constant 4 : index
    %c0_20 = arith.constant 0 : index
    %48 = vector.load %arg4[%c4, %c0_20] : memref<32x128xf32, #tpu.memory_space<vmem>>, vector<1x128xf32>
    %49 = vector.shape_cast %48 : vector<1x128xf32> to vector<128xf32>
    %50 = vector.shape_cast %49 : vector<128xf32> to vector<1x128xf32>
    %51 = vector.broadcast %50 : vector<1x128xf32> to vector<32x128xf32>
    %52 = arith.addf %47, %51 : vector<32x128xf32>
    %53 = vector.shape_cast %52 : vector<32x128xf32> to vector<2x16x128xf32>
    %54 = vector.shape_cast %53 : vector<2x16x128xf32> to vector<2x16x1x128xf32>
    %55 = vector.shape_cast %46 : vector<2x16x128xf32> to vector<2x1x16x128xf32>
    %56 = vector.broadcast %54 : vector<2x16x1x128xf32> to vector<2x16x16x128xf32>
    %57 = vector.broadcast %55 : vector<2x1x16x128xf32> to vector<2x16x16x128xf32>
    %58 = arith.addf %56, %57 : vector<2x16x16x128xf32>
    %c5 = arith.constant 5 : index
    %c0_21 = arith.constant 0 : index
    %59 = vector.load %arg4[%c5, %c0_21] : memref<32x128xf32, #tpu.memory_space<vmem>>, vector<1x128xf32>
    %60 = vector.shape_cast %59 : vector<1x128xf32> to vector<128xf32>
    %61 = vector.shape_cast %60 : vector<128xf32> to vector<1x1x1x128xf32>
    %62 = vector.broadcast %61 : vector<1x1x1x128xf32> to vector<2x16x16x128xf32>
    %63 = arith.mulf %12, %62 : vector<2x16x16x128xf32>
    %64 = arith.addf %58, %63 : vector<2x16x16x128xf32>
    %cst_22 = arith.constant 0.000000e+00 : f32
    %65 = vector.broadcast %cst_22 : f32 to vector<2x16x16x128xf32>
    %66 = arith.cmpf oge, %64, %65 : vector<2x16x16x128xf32>
    %cst_23 = arith.constant 2.000000e-01 : f32
    %67 = vector.broadcast %cst_23 : f32 to vector<2x16x16x128xf32>
    %68 = arith.mulf %67, %64 : vector<2x16x16x128xf32>
    %69 = arith.select %66, %64, %68 : vector<2x16x16x128xi1>, vector<2x16x16x128xf32>
    %70 = vector.shape_cast %69 : vector<2x16x16x128xf32> to vector<512x128xf32>
    %c0_24 = arith.constant 0 : index
    %c0_25 = arith.constant 0 : index
    %c0_26 = arith.constant 0 : index
    %71 = vector.load %arg6[%c0_24, %c0_25, %c0_26] : memref<4x128x128xf32, #tpu.memory_space<vmem>>, vector<1x128x128xf32>
    %72 = vector.shape_cast %71 : vector<1x128x128xf32> to vector<128x128xf32>
    %cst_27 = arith.constant dense<0.000000e+00> : vector<512x128xf32>
    %73 = tpu.matmul %70, %72, %cst_27 {dimension_numbers = #tpu.dot_dimension_numbers<[1], [0], [0], [1], [0, 0, 1, 1], [], []>} : vector<512x128xf32>, vector<128x128xf32>, vector<512x128xf32> -> vector<512x128xf32>
    %74 = vector.shape_cast %73 : vector<512x128xf32> to vector<2x16x16x128xf32>
    %75 = arith.addf %74, %8 : vector<2x16x16x128xf32>
    %cst_28 = arith.constant dense<0xFF800000> : vector<2x16x128xf32>
    %76 = vector.multi_reduction <maximumf>, %75, %cst_28 [2] : vector<2x16x16x128xf32> to vector<2x16x128xf32>
    %77 = vector.shape_cast %76 : vector<2x16x128xf32> to vector<2x16x1x128xf32>
    %78 = vector.broadcast %77 : vector<2x16x1x128xf32> to vector<2x16x16x128xf32>
    %79 = arith.subf %75, %78 : vector<2x16x16x128xf32>
    %80 = math.exp %79 : vector<2x16x16x128xf32>
    %cst_29 = arith.constant dense<0.000000e+00> : vector<2x16x128xf32>
    %81 = vector.multi_reduction <add>, %80, %cst_29 [2] : vector<2x16x16x128xf32> to vector<2x16x128xf32>
    %82 = vector.shape_cast %81 : vector<2x16x128xf32> to vector<2x16x1x128xf32>
    %cst_30 = arith.constant 9.99999968E-21 : f32
    %83 = vector.broadcast %cst_30 : f32 to vector<2x16x1x128xf32>
    %84 = arith.maximumf %82, %83 : vector<2x16x1x128xf32>
    %85 = tpu.reciprocal %84 {approx = true} : vector<2x16x1x128xf32> -> vector<2x16x1x128xf32>
    %86 = vector.broadcast %85 : vector<2x16x1x128xf32> to vector<2x16x16x128xf32>
    %87 = arith.mulf %80, %86 : vector<2x16x16x128xf32>
    %88 = vector.shape_cast %46 : vector<2x16x128xf32> to vector<2x1x16x128xf32>
    %89 = vector.broadcast %88 : vector<2x1x16x128xf32> to vector<2x16x16x128xf32>
    %90 = arith.mulf %87, %89 : vector<2x16x16x128xf32>
    %cst_31 = arith.constant dense<0.000000e+00> : vector<2x16x128xf32>
    %91 = vector.multi_reduction <add>, %90, %cst_31 [2] : vector<2x16x16x128xf32> to vector<2x16x128xf32>
    %c6 = arith.constant 6 : index
    %c0_32 = arith.constant 0 : index
    %92 = vector.load %arg4[%c6, %c0_32] : memref<32x128xf32, #tpu.memory_space<vmem>>, vector<1x128xf32>
    %93 = vector.shape_cast %92 : vector<1x128xf32> to vector<128xf32>
    %94 = vector.shape_cast %93 : vector<128xf32> to vector<1x1x128xf32>
    %95 = vector.broadcast %94 : vector<1x1x128xf32> to vector<2x16x128xf32>
    %96 = arith.mulf %91, %95 : vector<2x16x128xf32>
    %c7 = arith.constant 7 : index
    %c0_33 = arith.constant 0 : index
    %97 = vector.load %arg4[%c7, %c0_33] : memref<32x128xf32, #tpu.memory_space<vmem>>, vector<1x128xf32>
    %98 = vector.shape_cast %97 : vector<1x128xf32> to vector<128xf32>
    %99 = vector.shape_cast %98 : vector<128xf32> to vector<1x1x128xf32>
    %100 = vector.broadcast %99 : vector<1x1x128xf32> to vector<2x16x128xf32>
    %101 = arith.addf %96, %100 : vector<2x16x128xf32>
    %cst_34 = arith.constant 0.000000e+00 : f32
    %102 = vector.broadcast %cst_34 : f32 to vector<2x16x128xf32>
    %103 = arith.maximumf %101, %102 : vector<2x16x128xf32>
    %104 = vector.shape_cast %103 : vector<2x16x128xf32> to vector<32x128xf32>
    %c1_35 = arith.constant 1 : index
    %c0_36 = arith.constant 0 : index
    %c0_37 = arith.constant 0 : index
    %105 = vector.load %arg5[%c1_35, %c0_36, %c0_37] : memref<4x128x256xf32, #tpu.memory_space<vmem>>, vector<1x128x256xf32>
    %106 = vector.shape_cast %105 : vector<1x128x256xf32> to vector<128x256xf32>
    %cst_38 = arith.constant dense<0.000000e+00> : vector<32x256xf32>
    %107 = tpu.matmul %104, %106, %cst_38 {dimension_numbers = #tpu.dot_dimension_numbers<[1], [0], [0], [1], [0, 0, 1, 1], [], []>} : vector<32x128xf32>, vector<128x256xf32>, vector<32x256xf32> -> vector<32x256xf32>
    %108 = vector.extract_strided_slice %107 {offsets = [0, 0], sizes = [32, 128], strides = [1, 1]} : vector<32x256xf32> to vector<32x128xf32>
    %c8 = arith.constant 8 : index
    %c0_39 = arith.constant 0 : index
    %109 = vector.load %arg4[%c8, %c0_39] : memref<32x128xf32, #tpu.memory_space<vmem>>, vector<1x128xf32>
    %110 = vector.shape_cast %109 : vector<1x128xf32> to vector<128xf32>
    %111 = vector.shape_cast %110 : vector<128xf32> to vector<1x128xf32>
    %112 = vector.broadcast %111 : vector<1x128xf32> to vector<32x128xf32>
    %113 = arith.addf %108, %112 : vector<32x128xf32>
    %114 = vector.shape_cast %113 : vector<32x128xf32> to vector<2x16x128xf32>
    %115 = vector.extract_strided_slice %107 {offsets = [0, 128], sizes = [32, 128], strides = [1, 1]} : vector<32x256xf32> to vector<32x128xf32>
    %c9 = arith.constant 9 : index
    %c0_40 = arith.constant 0 : index
    %116 = vector.load %arg4[%c9, %c0_40] : memref<32x128xf32, #tpu.memory_space<vmem>>, vector<1x128xf32>
    %117 = vector.shape_cast %116 : vector<1x128xf32> to vector<128xf32>
    %118 = vector.shape_cast %117 : vector<128xf32> to vector<1x128xf32>
    %119 = vector.broadcast %118 : vector<1x128xf32> to vector<32x128xf32>
    %120 = arith.addf %115, %119 : vector<32x128xf32>
    %121 = vector.shape_cast %120 : vector<32x128xf32> to vector<2x16x128xf32>
    %122 = vector.shape_cast %121 : vector<2x16x128xf32> to vector<2x16x1x128xf32>
    %123 = vector.shape_cast %114 : vector<2x16x128xf32> to vector<2x1x16x128xf32>
    %124 = vector.broadcast %122 : vector<2x16x1x128xf32> to vector<2x16x16x128xf32>
    %125 = vector.broadcast %123 : vector<2x1x16x128xf32> to vector<2x16x16x128xf32>
    %126 = arith.addf %124, %125 : vector<2x16x16x128xf32>
    %c10 = arith.constant 10 : index
    %c0_41 = arith.constant 0 : index
    %127 = vector.load %arg4[%c10, %c0_41] : memref<32x128xf32, #tpu.memory_space<vmem>>, vector<1x128xf32>
    %128 = vector.shape_cast %127 : vector<1x128xf32> to vector<128xf32>
    %129 = vector.shape_cast %128 : vector<128xf32> to vector<1x1x1x128xf32>
    %130 = vector.broadcast %129 : vector<1x1x1x128xf32> to vector<2x16x16x128xf32>
    %131 = arith.mulf %12, %130 : vector<2x16x16x128xf32>
    %132 = arith.addf %126, %131 : vector<2x16x16x128xf32>
    %cst_42 = arith.constant 0.000000e+00 : f32
    %133 = vector.broadcast %cst_42 : f32 to vector<2x16x16x128xf32>
    %134 = arith.cmpf oge, %132, %133 : vector<2x16x16x128xf32>
    %cst_43 = arith.constant 2.000000e-01 : f32
    %135 = vector.broadcast %cst_43 : f32 to vector<2x16x16x128xf32>
    %136 = arith.mulf %135, %132 : vector<2x16x16x128xf32>
    %137 = arith.select %134, %132, %136 : vector<2x16x16x128xi1>, vector<2x16x16x128xf32>
    %138 = vector.shape_cast %137 : vector<2x16x16x128xf32> to vector<512x128xf32>
    %c1_44 = arith.constant 1 : index
    %c0_45 = arith.constant 0 : index
    %c0_46 = arith.constant 0 : index
    %139 = vector.load %arg6[%c1_44, %c0_45, %c0_46] : memref<4x128x128xf32, #tpu.memory_space<vmem>>, vector<1x128x128xf32>
    %140 = vector.shape_cast %139 : vector<1x128x128xf32> to vector<128x128xf32>
    %cst_47 = arith.constant dense<0.000000e+00> : vector<512x128xf32>
    %141 = tpu.matmul %138, %140, %cst_47 {dimension_numbers = #tpu.dot_dimension_numbers<[1], [0], [0], [1], [0, 0, 1, 1], [], []>} : vector<512x128xf32>, vector<128x128xf32>, vector<512x128xf32> -> vector<512x128xf32>
    %142 = vector.shape_cast %141 : vector<512x128xf32> to vector<2x16x16x128xf32>
    %143 = arith.addf %142, %8 : vector<2x16x16x128xf32>
    %cst_48 = arith.constant dense<0xFF800000> : vector<2x16x128xf32>
    %144 = vector.multi_reduction <maximumf>, %143, %cst_48 [2] : vector<2x16x16x128xf32> to vector<2x16x128xf32>
    %145 = vector.shape_cast %144 : vector<2x16x128xf32> to vector<2x16x1x128xf32>
    %146 = vector.broadcast %145 : vector<2x16x1x128xf32> to vector<2x16x16x128xf32>
    %147 = arith.subf %143, %146 : vector<2x16x16x128xf32>
    %148 = math.exp %147 : vector<2x16x16x128xf32>
    %cst_49 = arith.constant dense<0.000000e+00> : vector<2x16x128xf32>
    %149 = vector.multi_reduction <add>, %148, %cst_49 [2] : vector<2x16x16x128xf32> to vector<2x16x128xf32>
    %150 = vector.shape_cast %149 : vector<2x16x128xf32> to vector<2x16x1x128xf32>
    %cst_50 = arith.constant 9.99999968E-21 : f32
    %151 = vector.broadcast %cst_50 : f32 to vector<2x16x1x128xf32>
    %152 = arith.maximumf %150, %151 : vector<2x16x1x128xf32>
    %153 = tpu.reciprocal %152 {approx = true} : vector<2x16x1x128xf32> -> vector<2x16x1x128xf32>
    %154 = vector.broadcast %153 : vector<2x16x1x128xf32> to vector<2x16x16x128xf32>
    %155 = arith.mulf %148, %154 : vector<2x16x16x128xf32>
    %156 = vector.shape_cast %114 : vector<2x16x128xf32> to vector<2x1x16x128xf32>
    %157 = vector.broadcast %156 : vector<2x1x16x128xf32> to vector<2x16x16x128xf32>
    %158 = arith.mulf %155, %157 : vector<2x16x16x128xf32>
    %cst_51 = arith.constant dense<0.000000e+00> : vector<2x16x128xf32>
    %159 = vector.multi_reduction <add>, %158, %cst_51 [2] : vector<2x16x16x128xf32> to vector<2x16x128xf32>
    %c11 = arith.constant 11 : index
    %c0_52 = arith.constant 0 : index
    %160 = vector.load %arg4[%c11, %c0_52] : memref<32x128xf32, #tpu.memory_space<vmem>>, vector<1x128xf32>
    %161 = vector.shape_cast %160 : vector<1x128xf32> to vector<128xf32>
    %162 = vector.shape_cast %161 : vector<128xf32> to vector<1x1x128xf32>
    %163 = vector.broadcast %162 : vector<1x1x128xf32> to vector<2x16x128xf32>
    %164 = arith.mulf %159, %163 : vector<2x16x128xf32>
    %c12 = arith.constant 12 : index
    %c0_53 = arith.constant 0 : index
    %165 = vector.load %arg4[%c12, %c0_53] : memref<32x128xf32, #tpu.memory_space<vmem>>, vector<1x128xf32>
    %166 = vector.shape_cast %165 : vector<1x128xf32> to vector<128xf32>
    %167 = vector.shape_cast %166 : vector<128xf32> to vector<1x1x128xf32>
    %168 = vector.broadcast %167 : vector<1x1x128xf32> to vector<2x16x128xf32>
    %169 = arith.addf %164, %168 : vector<2x16x128xf32>
    %170 = arith.addf %169, %103 : vector<2x16x128xf32>
    %cst_54 = arith.constant 0.000000e+00 : f32
    %171 = vector.broadcast %cst_54 : f32 to vector<2x16x128xf32>
    %172 = arith.maximumf %170, %171 : vector<2x16x128xf32>
    %173 = vector.shape_cast %172 : vector<2x16x128xf32> to vector<32x128xf32>
    %c2_55 = arith.constant 2 : index
    %c0_56 = arith.constant 0 : index
    %c0_57 = arith.constant 0 : index
    %174 = vector.load %arg5[%c2_55, %c0_56, %c0_57] : memref<4x128x256xf32, #tpu.memory_space<vmem>>, vector<1x128x256xf32>
    %175 = vector.shape_cast %174 : vector<1x128x256xf32> to vector<128x256xf32>
    %cst_58 = arith.constant dense<0.000000e+00> : vector<32x256xf32>
    %176 = tpu.matmul %173, %175, %cst_58 {dimension_numbers = #tpu.dot_dimension_numbers<[1], [0], [0], [1], [0, 0, 1, 1], [], []>} : vector<32x128xf32>, vector<128x256xf32>, vector<32x256xf32> -> vector<32x256xf32>
    %177 = vector.extract_strided_slice %176 {offsets = [0, 0], sizes = [32, 128], strides = [1, 1]} : vector<32x256xf32> to vector<32x128xf32>
    %c13 = arith.constant 13 : index
    %c0_59 = arith.constant 0 : index
    %178 = vector.load %arg4[%c13, %c0_59] : memref<32x128xf32, #tpu.memory_space<vmem>>, vector<1x128xf32>
    %179 = vector.shape_cast %178 : vector<1x128xf32> to vector<128xf32>
    %180 = vector.shape_cast %179 : vector<128xf32> to vector<1x128xf32>
    %181 = vector.broadcast %180 : vector<1x128xf32> to vector<32x128xf32>
    %182 = arith.addf %177, %181 : vector<32x128xf32>
    %183 = vector.shape_cast %182 : vector<32x128xf32> to vector<2x16x128xf32>
    %184 = vector.extract_strided_slice %176 {offsets = [0, 128], sizes = [32, 128], strides = [1, 1]} : vector<32x256xf32> to vector<32x128xf32>
    %c14 = arith.constant 14 : index
    %c0_60 = arith.constant 0 : index
    %185 = vector.load %arg4[%c14, %c0_60] : memref<32x128xf32, #tpu.memory_space<vmem>>, vector<1x128xf32>
    %186 = vector.shape_cast %185 : vector<1x128xf32> to vector<128xf32>
    %187 = vector.shape_cast %186 : vector<128xf32> to vector<1x128xf32>
    %188 = vector.broadcast %187 : vector<1x128xf32> to vector<32x128xf32>
    %189 = arith.addf %184, %188 : vector<32x128xf32>
    %190 = vector.shape_cast %189 : vector<32x128xf32> to vector<2x16x128xf32>
    %191 = vector.shape_cast %190 : vector<2x16x128xf32> to vector<2x16x1x128xf32>
    %192 = vector.shape_cast %183 : vector<2x16x128xf32> to vector<2x1x16x128xf32>
    %193 = vector.broadcast %191 : vector<2x16x1x128xf32> to vector<2x16x16x128xf32>
    %194 = vector.broadcast %192 : vector<2x1x16x128xf32> to vector<2x16x16x128xf32>
    %195 = arith.addf %193, %194 : vector<2x16x16x128xf32>
    %c15 = arith.constant 15 : index
    %c0_61 = arith.constant 0 : index
    %196 = vector.load %arg4[%c15, %c0_61] : memref<32x128xf32, #tpu.memory_space<vmem>>, vector<1x128xf32>
    %197 = vector.shape_cast %196 : vector<1x128xf32> to vector<128xf32>
    %198 = vector.shape_cast %197 : vector<128xf32> to vector<1x1x1x128xf32>
    %199 = vector.broadcast %198 : vector<1x1x1x128xf32> to vector<2x16x16x128xf32>
    %200 = arith.mulf %12, %199 : vector<2x16x16x128xf32>
    %201 = arith.addf %195, %200 : vector<2x16x16x128xf32>
    %cst_62 = arith.constant 0.000000e+00 : f32
    %202 = vector.broadcast %cst_62 : f32 to vector<2x16x16x128xf32>
    %203 = arith.cmpf oge, %201, %202 : vector<2x16x16x128xf32>
    %cst_63 = arith.constant 2.000000e-01 : f32
    %204 = vector.broadcast %cst_63 : f32 to vector<2x16x16x128xf32>
    %205 = arith.mulf %204, %201 : vector<2x16x16x128xf32>
    %206 = arith.select %203, %201, %205 : vector<2x16x16x128xi1>, vector<2x16x16x128xf32>
    %207 = vector.shape_cast %206 : vector<2x16x16x128xf32> to vector<512x128xf32>
    %c2_64 = arith.constant 2 : index
    %c0_65 = arith.constant 0 : index
    %c0_66 = arith.constant 0 : index
    %208 = vector.load %arg6[%c2_64, %c0_65, %c0_66] : memref<4x128x128xf32, #tpu.memory_space<vmem>>, vector<1x128x128xf32>
    %209 = vector.shape_cast %208 : vector<1x128x128xf32> to vector<128x128xf32>
    %cst_67 = arith.constant dense<0.000000e+00> : vector<512x128xf32>
    %210 = tpu.matmul %207, %209, %cst_67 {dimension_numbers = #tpu.dot_dimension_numbers<[1], [0], [0], [1], [0, 0, 1, 1], [], []>} : vector<512x128xf32>, vector<128x128xf32>, vector<512x128xf32> -> vector<512x128xf32>
    %211 = vector.shape_cast %210 : vector<512x128xf32> to vector<2x16x16x128xf32>
    %212 = arith.addf %211, %8 : vector<2x16x16x128xf32>
    %cst_68 = arith.constant dense<0xFF800000> : vector<2x16x128xf32>
    %213 = vector.multi_reduction <maximumf>, %212, %cst_68 [2] : vector<2x16x16x128xf32> to vector<2x16x128xf32>
    %214 = vector.shape_cast %213 : vector<2x16x128xf32> to vector<2x16x1x128xf32>
    %215 = vector.broadcast %214 : vector<2x16x1x128xf32> to vector<2x16x16x128xf32>
    %216 = arith.subf %212, %215 : vector<2x16x16x128xf32>
    %217 = math.exp %216 : vector<2x16x16x128xf32>
    %cst_69 = arith.constant dense<0.000000e+00> : vector<2x16x128xf32>
    %218 = vector.multi_reduction <add>, %217, %cst_69 [2] : vector<2x16x16x128xf32> to vector<2x16x128xf32>
    %219 = vector.shape_cast %218 : vector<2x16x128xf32> to vector<2x16x1x128xf32>
    %cst_70 = arith.constant 9.99999968E-21 : f32
    %220 = vector.broadcast %cst_70 : f32 to vector<2x16x1x128xf32>
    %221 = arith.maximumf %219, %220 : vector<2x16x1x128xf32>
    %222 = tpu.reciprocal %221 {approx = true} : vector<2x16x1x128xf32> -> vector<2x16x1x128xf32>
    %223 = vector.broadcast %222 : vector<2x16x1x128xf32> to vector<2x16x16x128xf32>
    %224 = arith.mulf %217, %223 : vector<2x16x16x128xf32>
    %225 = vector.shape_cast %183 : vector<2x16x128xf32> to vector<2x1x16x128xf32>
    %226 = vector.broadcast %225 : vector<2x1x16x128xf32> to vector<2x16x16x128xf32>
    %227 = arith.mulf %224, %226 : vector<2x16x16x128xf32>
    %cst_71 = arith.constant dense<0.000000e+00> : vector<2x16x128xf32>
    %228 = vector.multi_reduction <add>, %227, %cst_71 [2] : vector<2x16x16x128xf32> to vector<2x16x128xf32>
    %c16 = arith.constant 16 : index
    %c0_72 = arith.constant 0 : index
    %229 = vector.load %arg4[%c16, %c0_72] : memref<32x128xf32, #tpu.memory_space<vmem>>, vector<1x128xf32>
    %230 = vector.shape_cast %229 : vector<1x128xf32> to vector<128xf32>
    %231 = vector.shape_cast %230 : vector<128xf32> to vector<1x1x128xf32>
    %232 = vector.broadcast %231 : vector<1x1x128xf32> to vector<2x16x128xf32>
    %233 = arith.mulf %228, %232 : vector<2x16x128xf32>
    %c17 = arith.constant 17 : index
    %c0_73 = arith.constant 0 : index
    %234 = vector.load %arg4[%c17, %c0_73] : memref<32x128xf32, #tpu.memory_space<vmem>>, vector<1x128xf32>
    %235 = vector.shape_cast %234 : vector<1x128xf32> to vector<128xf32>
    %236 = vector.shape_cast %235 : vector<128xf32> to vector<1x1x128xf32>
    %237 = vector.broadcast %236 : vector<1x1x128xf32> to vector<2x16x128xf32>
    %238 = arith.addf %233, %237 : vector<2x16x128xf32>
    %239 = arith.addf %238, %172 : vector<2x16x128xf32>
    %cst_74 = arith.constant 0.000000e+00 : f32
    %240 = vector.broadcast %cst_74 : f32 to vector<2x16x128xf32>
    %241 = arith.maximumf %239, %240 : vector<2x16x128xf32>
    %242 = vector.shape_cast %241 : vector<2x16x128xf32> to vector<32x128xf32>
    %c3_75 = arith.constant 3 : index
    %c0_76 = arith.constant 0 : index
    %c0_77 = arith.constant 0 : index
    %243 = vector.load %arg5[%c3_75, %c0_76, %c0_77] : memref<4x128x256xf32, #tpu.memory_space<vmem>>, vector<1x128x256xf32>
    %244 = vector.shape_cast %243 : vector<1x128x256xf32> to vector<128x256xf32>
    %cst_78 = arith.constant dense<0.000000e+00> : vector<32x256xf32>
    %245 = tpu.matmul %242, %244, %cst_78 {dimension_numbers = #tpu.dot_dimension_numbers<[1], [0], [0], [1], [0, 0, 1, 1], [], []>} : vector<32x128xf32>, vector<128x256xf32>, vector<32x256xf32> -> vector<32x256xf32>
    %246 = vector.extract_strided_slice %245 {offsets = [0, 0], sizes = [32, 128], strides = [1, 1]} : vector<32x256xf32> to vector<32x128xf32>
    %c18 = arith.constant 18 : index
    %c0_79 = arith.constant 0 : index
    %247 = vector.load %arg4[%c18, %c0_79] : memref<32x128xf32, #tpu.memory_space<vmem>>, vector<1x128xf32>
    %248 = vector.shape_cast %247 : vector<1x128xf32> to vector<128xf32>
    %249 = vector.shape_cast %248 : vector<128xf32> to vector<1x128xf32>
    %250 = vector.broadcast %249 : vector<1x128xf32> to vector<32x128xf32>
    %251 = arith.addf %246, %250 : vector<32x128xf32>
    %252 = vector.shape_cast %251 : vector<32x128xf32> to vector<2x16x128xf32>
    %253 = vector.extract_strided_slice %245 {offsets = [0, 128], sizes = [32, 128], strides = [1, 1]} : vector<32x256xf32> to vector<32x128xf32>
    %c19 = arith.constant 19 : index
    %c0_80 = arith.constant 0 : index
    %254 = vector.load %arg4[%c19, %c0_80] : memref<32x128xf32, #tpu.memory_space<vmem>>, vector<1x128xf32>
    %255 = vector.shape_cast %254 : vector<1x128xf32> to vector<128xf32>
    %256 = vector.shape_cast %255 : vector<128xf32> to vector<1x128xf32>
    %257 = vector.broadcast %256 : vector<1x128xf32> to vector<32x128xf32>
    %258 = arith.addf %253, %257 : vector<32x128xf32>
    %259 = vector.shape_cast %258 : vector<32x128xf32> to vector<2x16x128xf32>
    %260 = vector.shape_cast %259 : vector<2x16x128xf32> to vector<2x16x1x128xf32>
    %261 = vector.shape_cast %252 : vector<2x16x128xf32> to vector<2x1x16x128xf32>
    %262 = vector.broadcast %260 : vector<2x16x1x128xf32> to vector<2x16x16x128xf32>
    %263 = vector.broadcast %261 : vector<2x1x16x128xf32> to vector<2x16x16x128xf32>
    %264 = arith.addf %262, %263 : vector<2x16x16x128xf32>
    %c20 = arith.constant 20 : index
    %c0_81 = arith.constant 0 : index
    %265 = vector.load %arg4[%c20, %c0_81] : memref<32x128xf32, #tpu.memory_space<vmem>>, vector<1x128xf32>
    %266 = vector.shape_cast %265 : vector<1x128xf32> to vector<128xf32>
    %267 = vector.shape_cast %266 : vector<128xf32> to vector<1x1x1x128xf32>
    %268 = vector.broadcast %267 : vector<1x1x1x128xf32> to vector<2x16x16x128xf32>
    %269 = arith.mulf %12, %268 : vector<2x16x16x128xf32>
    %270 = arith.addf %264, %269 : vector<2x16x16x128xf32>
    %cst_82 = arith.constant 0.000000e+00 : f32
    %271 = vector.broadcast %cst_82 : f32 to vector<2x16x16x128xf32>
    %272 = arith.cmpf oge, %270, %271 : vector<2x16x16x128xf32>
    %cst_83 = arith.constant 2.000000e-01 : f32
    %273 = vector.broadcast %cst_83 : f32 to vector<2x16x16x128xf32>
    %274 = arith.mulf %273, %270 : vector<2x16x16x128xf32>
    %275 = arith.select %272, %270, %274 : vector<2x16x16x128xi1>, vector<2x16x16x128xf32>
    %276 = vector.shape_cast %275 : vector<2x16x16x128xf32> to vector<512x128xf32>
    %c3_84 = arith.constant 3 : index
    %c0_85 = arith.constant 0 : index
    %c0_86 = arith.constant 0 : index
    %277 = vector.load %arg6[%c3_84, %c0_85, %c0_86] : memref<4x128x128xf32, #tpu.memory_space<vmem>>, vector<1x128x128xf32>
    %278 = vector.shape_cast %277 : vector<1x128x128xf32> to vector<128x128xf32>
    %cst_87 = arith.constant dense<0.000000e+00> : vector<512x128xf32>
    %279 = tpu.matmul %276, %278, %cst_87 {dimension_numbers = #tpu.dot_dimension_numbers<[1], [0], [0], [1], [0, 0, 1, 1], [], []>} : vector<512x128xf32>, vector<128x128xf32>, vector<512x128xf32> -> vector<512x128xf32>
    %280 = vector.shape_cast %279 : vector<512x128xf32> to vector<2x16x16x128xf32>
    %281 = arith.addf %280, %8 : vector<2x16x16x128xf32>
    %cst_88 = arith.constant dense<0xFF800000> : vector<2x16x128xf32>
    %282 = vector.multi_reduction <maximumf>, %281, %cst_88 [2] : vector<2x16x16x128xf32> to vector<2x16x128xf32>
    %283 = vector.shape_cast %282 : vector<2x16x128xf32> to vector<2x16x1x128xf32>
    %284 = vector.broadcast %283 : vector<2x16x1x128xf32> to vector<2x16x16x128xf32>
    %285 = arith.subf %281, %284 : vector<2x16x16x128xf32>
    %286 = math.exp %285 : vector<2x16x16x128xf32>
    %cst_89 = arith.constant dense<0.000000e+00> : vector<2x16x128xf32>
    %287 = vector.multi_reduction <add>, %286, %cst_89 [2] : vector<2x16x16x128xf32> to vector<2x16x128xf32>
    %288 = vector.shape_cast %287 : vector<2x16x128xf32> to vector<2x16x1x128xf32>
    %cst_90 = arith.constant 9.99999968E-21 : f32
    %289 = vector.broadcast %cst_90 : f32 to vector<2x16x1x128xf32>
    %290 = arith.maximumf %288, %289 : vector<2x16x1x128xf32>
    %291 = tpu.reciprocal %290 {approx = true} : vector<2x16x1x128xf32> -> vector<2x16x1x128xf32>
    %292 = vector.broadcast %291 : vector<2x16x1x128xf32> to vector<2x16x16x128xf32>
    %293 = arith.mulf %286, %292 : vector<2x16x16x128xf32>
    %294 = vector.shape_cast %252 : vector<2x16x128xf32> to vector<2x1x16x128xf32>
    %295 = vector.broadcast %294 : vector<2x1x16x128xf32> to vector<2x16x16x128xf32>
    %296 = arith.mulf %293, %295 : vector<2x16x16x128xf32>
    %cst_91 = arith.constant dense<0.000000e+00> : vector<2x16x128xf32>
    %297 = vector.multi_reduction <add>, %296, %cst_91 [2] : vector<2x16x16x128xf32> to vector<2x16x128xf32>
    %c21 = arith.constant 21 : index
    %c0_92 = arith.constant 0 : index
    %298 = vector.load %arg4[%c21, %c0_92] : memref<32x128xf32, #tpu.memory_space<vmem>>, vector<1x128xf32>
    %299 = vector.shape_cast %298 : vector<1x128xf32> to vector<128xf32>
    %300 = vector.shape_cast %299 : vector<128xf32> to vector<1x1x128xf32>
    %301 = vector.broadcast %300 : vector<1x1x128xf32> to vector<2x16x128xf32>
    %302 = arith.mulf %297, %301 : vector<2x16x128xf32>
    %c22 = arith.constant 22 : index
    %c0_93 = arith.constant 0 : index
    %303 = vector.load %arg4[%c22, %c0_93] : memref<32x128xf32, #tpu.memory_space<vmem>>, vector<1x128xf32>
    %304 = vector.shape_cast %303 : vector<1x128xf32> to vector<128xf32>
    %305 = vector.shape_cast %304 : vector<128xf32> to vector<1x1x128xf32>
    %306 = vector.broadcast %305 : vector<1x1x128xf32> to vector<2x16x128xf32>
    %307 = arith.addf %302, %306 : vector<2x16x128xf32>
    %308 = arith.addf %307, %241 : vector<2x16x128xf32>
    %cst_94 = arith.constant 0.000000e+00 : f32
    %309 = vector.broadcast %cst_94 : f32 to vector<2x16x128xf32>
    %310 = arith.maximumf %308, %309 : vector<2x16x128xf32>
    %c0_95 = arith.constant 0 : index
    %c0_96 = arith.constant 0 : index
    %311 = vector.load %arg3[%c0_95, %c0_96] : memref<2x8xf32, #tpu.memory_space<vmem>>, vector<2x8xf32>
    %cst_97 = arith.constant dense<0.000000e+00> : vector<2x128xf32>
    %312 = vector.multi_reduction <add>, %310, %cst_97 [1] : vector<2x16x128xf32> to vector<2x128xf32>
    %cst_98 = arith.constant 1.600000e+01 : f32
    %313 = vector.broadcast %cst_98 : f32 to vector<2x128xf32>
    %314 = arith.divf %312, %313 : vector<2x128xf32>
    %c0_99 = arith.constant 0 : index
    %c0_100 = arith.constant 0 : index
    %315 = vector.load %arg7[%c0_99, %c0_100] : memref<520x128xf32, #tpu.memory_space<vmem>>, vector<8x128xf32>
    %cst_101 = arith.constant dense<0.000000e+00> : vector<2x128xf32>
    %316 = tpu.matmul %311, %315, %cst_101 {dimension_numbers = #tpu.dot_dimension_numbers<[1], [0], [0], [1], [0, 0, 1, 1], [], []>} : vector<2x8xf32>, vector<8x128xf32>, vector<2x128xf32> -> vector<2x128xf32>
    %c23 = arith.constant 23 : index
    %c0_102 = arith.constant 0 : index
    %317 = vector.load %arg4[%c23, %c0_102] : memref<32x128xf32, #tpu.memory_space<vmem>>, vector<1x128xf32>
    %318 = vector.shape_cast %317 : vector<1x128xf32> to vector<128xf32>
    %319 = vector.shape_cast %318 : vector<128xf32> to vector<1x128xf32>
    %320 = vector.broadcast %319 : vector<1x128xf32> to vector<2x128xf32>
    %321 = arith.addf %316, %320 : vector<2x128xf32>
    %cst_103 = arith.constant 0.000000e+00 : f32
    %322 = vector.broadcast %cst_103 : f32 to vector<2x128xf32>
    %323 = arith.maximumf %321, %322 : vector<2x128xf32>
    %c8_104 = arith.constant 8 : index
    %c0_105 = arith.constant 0 : index
    %324 = vector.load %arg7[%c8_104, %c0_105] : memref<520x128xf32, #tpu.memory_space<vmem>>, vector<128x128xf32>
    %cst_106 = arith.constant dense<0.000000e+00> : vector<2x128xf32>
    %325 = tpu.matmul %323, %324, %cst_106 {dimension_numbers = #tpu.dot_dimension_numbers<[1], [0], [0], [1], [0, 0, 1, 1], [], []>} : vector<2x128xf32>, vector<128x128xf32>, vector<2x128xf32> -> vector<2x128xf32>
    %c24 = arith.constant 24 : index
    %c0_107 = arith.constant 0 : index
    %326 = vector.load %arg4[%c24, %c0_107] : memref<32x128xf32, #tpu.memory_space<vmem>>, vector<1x128xf32>
    %327 = vector.shape_cast %326 : vector<1x128xf32> to vector<128xf32>
    %328 = vector.shape_cast %327 : vector<128xf32> to vector<1x128xf32>
    %329 = vector.broadcast %328 : vector<1x128xf32> to vector<2x128xf32>
    %330 = arith.addf %325, %329 : vector<2x128xf32>
    %cst_108 = arith.constant 0.000000e+00 : f32
    %331 = vector.broadcast %cst_108 : f32 to vector<2x128xf32>
    %332 = arith.maximumf %330, %331 : vector<2x128xf32>
    %c136 = arith.constant 136 : index
    %c0_109 = arith.constant 0 : index
    %333 = vector.load %arg7[%c136, %c0_109] : memref<520x128xf32, #tpu.memory_space<vmem>>, vector<128x128xf32>
    %cst_110 = arith.constant dense<0.000000e+00> : vector<2x128xf32>
    %334 = tpu.matmul %314, %333, %cst_110 {dimension_numbers = #tpu.dot_dimension_numbers<[1], [0], [0], [1], [0, 0, 1, 1], [], []>} : vector<2x128xf32>, vector<128x128xf32>, vector<2x128xf32> -> vector<2x128xf32>
    %c264 = arith.constant 264 : index
    %c0_111 = arith.constant 0 : index
    %335 = vector.load %arg7[%c264, %c0_111] : memref<520x128xf32, #tpu.memory_space<vmem>>, vector<128x128xf32>
    %cst_112 = arith.constant dense<0.000000e+00> : vector<2x128xf32>
    %336 = tpu.matmul %332, %335, %cst_112 {dimension_numbers = #tpu.dot_dimension_numbers<[1], [0], [0], [1], [0, 0, 1, 1], [], []>} : vector<2x128xf32>, vector<128x128xf32>, vector<2x128xf32> -> vector<2x128xf32>
    %337 = arith.addf %334, %336 : vector<2x128xf32>
    %c25 = arith.constant 25 : index
    %c0_113 = arith.constant 0 : index
    %338 = vector.load %arg4[%c25, %c0_113] : memref<32x128xf32, #tpu.memory_space<vmem>>, vector<1x128xf32>
    %339 = vector.shape_cast %338 : vector<1x128xf32> to vector<128xf32>
    %340 = vector.shape_cast %339 : vector<128xf32> to vector<1x128xf32>
    %341 = vector.broadcast %340 : vector<1x128xf32> to vector<2x128xf32>
    %342 = arith.addf %337, %341 : vector<2x128xf32>
    %cst_114 = arith.constant 0.000000e+00 : f32
    %343 = vector.broadcast %cst_114 : f32 to vector<2x128xf32>
    %344 = arith.maximumf %342, %343 : vector<2x128xf32>
    %c392 = arith.constant 392 : index
    %c0_115 = arith.constant 0 : index
    %345 = vector.load %arg7[%c392, %c0_115] : memref<520x128xf32, #tpu.memory_space<vmem>>, vector<128x128xf32>
    %cst_116 = arith.constant dense<0.000000e+00> : vector<2x128xf32>
    %346 = tpu.matmul %344, %345, %cst_116 {dimension_numbers = #tpu.dot_dimension_numbers<[1], [0], [0], [1], [0, 0, 1, 1], [], []>} : vector<2x128xf32>, vector<128x128xf32>, vector<2x128xf32> -> vector<2x128xf32>
    %c26 = arith.constant 26 : index
    %c0_117 = arith.constant 0 : index
    %347 = vector.load %arg4[%c26, %c0_117] : memref<32x128xf32, #tpu.memory_space<vmem>>, vector<1x128xf32>
    %348 = vector.shape_cast %347 : vector<1x128xf32> to vector<128xf32>
    %349 = vector.shape_cast %348 : vector<128xf32> to vector<1x128xf32>
    %350 = vector.broadcast %349 : vector<1x128xf32> to vector<2x128xf32>
    %351 = arith.addf %346, %350 : vector<2x128xf32>
    %cst_118 = arith.constant 0.000000e+00 : f32
    %352 = vector.broadcast %cst_118 : f32 to vector<2x128xf32>
    %353 = arith.maximumf %351, %352 : vector<2x128xf32>
    %c27 = arith.constant 27 : index
    %c0_119 = arith.constant 0 : index
    %354 = vector.load %arg4[%c27, %c0_119] : memref<32x128xf32, #tpu.memory_space<vmem>>, vector<1x128xf32>
    %355 = vector.shape_cast %354 : vector<1x128xf32> to vector<128xf32>
    %356 = vector.shape_cast %355 : vector<128xf32> to vector<1x128xf32>
    %357 = vector.broadcast %356 : vector<1x128xf32> to vector<2x128xf32>
    %358 = arith.mulf %353, %357 : vector<2x128xf32>
    %cst_120 = arith.constant dense<0.000000e+00> : vector<2xf32>
    %359 = vector.multi_reduction <add>, %358, %cst_120 [1] : vector<2x128xf32> to vector<2xf32>
    %360 = vector.shape_cast %359 : vector<2xf32> to vector<2x1xf32>
    %c28 = arith.constant 28 : index
    %c0_121 = arith.constant 0 : index
    %361 = vector.load %arg4[%c28, %c0_121] : memref<32x128xf32, #tpu.memory_space<vmem>>, vector<1x1xf32>
    %362 = vector.broadcast %361 : vector<1x1xf32> to vector<2x1xf32>
    %363 = arith.addf %360, %362 : vector<2x1xf32>
    %c0_122 = arith.constant 0 : index
    %c0_123 = arith.constant 0 : index
    %364 = vector.load %arg8[%c0_122, %c0_123] : memref<2x1xf32, #tpu.memory_space<vmem>>, vector<2x1xf32>
    tpu.vector_store %arg8[%c0_122, %c0_123], %363 {strides = array<i32>} : memref<2x1xf32, #tpu.memory_space<vmem>>, vector<2x1xf32>,
    return
  }
}

</mosaic_0001>

<llo_original>
// kernel: forward.1
$region0: #{forward.1}
  #allocation0 [shape = 'u32[]', space=smem, size = 0x4, offset = 0x4, fixed_abs, tag = 'smem constant byte address 0x4 - core index']
  #allocation1 [shape = 'u32[72,128]{1,0:T(1,128)}', space=vmem, size = 0x9000, scoped, tag = 'internal scratch']
  %s0 = inlined_call_operand.vmem [shape: f32[2,16,2], index: 0, kind: input, shape index: {}]
  %s1 = inlined_call_operand.vmem [shape: f32[2,16,16], index: 1, kind: input, shape index: {}]
  %s2 = inlined_call_operand.hbm [shape: f32[2,16,16], index: 2, kind: input, shape index: {}]
  %s3 = inlined_call_operand.vmem [shape: f32[2,8], index: 3, kind: input, shape index: {}]
  %s4 = inlined_call_operand.hbm [shape: f32[32,128], index: 4, kind: input, shape index: {}]
  %s5 = inlined_call_operand.hbm [shape: f32[4,128,256], index: 5, kind: input, shape index: {}]
  %s6 = inlined_call_operand.hbm [shape: f32[4,128,128], index: 6, kind: input, shape index: {}]
  %s7 = inlined_call_operand.hbm [shape: f32[520,128], index: 7, kind: input, shape index: {}]
  %s8 = inlined_call_operand.vmem [shape: f32[2,1], index: 8, kind: output, shape index: {}]
  %s9 = sld [smem:[#allocation0]]
  $region62: #{forward.1} parent=0
    _
  %s11 = ssub.s32 1, %s9
  %s12 = scalar_select 0, %s11, %s9
  $region1: #{forward.1} parent=0
    #allocation2 [shape = 'u8[16384]{0}', space=vmem, size = 0x4000, scoped, tag = 'input window, operand 2, single buffered']
    #allocation3 [shape = 's32[1]{0}', space=sflag, size = 0x4, scoped, tag = 'scoped memory for forward.1']
    #allocation4 [shape = 'u8[16384]{0}', space=vmem, size = 0x4000, scoped, tag = 'input window, operand 4, single buffered']
    #allocation5 [shape = 's32[1]{0}', space=sflag, size = 0x4, scoped, tag = 'scoped memory for forward.1']
    #allocation6 [shape = 'u8[524288]{0}', space=vmem, size = 0x80000, scoped, tag = 'input window, operand 5, single buffered']
    #allocation7 [shape = 'u8[262144]{0}', space=vmem, size = 0x40000, scoped, tag = 'input window, operand 6, single buffered']
    #allocation8 [shape = 's32[1]{0}', space=sflag, size = 0x4, scoped, tag = 'scoped memory for forward.1']
    #allocation9 [shape = 'u8[266240]{0}', space=vmem, size = 0x41000, scoped, tag = 'input window, operand 7, single buffered']
    %13 = vsyncpa [#allocation3], 0
    %14 = vsyncpa [#allocation5], 0
    %15 = vsyncpa [#allocation8], 0
    // Predicated region
    $region2: #{forward.1} parent=1 // pred_check
      _
    $region3: #{forward.1} parent=1 // pred_check_branch
      %17 = sbr.rel (0) target = $region5
    $region4: #{forward.1} parent=1 // pred_region
      _
    $region5: #{forward.1} parent=1 // pred_fallthru
      _
    // Predicated region
    $region6: #{forward.1} parent=1 // pred_check
      _
    $region7: #{forward.1} parent=1 // pred_check_branch
      %19 = sbr.rel (0) target = $region9
    $region8: #{forward.1} parent=1 // pred_region
      _
    $region9: #{forward.1} parent=1 // pred_fallthru
      _
    // Predicated region
    $region10: #{forward.1} parent=1 // pred_check
      _
    $region11: #{forward.1} parent=1 // pred_check_branch
      %21 = sbr.rel (0) target = $region13
    $region12: #{forward.1} parent=1 // pred_region
      %23 = vsyncadd [#allocation3], 0
      %s24 = sshll.u32 %s2, 4
      %s25 = int_to_ptr.hbm [resolvable:$true] %s24
      %s26 = sshll.u32 [#allocation2], 4
      %s27 = int_to_ptr.vmem [resolvable:$true] %s26
      %32 = dma.hbm_to_vmem [thread:$0]  %s25, 512, %s27, [#allocation3], 128, 128, 8
    $region13: #{forward.1} parent=1 // pred_fallthru
      _
    // Predicated region
    $region14: #{forward.1} parent=1 // pred_check
      _
    $region15: #{forward.1} parent=1 // pred_check_branch
      %34 = sbr.rel (0) target = $region17
    $region16: #{forward.1} parent=1 // pred_region
      _
    $region17: #{forward.1} parent=1 // pred_fallthru
      _
    // Predicated region
    $region18: #{forward.1} parent=1 // pred_check
      _
    $region19: #{forward.1} parent=1 // pred_check_branch
      %36 = sbr.rel (0) target = $region21
    $region20: #{forward.1} parent=1 // pred_region
      %38 = vsyncadd [#allocation5], 0
      %s39 = sshll.u32 %s4, 4
      %s40 = int_to_ptr.hbm [resolvable:$true] %s39
      %s41 = sshll.u32 [#allocation4], 4
      %s42 = int_to_ptr.vmem [resolvable:$true] %s41
      %47 = dma.hbm_to_vmem [thread:$0]  %s40, 512, %s42, [#allocation5], 128, 128, 8
    $region21: #{forward.1} parent=1 // pred_fallthru
      _
    // Predicated region
    $region22: #{forward.1} parent=1 // pred_check
      _
    $region23: #{forward.1} parent=1 // pred_check_branch
      %49 = sbr.rel (0) target = $region25
    $region24: #{forward.1} parent=1 // pred_region
      %51 = vsyncadd [#allocation5], 0
      %s52 = sshll.u32 %s5, 4
      %s53 = int_to_ptr.hbm [resolvable:$true] %s52
      %s54 = sshll.u32 [#allocation6], 4
      %s55 = int_to_ptr.vmem [resolvable:$true] %s54
      %60 = dma.hbm_to_vmem [thread:$0]  %s53, 16384, %s55, [#allocation5], 256, 256, 16
    $region25: #{forward.1} parent=1 // pred_fallthru
      _
    // Predicated region
    $region26: #{forward.1} parent=1 // pred_check
      _
    $region27: #{forward.1} parent=1 // pred_check_branch
      %62 = sbr.rel (0) target = $region29
    $region28: #{forward.1} parent=1 // pred_region
      %64 = vsyncadd [#allocation8], 0
      %s65 = sshll.u32 %s6, 4
      %s66 = int_to_ptr.hbm [resolvable:$true] %s65
      %s67 = sshll.u32 [#allocation7], 4
      %s68 = int_to_ptr.vmem [resolvable:$true] %s67
      %73 = dma.hbm_to_vmem [thread:$0]  %s66, 8192, %s68, [#allocation8], 128, 128, 8
    $region29: #{forward.1} parent=1 // pred_fallthru
      _
    // Predicated region
    $region30: #{forward.1} parent=1 // pred_check
      _
    $region31: #{forward.1} parent=1 // pred_check_branch
      %75 = sbr.rel (0) target = $region33
    $region32: #{forward.1} parent=1 // pred_region
      %77 = vsyncadd [#allocation8], 0
      %s78 = sshll.u32 %s7, 4
      %s79 = int_to_ptr.hbm [resolvable:$true] %s78
      %s80 = sshll.u32 [#allocation9], 4
      %s81 = int_to_ptr.vmem [resolvable:$true] %s80
      %86 = dma.hbm_to_vmem [thread:$0]  %s79, 8320, %s81, [#allocation8], 128, 128, 8
    $region33: #{forward.1} parent=1 // pred_fallthru
      _
    // Predicated region
    $region34: #{forward.1} parent=1 // pred_check
      _
    $region35: #{forward.1} parent=1 // pred_check_branch
      %88 = sbr.rel (0) target = $region37
    $region36: #{forward.1} parent=1 // pred_region
      %90 = dma.done [#allocation3], 512
    $region37: #{forward.1} parent=1 // pred_fallthru
      _
    // Predicated region
    $region38: #{forward.1} parent=1 // pred_check
      _
    $region39: #{forward.1} parent=1 // pred_check_branch
      %92 = sbr.rel (0) target = $region41
    $region40: #{forward.1} parent=1 // pred_region
      %94 = dma.done [#allocation5], 512
    $region41: #{forward.1} parent=1 // pred_fallthru
      _
    // Predicated region
    $region42: #{forward.1} parent=1 // pred_check
      _
    $region43: #{forward.1} parent=1 // pred_check_branch
      %96 = sbr.rel (0) target = $region45
    $region44: #{forward.1} parent=1 // pred_region
      %98 = dma.done [#allocation5], 16384
    $region45: #{forward.1} parent=1 // pred_fallthru
      _
    // Predicated region
    $region46: #{forward.1} parent=1 // pred_check
      _
    $region47: #{forward.1} parent=1 // pred_check_branch
      %100 = sbr.rel (0) target = $region49
    $region48: #{forward.1} parent=1 // pred_region
      %102 = dma.done [#allocation8], 8192
    $region49: #{forward.1} parent=1 // pred_fallthru
      _
    // Predicated region
    $region50: #{forward.1} parent=1 // pred_check
      _
    $region51: #{forward.1} parent=1 // pred_check_branch
      %104 = sbr.rel (0) target = $region53
    $region52: #{forward.1} parent=1 // pred_region
      %106 = dma.done [#allocation8], 8320
    $region53: #{forward.1} parent=1 // pred_fallthru
      _
    %v107 = vld [vmem:[%s1] sm:$0xff]
    %v108 = vld [vmem:[%s1 + $0x8] sm:$0xff]
    %v109 = vld [vmem:[%s1 + $0x10] sm:$0xff]
    %v110 = vld [vmem:[%s1 + $0x18] sm:$0xff]
    %vm111 = vcmp.gt.f32.partialorder %v107, 0.0
    %vm112 = vcmp.gt.f32.partialorder %v108, 0.0
    %vm113 = vcmp.gt.f32.partialorder %v109, 0.0
    %vm114 = vcmp.gt.f32.partialorder %v110, 0.0
    %v115 = vsel %vm111, 0.0, -1e+30
    %v116 = vsel %vm112, 0.0, -1e+30
    %v117 = vsel %vm113, 0.0, -1e+30
    %v118 = vsel %vm114, 0.0, -1e+30
    %v119 = vperm.slane %v115, 0
    %v120 = vlaneseq
    %v121 = vshrl.u32 %v120, 7
    %123 = vset.pattern.permute.xlu0 %v121
    %124 = vperm.xlu0 %123, %v119
    %v125 = vpop.permute.xlu0 %124
    %v126 = vlaneseq
    %v127 = vshrl.u32 %v126, 7
    %v128 = vadd.s32 %v127, 8
    %129 = vset.pattern.permute.xlu0 %v128
    %130 = vperm.xlu0 %129, %v119
    %v131 = vpop.permute.xlu0 %130
    %v132 = vperm.slane %v115, 1
    %v133 = vlaneseq
    %v134 = vshrl.u32 %v133, 7
    %136 = vset.pattern.permute.xlu0 %v134
    %137 = vperm.xlu0 %136, %v132
    %v138 = vpop.permute.xlu0 %137
    %v139 = vlaneseq
    %v140 = vshrl.u32 %v139, 7
    %v141 = vadd.s32 %v140, 8
    %142 = vset.pattern.permute.xlu0 %v141
    %143 = vperm.xlu0 %142, %v132
    %v144 = vpop.permute.xlu0 %143
    %v145 = vperm.slane %v115, 2
    %v146 = vlaneseq
    %v147 = vshrl.u32 %v146, 7
    %149 = vset.pattern.permute.xlu0 %v147
    %150 = vperm.xlu0 %149, %v145
    %v151 = vpop.permute.xlu0 %150
    %v152 = vlaneseq
    %v153 = vshrl.u32 %v152, 7
    %v154 = vadd.s32 %v153, 8
    %155 = vset.pattern.permute.xlu0 %v154
    %156 = vperm.xlu0 %155, %v145
    %v157 = vpop.permute.xlu0 %156
    %v158 = vperm.slane %v115, 3
    %v159 = vlaneseq
    %v160 = vshrl.u32 %v159, 7
    %162 = vset.pattern.permute.xlu0 %v160
    %163 = vperm.xlu0 %162, %v158
    %v164 = vpop.permute.xlu0 %163
    %v165 = vlaneseq
    %v166 = vshrl.u32 %v165, 7
    %v167 = vadd.s32 %v166, 8
    %168 = vset.pattern.permute.xlu0 %v167
    %169 = vperm.xlu0 %168, %v158
    %v170 = vpop.permute.xlu0 %169
    %v171 = vperm.slane %v115, 4
    %v172 = vlaneseq
    %v173 = vshrl.u32 %v172, 7
    %175 = vset.pattern.permute.xlu0 %v173
    %176 = vperm.xlu0 %175, %v171
    %v177 = vpop.permute.xlu0 %176
    %v178 = vlaneseq
    %v179 = vshrl.u32 %v178, 7
    %v180 = vadd.s32 %v179, 8
    %181 = vset.pattern.permute.xlu0 %v180
    %182 = vperm.xlu0 %181, %v171
    %v183 = vpop.permute.xlu0 %182
    %v184 = vperm.slane %v115, 5
    %v185 = vlaneseq
    %v186 = vshrl.u32 %v185, 7
    %188 = vset.pattern.permute.xlu0 %v186
    %189 = vperm.xlu0 %188, %v184
    %v190 = vpop.permute.xlu0 %189
    %v191 = vlaneseq
    %v192 = vshrl.u32 %v191, 7
    %v193 = vadd.s32 %v192, 8
    %194 = vset.pattern.permute.xlu0 %v193
    %195 = vperm.xlu0 %194, %v184
    %v196 = vpop.permute.xlu0 %195
    %v197 = vperm.slane %v115, 6
    %v198 = vlaneseq
    %v199 = vshrl.u32 %v198, 7
    %201 = vset.pattern.permute.xlu0 %v199
    %202 = vperm.xlu0 %201, %v197
    %v203 = vpop.permute.xlu0 %202
    %v204 = vlaneseq
    %v205 = vshrl.u32 %v204, 7
    %v206 = vadd.s32 %v205, 8
    %207 = vset.pattern.permute.xlu0 %v206
    %208 = vperm.xlu0 %207, %v197
    %v209 = vpop.permute.xlu0 %208
    %v210 = vperm.slane %v115, 7
    %v211 = vlaneseq
    %v212 = vshrl.u32 %v211, 7
    %214 = vset.pattern.permute.xlu0 %v212
    %215 = vperm.xlu0 %214, %v210
    %v216 = vpop.permute.xlu0 %215
    %v217 = vlaneseq
    %v218 = vshrl.u32 %v217, 7
    %v219 = vadd.s32 %v218, 8
    %220 = vset.pattern.permute.xlu0 %v219
    %221 = vperm.xlu0 %220, %v210
    %v222 = vpop.permute.xlu0 %221
    %v223 = vperm.slane %v116, 0
    %v224 = vlaneseq
    %v225 = vshrl.u32 %v224, 7
    %227 = vset.pattern.permute.xlu0 %v225
    %228 = vperm.xlu0 %227, %v223
    %v229 = vpop.permute.xlu0 %228
    %v230 = vlaneseq
    %v231 = vshrl.u32 %v230, 7
    %v232 = vadd.s32 %v231, 8
    %233 = vset.pattern.permute.xlu0 %v232
    %234 = vperm.xlu0 %233, %v223
    %v235 = vpop.permute.xlu0 %234
    %v236 = vperm.slane %v116, 1
    %v237 = vlaneseq
    %v238 = vshrl.u32 %v237, 7
    %240 = vset.pattern.permute.xlu0 %v238
    %241 = vperm.xlu0 %240, %v236
    %v242 = vpop.permute.xlu0 %241
    %v243 = vlaneseq
    %v244 = vshrl.u32 %v243, 7
    %v245 = vadd.s32 %v244, 8
    %246 = vset.pattern.permute.xlu0 %v245
    %247 = vperm.xlu0 %246, %v236
    %v248 = vpop.permute.xlu0 %247
    %v249 = vperm.slane %v116, 2
    %v250 = vlaneseq
    %v251 = vshrl.u32 %v250, 7
    %253 = vset.pattern.permute.xlu0 %v251
    %254 = vperm.xlu0 %253, %v249
    %v255 = vpop.permute.xlu0 %254
    %v256 = vlaneseq
    %v257 = vshrl.u32 %v256, 7
    %v258 = vadd.s32 %v257, 8
    %259 = vset.pattern.permute.xlu0 %v258
    %260 = vperm.xlu0 %259, %v249
    %v261 = vpop.permute.xlu0 %260
    %v262 = vperm.slane %v116, 3
    %v263 = vlaneseq
    %v264 = vshrl.u32 %v263, 7
    %266 = vset.pattern.permute.xlu0 %v264
    %267 = vperm.xlu0 %266, %v262
    %v268 = vpop.permute.xlu0 %267
    %v269 = vlaneseq
    %v270 = vshrl.u32 %v269, 7
    %v271 = vadd.s32 %v270, 8
    %272 = vset.pattern.permute.xlu0 %v271
    %273 = vperm.xlu0 %272, %v262
    %v274 = vpop.permute.xlu0 %273
    %v275 = vperm.slane %v116, 4
    %v276 = vlaneseq
    %v277 = vshrl.u32 %v276, 7
    %279 = vset.pattern.permute.xlu0 %v277
    %280 = vperm.xlu0 %279, %v275
    %v281 = vpop.permute.xlu0 %280
    %v282 = vlaneseq
    %v283 = vshrl.u32 %v282, 7
    %v284 = vadd.s32 %v283, 8
    %285 = vset.pattern.permute.xlu0 %v284
    %286 = vperm.xlu0 %285, %v275
    %v287 = vpop.permute.xlu0 %286
    %v288 = vperm.slane %v116, 5
    %v289 = vlaneseq
    %v290 = vshrl.u32 %v289, 7
    %292 = vset.pattern.permute.xlu0 %v290
    %293 = vperm.xlu0 %292, %v288
    %v294 = vpop.permute.xlu0 %293
    %v295 = vlaneseq
    %v296 = vshrl.u32 %v295, 7
    %v297 = vadd.s32 %v296, 8
    %298 = vset.pattern.permute.xlu0 %v297
    %299 = vperm.xlu0 %298, %v288
    %v300 = vpop.permute.xlu0 %299
    %v301 = vperm.slane %v116, 6
    %v302 = vlaneseq
    %v303 = vshrl.u32 %v302, 7
    %305 = vset.pattern.permute.xlu0 %v303
    %306 = vperm.xlu0 %305, %v301
    %v307 = vpop.permute.xlu0 %306
    %v308 = vlaneseq
    %v309 = vshrl.u32 %v308, 7
    %v310 = vadd.s32 %v309, 8
    %311 = vset.pattern.permute.xlu0 %v310
    %312 = vperm.xlu0 %311, %v301
    %v313 = vpop.permute.xlu0 %312
    %v314 = vperm.slane %v116, 7
    %v315 = vlaneseq
    %v316 = vshrl.u32 %v315, 7
    %318 = vset.pattern.permute.xlu0 %v316
    %319 = vperm.xlu0 %318, %v314
    %v320 = vpop.permute.xlu0 %319
    %v321 = vlaneseq
    %v322 = vshrl.u32 %v321, 7
    %v323 = vadd.s32 %v322, 8
    %324 = vset.pattern.permute.xlu0 %v323
    %325 = vperm.xlu0 %324, %v314
    %v326 = vpop.permute.xlu0 %325
    %v327 = vperm.slane %v117, 0
    %v328 = vlaneseq
    %v329 = vshrl.u32 %v328, 7
    %331 = vset.pattern.permute.xlu0 %v329
    %332 = vperm.xlu0 %331, %v327
    %v333 = vpop.permute.xlu0 %332
    %v334 = vlaneseq
    %v335 = vshrl.u32 %v334, 7
    %v336 = vadd.s32 %v335, 8
    %337 = vset.pattern.permute.xlu0 %v336
    %338 = vperm.xlu0 %337, %v327
    %v339 = vpop.permute.xlu0 %338
    %v340 = vperm.slane %v117, 1
    %v341 = vlaneseq
    %v342 = vshrl.u32 %v341, 7
    %344 = vset.pattern.permute.xlu0 %v342
    %345 = vperm.xlu0 %344, %v340
    %v346 = vpop.permute.xlu0 %345
    %v347 = vlaneseq
    %v348 = vshrl.u32 %v347, 7
    %v349 = vadd.s32 %v348, 8
    %350 = vset.pattern.permute.xlu0 %v349
    %351 = vperm.xlu0 %350, %v340
    %v352 = vpop.permute.xlu0 %351
    %v353 = vperm.slane %v117, 2
    %v354 = vlaneseq
    %v355 = vshrl.u32 %v354, 7
    %357 = vset.pattern.permute.xlu0 %v355
    %358 = vperm.xlu0 %357, %v353
    %v359 = vpop.permute.xlu0 %358
    %v360 = vlaneseq
    %v361 = vshrl.u32 %v360, 7
    %v362 = vadd.s32 %v361, 8
    %363 = vset.pattern.permute.xlu0 %v362
    %364 = vperm.xlu0 %363, %v353
    %v365 = vpop.permute.xlu0 %364
    %v366 = vperm.slane %v117, 3
    %v367 = vlaneseq
    %v368 = vshrl.u32 %v367, 7
    %370 = vset.pattern.permute.xlu0 %v368
    %371 = vperm.xlu0 %370, %v366
    %v372 = vpop.permute.xlu0 %371
    %v373 = vlaneseq
    %v374 = vshrl.u32 %v373, 7
    %v375 = vadd.s32 %v374, 8
    %376 = vset.pattern.permute.xlu0 %v375
    %377 = vperm.xlu0 %376, %v366
    %v378 = vpop.permute.xlu0 %377
    %v379 = vperm.slane %v117, 4
    %v380 = vlaneseq
    %v381 = vshrl.u32 %v380, 7
    %383 = vset.pattern.permute.xlu0 %v381
    %384 = vperm.xlu0 %383, %v379
    %v385 = vpop.permute.xlu0 %384
    %v386 = vlaneseq
    %v387 = vshrl.u32 %v386, 7
    %v388 = vadd.s32 %v387, 8
    %389 = vset.pattern.permute.xlu0 %v388
    %390 = vperm.xlu0 %389, %v379
    %v391 = vpop.permute.xlu0 %390
    %v392 = vperm.slane %v117, 5
    %v393 = vlaneseq
    %v394 = vshrl.u32 %v393, 7
    %396 = vset.pattern.permute.xlu0 %v394
    %397 = vperm.xlu0 %396, %v392
    %v398 = vpop.permute.xlu0 %397
    %v399 = vlaneseq
    %v400 = vshrl.u32 %v399, 7
    %v401 = vadd.s32 %v400, 8
    %402 = vset.pattern.permute.xlu0 %v401
    %403 = vperm.xlu0 %402, %v392
    %v404 = vpop.permute.xlu0 %403
    %v405 = vperm.slane %v117, 6
    %v406 = vlaneseq
    %v407 = vshrl.u32 %v406, 7
    %409 = vset.pattern.permute.xlu0 %v407
    %410 = vperm.xlu0 %409, %v405
    %v411 = vpop.permute.xlu0 %410
    %v412 = vlaneseq
    %v413 = vshrl.u32 %v412, 7
    %v414 = vadd.s32 %v413, 8
    %415 = vset.pattern.permute.xlu0 %v414
    %416 = vperm.xlu0 %415, %v405
    %v417 = vpop.permute.xlu0 %416
    %v418 = vperm.slane %v117, 7
    %v419 = vlaneseq
    %v420 = vshrl.u32 %v419, 7
    %422 = vset.pattern.permute.xlu0 %v420
    %423 = vperm.xlu0 %422, %v418
    %v424 = vpop.permute.xlu0 %423
    %v425 = vlaneseq
    %v426 = vshrl.u32 %v425, 7
    %v427 = vadd.s32 %v426, 8
    %428 = vset.pattern.permute.xlu0 %v427
    %429 = vperm.xlu0 %428, %v418
    %v430 = vpop.permute.xlu0 %429
    %v431 = vperm.slane %v118, 0
    %v432 = vlaneseq
    %v433 = vshrl.u32 %v432, 7
    %435 = vset.pattern.permute.xlu0 %v433
    %436 = vperm.xlu0 %435, %v431
    %v437 = vpop.permute.xlu0 %436
    %v438 = vlaneseq
    %v439 = vshrl.u32 %v438, 7
    %v440 = vadd.s32 %v439, 8
    %441 = vset.pattern.permute.xlu0 %v440
    %442 = vperm.xlu0 %441, %v431
    %v443 = vpop.permute.xlu0 %442
    %v444 = vperm.slane %v118, 1
    %v445 = vlaneseq
    %v446 = vshrl.u32 %v445, 7
    %448 = vset.pattern.permute.xlu0 %v446
    %449 = vperm.xlu0 %448, %v444
    %v450 = vpop.permute.xlu0 %449
    %v451 = vlaneseq
    %v452 = vshrl.u32 %v451, 7
    %v453 = vadd.s32 %v452, 8
    %454 = vset.pattern.permute.xlu0 %v453
    %455 = vperm.xlu0 %454, %v444
    %v456 = vpop.permute.xlu0 %455
    %v457 = vperm.slane %v118, 2
    %v458 = vlaneseq
    %v459 = vshrl.u32 %v458, 7
    %461 = vset.pattern.permute.xlu0 %v459
    %462 = vperm.xlu0 %461, %v457
    %v463 = vpop.permute.xlu0 %462
    %v464 = vlaneseq
    %v465 = vshrl.u32 %v464, 7
    %v466 = vadd.s32 %v465, 8
    %467 = vset.pattern.permute.xlu0 %v466
    %468 = vperm.xlu0 %467, %v457
    %v469 = vpop.permute.xlu0 %468
    %v470 = vperm.slane %v118, 3
    %v471 = vlaneseq
    %v472 = vshrl.u32 %v471, 7
    %474 = vset.pattern.permute.xlu0 %v472
    %475 = vperm.xlu0 %474, %v470
    %v476 = vpop.permute.xlu0 %475
    %v477 = vlaneseq
    %v478 = vshrl.u32 %v477, 7
    %v479 = vadd.s32 %v478, 8
    %480 = vset.pattern.permute.xlu0 %v479
    %481 = vperm.xlu0 %480, %v470
    %v482 = vpop.permute.xlu0 %481
    %v483 = vperm.slane %v118, 4
    %v484 = vlaneseq
    %v485 = vshrl.u32 %v484, 7
    %487 = vset.pattern.permute.xlu0 %v485
    %488 = vperm.xlu0 %487, %v483
    %v489 = vpop.permute.xlu0 %488
    %v490 = vlaneseq
    %v491 = vshrl.u32 %v490, 7
    %v492 = vadd.s32 %v491, 8
    %493 = vset.pattern.permute.xlu0 %v492
    %494 = vperm.xlu0 %493, %v483
    %v495 = vpop.permute.xlu0 %494
    %v496 = vperm.slane %v118, 5
    %v497 = vlaneseq
    %v498 = vshrl.u32 %v497, 7
    %500 = vset.pattern.permute.xlu0 %v498
    %501 = vperm.xlu0 %500, %v496
    %v502 = vpop.permute.xlu0 %501
    %v503 = vlaneseq
    %v504 = vshrl.u32 %v503, 7
    %v505 = vadd.s32 %v504, 8
    %506 = vset.pattern.permute.xlu0 %v505
    %507 = vperm.xlu0 %506, %v496
    %v508 = vpop.permute.xlu0 %507
    %v509 = vperm.slane %v118, 6
    %v510 = vlaneseq
    %v511 = vshrl.u32 %v510, 7
    %513 = vset.pattern.permute.xlu0 %v511
    %514 = vperm.xlu0 %513, %v509
    %v515 = vpop.permute.xlu0 %514
    %v516 = vlaneseq
    %v517 = vshrl.u32 %v516, 7
    %v518 = vadd.s32 %v517, 8
    %519 = vset.pattern.permute.xlu0 %v518
    %520 = vperm.xlu0 %519, %v509
    %v521 = vpop.permute.xlu0 %520
    %v522 = vperm.slane %v118, 7
    %v523 = vlaneseq
    %v524 = vshrl.u32 %v523, 7
    %526 = vset.pattern.permute.xlu0 %v524
    %527 = vperm.xlu0 %526, %v522
    %v528 = vpop.permute.xlu0 %527
    %v529 = vlaneseq
    %v530 = vshrl.u32 %v529, 7
    %v531 = vadd.s32 %v530, 8
    %532 = vset.pattern.permute.xlu0 %v531
    %533 = vperm.xlu0 %532, %v522
    %v534 = vpop.permute.xlu0 %533
    %v535 = vld [vmem:[#allocation2] sm:$0xff]
    %v536 = vld [vmem:[#allocation2 + $0x8] sm:$0xff]
    %v537 = vld [vmem:[#allocation2 + $0x10] sm:$0xff]
    %v538 = vld [vmem:[#allocation2 + $0x18] sm:$0xff]
    %v539 = vperm.slane %v535, 0
    %v540 = vlaneseq
    %v541 = vshrl.u32 %v540, 7
    %543 = vset.pattern.permute.xlu0 %v541
    %544 = vperm.xlu0 %543, %v539
    %v545 = vpop.permute.xlu0 %544
    %v546 = vlaneseq
    %v547 = vshrl.u32 %v546, 7
    %v548 = vadd.s32 %v547, 8
    %549 = vset.pattern.permute.xlu0 %v548
    %550 = vperm.xlu0 %549, %v539
    %v551 = vpop.permute.xlu0 %550
    %v552 = vperm.slane %v535, 1
    %v553 = vlaneseq
    %v554 = vshrl.u32 %v553, 7
    %556 = vset.pattern.permute.xlu0 %v554
    %557 = vperm.xlu0 %556, %v552
    %v558 = vpop.permute.xlu0 %557
    %v559 = vlaneseq
    %v560 = vshrl.u32 %v559, 7
    %v561 = vadd.s32 %v560, 8
    %562 = vset.pattern.permute.xlu0 %v561
    %563 = vperm.xlu0 %562, %v552
    %v564 = vpop.permute.xlu0 %563
    %v565 = vperm.slane %v535, 2
    %v566 = vlaneseq
    %v567 = vshrl.u32 %v566, 7
    %569 = vset.pattern.permute.xlu0 %v567
    %570 = vperm.xlu0 %569, %v565
    %v571 = vpop.permute.xlu0 %570
    %v572 = vlaneseq
    %v573 = vshrl.u32 %v572, 7
    %v574 = vadd.s32 %v573, 8
    %575 = vset.pattern.permute.xlu0 %v574
    %576 = vperm.xlu0 %575, %v565
    %v577 = vpop.permute.xlu0 %576
    %v578 = vperm.slane %v535, 3
    %v579 = vlaneseq
    %v580 = vshrl.u32 %v579, 7
    %582 = vset.pattern.permute.xlu0 %v580
    %583 = vperm.xlu0 %582, %v578
    %v584 = vpop.permute.xlu0 %583
    %v585 = vlaneseq
    %v586 = vshrl.u32 %v585, 7
    %v587 = vadd.s32 %v586, 8
    %588 = vset.pattern.permute.xlu0 %v587
    %589 = vperm.xlu0 %588, %v578
    %v590 = vpop.permute.xlu0 %589
    %v591 = vperm.slane %v535, 4
    %v592 = vlaneseq
    %v593 = vshrl.u32 %v592, 7
    %595 = vset.pattern.permute.xlu0 %v593
    %596 = vperm.xlu0 %595, %v591
    %v597 = vpop.permute.xlu0 %596
    %v598 = vlaneseq
    %v599 = vshrl.u32 %v598, 7
    %v600 = vadd.s32 %v599, 8
    %601 = vset.pattern.permute.xlu0 %v600
    %602 = vperm.xlu0 %601, %v591
    %v603 = vpop.permute.xlu0 %602
    %v604 = vperm.slane %v535, 5
    %v605 = vlaneseq
    %v606 = vshrl.u32 %v605, 7
    %608 = vset.pattern.permute.xlu0 %v606
    %609 = vperm.xlu0 %608, %v604
    %v610 = vpop.permute.xlu0 %609
    %v611 = vlaneseq
    %v612 = vshrl.u32 %v611, 7
    %v613 = vadd.s32 %v612, 8
    %614 = vset.pattern.permute.xlu0 %v613
    %615 = vperm.xlu0 %614, %v604
    %v616 = vpop.permute.xlu0 %615
    %v617 = vperm.slane %v535, 6
    %v618 = vlaneseq
    %v619 = vshrl.u32 %v618, 7
    %621 = vset.pattern.permute.xlu0 %v619
    %622 = vperm.xlu0 %621, %v617
    %v623 = vpop.permute.xlu0 %622
    %v624 = vlaneseq
    %v625 = vshrl.u32 %v624, 7
    %v626 = vadd.s32 %v625, 8
    %627 = vset.pattern.permute.xlu0 %v626
    %628 = vperm.xlu0 %627, %v617
    %v629 = vpop.permute.xlu0 %628
    %v630 = vperm.slane %v535, 7
    %v631 = vlaneseq
    %v632 = vshrl.u32 %v631, 7
    %634 = vset.pattern.permute.xlu0 %v632
    %635 = vperm.xlu0 %634, %v630
    %v636 = vpop.permute.xlu0 %635
    %v637 = vlaneseq
    %v638 = vshrl.u32 %v637, 7
    %v639 = vadd.s32 %v638, 8
    %640 = vset.pattern.permute.xlu0 %v639
    %641 = vperm.xlu0 %640, %v630
    %v642 = vpop.permute.xlu0 %641
    %v643 = vperm.slane %v536, 0
    %v644 = vlaneseq
    %v645 = vshrl.u32 %v644, 7
    %647 = vset.pattern.permute.xlu0 %v645
    %648 = vperm.xlu0 %647, %v643
    %v649 = vpop.permute.xlu0 %648
    %v650 = vlaneseq
    %v651 = vshrl.u32 %v650, 7
    %v652 = vadd.s32 %v651, 8
    %653 = vset.pattern.permute.xlu0 %v652
    %654 = vperm.xlu0 %653, %v643
    %v655 = vpop.permute.xlu0 %654
    %v656 = vperm.slane %v536, 1
    %v657 = vlaneseq
    %v658 = vshrl.u32 %v657, 7
    %660 = vset.pattern.permute.xlu0 %v658
    %661 = vperm.xlu0 %660, %v656
    %v662 = vpop.permute.xlu0 %661
    %v663 = vlaneseq
    %v664 = vshrl.u32 %v663, 7
    %v665 = vadd.s32 %v664, 8
    %666 = vset.pattern.permute.xlu0 %v665
    %667 = vperm.xlu0 %666, %v656
    %v668 = vpop.permute.xlu0 %667
    %v669 = vperm.slane %v536, 2
    %v670 = vlaneseq
    %v671 = vshrl.u32 %v670, 7
    %673 = vset.pattern.permute.xlu0 %v671
    %674 = vperm.xlu0 %673, %v669
    %v675 = vpop.permute.xlu0 %674
    %v676 = vlaneseq
    %v677 = vshrl.u32 %v676, 7
    %v678 = vadd.s32 %v677, 8
    %679 = vset.pattern.permute.xlu0 %v678
    %680 = vperm.xlu0 %679, %v669
    %v681 = vpop.permute.xlu0 %680
    %v682 = vperm.slane %v536, 3
    %v683 = vlaneseq
    %v684 = vshrl.u32 %v683, 7
    %686 = vset.pattern.permute.xlu0 %v684
    %687 = vperm.xlu0 %686, %v682
    %v688 = vpop.permute.xlu0 %687
    %v689 = vlaneseq
    %v690 = vshrl.u32 %v689, 7
    %v691 = vadd.s32 %v690, 8
    %692 = vset.pattern.permute.xlu0 %v691
    %693 = vperm.xlu0 %692, %v682
    %v694 = vpop.permute.xlu0 %693
    %v695 = vperm.slane %v536, 4
    %v696 = vlaneseq
    %v697 = vshrl.u32 %v696, 7
    %699 = vset.pattern.permute.xlu0 %v697
    %700 = vperm.xlu0 %699, %v695
    %v701 = vpop.permute.xlu0 %700
    %v702 = vlaneseq
    %v703 = vshrl.u32 %v702, 7
    %v704 = vadd.s32 %v703, 8
    %705 = vset.pattern.permute.xlu0 %v704
    %706 = vperm.xlu0 %705, %v695
    %v707 = vpop.permute.xlu0 %706
    %v708 = vperm.slane %v536, 5
    %v709 = vlaneseq
    %v710 = vshrl.u32 %v709, 7
    %712 = vset.pattern.permute.xlu0 %v710
    %713 = vperm.xlu0 %712, %v708
    %v714 = vpop.permute.xlu0 %713
    %v715 = vlaneseq
    %v716 = vshrl.u32 %v715, 7
    %v717 = vadd.s32 %v716, 8
    %718 = vset.pattern.permute.xlu0 %v717
    %719 = vperm.xlu0 %718, %v708
    %v720 = vpop.permute.xlu0 %719
    %v721 = vperm.slane %v536, 6
    %v722 = vlaneseq
    %v723 = vshrl.u32 %v722, 7
    %725 = vset.pattern.permute.xlu0 %v723
    %726 = vperm.xlu0 %725, %v721
    %v727 = vpop.permute.xlu0 %726
    %v728 = vlaneseq
    %v729 = vshrl.u32 %v728, 7
    %v730 = vadd.s32 %v729, 8
    %731 = vset.pattern.permute.xlu0 %v730
    %732 = vperm.xlu0 %731, %v721
    %v733 = vpop.permute.xlu0 %732
    %v734 = vperm.slane %v536, 7
    %v735 = vlaneseq
    %v736 = vshrl.u32 %v735, 7
    %738 = vset.pattern.permute.xlu0 %v736
    %739 = vperm.xlu0 %738, %v734
    %v740 = vpop.permute.xlu0 %739
    %v741 = vlaneseq
    %v742 = vshrl.u32 %v741, 7
    %v743 = vadd.s32 %v742, 8
    %744 = vset.pattern.permute.xlu0 %v743
    %745 = vperm.xlu0 %744, %v734
    %v746 = vpop.permute.xlu0 %745
    %v747 = vperm.slane %v537, 0
    %v748 = vlaneseq
    %v749 = vshrl.u32 %v748, 7
    %751 = vset.pattern.permute.xlu0 %v749
    %752 = vperm.xlu0 %751, %v747
    %v753 = vpop.permute.xlu0 %752
    %v754 = vlaneseq
    %v755 = vshrl.u32 %v754, 7
    %v756 = vadd.s32 %v755, 8
    %757 = vset.pattern.permute.xlu0 %v756
    %758 = vperm.xlu0 %757, %v747
    %v759 = vpop.permute.xlu0 %758
    %v760 = vperm.slane %v537, 1
    %v761 = vlaneseq
    %v762 = vshrl.u32 %v761, 7
    %764 = vset.pattern.permute.xlu0 %v762
    %765 = vperm.xlu0 %764, %v760
    %v766 = vpop.permute.xlu0 %765
    %v767 = vlaneseq
    %v768 = vshrl.u32 %v767, 7
    %v769 = vadd.s32 %v768, 8
    %770 = vset.pattern.permute.xlu0 %v769
    %771 = vperm.xlu0 %770, %v760
    %v772 = vpop.permute.xlu0 %771
    %v773 = vperm.slane %v537, 2
    %v774 = vlaneseq
    %v775 = vshrl.u32 %v774, 7
    %777 = vset.pattern.permute.xlu0 %v775
    %778 = vperm.xlu0 %777, %v773
    %v779 = vpop.permute.xlu0 %778
    %v780 = vlaneseq
    %v781 = vshrl.u32 %v780, 7
    %v782 = vadd.s32 %v781, 8
    %783 = vset.pattern.permute.xlu0 %v782
    %784 = vperm.xlu0 %783, %v773
    %v785 = vpop.permute.xlu0 %784
    %v786 = vperm.slane %v537, 3
    %v787 = vlaneseq
    %v788 = vshrl.u32 %v787, 7
    %790 = vset.pattern.permute.xlu0 %v788
    %791 = vperm.xlu0 %790, %v786
    %v792 = vpop.permute.xlu0 %791
    %v793 = vlaneseq
    %v794 = vshrl.u32 %v793, 7
    %v795 = vadd.s32 %v794, 8
    %796 = vset.pattern.permute.xlu0 %v795
    %797 = vperm.xlu0 %796, %v786
    %v798 = vpop.permute.xlu0 %797
    %v799 = vperm.slane %v537, 4
    %v800 = vlaneseq
    %v801 = vshrl.u32 %v800, 7
    %803 = vset.pattern.permute.xlu0 %v801
    %804 = vperm.xlu0 %803, %v799
    %v805 = vpop.permute.xlu0 %804
    %v806 = vlaneseq
    %v807 = vshrl.u32 %v806, 7
    %v808 = vadd.s32 %v807, 8
    %809 = vset.pattern.permute.xlu0 %v808
    %810 = vperm.xlu0 %809, %v799
    %v811 = vpop.permute.xlu0 %810
    %v812 = vperm.slane %v537, 5
    %v813 = vlaneseq
    %v814 = vshrl.u32 %v813, 7
    %816 = vset.pattern.permute.xlu0 %v814
    %817 = vperm.xlu0 %816, %v812
    %v818 = vpop.permute.xlu0 %817
    %v819 = vlaneseq
    %v820 = vshrl.u32 %v819, 7
    %v821 = vadd.s32 %v820, 8
    %822 = vset.pattern.permute.xlu0 %v821
    %823 = vperm.xlu0 %822, %v812
    %v824 = vpop.permute.xlu0 %823
    %v825 = vperm.slane %v537, 6
    %v826 = vlaneseq
    %v827 = vshrl.u32 %v826, 7
    %829 = vset.pattern.permute.xlu0 %v827
    %830 = vperm.xlu0 %829, %v825
    %v831 = vpop.permute.xlu0 %830
    %v832 = vlaneseq
    %v833 = vshrl.u32 %v832, 7
    %v834 = vadd.s32 %v833, 8
    %835 = vset.pattern.permute.xlu0 %v834
    %836 = vperm.xlu0 %835, %v825
    %v837 = vpop.permute.xlu0 %836
    %v838 = vperm.slane %v537, 7
    %v839 = vlaneseq
    %v840 = vshrl.u32 %v839, 7
    %842 = vset.pattern.permute.xlu0 %v840
    %843 = vperm.xlu0 %842, %v838
    %v844 = vpop.permute.xlu0 %843
    %v845 = vlaneseq
    %v846 = vshrl.u32 %v845, 7
    %v847 = vadd.s32 %v846, 8
    %848 = vset.pattern.permute.xlu0 %v847
    %849 = vperm.xlu0 %848, %v838
    %v850 = vpop.permute.xlu0 %849
    %v851 = vperm.slane %v538, 0
    %v852 = vlaneseq
    %v853 = vshrl.u32 %v852, 7
    %855 = vset.pattern.permute.xlu0 %v853
    %856 = vperm.xlu0 %855, %v851
    %v857 = vpop.permute.xlu0 %856
    %v858 = vlaneseq
    %v859 = vshrl.u32 %v858, 7
    %v860 = vadd.s32 %v859, 8
    %861 = vset.pattern.permute.xlu0 %v860
    %862 = vperm.xlu0 %861, %v851
    %v863 = vpop.permute.xlu0 %862
    %v864 = vperm.slane %v538, 1
    %v865 = vlaneseq
    %v866 = vshrl.u32 %v865, 7
    %868 = vset.pattern.permute.xlu0 %v866
    %869 = vperm.xlu0 %868, %v864
    %v870 = vpop.permute.xlu0 %869
    %v871 = vlaneseq
    %v872 = vshrl.u32 %v871, 7
    %v873 = vadd.s32 %v872, 8
    %874 = vset.pattern.permute.xlu0 %v873
    %875 = vperm.xlu0 %874, %v864
    %v876 = vpop.permute.xlu0 %875
    %v877 = vperm.slane %v538, 2
    %v878 = vlaneseq
    %v879 = vshrl.u32 %v878, 7
    %881 = vset.pattern.permute.xlu0 %v879
    %882 = vperm.xlu0 %881, %v877
    %v883 = vpop.permute.xlu0 %882
    %v884 = vlaneseq
    %v885 = vshrl.u32 %v884, 7
    %v886 = vadd.s32 %v885, 8
    %887 = vset.pattern.permute.xlu0 %v886
    %888 = vperm.xlu0 %887, %v877
    %v889 = vpop.permute.xlu0 %888
    %v890 = vperm.slane %v538, 3
    %v891 = vlaneseq
    %v892 = vshrl.u32 %v891, 7
    %894 = vset.pattern.permute.xlu0 %v892
    %895 = vperm.xlu0 %894, %v890
    %v896 = vpop.permute.xlu0 %895
    %v897 = vlaneseq
    %v898 = vshrl.u32 %v897, 7
    %v899 = vadd.s32 %v898, 8
    %900 = vset.pattern.permute.xlu0 %v899
    %901 = vperm.xlu0 %900, %v890
    %v902 = vpop.permute.xlu0 %901
    %v903 = vperm.slane %v538, 4
    %v904 = vlaneseq
    %v905 = vshrl.u32 %v904, 7
    %907 = vset.pattern.permute.xlu0 %v905
    %908 = vperm.xlu0 %907, %v903
    %v909 = vpop.permute.xlu0 %908
    %v910 = vlaneseq
    %v911 = vshrl.u32 %v910, 7
    %v912 = vadd.s32 %v911, 8
    %913 = vset.pattern.permute.xlu0 %v912
    %914 = vperm.xlu0 %913, %v903
    %v915 = vpop.permute.xlu0 %914
    %v916 = vperm.slane %v538, 5
    %v917 = vlaneseq
    %v918 = vshrl.u32 %v917, 7
    %920 = vset.pattern.permute.xlu0 %v918
    %921 = vperm.xlu0 %920, %v916
    %v922 = vpop.permute.xlu0 %921
    %v923 = vlaneseq
    %v924 = vshrl.u32 %v923, 7
    %v925 = vadd.s32 %v924, 8
    %926 = vset.pattern.permute.xlu0 %v925
    %927 = vperm.xlu0 %926, %v916
    %v928 = vpop.permute.xlu0 %927
    %v929 = vperm.slane %v538, 6
    %v930 = vlaneseq
    %v931 = vshrl.u32 %v930, 7
    %933 = vset.pattern.permute.xlu0 %v931
    %934 = vperm.xlu0 %933, %v929
    %v935 = vpop.permute.xlu0 %934
    %v936 = vlaneseq
    %v937 = vshrl.u32 %v936, 7
    %v938 = vadd.s32 %v937, 8
    %939 = vset.pattern.permute.xlu0 %v938
    %940 = vperm.xlu0 %939, %v929
    %v941 = vpop.permute.xlu0 %940
    %v942 = vperm.slane %v538, 7
    %v943 = vlaneseq
    %v944 = vshrl.u32 %v943, 7
    %946 = vset.pattern.permute.xlu0 %v944
    %947 = vperm.xlu0 %946, %v942
    %v948 = vpop.permute.xlu0 %947
    %v949 = vlaneseq
    %v950 = vshrl.u32 %v949, 7
    %v951 = vadd.s32 %v950, 8
    %952 = vset.pattern.permute.xlu0 %v951
    %953 = vperm.xlu0 %952, %v942
    %v954 = vpop.permute.xlu0 %953
    %v955 = vld [vmem:[%s0] sm:$0xff]
    %v956 = vld [vmem:[%s0 + $0x8] sm:$0xff]
    %v957 = vld [vmem:[%s0 + $0x10] sm:$0xff]
    %v958 = vld [vmem:[%s0 + $0x18] sm:$0xff]
    %v959 = vld [vmem:[#allocation4] sm:$0x1]
    %961 = vset.pattern.permute.xlu0 0
    %962 = vperm.xlu0 %961, %v955
    %v963 = vpop.permute.xlu0 %962
    %966 = vset.pattern.permute.xlu0 0
    %967 = vperm.xlu0 %966, %v956
    %v968 = vpop.permute.xlu0 %967
    %971 = vset.pattern.permute.xlu0 0
    %972 = vperm.xlu0 %971, %v957
    %v973 = vpop.permute.xlu0 %972
    %976 = vset.pattern.permute.xlu0 0
    %977 = vperm.xlu0 %976, %v958
    %v978 = vpop.permute.xlu0 %977
    %v980 = vperm.slane %v959, 0
    %v981 = vmul.f32 %v963, %v980
    %v982 = vmul.f32 %v968, %v980
    %v983 = vmul.f32 %v973, %v980
    %v984 = vmul.f32 %v978, %v980
    %v985 = vld [vmem:[#allocation4 + $0x1] sm:$0x1]
    %986 = vset.pattern.permute.xlu0 1
    %987 = vperm.xlu0 %986, %v955
    %v988 = vpop.permute.xlu0 %987
    %990 = vset.pattern.permute.xlu0 1
    %991 = vperm.xlu0 %990, %v956
    %v992 = vpop.permute.xlu0 %991
    %994 = vset.pattern.permute.xlu0 1
    %995 = vperm.xlu0 %994, %v957
    %v996 = vpop.permute.xlu0 %995
    %998 = vset.pattern.permute.xlu0 1
    %999 = vperm.xlu0 %998, %v958
    %v1000 = vpop.permute.xlu0 %999
    %v1002 = vperm.slane %v985, 0
    %v1003 = vmul.f32 %v988, %v1002
    %v1004 = vmul.f32 %v992, %v1002
    %v1005 = vmul.f32 %v996, %v1002
    %v1006 = vmul.f32 %v1000, %v1002
    %v1007 = vadd.f32 %v981, %v1003
    %v1008 = vadd.f32 %v982, %v1004
    %v1009 = vadd.f32 %v983, %v1005
    %v1010 = vadd.f32 %v984, %v1006
    %v1011 = vld [vmem:[#allocation4 + $0x2] sm:$0x1]
    %v1012 = vperm.slane %v1011, 0
    %v1013 = vadd.f32 %v1007, %v1012
    %v1014 = vadd.f32 %v1008, %v1012
    %v1015 = vadd.f32 %v1009, %v1012
    %v1016 = vadd.f32 %v1010, %v1012
    %v1017 = vmax.f32 %v1013, 0.0
    %v1018 = vmax.f32 %v1014, 0.0
    %v1019 = vmax.f32 %v1015, 0.0
    %v1020 = vmax.f32 %v1016, 0.0
    %v1021 = vld [vmem:[#allocation6] sm:$0xff]
    %v1022 = vld [vmem:[#allocation6 + $0x8] sm:$0xff]
    %v1023 = vld [vmem:[#allocation6 + $0x10] sm:$0xff]
    %v1024 = vld [vmem:[#allocation6 + $0x18] sm:$0xff]
    %v1025 = vld [vmem:[#allocation6 + $0x20] sm:$0xff]
    %v1026 = vld [vmem:[#allocation6 + $0x28] sm:$0xff]
    %v1027 = vld [vmem:[#allocation6 + $0x30] sm:$0xff]
    %v1028 = vld [vmem:[#allocation6 + $0x38] sm:$0xff]
    %v1029 = vld [vmem:[#allocation6 + $0x40] sm:$0xff]
    %v1030 = vld [vmem:[#allocation6 + $0x48] sm:$0xff]
    %v1031 = vld [vmem:[#allocation6 + $0x50] sm:$0xff]
    %v1032 = vld [vmem:[#allocation6 + $0x58] sm:$0xff]
    %v1033 = vld [vmem:[#allocation6 + $0x60] sm:$0xff]
    %v1034 = vld [vmem:[#allocation6 + $0x68] sm:$0xff]
    %v1035 = vld [vmem:[#allocation6 + $0x70] sm:$0xff]
    %v1036 = vld [vmem:[#allocation6 + $0x78] sm:$0xff]
    %v1037 = vld [vmem:[#allocation6 + $0x80] sm:$0xff]
    %v1038 = vld [vmem:[#allocation6 + $0x88] sm:$0xff]
    %v1039 = vld [vmem:[#allocation6 + $0x90] sm:$0xff]
    %v1040 = vld [vmem:[#allocation6 + $0x98] sm:$0xff]
    %v1041 = vld [vmem:[#allocation6 + $0xa0] sm:$0xff]
    %v1042 = vld [vmem:[#allocation6 + $0xa8] sm:$0xff]
    %v1043 = vld [vmem:[#allocation6 + $0xb0] sm:$0xff]
    %v1044 = vld [vmem:[#allocation6 + $0xb8] sm:$0xff]
    %v1045 = vld [vmem:[#allocation6 + $0xc0] sm:$0xff]
    %v1046 = vld [vmem:[#allocation6 + $0xc8] sm:$0xff]
    %v1047 = vld [vmem:[#allocation6 + $0xd0] sm:$0xff]
    %v1048 = vld [vmem:[#allocation6 + $0xd8] sm:$0xff]
    %v1049 = vld [vmem:[#allocation6 + $0xe0] sm:$0xff]
    %v1050 = vld [vmem:[#allocation6 + $0xe8] sm:$0xff]
    %v1051 = vld [vmem:[#allocation6 + $0xf0] sm:$0xff]
    %v1052 = vld [vmem:[#allocation6 + $0xf8] sm:$0xff]
    %1053 = vmatpush.msra.mxu0 %v1051
    %1054 = vmatpush.msra.mxu0 %v1049
    %1055 = vmatpush.msra.mxu0 %v1047
    %1056 = vmatpush.msra.mxu0 %v1045
    %1057 = vmatpush.msra.mxu0 %v1043
    %1058 = vmatpush.msra.mxu0 %v1041
    %1059 = vmatpush.msra.mxu0 %v1039
    %1060 = vmatpush.msra.mxu0 %v1037
    %1061 = vmatpush.msra.mxu0 %v1035
    %1062 = vmatpush.msra.mxu0 %v1033
    %1063 = vmatpush.msra.mxu0 %v1031
    %1064 = vmatpush.msra.mxu0 %v1029
    %1065 = vmatpush.msra.mxu0 %v1027
    %1066 = vmatpush.msra.mxu0 %v1025
    %1067 = vmatpush.msra.mxu0 %v1023
    %1068 = vmatpush.msra.mxu0 %v1021
    %1069 = vmatmul.f32.gmra.mxu0 %v1017
    %v1070 = vpop.f32.mrf.mxu0
    %v1071 = vadd.f32 0.0, %v1070
    %1072 = vmatmul.f32.gmra.mxu0 %v1018
    %v1073 = vpop.f32.mrf.mxu0
    %v1074 = vadd.f32 0.0, %v1073
    %1075 = vmatmul.f32.gmra.mxu0 %v1019
    %v1076 = vpop.f32.mrf.mxu0
    %v1077 = vadd.f32 0.0, %v1076
    %1078 = vmatmul.f32.gmra.mxu0 %v1020
    %v1079 = vpop.f32.mrf.mxu0
    %v1080 = vadd.f32 0.0, %v1079
    %1081 = vdwg.mxu0
    %1082 = vmatpush.msra.mxu0 %v1052
    %1083 = vmatpush.msra.mxu0 %v1050
    %1084 = vmatpush.msra.mxu0 %v1048
    %1085 = vmatpush.msra.mxu0 %v1046
    %1086 = vmatpush.msra.mxu0 %v1044
    %1087 = vmatpush.msra.mxu0 %v1042
    %1088 = vmatpush.msra.mxu0 %v1040
    %1089 = vmatpush.msra.mxu0 %v1038
    %1090 = vmatpush.msra.mxu0 %v1036
    %1091 = vmatpush.msra.mxu0 %v1034
    %1092 = vmatpush.msra.mxu0 %v1032
    %1093 = vmatpush.msra.mxu0 %v1030
    %1094 = vmatpush.msra.mxu0 %v1028
    %1095 = vmatpush.msra.mxu0 %v1026
    %1096 = vmatpush.msra.mxu0 %v1024
    %1097 = vmatpush.msra.mxu0 %v1022
    %1098 = vmatmul.f32.gmra.mxu0 %v1017
    %v1099 = vpop.f32.mrf.mxu0
    %v1100 = vadd.f32 0.0, %v1099
    %1101 = vmatmul.f32.gmra.mxu0 %v1018
    %v1102 = vpop.f32.mrf.mxu0
    %v1103 = vadd.f32 0.0, %v1102
    %1104 = vmatmul.f32.gmra.mxu0 %v1019
    %v1105 = vpop.f32.mrf.mxu0
    %v1106 = vadd.f32 0.0, %v1105
    %1107 = vmatmul.f32.gmra.mxu0 %v1020
    %v1108 = vpop.f32.mrf.mxu0
    %v1109 = vadd.f32 0.0, %v1108
    %1110 = vdwg.mxu0
    %v1111 = vld [vmem:[#allocation4 + $0x3] sm:$0x1]
    %v1112 = vperm.slane %v1111, 0
    %v1113 = vadd.f32 %v1071, %v1112
    %v1114 = vadd.f32 %v1074, %v1112
    %v1115 = vadd.f32 %v1077, %v1112
    %v1116 = vadd.f32 %v1080, %v1112
    %v1117 = vld [vmem:[#allocation4 + $0x4] sm:$0x1]
    %v1118 = vperm.slane %v1117, 0
    %v1119 = vadd.f32 %v1100, %v1118
    %v1120 = vadd.f32 %v1103, %v1118
    %v1121 = vadd.f32 %v1106, %v1118
    %v1122 = vadd.f32 %v1109, %v1118
    %v1127 = vrot.slane %v1119, 1
    %v1128 = vrot.slane %v1119, 2
    %v1129 = vrot.slane %v1119, 3
    %v1130 = vrot.slane %v1119, 4
    %v1131 = vrot.slane %v1119, 5
    %v1132 = vrot.slane %v1119, 6
    %v1133 = vrot.slane %v1119, 7
    %v1134 = vrot.slane %v1120, 1
    %v1135 = vrot.slane %v1120, 2
    %v1136 = vrot.slane %v1120, 3
    %v1137 = vrot.slane %v1120, 4
    %v1138 = vrot.slane %v1120, 5
    %v1139 = vrot.slane %v1120, 6
    %v1140 = vrot.slane %v1120, 7
    %v1141 = vrot.slane %v1121, 1
    %v1142 = vrot.slane %v1121, 2
    %v1143 = vrot.slane %v1121, 3
    %v1144 = vrot.slane %v1121, 4
    %v1145 = vrot.slane %v1121, 5
    %v1146 = vrot.slane %v1121, 6
    %v1147 = vrot.slane %v1121, 7
    %v1148 = vrot.slane %v1122, 1
    %v1149 = vrot.slane %v1122, 2
    %v1150 = vrot.slane %v1122, 3
    %v1151 = vrot.slane %v1122, 4
    %v1152 = vrot.slane %v1122, 5
    %v1153 = vrot.slane %v1122, 6
    %v1154 = vrot.slane %v1122, 7
    %v1155 = vperm.slane %v1119, 0
    %v1156 = vperm.slane %v1127, 0
    %v1157 = vperm.slane %v1128, 0
    %v1158 = vperm.slane %v1129, 0
    %v1159 = vperm.slane %v1130, 0
    %v1160 = vperm.slane %v1131, 0
    %v1161 = vperm.slane %v1132, 0
    %v1162 = vperm.slane %v1133, 0
    %v1163 = vperm.slane %v1120, 0
    %v1164 = vperm.slane %v1134, 0
    %v1165 = vperm.slane %v1135, 0
    %v1166 = vperm.slane %v1136, 0
    %v1167 = vperm.slane %v1137, 0
    %v1168 = vperm.slane %v1138, 0
    %v1169 = vperm.slane %v1139, 0
    %v1170 = vperm.slane %v1140, 0
    %v1171 = vperm.slane %v1121, 0
    %v1172 = vperm.slane %v1141, 0
    %v1173 = vperm.slane %v1142, 0
    %v1174 = vperm.slane %v1143, 0
    %v1175 = vperm.slane %v1144, 0
    %v1176 = vperm.slane %v1145, 0
    %v1177 = vperm.slane %v1146, 0
    %v1178 = vperm.slane %v1147, 0
    %v1179 = vperm.slane %v1122, 0
    %v1180 = vperm.slane %v1148, 0
    %v1181 = vperm.slane %v1149, 0
    %v1182 = vperm.slane %v1150, 0
    %v1183 = vperm.slane %v1151, 0
    %v1184 = vperm.slane %v1152, 0
    %v1185 = vperm.slane %v1153, 0
    %v1186 = vperm.slane %v1154, 0
    %v1219 = vadd.f32 %v1155, %v1113
    %v1220 = vadd.f32 %v1155, %v1114
    %v1221 = vadd.f32 %v1156, %v1113
    %v1222 = vadd.f32 %v1156, %v1114
    %v1223 = vadd.f32 %v1157, %v1113
    %v1224 = vadd.f32 %v1157, %v1114
    %v1225 = vadd.f32 %v1158, %v1113
    %v1226 = vadd.f32 %v1158, %v1114
    %v1227 = vadd.f32 %v1159, %v1113
    %v1228 = vadd.f32 %v1159, %v1114
    %v1229 = vadd.f32 %v1160, %v1113
    %v1230 = vadd.f32 %v1160, %v1114
    %v1231 = vadd.f32 %v1161, %v1113
    %v1232 = vadd.f32 %v1161, %v1114
    %v1233 = vadd.f32 %v1162, %v1113
    %v1234 = vadd.f32 %v1162, %v1114
    %v1235 = vadd.f32 %v1163, %v1113
    %v1236 = vadd.f32 %v1163, %v1114
    %v1237 = vadd.f32 %v1164, %v1113
    %v1238 = vadd.f32 %v1164, %v1114
    %v1239 = vadd.f32 %v1165, %v1113
    %v1240 = vadd.f32 %v1165, %v1114
    %v1241 = vadd.f32 %v1166, %v1113
    %v1242 = vadd.f32 %v1166, %v1114
    %v1243 = vadd.f32 %v1167, %v1113
    %v1244 = vadd.f32 %v1167, %v1114
    %v1245 = vadd.f32 %v1168, %v1113
    %v1246 = vadd.f32 %v1168, %v1114
    %v1247 = vadd.f32 %v1169, %v1113
    %v1248 = vadd.f32 %v1169, %v1114
    %v1249 = vadd.f32 %v1170, %v1113
    %v1250 = vadd.f32 %v1170, %v1114
    %v1251 = vadd.f32 %v1171, %v1115
    %v1252 = vadd.f32 %v1171, %v1116
    %v1253 = vadd.f32 %v1172, %v1115
    %v1254 = vadd.f32 %v1172, %v1116
    %v1255 = vadd.f32 %v1173, %v1115
    %v1256 = vadd.f32 %v1173, %v1116
    %v1257 = vadd.f32 %v1174, %v1115
    %v1258 = vadd.f32 %v1174, %v1116
    %v1259 = vadd.f32 %v1175, %v1115
    %v1260 = vadd.f32 %v1175, %v1116
    %v1261 = vadd.f32 %v1176, %v1115
    %v1262 = vadd.f32 %v1176, %v1116
    %v1263 = vadd.f32 %v1177, %v1115
    %v1264 = vadd.f32 %v1177, %v1116
    %v1265 = vadd.f32 %v1178, %v1115
    %v1266 = vadd.f32 %v1178, %v1116
    %v1267 = vadd.f32 %v1179, %v1115
    %v1268 = vadd.f32 %v1179, %v1116
    %v1269 = vadd.f32 %v1180, %v1115
    %v1270 = vadd.f32 %v1180, %v1116
    %v1271 = vadd.f32 %v1181, %v1115
    %v1272 = vadd.f32 %v1181, %v1116
    %v1273 = vadd.f32 %v1182, %v1115
    %v1274 = vadd.f32 %v1182, %v1116
    %v1275 = vadd.f32 %v1183, %v1115
    %v1276 = vadd.f32 %v1183, %v1116
    %v1277 = vadd.f32 %v1184, %v1115
    %v1278 = vadd.f32 %v1184, %v1116
    %v1279 = vadd.f32 %v1185, %v1115
    %v1280 = vadd.f32 %v1185, %v1116
    %v1281 = vadd.f32 %v1186, %v1115
    %v1282 = vadd.f32 %v1186, %v1116
    %v1283 = vld [vmem:[#allocation4 + $0x5] sm:$0x1]
    %v1284 = vperm.slane %v1283, 0
    %v1285 = vmul.f32 %v545, %v1284
    %v1286 = vmul.f32 %v551, %v1284
    %v1287 = vmul.f32 %v558, %v1284
    %v1288 = vmul.f32 %v564, %v1284
    %v1289 = vmul.f32 %v571, %v1284
    %v1290 = vmul.f32 %v577, %v1284
    %v1291 = vmul.f32 %v584, %v1284
    %v1292 = vmul.f32 %v590, %v1284
    %v1293 = vmul.f32 %v597, %v1284
    %v1294 = vmul.f32 %v603, %v1284
    %v1295 = vmul.f32 %v610, %v1284
    %v1296 = vmul.f32 %v616, %v1284
    %v1297 = vmul.f32 %v623, %v1284
    %v1298 = vmul.f32 %v629, %v1284
    %v1299 = vmul.f32 %v636, %v1284
    %v1300 = vmul.f32 %v642, %v1284
    %v1301 = vmul.f32 %v649, %v1284
    %v1302 = vmul.f32 %v655, %v1284
    %v1303 = vmul.f32 %v662, %v1284
    %v1304 = vmul.f32 %v668, %v1284
    %v1305 = vmul.f32 %v675, %v1284
    %v1306 = vmul.f32 %v681, %v1284
    %v1307 = vmul.f32 %v688, %v1284
    %v1308 = vmul.f32 %v694, %v1284
    %v1309 = vmul.f32 %v701, %v1284
    %v1310 = vmul.f32 %v707, %v1284
    %v1311 = vmul.f32 %v714, %v1284
    %v1312 = vmul.f32 %v720, %v1284
    %v1313 = vmul.f32 %v727, %v1284
    %v1314 = vmul.f32 %v733, %v1284
    %v1315 = vmul.f32 %v740, %v1284
    %v1316 = vmul.f32 %v746, %v1284
    %v1317 = vmul.f32 %v753, %v1284
    %v1318 = vmul.f32 %v759, %v1284
    %v1319 = vmul.f32 %v766, %v1284
    %v1320 = vmul.f32 %v772, %v1284
    %v1321 = vmul.f32 %v779, %v1284
    %v1322 = vmul.f32 %v785, %v1284
    %v1323 = vmul.f32 %v792, %v1284
    %v1324 = vmul.f32 %v798, %v1284
    %v1325 = vmul.f32 %v805, %v1284
    %v1326 = vmul.f32 %v811, %v1284
    %v1327 = vmul.f32 %v818, %v1284
    %v1328 = vmul.f32 %v824, %v1284
    %v1329 = vmul.f32 %v831, %v1284
    %v1330 = vmul.f32 %v837, %v1284
    %v1331 = vmul.f32 %v844, %v1284
    %v1332 = vmul.f32 %v850, %v1284
    %v1333 = vmul.f32 %v857, %v1284
    %v1334 = vmul.f32 %v863, %v1284
    %v1335 = vmul.f32 %v870, %v1284
    %v1336 = vmul.f32 %v876, %v1284
    %v1337 = vmul.f32 %v883, %v1284
    %v1338 = vmul.f32 %v889, %v1284
    %v1339 = vmul.f32 %v896, %v1284
    %v1340 = vmul.f32 %v902, %v1284
    %v1341 = vmul.f32 %v909, %v1284
    %v1342 = vmul.f32 %v915, %v1284
    %v1343 = vmul.f32 %v922, %v1284
    %v1344 = vmul.f32 %v928, %v1284
    %v1345 = vmul.f32 %v935, %v1284
    %v1346 = vmul.f32 %v941, %v1284
    %v1347 = vmul.f32 %v948, %v1284
    %v1348 = vmul.f32 %v954, %v1284
    %v1349 = vadd.f32 %v1219, %v1285
    %v1350 = vadd.f32 %v1220, %v1286
    %v1351 = vadd.f32 %v1221, %v1287
    %v1352 = vadd.f32 %v1222, %v1288
    %v1353 = vadd.f32 %v1223, %v1289
    %v1354 = vadd.f32 %v1224, %v1290
    %v1355 = vadd.f32 %v1225, %v1291
    %v1356 = vadd.f32 %v1226, %v1292
    %v1357 = vadd.f32 %v1227, %v1293
    %v1358 = vadd.f32 %v1228, %v1294
    %v1359 = vadd.f32 %v1229, %v1295
    %v1360 = vadd.f32 %v1230, %v1296
    %v1361 = vadd.f32 %v1231, %v1297
    %v1362 = vadd.f32 %v1232, %v1298
    %v1363 = vadd.f32 %v1233, %v1299
    %v1364 = vadd.f32 %v1234, %v1300
    %v1365 = vadd.f32 %v1235, %v1301
    %v1366 = vadd.f32 %v1236, %v1302
    %v1367 = vadd.f32 %v1237, %v1303
    %v1368 = vadd.f32 %v1238, %v1304
    %v1369 = vadd.f32 %v1239, %v1305
    %v1370 = vadd.f32 %v1240, %v1306
    %v1371 = vadd.f32 %v1241, %v1307
    %v1372 = vadd.f32 %v1242, %v1308
    %v1373 = vadd.f32 %v1243, %v1309
    %v1374 = vadd.f32 %v1244, %v1310
    %v1375 = vadd.f32 %v1245, %v1311
    %v1376 = vadd.f32 %v1246, %v1312
    %v1377 = vadd.f32 %v1247, %v1313
    %v1378 = vadd.f32 %v1248, %v1314
    %v1379 = vadd.f32 %v1249, %v1315
    %v1380 = vadd.f32 %v1250, %v1316
    %v1381 = vadd.f32 %v1251, %v1317
    %v1382 = vadd.f32 %v1252, %v1318
    %v1383 = vadd.f32 %v1253, %v1319
    %v1384 = vadd.f32 %v1254, %v1320
    %v1385 = vadd.f32 %v1255, %v1321
    %v1386 = vadd.f32 %v1256, %v1322
    %v1387 = vadd.f32 %v1257, %v1323
    %v1388 = vadd.f32 %v1258, %v1324
    %v1389 = vadd.f32 %v1259, %v1325
    %v1390 = vadd.f32 %v1260, %v1326
    %v1391 = vadd.f32 %v1261, %v1327
    %v1392 = vadd.f32 %v1262, %v1328
    %v1393 = vadd.f32 %v1263, %v1329
    %v1394 = vadd.f32 %v1264, %v1330
    %v1395 = vadd.f32 %v1265, %v1331
    %v1396 = vadd.f32 %v1266, %v1332
    %v1397 = vadd.f32 %v1267, %v1333
    %v1398 = vadd.f32 %v1268, %v1334
    %v1399 = vadd.f32 %v1269, %v1335
    %v1400 = vadd.f32 %v1270, %v1336
    %v1401 = vadd.f32 %v1271, %v1337
    %v1402 = vadd.f32 %v1272, %v1338
    %v1403 = vadd.f32 %v1273, %v1339
    %v1404 = vadd.f32 %v1274, %v1340
    %v1405 = vadd.f32 %v1275, %v1341
    %v1406 = vadd.f32 %v1276, %v1342
    %v1407 = vadd.f32 %v1277, %v1343
    %v1408 = vadd.f32 %v1278, %v1344
    %v1409 = vadd.f32 %v1279, %v1345
    %v1410 = vadd.f32 %v1280, %v1346
    %v1411 = vadd.f32 %v1281, %v1347
    %v1412 = vadd.f32 %v1282, %v1348
    %vm1413 = vcmp.ge.f32.partialorder %v1349, 0.0
    %vm1414 = vcmp.ge.f32.partialorder %v1350, 0.0
    %vm1415 = vcmp.ge.f32.partialorder %v1351, 0.0
    %vm1416 = vcmp.ge.f32.partialorder %v1352, 0.0
    %vm1417 = vcmp.ge.f32.partialorder %v1353, 0.0
    %vm1418 = vcmp.ge.f32.partialorder %v1354, 0.0
    %vm1419 = vcmp.ge.f32.partialorder %v1355, 0.0
    %vm1420 = vcmp.ge.f32.partialorder %v1356, 0.0
    %vm1421 = vcmp.ge.f32.partialorder %v1357, 0.0
    %vm1422 = vcmp.ge.f32.partialorder %v1358, 0.0
    %vm1423 = vcmp.ge.f32.partialorder %v1359, 0.0
    %vm1424 = vcmp.ge.f32.partialorder %v1360, 0.0
    %vm1425 = vcmp.ge.f32.partialorder %v1361, 0.0
    %vm1426 = vcmp.ge.f32.partialorder %v1362, 0.0
    %vm1427 = vcmp.ge.f32.partialorder %v1363, 0.0
    %vm1428 = vcmp.ge.f32.partialorder %v1364, 0.0
    %vm1429 = vcmp.ge.f32.partialorder %v1365, 0.0
    %vm1430 = vcmp.ge.f32.partialorder %v1366, 0.0
    %vm1431 = vcmp.ge.f32.partialorder %v1367, 0.0
    %vm1432 = vcmp.ge.f32.partialorder %v1368, 0.0
    %vm1433 = vcmp.ge.f32.partialorder %v1369, 0.0
    %vm1434 = vcmp.ge.f32.partialorder %v1370, 0.0
    %vm1435 = vcmp.ge.f32.partialorder %v1371, 0.0
    %vm1436 = vcmp.ge.f32.partialorder %v1372, 0.0
    %vm1437 = vcmp.ge.f32.partialorder %v1373, 0.0
    %vm1438 = vcmp.ge.f32.partialorder %v1374, 0.0
    %vm1439 = vcmp.ge.f32.partialorder %v1375, 0.0
    %vm1440 = vcmp.ge.f32.partialorder %v1376, 0.0
    %vm1441 = vcmp.ge.f32.partialorder %v1377, 0.0
    %vm1442 = vcmp.ge.f32.partialorder %v1378, 0.0
    %vm1443 = vcmp.ge.f32.partialorder %v1379, 0.0
    %vm1444 = vcmp.ge.f32.partialorder %v1380, 0.0
    %vm1445 = vcmp.ge.f32.partialorder %v1381, 0.0
    %vm1446 = vcmp.ge.f32.partialorder %v1382, 0.0
    %vm1447 = vcmp.ge.f32.partialorder %v1383, 0.0
    %vm1448 = vcmp.ge.f32.partialorder %v1384, 0.0
    %vm1449 = vcmp.ge.f32.partialorder %v1385, 0.0
    %vm1450 = vcmp.ge.f32.partialorder %v1386, 0.0
    %vm1451 = vcmp.ge.f32.partialorder %v1387, 0.0
    %vm1452 = vcmp.ge.f32.partialorder %v1388, 0.0
    %vm1453 = vcmp.ge.f32.partialorder %v1389, 0.0
    %vm1454 = vcmp.ge.f32.partialorder %v1390, 0.0
    %vm1455 = vcmp.ge.f32.partialorder %v1391, 0.0
    %vm1456 = vcmp.ge.f32.partialorder %v1392, 0.0
    %vm1457 = vcmp.ge.f32.partialorder %v1393, 0.0
    %vm1458 = vcmp.ge.f32.partialorder %v1394, 0.0
    %vm1459 = vcmp.ge.f32.partialorder %v1395, 0.0
    %vm1460 = vcmp.ge.f32.partialorder %v1396, 0.0
    %vm1461 = vcmp.ge.f32.partialorder %v1397, 0.0
    %vm1462 = vcmp.ge.f32.partialorder %v1398, 0.0
    %vm1463 = vcmp.ge.f32.partialorder %v1399, 0.0
    %vm1464 = vcmp.ge.f32.partialorder %v1400, 0.0
    %vm1465 = vcmp.ge.f32.partialorder %v1401, 0.0
    %vm1466 = vcmp.ge.f32.partialorder %v1402, 0.0
    %vm1467 = vcmp.ge.f32.partialorder %v1403, 0.0
    %vm1468 = vcmp.ge.f32.partialorder %v1404, 0.0
    %vm1469 = vcmp.ge.f32.partialorder %v1405, 0.0
    %vm1470 = vcmp.ge.f32.partialorder %v1406, 0.0
    %vm1471 = vcmp.ge.f32.partialorder %v1407, 0.0
    %vm1472 = vcmp.ge.f32.partialorder %v1408, 0.0
    %vm1473 = vcmp.ge.f32.partialorder %v1409, 0.0
    %vm1474 = vcmp.ge.f32.partialorder %v1410, 0.0
    %vm1475 = vcmp.ge.f32.partialorder %v1411, 0.0
    %vm1476 = vcmp.ge.f32.partialorder %v1412, 0.0
    %v1477 = vmul.f32 %v1349, 0.2
    %v1478 = vmul.f32 %v1350, 0.2
    %v1479 = vmul.f32 %v1351, 0.2
    %v1480 = vmul.f32 %v1352, 0.2
    %v1481 = vmul.f32 %v1353, 0.2
    %v1482 = vmul.f32 %v1354, 0.2
    %v1483 = vmul.f32 %v1355, 0.2
    %v1484 = vmul.f32 %v1356, 0.2
    %v1485 = vmul.f32 %v1357, 0.2
    %v1486 = vmul.f32 %v1358, 0.2
    %v1487 = vmul.f32 %v1359, 0.2
    %v1488 = vmul.f32 %v1360, 0.2
    %v1489 = vmul.f32 %v1361, 0.2
    %v1490 = vmul.f32 %v1362, 0.2
    %v1491 = vmul.f32 %v1363, 0.2
    %v1492 = vmul.f32 %v1364, 0.2
    %v1493 = vmul.f32 %v1365, 0.2
    %v1494 = vmul.f32 %v1366, 0.2
    %v1495 = vmul.f32 %v1367, 0.2
    %v1496 = vmul.f32 %v1368, 0.2
    %v1497 = vmul.f32 %v1369, 0.2
    %v1498 = vmul.f32 %v1370, 0.2
    %v1499 = vmul.f32 %v1371, 0.2
    %v1500 = vmul.f32 %v1372, 0.2
    %v1501 = vmul.f32 %v1373, 0.2
    %v1502 = vmul.f32 %v1374, 0.2
    %v1503 = vmul.f32 %v1375, 0.2
    %v1504 = vmul.f32 %v1376, 0.2
    %v1505 = vmul.f32 %v1377, 0.2
    %v1506 = vmul.f32 %v1378, 0.2
    %v1507 = vmul.f32 %v1379, 0.2
    %v1508 = vmul.f32 %v1380, 0.2
    %v1509 = vmul.f32 %v1381, 0.2
    %v1510 = vmul.f32 %v1382, 0.2
    %v1511 = vmul.f32 %v1383, 0.2
    %v1512 = vmul.f32 %v1384, 0.2
    %v1513 = vmul.f32 %v1385, 0.2
    %v1514 = vmul.f32 %v1386, 0.2
    %v1515 = vmul.f32 %v1387, 0.2
    %v1516 = vmul.f32 %v1388, 0.2
    %v1517 = vmul.f32 %v1389, 0.2
    %v1518 = vmul.f32 %v1390, 0.2
    %v1519 = vmul.f32 %v1391, 0.2
    %v1520 = vmul.f32 %v1392, 0.2
    %v1521 = vmul.f32 %v1393, 0.2
    %v1522 = vmul.f32 %v1394, 0.2
    %v1523 = vmul.f32 %v1395, 0.2
    %v1524 = vmul.f32 %v1396, 0.2
    %v1525 = vmul.f32 %v1397, 0.2
    %v1526 = vmul.f32 %v1398, 0.2
    %v1527 = vmul.f32 %v1399, 0.2
    %v1528 = vmul.f32 %v1400, 0.2
    %v1529 = vmul.f32 %v1401, 0.2
    %v1530 = vmul.f32 %v1402, 0.2
    %v1531 = vmul.f32 %v1403, 0.2
    %v1532 = vmul.f32 %v1404, 0.2
    %v1533 = vmul.f32 %v1405, 0.2
    %v1534 = vmul.f32 %v1406, 0.2
    %v1535 = vmul.f32 %v1407, 0.2
    %v1536 = vmul.f32 %v1408, 0.2
    %v1537 = vmul.f32 %v1409, 0.2
    %v1538 = vmul.f32 %v1410, 0.2
    %v1539 = vmul.f32 %v1411, 0.2
    %v1540 = vmul.f32 %v1412, 0.2
    %v1541 = vsel %vm1413, %v1349, %v1477
    %v1542 = vsel %vm1414, %v1350, %v1478
    %v1543 = vsel %vm1415, %v1351, %v1479
    %v1544 = vsel %vm1416, %v1352, %v1480
    %v1545 = vsel %vm1417, %v1353, %v1481
    %v1546 = vsel %vm1418, %v1354, %v1482
    %v1547 = vsel %vm1419, %v1355, %v1483
    %v1548 = vsel %vm1420, %v1356, %v1484
    %v1549 = vsel %vm1421, %v1357, %v1485
    %v1550 = vsel %vm1422, %v1358, %v1486
    %v1551 = vsel %vm1423, %v1359, %v1487
    %v1552 = vsel %vm1424, %v1360, %v1488
    %v1553 = vsel %vm1425, %v1361, %v1489
    %v1554 = vsel %vm1426, %v1362, %v1490
    %v1555 = vsel %vm1427, %v1363, %v1491
    %v1556 = vsel %vm1428, %v1364, %v1492
    %v1557 = vsel %vm1429, %v1365, %v1493
    %v1558 = vsel %vm1430, %v1366, %v1494
    %v1559 = vsel %vm1431, %v1367, %v1495
    %v1560 = vsel %vm1432, %v1368, %v1496
    %v1561 = vsel %vm1433, %v1369, %v1497
    %v1562 = vsel %vm1434, %v1370, %v1498
    %v1563 = vsel %vm1435, %v1371, %v1499
    %v1564 = vsel %vm1436, %v1372, %v1500
    %v1565 = vsel %vm1437, %v1373, %v1501
    %v1566 = vsel %vm1438, %v1374, %v1502
    %v1567 = vsel %vm1439, %v1375, %v1503
    %v1568 = vsel %vm1440, %v1376, %v1504
    %v1569 = vsel %vm1441, %v1377, %v1505
    %v1570 = vsel %vm1442, %v1378, %v1506
    %v1571 = vsel %vm1443, %v1379, %v1507
    %v1572 = vsel %vm1444, %v1380, %v1508
    %v1573 = vsel %vm1445, %v1381, %v1509
    %v1574 = vsel %vm1446, %v1382, %v1510
    %v1575 = vsel %vm1447, %v1383, %v1511
    %v1576 = vsel %vm1448, %v1384, %v1512
    %v1577 = vsel %vm1449, %v1385, %v1513
    %v1578 = vsel %vm1450, %v1386, %v1514
    %v1579 = vsel %vm1451, %v1387, %v1515
    %v1580 = vsel %vm1452, %v1388, %v1516
    %v1581 = vsel %vm1453, %v1389, %v1517
    %v1582 = vsel %vm1454, %v1390, %v1518
    %v1583 = vsel %vm1455, %v1391, %v1519
    %v1584 = vsel %vm1456, %v1392, %v1520
    %v1585 = vsel %vm1457, %v1393, %v1521
    %v1586 = vsel %vm1458, %v1394, %v1522
    %v1587 = vsel %vm1459, %v1395, %v1523
    %v1588 = vsel %vm1460, %v1396, %v1524
    %v1589 = vsel %vm1461, %v1397, %v1525
    %v1590 = vsel %vm1462, %v1398, %v1526
    %v1591 = vsel %vm1463, %v1399, %v1527
    %v1592 = vsel %vm1464, %v1400, %v1528
    %v1593 = vsel %vm1465, %v1401, %v1529
    %v1594 = vsel %vm1466, %v1402, %v1530
    %v1595 = vsel %vm1467, %v1403, %v1531
    %v1596 = vsel %vm1468, %v1404, %v1532
    %v1597 = vsel %vm1469, %v1405, %v1533
    %v1598 = vsel %vm1470, %v1406, %v1534
    %v1599 = vsel %vm1471, %v1407, %v1535
    %v1600 = vsel %vm1472, %v1408, %v1536
    %v1601 = vsel %vm1473, %v1409, %v1537
    %v1602 = vsel %vm1474, %v1410, %v1538
    %v1603 = vsel %vm1475, %v1411, %v1539
    %v1604 = vsel %vm1476, %v1412, %v1540
    %v1605 = vld [vmem:[#allocation7] sm:$0xff]
    %v1606 = vld [vmem:[#allocation7 + $0x8] sm:$0xff]
    %v1607 = vld [vmem:[#allocation7 + $0x10] sm:$0xff]
    %v1608 = vld [vmem:[#allocation7 + $0x18] sm:$0xff]
    %v1609 = vld [vmem:[#allocation7 + $0x20] sm:$0xff]
    %v1610 = vld [vmem:[#allocation7 + $0x28] sm:$0xff]
    %v1611 = vld [vmem:[#allocation7 + $0x30] sm:$0xff]
    %v1612 = vld [vmem:[#allocation7 + $0x38] sm:$0xff]
    %v1613 = vld [vmem:[#allocation7 + $0x40] sm:$0xff]
    %v1614 = vld [vmem:[#allocation7 + $0x48] sm:$0xff]
    %v1615 = vld [vmem:[#allocation7 + $0x50] sm:$0xff]
    %v1616 = vld [vmem:[#allocation7 + $0x58] sm:$0xff]
    %v1617 = vld [vmem:[#allocation7 + $0x60] sm:$0xff]
    %v1618 = vld [vmem:[#allocation7 + $0x68] sm:$0xff]
    %v1619 = vld [vmem:[#allocation7 + $0x70] sm:$0xff]
    %v1620 = vld [vmem:[#allocation7 + $0x78] sm:$0xff]
    %1621 = vmatpush.msra.mxu0 %v1620
    %1622 = vmatpush.msra.mxu0 %v1619
    %1623 = vmatpush.msra.mxu0 %v1618
    %1624 = vmatpush.msra.mxu0 %v1617
    %1625 = vmatpush.msra.mxu0 %v1616
    %1626 = vmatpush.msra.mxu0 %v1615
    %1627 = vmatpush.msra.mxu0 %v1614
    %1628 = vmatpush.msra.mxu0 %v1613
    %1629 = vmatpush.msra.mxu0 %v1612
    %1630 = vmatpush.msra.mxu0 %v1611
    %1631 = vmatpush.msra.mxu0 %v1610
    %1632 = vmatpush.msra.mxu0 %v1609
    %1633 = vmatpush.msra.mxu0 %v1608
    %1634 = vmatpush.msra.mxu0 %v1607
    %1635 = vmatpush.msra.mxu0 %v1606
    %1636 = vmatpush.msra.mxu0 %v1605
    %1637 = vmatmul.f32.gmra.mxu0 %v1541
    %v1638 = vpop.f32.mrf.mxu0
    %v1639 = vadd.f32 0.0, %v1638
    %1640 = vmatmul.f32.gmra.mxu0 %v1542
    %v1641 = vpop.f32.mrf.mxu0
    %v1642 = vadd.f32 0.0, %v1641
    %1643 = vmatmul.f32.gmra.mxu0 %v1543
    %v1644 = vpop.f32.mrf.mxu0
    %v1645 = vadd.f32 0.0, %v1644
    %1646 = vmatmul.f32.gmra.mxu0 %v1544
    %v1647 = vpop.f32.mrf.mxu0
    %v1648 = vadd.f32 0.0, %v1647
    %1649 = vmatmul.f32.gmra.mxu0 %v1545
    %v1650 = vpop.f32.mrf.mxu0
    %v1651 = vadd.f32 0.0, %v1650
    %1652 = vmatmul.f32.gmra.mxu0 %v1546
    %v1653 = vpop.f32.mrf.mxu0
    %v1654 = vadd.f32 0.0, %v1653
    %1655 = vmatmul.f32.gmra.mxu0 %v1547
    %v1656 = vpop.f32.mrf.mxu0
    %v1657 = vadd.f32 0.0, %v1656
    %1658 = vmatmul.f32.gmra.mxu0 %v1548
    %v1659 = vpop.f32.mrf.mxu0
    %v1660 = vadd.f32 0.0, %v1659
    %1661 = vmatmul.f32.gmra.mxu0 %v1549
    %v1662 = vpop.f32.mrf.mxu0
    %v1663 = vadd.f32 0.0, %v1662
    %1664 = vmatmul.f32.gmra.mxu0 %v1550
    %v1665 = vpop.f32.mrf.mxu0
    %v1666 = vadd.f32 0.0, %v1665
    %1667 = vmatmul.f32.gmra.mxu0 %v1551
    %v1668 = vpop.f32.mrf.mxu0
    %v1669 = vadd.f32 0.0, %v1668
    %1670 = vmatmul.f32.gmra.mxu0 %v1552
    %v1671 = vpop.f32.mrf.mxu0
    %v1672 = vadd.f32 0.0, %v1671
    %1673 = vmatmul.f32.gmra.mxu0 %v1553
    %v1674 = vpop.f32.mrf.mxu0
    %v1675 = vadd.f32 0.0, %v1674
    %1676 = vmatmul.f32.gmra.mxu0 %v1554
    %v1677 = vpop.f32.mrf.mxu0
    %v1678 = vadd.f32 0.0, %v1677
    %1679 = vmatmul.f32.gmra.mxu0 %v1555
    %v1680 = vpop.f32.mrf.mxu0
    %v1681 = vadd.f32 0.0, %v1680
    %1682 = vmatmul.f32.gmra.mxu0 %v1556
    %v1683 = vpop.f32.mrf.mxu0
    %v1684 = vadd.f32 0.0, %v1683
    %1685 = vmatmul.f32.gmra.mxu0 %v1557
    %v1686 = vpop.f32.mrf.mxu0
    %v1687 = vadd.f32 0.0, %v1686
    %1688 = vmatmul.f32.gmra.mxu0 %v1558
    %v1689 = vpop.f32.mrf.mxu0
    %v1690 = vadd.f32 0.0, %v1689
    %1691 = vmatmul.f32.gmra.mxu0 %v1559
    %v1692 = vpop.f32.mrf.mxu0
    %v1693 = vadd.f32 0.0, %v1692
    %1694 = vmatmul.f32.gmra.mxu0 %v1560
    %v1695 = vpop.f32.mrf.mxu0
    %v1696 = vadd.f32 0.0, %v1695
    %1697 = vmatmul.f32.gmra.mxu0 %v1561
    %v1698 = vpop.f32.mrf.mxu0
    %v1699 = vadd.f32 0.0, %v1698
    %1700 = vmatmul.f32.gmra.mxu0 %v1562
    %v1701 = vpop.f32.mrf.mxu0
    %v1702 = vadd.f32 0.0, %v1701
    %1703 = vmatmul.f32.gmra.mxu0 %v1563
    %v1704 = vpop.f32.mrf.mxu0
    %v1705 = vadd.f32 0.0, %v1704
    %1706 = vmatmul.f32.gmra.mxu0 %v1564
    %v1707 = vpop.f32.mrf.mxu0
    %v1708 = vadd.f32 0.0, %v1707
    %1709 = vmatmul.f32.gmra.mxu0 %v1565
    %v1710 = vpop.f32.mrf.mxu0
    %v1711 = vadd.f32 0.0, %v1710
    %1712 = vmatmul.f32.gmra.mxu0 %v1566
    %v1713 = vpop.f32.mrf.mxu0
    %v1714 = vadd.f32 0.0, %v1713
    %1715 = vmatmul.f32.gmra.mxu0 %v1567
    %v1716 = vpop.f32.mrf.mxu0
    %v1717 = vadd.f32 0.0, %v1716
    %1718 = vmatmul.f32.gmra.mxu0 %v1568
    %v1719 = vpop.f32.mrf.mxu0
    %v1720 = vadd.f32 0.0, %v1719
    %1721 = vmatmul.f32.gmra.mxu0 %v1569
    %v1722 = vpop.f32.mrf.mxu0
    %v1723 = vadd.f32 0.0, %v1722
    %1724 = vmatmul.f32.gmra.mxu0 %v1570
    %v1725 = vpop.f32.mrf.mxu0
    %v1726 = vadd.f32 0.0, %v1725
    %1727 = vmatmul.f32.gmra.mxu0 %v1571
    %v1728 = vpop.f32.mrf.mxu0
    %v1729 = vadd.f32 0.0, %v1728
    %1730 = vmatmul.f32.gmra.mxu0 %v1572
    %v1731 = vpop.f32.mrf.mxu0
    %v1732 = vadd.f32 0.0, %v1731
    %1733 = vmatmul.f32.gmra.mxu0 %v1573
    %v1734 = vpop.f32.mrf.mxu0
    %v1735 = vadd.f32 0.0, %v1734
    %1736 = vmatmul.f32.gmra.mxu0 %v1574
    %v1737 = vpop.f32.mrf.mxu0
    %v1738 = vadd.f32 0.0, %v1737
    %1739 = vmatmul.f32.gmra.mxu0 %v1575
    %v1740 = vpop.f32.mrf.mxu0
    %v1741 = vadd.f32 0.0, %v1740
    %1742 = vmatmul.f32.gmra.mxu0 %v1576
    %v1743 = vpop.f32.mrf.mxu0
    %v1744 = vadd.f32 0.0, %v1743
    %1745 = vmatmul.f32.gmra.mxu0 %v1577
    %v1746 = vpop.f32.mrf.mxu0
    %v1747 = vadd.f32 0.0, %v1746
    %1748 = vmatmul.f32.gmra.mxu0 %v1578
    %v1749 = vpop.f32.mrf.mxu0
    %v1750 = vadd.f32 0.0, %v1749
    %1751 = vmatmul.f32.gmra.mxu0 %v1579
    %v1752 = vpop.f32.mrf.mxu0
    %v1753 = vadd.f32 0.0, %v1752
    %1754 = vmatmul.f32.gmra.mxu0 %v1580
    %v1755 = vpop.f32.mrf.mxu0
    %v1756 = vadd.f32 0.0, %v1755
    %1757 = vmatmul.f32.gmra.mxu0 %v1581
    %v1758 = vpop.f32.mrf.mxu0
    %v1759 = vadd.f32 0.0, %v1758
    %1760 = vmatmul.f32.gmra.mxu0 %v1582
    %v1761 = vpop.f32.mrf.mxu0
    %v1762 = vadd.f32 0.0, %v1761
    %1763 = vmatmul.f32.gmra.mxu0 %v1583
    %v1764 = vpop.f32.mrf.mxu0
    %v1765 = vadd.f32 0.0, %v1764
    %1766 = vmatmul.f32.gmra.mxu0 %v1584
    %v1767 = vpop.f32.mrf.mxu0
    %v1768 = vadd.f32 0.0, %v1767
    %1769 = vmatmul.f32.gmra.mxu0 %v1585
    %v1770 = vpop.f32.mrf.mxu0
    %v1771 = vadd.f32 0.0, %v1770
    %1772 = vmatmul.f32.gmra.mxu0 %v1586
    %v1773 = vpop.f32.mrf.mxu0
    %v1774 = vadd.f32 0.0, %v1773
    %1775 = vmatmul.f32.gmra.mxu0 %v1587
    %v1776 = vpop.f32.mrf.mxu0
    %v1777 = vadd.f32 0.0, %v1776
    %1778 = vmatmul.f32.gmra.mxu0 %v1588
    %v1779 = vpop.f32.mrf.mxu0
    %v1780 = vadd.f32 0.0, %v1779
    %1781 = vmatmul.f32.gmra.mxu0 %v1589
    %v1782 = vpop.f32.mrf.mxu0
    %v1783 = vadd.f32 0.0, %v1782
    %1784 = vmatmul.f32.gmra.mxu0 %v1590
    %v1785 = vpop.f32.mrf.mxu0
    %v1786 = vadd.f32 0.0, %v1785
    %1787 = vmatmul.f32.gmra.mxu0 %v1591
    %v1788 = vpop.f32.mrf.mxu0
    %v1789 = vadd.f32 0.0, %v1788
    %1790 = vmatmul.f32.gmra.mxu0 %v1592
    %v1791 = vpop.f32.mrf.mxu0
    %v1792 = vadd.f32 0.0, %v1791
    %1793 = vmatmul.f32.gmra.mxu0 %v1593
    %v1794 = vpop.f32.mrf.mxu0
    %v1795 = vadd.f32 0.0, %v1794
    %1796 = vmatmul.f32.gmra.mxu0 %v1594
    %v1797 = vpop.f32.mrf.mxu0
    %v1798 = vadd.f32 0.0, %v1797
    %1799 = vmatmul.f32.gmra.mxu0 %v1595
    %v1800 = vpop.f32.mrf.mxu0
    %v1801 = vadd.f32 0.0, %v1800
    %1802 = vmatmul.f32.gmra.mxu0 %v1596
    %v1803 = vpop.f32.mrf.mxu0
    %v1804 = vadd.f32 0.0, %v1803
    %1805 = vmatmul.f32.gmra.mxu0 %v1597
    %v1806 = vpop.f32.mrf.mxu0
    %v1807 = vadd.f32 0.0, %v1806
    %1808 = vmatmul.f32.gmra.mxu0 %v1598
    %v1809 = vpop.f32.mrf.mxu0
    %v1810 = vadd.f32 0.0, %v1809
    %1811 = vmatmul.f32.gmra.mxu0 %v1599
    %v1812 = vpop.f32.mrf.mxu0
    %v1813 = vadd.f32 0.0, %v1812
    %1814 = vmatmul.f32.gmra.mxu0 %v1600
    %v1815 = vpop.f32.mrf.mxu0
    %v1816 = vadd.f32 0.0, %v1815
    %1817 = vmatmul.f32.gmra.mxu0 %v1601
    %v1818 = vpop.f32.mrf.mxu0
    %v1819 = vadd.f32 0.0, %v1818
    %1820 = vmatmul.f32.gmra.mxu0 %v1602
    %v1821 = vpop.f32.mrf.mxu0
    %v1822 = vadd.f32 0.0, %v1821
    %1823 = vmatmul.f32.gmra.mxu0 %v1603
    %v1824 = vpop.f32.mrf.mxu0
    %v1825 = vadd.f32 0.0, %v1824
    %1826 = vmatmul.f32.gmra.mxu0 %v1604
    %v1827 = vpop.f32.mrf.mxu0
    %v1828 = vadd.f32 0.0, %v1827
    %1829 = vdwg.mxu0
    %v1830 = vadd.f32 %v1639, %v125
    %v1831 = vadd.f32 %v1642, %v131
    %v1832 = vadd.f32 %v1645, %v138
    %v1833 = vadd.f32 %v1648, %v144
    %v1834 = vadd.f32 %v1651, %v151
    %v1835 = vadd.f32 %v1654, %v157
    %v1836 = vadd.f32 %v1657, %v164
    %v1837 = vadd.f32 %v1660, %v170
    %v1838 = vadd.f32 %v1663, %v177
    %v1839 = vadd.f32 %v1666, %v183
    %v1840 = vadd.f32 %v1669, %v190
    %v1841 = vadd.f32 %v1672, %v196
    %v1842 = vadd.f32 %v1675, %v203
    %v1843 = vadd.f32 %v1678, %v209
    %v1844 = vadd.f32 %v1681, %v216
    %v1845 = vadd.f32 %v1684, %v222
    %v1846 = vadd.f32 %v1687, %v229
    %v1847 = vadd.f32 %v1690, %v235
    %v1848 = vadd.f32 %v1693, %v242
    %v1849 = vadd.f32 %v1696, %v248
    %v1850 = vadd.f32 %v1699, %v255
    %v1851 = vadd.f32 %v1702, %v261
    %v1852 = vadd.f32 %v1705, %v268
    %v1853 = vadd.f32 %v1708, %v274
    %v1854 = vadd.f32 %v1711, %v281
    %v1855 = vadd.f32 %v1714, %v287
    %v1856 = vadd.f32 %v1717, %v294
    %v1857 = vadd.f32 %v1720, %v300
    %v1858 = vadd.f32 %v1723, %v307
    %v1859 = vadd.f32 %v1726, %v313
    %v1860 = vadd.f32 %v1729, %v320
    %v1861 = vadd.f32 %v1732, %v326
    %v1862 = vadd.f32 %v1735, %v333
    %v1863 = vadd.f32 %v1738, %v339
    %v1864 = vadd.f32 %v1741, %v346
    %v1865 = vadd.f32 %v1744, %v352
    %v1866 = vadd.f32 %v1747, %v359
    %v1867 = vadd.f32 %v1750, %v365
    %v1868 = vadd.f32 %v1753, %v372
    %v1869 = vadd.f32 %v1756, %v378
    %v1870 = vadd.f32 %v1759, %v385
    %v1871 = vadd.f32 %v1762, %v391
    %v1872 = vadd.f32 %v1765, %v398
    %v1873 = vadd.f32 %v1768, %v404
    %v1874 = vadd.f32 %v1771, %v411
    %v1875 = vadd.f32 %v1774, %v417
    %v1876 = vadd.f32 %v1777, %v424
    %v1877 = vadd.f32 %v1780, %v430
    %v1878 = vadd.f32 %v1783, %v437
    %v1879 = vadd.f32 %v1786, %v443
    %v1880 = vadd.f32 %v1789, %v450
    %v1881 = vadd.f32 %v1792, %v456
    %v1882 = vadd.f32 %v1795, %v463
    %v1883 = vadd.f32 %v1798, %v469
    %v1884 = vadd.f32 %v1801, %v476
    %v1885 = vadd.f32 %v1804, %v482
    %v1886 = vadd.f32 %v1807, %v489
    %v1887 = vadd.f32 %v1810, %v495
    %v1888 = vadd.f32 %v1813, %v502
    %v1889 = vadd.f32 %v1816, %v508
    %v1890 = vadd.f32 %v1819, %v515
    %v1891 = vadd.f32 %v1822, %v521
    %v1892 = vadd.f32 %v1825, %v528
    %v1893 = vadd.f32 %v1828, %v534
    %v1894 = vmax.f32 %v1830, %v1831
    %v1895 = vrot.slane %v1894, 4
    %v1896 = vmax.f32 %v1894, %v1895
    %v1897 = vrot.slane %v1896, 2
    %v1898 = vmax.f32 %v1896, %v1897
    %v1899 = vrot.slane %v1898, 1
    %v1900 = vmax.f32 %v1898, %v1899
    %v1901 = vmax.f32 %v1832, %v1833
    %v1902 = vrot.slane %v1901, 4
    %v1903 = vmax.f32 %v1901, %v1902
    %v1904 = vrot.slane %v1903, 2
    %v1905 = vmax.f32 %v1903, %v1904
    %v1906 = vrot.slane %v1905, 1
    %v1907 = vmax.f32 %v1905, %v1906
    %v1908 = vmax.f32 %v1834, %v1835
    %v1909 = vrot.slane %v1908, 4
    %v1910 = vmax.f32 %v1908, %v1909
    %v1911 = vrot.slane %v1910, 2
    %v1912 = vmax.f32 %v1910, %v1911
    %v1913 = vrot.slane %v1912, 1
    %v1914 = vmax.f32 %v1912, %v1913
    %v1915 = vmax.f32 %v1836, %v1837
    %v1916 = vrot.slane %v1915, 4
    %v1917 = vmax.f32 %v1915, %v1916
    %v1918 = vrot.slane %v1917, 2
    %v1919 = vmax.f32 %v1917, %v1918
    %v1920 = vrot.slane %v1919, 1
    %v1921 = vmax.f32 %v1919, %v1920
    %v1922 = vmax.f32 %v1838, %v1839
    %v1923 = vrot.slane %v1922, 4
    %v1924 = vmax.f32 %v1922, %v1923
    %v1925 = vrot.slane %v1924, 2
    %v1926 = vmax.f32 %v1924, %v1925
    %v1927 = vrot.slane %v1926, 1
    %v1928 = vmax.f32 %v1926, %v1927
    %v1929 = vmax.f32 %v1840, %v1841
    %v1930 = vrot.slane %v1929, 4
    %v1931 = vmax.f32 %v1929, %v1930
    %v1932 = vrot.slane %v1931, 2
    %v1933 = vmax.f32 %v1931, %v1932
    %v1934 = vrot.slane %v1933, 1
    %v1935 = vmax.f32 %v1933, %v1934
    %v1936 = vmax.f32 %v1842, %v1843
    %v1937 = vrot.slane %v1936, 4
    %v1938 = vmax.f32 %v1936, %v1937
    %v1939 = vrot.slane %v1938, 2
    %v1940 = vmax.f32 %v1938, %v1939
    %v1941 = vrot.slane %v1940, 1
    %v1942 = vmax.f32 %v1940, %v1941
    %v1943 = vmax.f32 %v1844, %v1845
    %v1944 = vrot.slane %v1943, 4
    %v1945 = vmax.f32 %v1943, %v1944
    %v1946 = vrot.slane %v1945, 2
    %v1947 = vmax.f32 %v1945, %v1946
    %v1948 = vrot.slane %v1947, 1
    %v1949 = vmax.f32 %v1947, %v1948
    %v1950 = vmax.f32 %v1846, %v1847
    %v1951 = vrot.slane %v1950, 4
    %v1952 = vmax.f32 %v1950, %v1951
    %v1953 = vrot.slane %v1952, 2
    %v1954 = vmax.f32 %v1952, %v1953
    %v1955 = vrot.slane %v1954, 1
    %v1956 = vmax.f32 %v1954, %v1955
    %v1957 = vmax.f32 %v1848, %v1849
    %v1958 = vrot.slane %v1957, 4
    %v1959 = vmax.f32 %v1957, %v1958
    %v1960 = vrot.slane %v1959, 2
    %v1961 = vmax.f32 %v1959, %v1960
    %v1962 = vrot.slane %v1961, 1
    %v1963 = vmax.f32 %v1961, %v1962
    %v1964 = vmax.f32 %v1850, %v1851
    %v1965 = vrot.slane %v1964, 4
    %v1966 = vmax.f32 %v1964, %v1965
    %v1967 = vrot.slane %v1966, 2
    %v1968 = vmax.f32 %v1966, %v1967
    %v1969 = vrot.slane %v1968, 1
    %v1970 = vmax.f32 %v1968, %v1969
    %v1971 = vmax.f32 %v1852, %v1853
    %v1972 = vrot.slane %v1971, 4
    %v1973 = vmax.f32 %v1971, %v1972
    %v1974 = vrot.slane %v1973, 2
    %v1975 = vmax.f32 %v1973, %v1974
    %v1976 = vrot.slane %v1975, 1
    %v1977 = vmax.f32 %v1975, %v1976
    %v1978 = vmax.f32 %v1854, %v1855
    %v1979 = vrot.slane %v1978, 4
    %v1980 = vmax.f32 %v1978, %v1979
    %v1981 = vrot.slane %v1980, 2
    %v1982 = vmax.f32 %v1980, %v1981
    %v1983 = vrot.slane %v1982, 1
    %v1984 = vmax.f32 %v1982, %v1983
    %v1985 = vmax.f32 %v1856, %v1857
    %v1986 = vrot.slane %v1985, 4
    %v1987 = vmax.f32 %v1985, %v1986
    %v1988 = vrot.slane %v1987, 2
    %v1989 = vmax.f32 %v1987, %v1988
    %v1990 = vrot.slane %v1989, 1
    %v1991 = vmax.f32 %v1989, %v1990
    %v1992 = vmax.f32 %v1858, %v1859
    %v1993 = vrot.slane %v1992, 4
    %v1994 = vmax.f32 %v1992, %v1993
    %v1995 = vrot.slane %v1994, 2
    %v1996 = vmax.f32 %v1994, %v1995
    %v1997 = vrot.slane %v1996, 1
    %v1998 = vmax.f32 %v1996, %v1997
    %v1999 = vmax.f32 %v1860, %v1861
    %v2000 = vrot.slane %v1999, 4
    %v2001 = vmax.f32 %v1999, %v2000
    %v2002 = vrot.slane %v2001, 2
    %v2003 = vmax.f32 %v2001, %v2002
    %v2004 = vrot.slane %v2003, 1
    %v2005 = vmax.f32 %v2003, %v2004
    %v2006 = vmax.f32 %v1862, %v1863
    %v2007 = vrot.slane %v2006, 4
    %v2008 = vmax.f32 %v2006, %v2007
    %v2009 = vrot.slane %v2008, 2
    %v2010 = vmax.f32 %v2008, %v2009
    %v2011 = vrot.slane %v2010, 1
    %v2012 = vmax.f32 %v2010, %v2011
    %v2013 = vmax.f32 %v1864, %v1865
    %v2014 = vrot.slane %v2013, 4
    %v2015 = vmax.f32 %v2013, %v2014
    %v2016 = vrot.slane %v2015, 2
    %v2017 = vmax.f32 %v2015, %v2016
    %v2018 = vrot.slane %v2017, 1
    %v2019 = vmax.f32 %v2017, %v2018
    %v2020 = vmax.f32 %v1866, %v1867
    %v2021 = vrot.slane %v2020, 4
    %v2022 = vmax.f32 %v2020, %v2021
    %v2023 = vrot.slane %v2022, 2
    %v2024 = vmax.f32 %v2022, %v2023
    %v2025 = vrot.slane %v2024, 1
    %v2026 = vmax.f32 %v2024, %v2025
    %v2027 = vmax.f32 %v1868, %v1869
    %v2028 = vrot.slane %v2027, 4
    %v2029 = vmax.f32 %v2027, %v2028
    %v2030 = vrot.slane %v2029, 2
    %v2031 = vmax.f32 %v2029, %v2030
    %v2032 = vrot.slane %v2031, 1
    %v2033 = vmax.f32 %v2031, %v2032
    %v2034 = vmax.f32 %v1870, %v1871
    %v2035 = vrot.slane %v2034, 4
    %v2036 = vmax.f32 %v2034, %v2035
    %v2037 = vrot.slane %v2036, 2
    %v2038 = vmax.f32 %v2036, %v2037
    %v2039 = vrot.slane %v2038, 1
    %v2040 = vmax.f32 %v2038, %v2039
    %v2041 = vmax.f32 %v1872, %v1873
    %v2042 = vrot.slane %v2041, 4
    %v2043 = vmax.f32 %v2041, %v2042
    %v2044 = vrot.slane %v2043, 2
    %v2045 = vmax.f32 %v2043, %v2044
    %v2046 = vrot.slane %v2045, 1
    %v2047 = vmax.f32 %v2045, %v2046
    %v2048 = vmax.f32 %v1874, %v1875
    %v2049 = vrot.slane %v2048, 4
    %v2050 = vmax.f32 %v2048, %v2049
    %v2051 = vrot.slane %v2050, 2
    %v2052 = vmax.f32 %v2050, %v2051
    %v2053 = vrot.slane %v2052, 1
    %v2054 = vmax.f32 %v2052, %v2053
    %v2055 = vmax.f32 %v1876, %v1877
    %v2056 = vrot.slane %v2055, 4
    %v2057 = vmax.f32 %v2055, %v2056
    %v2058 = vrot.slane %v2057, 2
    %v2059 = vmax.f32 %v2057, %v2058
    %v2060 = vrot.slane %v2059, 1
    %v2061 = vmax.f32 %v2059, %v2060
    %v2062 = vmax.f32 %v1878, %v1879
    %v2063 = vrot.slane %v2062, 4
    %v2064 = vmax.f32 %v2062, %v2063
    %v2065 = vrot.slane %v2064, 2
    %v2066 = vmax.f32 %v2064, %v2065
    %v2067 = vrot.slane %v2066, 1
    %v2068 = vmax.f32 %v2066, %v2067
    %v2069 = vmax.f32 %v1880, %v1881
    %v2070 = vrot.slane %v2069, 4
    %v2071 = vmax.f32 %v2069, %v2070
    %v2072 = vrot.slane %v2071, 2
    %v2073 = vmax.f32 %v2071, %v2072
    %v2074 = vrot.slane %v2073, 1
    %v2075 = vmax.f32 %v2073, %v2074
    %v2076 = vmax.f32 %v1882, %v1883
    %v2077 = vrot.slane %v2076, 4
    %v2078 = vmax.f32 %v2076, %v2077
    %v2079 = vrot.slane %v2078, 2
    %v2080 = vmax.f32 %v2078, %v2079
    %v2081 = vrot.slane %v2080, 1
    %v2082 = vmax.f32 %v2080, %v2081
    %v2083 = vmax.f32 %v1884, %v1885
    %v2084 = vrot.slane %v2083, 4
    %v2085 = vmax.f32 %v2083, %v2084
    %v2086 = vrot.slane %v2085, 2
    %v2087 = vmax.f32 %v2085, %v2086
    %v2088 = vrot.slane %v2087, 1
    %v2089 = vmax.f32 %v2087, %v2088
    %v2090 = vmax.f32 %v1886, %v1887
    %v2091 = vrot.slane %v2090, 4
    %v2092 = vmax.f32 %v2090, %v2091
    %v2093 = vrot.slane %v2092, 2
    %v2094 = vmax.f32 %v2092, %v2093
    %v2095 = vrot.slane %v2094, 1
    %v2096 = vmax.f32 %v2094, %v2095
    %v2097 = vmax.f32 %v1888, %v1889
    %v2098 = vrot.slane %v2097, 4
    %v2099 = vmax.f32 %v2097, %v2098
    %v2100 = vrot.slane %v2099, 2
    %v2101 = vmax.f32 %v2099, %v2100
    %v2102 = vrot.slane %v2101, 1
    %v2103 = vmax.f32 %v2101, %v2102
    %v2104 = vmax.f32 %v1890, %v1891
    %v2105 = vrot.slane %v2104, 4
    %v2106 = vmax.f32 %v2104, %v2105
    %v2107 = vrot.slane %v2106, 2
    %v2108 = vmax.f32 %v2106, %v2107
    %v2109 = vrot.slane %v2108, 1
    %v2110 = vmax.f32 %v2108, %v2109
    %v2111 = vmax.f32 %v1892, %v1893
    %v2112 = vrot.slane %v2111, 4
    %v2113 = vmax.f32 %v2111, %v2112
    %v2114 = vrot.slane %v2113, 2
    %v2115 = vmax.f32 %v2113, %v2114
    %v2116 = vrot.slane %v2115, 1
    %v2117 = vmax.f32 %v2115, %v2116
    %v2118 = vsub.f32 %v1830, %v1900
    %v2119 = vsub.f32 %v1831, %v1900
    %v2120 = vsub.f32 %v1832, %v1907
    %v2121 = vsub.f32 %v1833, %v1907
    %v2122 = vsub.f32 %v1834, %v1914
    %v2123 = vsub.f32 %v1835, %v1914
    %v2124 = vsub.f32 %v1836, %v1921
    %v2125 = vsub.f32 %v1837, %v1921
    %v2126 = vsub.f32 %v1838, %v1928
    %v2127 = vsub.f32 %v1839, %v1928
    %v2128 = vsub.f32 %v1840, %v1935
    %v2129 = vsub.f32 %v1841, %v1935
    %v2130 = vsub.f32 %v1842, %v1942
    %v2131 = vsub.f32 %v1843, %v1942
    %v2132 = vsub.f32 %v1844, %v1949
    %v2133 = vsub.f32 %v1845, %v1949
    %v2134 = vsub.f32 %v1846, %v1956
    %v2135 = vsub.f32 %v1847, %v1956
    %v2136 = vsub.f32 %v1848, %v1963
    %v2137 = vsub.f32 %v1849, %v1963
    %v2138 = vsub.f32 %v1850, %v1970
    %v2139 = vsub.f32 %v1851, %v1970
    %v2140 = vsub.f32 %v1852, %v1977
    %v2141 = vsub.f32 %v1853, %v1977
    %v2142 = vsub.f32 %v1854, %v1984
    %v2143 = vsub.f32 %v1855, %v1984
    %v2144 = vsub.f32 %v1856, %v1991
    %v2145 = vsub.f32 %v1857, %v1991
    %v2146 = vsub.f32 %v1858, %v1998
    %v2147 = vsub.f32 %v1859, %v1998
    %v2148 = vsub.f32 %v1860, %v2005
    %v2149 = vsub.f32 %v1861, %v2005
    %v2150 = vsub.f32 %v1862, %v2012
    %v2151 = vsub.f32 %v1863, %v2012
    %v2152 = vsub.f32 %v1864, %v2019
    %v2153 = vsub.f32 %v1865, %v2019
    %v2154 = vsub.f32 %v1866, %v2026
    %v2155 = vsub.f32 %v1867, %v2026
    %v2156 = vsub.f32 %v1868, %v2033
    %v2157 = vsub.f32 %v1869, %v2033
    %v2158 = vsub.f32 %v1870, %v2040
    %v2159 = vsub.f32 %v1871, %v2040
    %v2160 = vsub.f32 %v1872, %v2047
    %v2161 = vsub.f32 %v1873, %v2047
    %v2162 = vsub.f32 %v1874, %v2054
    %v2163 = vsub.f32 %v1875, %v2054
    %v2164 = vsub.f32 %v1876, %v2061
    %v2165 = vsub.f32 %v1877, %v2061
    %v2166 = vsub.f32 %v1878, %v2068
    %v2167 = vsub.f32 %v1879, %v2068
    %v2168 = vsub.f32 %v1880, %v2075
    %v2169 = vsub.f32 %v1881, %v2075
    %v2170 = vsub.f32 %v1882, %v2082
    %v2171 = vsub.f32 %v1883, %v2082
    %v2172 = vsub.f32 %v1884, %v2089
    %v2173 = vsub.f32 %v1885, %v2089
    %v2174 = vsub.f32 %v1886, %v2096
    %v2175 = vsub.f32 %v1887, %v2096
    %v2176 = vsub.f32 %v1888, %v2103
    %v2177 = vsub.f32 %v1889, %v2103
    %v2178 = vsub.f32 %v1890, %v2110
    %v2179 = vsub.f32 %v1891, %v2110
    %v2180 = vsub.f32 %v1892, %v2117
    %v2181 = vsub.f32 %v1893, %v2117
    %v2182 = vmul.f32 %v2118, 1.442695
    %v2183 = vpow.pop %v2182
    %v2184 = vmul.f32 %v2119, 1.442695
    %v2185 = vpow.pop %v2184
    %v2186 = vmul.f32 %v2120, 1.442695
    %v2187 = vpow.pop %v2186
    %v2188 = vmul.f32 %v2121, 1.442695
    %v2189 = vpow.pop %v2188
    %v2190 = vmul.f32 %v2122, 1.442695
    %v2191 = vpow.pop %v2190
    %v2192 = vmul.f32 %v2123, 1.442695
    %v2193 = vpow.pop %v2192
    %v2194 = vmul.f32 %v2124, 1.442695
    %v2195 = vpow.pop %v2194
    %v2196 = vmul.f32 %v2125, 1.442695
    %v2197 = vpow.pop %v2196
    %v2198 = vmul.f32 %v2126, 1.442695
    %v2199 = vpow.pop %v2198
    %v2200 = vmul.f32 %v2127, 1.442695
    %v2201 = vpow.pop %v2200
    %v2202 = vmul.f32 %v2128, 1.442695
    %v2203 = vpow.pop %v2202
    %v2204 = vmul.f32 %v2129, 1.442695
    %v2205 = vpow.pop %v2204
    %v2206 = vmul.f32 %v2130, 1.442695
    %v2207 = vpow.pop %v2206
    %v2208 = vmul.f32 %v2131, 1.442695
    %v2209 = vpow.pop %v2208
    %v2210 = vmul.f32 %v2132, 1.442695
    %v2211 = vpow.pop %v2210
    %v2212 = vmul.f32 %v2133, 1.442695
    %v2213 = vpow.pop %v2212
    %v2214 = vmul.f32 %v2134, 1.442695
    %v2215 = vpow.pop %v2214
    %v2216 = vmul.f32 %v2135, 1.442695
    %v2217 = vpow.pop %v2216
    %v2218 = vmul.f32 %v2136, 1.442695
    %v2219 = vpow.pop %v2218
    %v2220 = vmul.f32 %v2137, 1.442695
    %v2221 = vpow.pop %v2220
    %v2222 = vmul.f32 %v2138, 1.442695
    %v2223 = vpow.pop %v2222
    %v2224 = vmul.f32 %v2139, 1.442695
    %v2225 = vpow.pop %v2224
    %v2226 = vmul.f32 %v2140, 1.442695
    %v2227 = vpow.pop %v2226
    %v2228 = vmul.f32 %v2141, 1.442695
    %v2229 = vpow.pop %v2228
    %v2230 = vmul.f32 %v2142, 1.442695
    %v2231 = vpow.pop %v2230
    %v2232 = vmul.f32 %v2143, 1.442695
    %v2233 = vpow.pop %v2232
    %v2234 = vmul.f32 %v2144, 1.442695
    %v2235 = vpow.pop %v2234
    %v2236 = vmul.f32 %v2145, 1.442695
    %v2237 = vpow.pop %v2236
    %v2238 = vmul.f32 %v2146, 1.442695
    %v2239 = vpow.pop %v2238
    %v2240 = vmul.f32 %v2147, 1.442695
    %v2241 = vpow.pop %v2240
    %v2242 = vmul.f32 %v2148, 1.442695
    %v2243 = vpow.pop %v2242
    %v2244 = vmul.f32 %v2149, 1.442695
    %v2245 = vpow.pop %v2244
    %v2246 = vmul.f32 %v2150, 1.442695
    %v2247 = vpow.pop %v2246
    %v2248 = vmul.f32 %v2151, 1.442695
    %v2249 = vpow.pop %v2248
    %v2250 = vmul.f32 %v2152, 1.442695
    %v2251 = vpow.pop %v2250
    %v2252 = vmul.f32 %v2153, 1.442695
    %v2253 = vpow.pop %v2252
    %v2254 = vmul.f32 %v2154, 1.442695
    %v2255 = vpow.pop %v2254
    %v2256 = vmul.f32 %v2155, 1.442695
    %v2257 = vpow.pop %v2256
    %v2258 = vmul.f32 %v2156, 1.442695
    %v2259 = vpow.pop %v2258
    %v2260 = vmul.f32 %v2157, 1.442695
    %v2261 = vpow.pop %v2260
    %v2262 = vmul.f32 %v2158, 1.442695
    %v2263 = vpow.pop %v2262
    %v2264 = vmul.f32 %v2159, 1.442695
    %v2265 = vpow.pop %v2264
    %v2266 = vmul.f32 %v2160, 1.442695
    %v2267 = vpow.pop %v2266
    %v2268 = vmul.f32 %v2161, 1.442695
    %v2269 = vpow.pop %v2268
    %v2270 = vmul.f32 %v2162, 1.442695
    %v2271 = vpow.pop %v2270
    %v2272 = vmul.f32 %v2163, 1.442695
    %v2273 = vpow.pop %v2272
    %v2274 = vmul.f32 %v2164, 1.442695
    %v2275 = vpow.pop %v2274
    %v2276 = vmul.f32 %v2165, 1.442695
    %v2277 = vpow.pop %v2276
    %v2278 = vmul.f32 %v2166, 1.442695
    %v2279 = vpow.pop %v2278
    %v2280 = vmul.f32 %v2167, 1.442695
    %v2281 = vpow.pop %v2280
    %v2282 = vmul.f32 %v2168, 1.442695
    %v2283 = vpow.pop %v2282
    %v2284 = vmul.f32 %v2169, 1.442695
    %v2285 = vpow.pop %v2284
    %v2286 = vmul.f32 %v2170, 1.442695
    %v2287 = vpow.pop %v2286
    %v2288 = vmul.f32 %v2171, 1.442695
    %v2289 = vpow.pop %v2288
    %v2290 = vmul.f32 %v2172, 1.442695
    %v2291 = vpow.pop %v2290
    %v2292 = vmul.f32 %v2173, 1.442695
    %v2293 = vpow.pop %v2292
    %v2294 = vmul.f32 %v2174, 1.442695
    %v2295 = vpow.pop %v2294
    %v2296 = vmul.f32 %v2175, 1.442695
    %v2297 = vpow.pop %v2296
    %v2298 = vmul.f32 %v2176, 1.442695
    %v2299 = vpow.pop %v2298
    %v2300 = vmul.f32 %v2177, 1.442695
    %v2301 = vpow.pop %v2300
    %v2302 = vmul.f32 %v2178, 1.442695
    %v2303 = vpow.pop %v2302
    %v2304 = vmul.f32 %v2179, 1.442695
    %v2305 = vpow.pop %v2304
    %v2306 = vmul.f32 %v2180, 1.442695
    %v2307 = vpow.pop %v2306
    %v2308 = vmul.f32 %v2181, 1.442695
    %v2309 = vpow.pop %v2308
    %v2310 = vadd.f32 %v2183, %v2185
    %v2311 = vrot.slane %v2310, 4
    %v2312 = vadd.f32 %v2310, %v2311
    %v2313 = vrot.slane %v2312, 2
    %v2314 = vadd.f32 %v2312, %v2313
    %v2315 = vrot.slane %v2314, 1
    %v2316 = vadd.f32 %v2314, %v2315
    %v2317 = vadd.f32 %v2187, %v2189
    %v2318 = vrot.slane %v2317, 4
    %v2319 = vadd.f32 %v2317, %v2318
    %v2320 = vrot.slane %v2319, 2
    %v2321 = vadd.f32 %v2319, %v2320
    %v2322 = vrot.slane %v2321, 1
    %v2323 = vadd.f32 %v2321, %v2322
    %v2324 = vadd.f32 %v2191, %v2193
    %v2325 = vrot.slane %v2324, 4
    %v2326 = vadd.f32 %v2324, %v2325
    %v2327 = vrot.slane %v2326, 2
    %v2328 = vadd.f32 %v2326, %v2327
    %v2329 = vrot.slane %v2328, 1
    %v2330 = vadd.f32 %v2328, %v2329
    %v2331 = vadd.f32 %v2195, %v2197
    %v2332 = vrot.slane %v2331, 4
    %v2333 = vadd.f32 %v2331, %v2332
    %v2334 = vrot.slane %v2333, 2
    %v2335 = vadd.f32 %v2333, %v2334
    %v2336 = vrot.slane %v2335, 1
    %v2337 = vadd.f32 %v2335, %v2336
    %v2338 = vadd.f32 %v2199, %v2201
    %v2339 = vrot.slane %v2338, 4
    %v2340 = vadd.f32 %v2338, %v2339
    %v2341 = vrot.slane %v2340, 2
    %v2342 = vadd.f32 %v2340, %v2341
    %v2343 = vrot.slane %v2342, 1
    %v2344 = vadd.f32 %v2342, %v2343
    %v2345 = vadd.f32 %v2203, %v2205
    %v2346 = vrot.slane %v2345, 4
    %v2347 = vadd.f32 %v2345, %v2346
    %v2348 = vrot.slane %v2347, 2
    %v2349 = vadd.f32 %v2347, %v2348
    %v2350 = vrot.slane %v2349, 1
    %v2351 = vadd.f32 %v2349, %v2350
    %v2352 = vadd.f32 %v2207, %v2209
    %v2353 = vrot.slane %v2352, 4
    %v2354 = vadd.f32 %v2352, %v2353
    %v2355 = vrot.slane %v2354, 2
    %v2356 = vadd.f32 %v2354, %v2355
    %v2357 = vrot.slane %v2356, 1
    %v2358 = vadd.f32 %v2356, %v2357
    %v2359 = vadd.f32 %v2211, %v2213
    %v2360 = vrot.slane %v2359, 4
    %v2361 = vadd.f32 %v2359, %v2360
    %v2362 = vrot.slane %v2361, 2
    %v2363 = vadd.f32 %v2361, %v2362
    %v2364 = vrot.slane %v2363, 1
    %v2365 = vadd.f32 %v2363, %v2364
    %v2366 = vadd.f32 %v2215, %v2217
    %v2367 = vrot.slane %v2366, 4
    %v2368 = vadd.f32 %v2366, %v2367
    %v2369 = vrot.slane %v2368, 2
    %v2370 = vadd.f32 %v2368, %v2369
    %v2371 = vrot.slane %v2370, 1
    %v2372 = vadd.f32 %v2370, %v2371
    %v2373 = vadd.f32 %v2219, %v2221
    %v2374 = vrot.slane %v2373, 4
    %v2375 = vadd.f32 %v2373, %v2374
    %v2376 = vrot.slane %v2375, 2
    %v2377 = vadd.f32 %v2375, %v2376
    %v2378 = vrot.slane %v2377, 1
    %v2379 = vadd.f32 %v2377, %v2378
    %v2380 = vadd.f32 %v2223, %v2225
    %v2381 = vrot.slane %v2380, 4
    %v2382 = vadd.f32 %v2380, %v2381
    %v2383 = vrot.slane %v2382, 2
    %v2384 = vadd.f32 %v2382, %v2383
    %v2385 = vrot.slane %v2384, 1
    %v2386 = vadd.f32 %v2384, %v2385
    %v2387 = vadd.f32 %v2227, %v2229
    %v2388 = vrot.slane %v2387, 4
    %v2389 = vadd.f32 %v2387, %v2388
    %v2390 = vrot.slane %v2389, 2
    %v2391 = vadd.f32 %v2389, %v2390
    %v2392 = vrot.slane %v2391, 1
    %v2393 = vadd.f32 %v2391, %v2392
    %v2394 = vadd.f32 %v2231, %v2233
    %v2395 = vrot.slane %v2394, 4
    %v2396 = vadd.f32 %v2394, %v2395
    %v2397 = vrot.slane %v2396, 2
    %v2398 = vadd.f32 %v2396, %v2397
    %v2399 = vrot.slane %v2398, 1
    %v2400 = vadd.f32 %v2398, %v2399
    %v2401 = vadd.f32 %v2235, %v2237
    %v2402 = vrot.slane %v2401, 4
    %v2403 = vadd.f32 %v2401, %v2402
    %v2404 = vrot.slane %v2403, 2
    %v2405 = vadd.f32 %v2403, %v2404
    %v2406 = vrot.slane %v2405, 1
    %v2407 = vadd.f32 %v2405, %v2406
    %v2408 = vadd.f32 %v2239, %v2241
    %v2409 = vrot.slane %v2408, 4
    %v2410 = vadd.f32 %v2408, %v2409
    %v2411 = vrot.slane %v2410, 2
    %v2412 = vadd.f32 %v2410, %v2411
    %v2413 = vrot.slane %v2412, 1
    %v2414 = vadd.f32 %v2412, %v2413
    %v2415 = vadd.f32 %v2243, %v2245
    %v2416 = vrot.slane %v2415, 4
    %v2417 = vadd.f32 %v2415, %v2416
    %v2418 = vrot.slane %v2417, 2
    %v2419 = vadd.f32 %v2417, %v2418
    %v2420 = vrot.slane %v2419, 1
    %v2421 = vadd.f32 %v2419, %v2420
    %v2422 = vadd.f32 %v2247, %v2249
    %v2423 = vrot.slane %v2422, 4
    %v2424 = vadd.f32 %v2422, %v2423
    %v2425 = vrot.slane %v2424, 2
    %v2426 = vadd.f32 %v2424, %v2425
    %v2427 = vrot.slane %v2426, 1
    %v2428 = vadd.f32 %v2426, %v2427
    %v2429 = vadd.f32 %v2251, %v2253
    %v2430 = vrot.slane %v2429, 4
    %v2431 = vadd.f32 %v2429, %v2430
    %v2432 = vrot.slane %v2431, 2
    %v2433 = vadd.f32 %v2431, %v2432
    %v2434 = vrot.slane %v2433, 1
    %v2435 = vadd.f32 %v2433, %v2434
    %v2436 = vadd.f32 %v2255, %v2257
    %v2437 = vrot.slane %v2436, 4
    %v2438 = vadd.f32 %v2436, %v2437
    %v2439 = vrot.slane %v2438, 2
    %v2440 = vadd.f32 %v2438, %v2439
    %v2441 = vrot.slane %v2440, 1
    %v2442 = vadd.f32 %v2440, %v2441
    %v2443 = vadd.f32 %v2259, %v2261
    %v2444 = vrot.slane %v2443, 4
    %v2445 = vadd.f32 %v2443, %v2444
    %v2446 = vrot.slane %v2445, 2
    %v2447 = vadd.f32 %v2445, %v2446
    %v2448 = vrot.slane %v2447, 1
    %v2449 = vadd.f32 %v2447, %v2448
    %v2450 = vadd.f32 %v2263, %v2265
    %v2451 = vrot.slane %v2450, 4
    %v2452 = vadd.f32 %v2450, %v2451
    %v2453 = vrot.slane %v2452, 2
    %v2454 = vadd.f32 %v2452, %v2453
    %v2455 = vrot.slane %v2454, 1
    %v2456 = vadd.f32 %v2454, %v2455
    %v2457 = vadd.f32 %v2267, %v2269
    %v2458 = vrot.slane %v2457, 4
    %v2459 = vadd.f32 %v2457, %v2458
    %v2460 = vrot.slane %v2459, 2
    %v2461 = vadd.f32 %v2459, %v2460
    %v2462 = vrot.slane %v2461, 1
    %v2463 = vadd.f32 %v2461, %v2462
    %v2464 = vadd.f32 %v2271, %v2273
    %v2465 = vrot.slane %v2464, 4
    %v2466 = vadd.f32 %v2464, %v2465
    %v2467 = vrot.slane %v2466, 2
    %v2468 = vadd.f32 %v2466, %v2467
    %v2469 = vrot.slane %v2468, 1
    %v2470 = vadd.f32 %v2468, %v2469
    %v2471 = vadd.f32 %v2275, %v2277
    %v2472 = vrot.slane %v2471, 4
    %v2473 = vadd.f32 %v2471, %v2472
    %v2474 = vrot.slane %v2473, 2
    %v2475 = vadd.f32 %v2473, %v2474
    %v2476 = vrot.slane %v2475, 1
    %v2477 = vadd.f32 %v2475, %v2476
    %v2478 = vadd.f32 %v2279, %v2281
    %v2479 = vrot.slane %v2478, 4
    %v2480 = vadd.f32 %v2478, %v2479
    %v2481 = vrot.slane %v2480, 2
    %v2482 = vadd.f32 %v2480, %v2481
    %v2483 = vrot.slane %v2482, 1
    %v2484 = vadd.f32 %v2482, %v2483
    %v2485 = vadd.f32 %v2283, %v2285
    %v2486 = vrot.slane %v2485, 4
    %v2487 = vadd.f32 %v2485, %v2486
    %v2488 = vrot.slane %v2487, 2
    %v2489 = vadd.f32 %v2487, %v2488
    %v2490 = vrot.slane %v2489, 1
    %v2491 = vadd.f32 %v2489, %v2490
    %v2492 = vadd.f32 %v2287, %v2289
    %v2493 = vrot.slane %v2492, 4
    %v2494 = vadd.f32 %v2492, %v2493
    %v2495 = vrot.slane %v2494, 2
    %v2496 = vadd.f32 %v2494, %v2495
    %v2497 = vrot.slane %v2496, 1
    %v2498 = vadd.f32 %v2496, %v2497
    %v2499 = vadd.f32 %v2291, %v2293
    %v2500 = vrot.slane %v2499, 4
    %v2501 = vadd.f32 %v2499, %v2500
    %v2502 = vrot.slane %v2501, 2
    %v2503 = vadd.f32 %v2501, %v2502
    %v2504 = vrot.slane %v2503, 1
    %v2505 = vadd.f32 %v2503, %v2504
    %v2506 = vadd.f32 %v2295, %v2297
    %v2507 = vrot.slane %v2506, 4
    %v2508 = vadd.f32 %v2506, %v2507
    %v2509 = vrot.slane %v2508, 2
    %v2510 = vadd.f32 %v2508, %v2509
    %v2511 = vrot.slane %v2510, 1
    %v2512 = vadd.f32 %v2510, %v2511
    %v2513 = vadd.f32 %v2299, %v2301
    %v2514 = vrot.slane %v2513, 4
    %v2515 = vadd.f32 %v2513, %v2514
    %v2516 = vrot.slane %v2515, 2
    %v2517 = vadd.f32 %v2515, %v2516
    %v2518 = vrot.slane %v2517, 1
    %v2519 = vadd.f32 %v2517, %v2518
    %v2520 = vadd.f32 %v2303, %v2305
    %v2521 = vrot.slane %v2520, 4
    %v2522 = vadd.f32 %v2520, %v2521
    %v2523 = vrot.slane %v2522, 2
    %v2524 = vadd.f32 %v2522, %v2523
    %v2525 = vrot.slane %v2524, 1
    %v2526 = vadd.f32 %v2524, %v2525
    %v2527 = vadd.f32 %v2307, %v2309
    %v2528 = vrot.slane %v2527, 4
    %v2529 = vadd.f32 %v2527, %v2528
    %v2530 = vrot.slane %v2529, 2
    %v2531 = vadd.f32 %v2529, %v2530
    %v2532 = vrot.slane %v2531, 1
    %v2533 = vadd.f32 %v2531, %v2532
    %v2534 = vmax.f32 %v2316, 1e-20
    %v2535 = vmax.f32 %v2323, 1e-20
    %v2536 = vmax.f32 %v2330, 1e-20
    %v2537 = vmax.f32 %v2337, 1e-20
    %v2538 = vmax.f32 %v2344, 1e-20
    %v2539 = vmax.f32 %v2351, 1e-20
    %v2540 = vmax.f32 %v2358, 1e-20
    %v2541 = vmax.f32 %v2365, 1e-20
    %v2542 = vmax.f32 %v2372, 1e-20
    %v2543 = vmax.f32 %v2379, 1e-20
    %v2544 = vmax.f32 %v2386, 1e-20
    %v2545 = vmax.f32 %v2393, 1e-20
    %v2546 = vmax.f32 %v2400, 1e-20
    %v2547 = vmax.f32 %v2407, 1e-20
    %v2548 = vmax.f32 %v2414, 1e-20
    %v2549 = vmax.f32 %v2421, 1e-20
    %v2550 = vmax.f32 %v2428, 1e-20
    %v2551 = vmax.f32 %v2435, 1e-20
    %v2552 = vmax.f32 %v2442, 1e-20
    %v2553 = vmax.f32 %v2449, 1e-20
    %v2554 = vmax.f32 %v2456, 1e-20
    %v2555 = vmax.f32 %v2463, 1e-20
    %v2556 = vmax.f32 %v2470, 1e-20
    %v2557 = vmax.f32 %v2477, 1e-20
    %v2558 = vmax.f32 %v2484, 1e-20
    %v2559 = vmax.f32 %v2491, 1e-20
    %v2560 = vmax.f32 %v2498, 1e-20
    %v2561 = vmax.f32 %v2505, 1e-20
    %v2562 = vmax.f32 %v2512, 1e-20
    %v2563 = vmax.f32 %v2519, 1e-20
    %v2564 = vmax.f32 %v2526, 1e-20
    %v2565 = vmax.f32 %v2533, 1e-20
    %v2566 = vrcp.pop %v2534
    %v2567 = vrcp.pop %v2535
    %v2568 = vrcp.pop %v2536
    %v2569 = vrcp.pop %v2537
    %v2570 = vrcp.pop %v2538
    %v2571 = vrcp.pop %v2539
    %v2572 = vrcp.pop %v2540
    %v2573 = vrcp.pop %v2541
    %v2574 = vrcp.pop %v2542
    %v2575 = vrcp.pop %v2543
    %v2576 = vrcp.pop %v2544
    %v2577 = vrcp.pop %v2545
    %v2578 = vrcp.pop %v2546
    %v2579 = vrcp.pop %v2547
    %v2580 = vrcp.pop %v2548
    %v2581 = vrcp.pop %v2549
    %v2582 = vrcp.pop %v2550
    %v2583 = vrcp.pop %v2551
    %v2584 = vrcp.pop %v2552
    %v2585 = vrcp.pop %v2553
    %v2586 = vrcp.pop %v2554
    %v2587 = vrcp.pop %v2555
    %v2588 = vrcp.pop %v2556
    %v2589 = vrcp.pop %v2557
    %v2590 = vrcp.pop %v2558
    %v2591 = vrcp.pop %v2559
    %v2592 = vrcp.pop %v2560
    %v2593 = vrcp.pop %v2561
    %v2594 = vrcp.pop %v2562
    %v2595 = vrcp.pop %v2563
    %v2596 = vrcp.pop %v2564
    %v2597 = vrcp.pop %v2565
    %v2598 = vmul.f32 %v2183, %v2566
    %v2599 = vmul.f32 %v2185, %v2566
    %v2600 = vmul.f32 %v2187, %v2567
    %v2601 = vmul.f32 %v2189, %v2567
    %v2602 = vmul.f32 %v2191, %v2568
    %v2603 = vmul.f32 %v2193, %v2568
    %v2604 = vmul.f32 %v2195, %v2569
    %v2605 = vmul.f32 %v2197, %v2569
    %v2606 = vmul.f32 %v2199, %v2570
    %v2607 = vmul.f32 %v2201, %v2570
    %v2608 = vmul.f32 %v2203, %v2571
    %v2609 = vmul.f32 %v2205, %v2571
    %v2610 = vmul.f32 %v2207, %v2572
    %v2611 = vmul.f32 %v2209, %v2572
    %v2612 = vmul.f32 %v2211, %v2573
    %v2613 = vmul.f32 %v2213, %v2573
    %v2614 = vmul.f32 %v2215, %v2574
    %v2615 = vmul.f32 %v2217, %v2574
    %v2616 = vmul.f32 %v2219, %v2575
    %v2617 = vmul.f32 %v2221, %v2575
    %v2618 = vmul.f32 %v2223, %v2576
    %v2619 = vmul.f32 %v2225, %v2576
    %v2620 = vmul.f32 %v2227, %v2577
    %v2621 = vmul.f32 %v2229, %v2577
    %v2622 = vmul.f32 %v2231, %v2578
    %v2623 = vmul.f32 %v2233, %v2578
    %v2624 = vmul.f32 %v2235, %v2579
    %v2625 = vmul.f32 %v2237, %v2579
    %v2626 = vmul.f32 %v2239, %v2580
    %v2627 = vmul.f32 %v2241, %v2580
    %v2628 = vmul.f32 %v2243, %v2581
    %v2629 = vmul.f32 %v2245, %v2581
    %v2630 = vmul.f32 %v2247, %v2582
    %v2631 = vmul.f32 %v2249, %v2582
    %v2632 = vmul.f32 %v2251, %v2583
    %v2633 = vmul.f32 %v2253, %v2583
    %v2634 = vmul.f32 %v2255, %v2584
    %v2635 = vmul.f32 %v2257, %v2584
    %v2636 = vmul.f32 %v2259, %v2585
    %v2637 = vmul.f32 %v2261, %v2585
    %v2638 = vmul.f32 %v2263, %v2586
    %v2639 = vmul.f32 %v2265, %v2586
    %v2640 = vmul.f32 %v2267, %v2587
    %v2641 = vmul.f32 %v2269, %v2587
    %v2642 = vmul.f32 %v2271, %v2588
    %v2643 = vmul.f32 %v2273, %v2588
    %v2644 = vmul.f32 %v2275, %v2589
    %v2645 = vmul.f32 %v2277, %v2589
    %v2646 = vmul.f32 %v2279, %v2590
    %v2647 = vmul.f32 %v2281, %v2590
    %v2648 = vmul.f32 %v2283, %v2591
    %v2649 = vmul.f32 %v2285, %v2591
    %v2650 = vmul.f32 %v2287, %v2592
    %v2651 = vmul.f32 %v2289, %v2592
    %v2652 = vmul.f32 %v2291, %v2593
    %v2653 = vmul.f32 %v2293, %v2593
    %v2654 = vmul.f32 %v2295, %v2594
    %v2655 = vmul.f32 %v2297, %v2594
    %v2656 = vmul.f32 %v2299, %v2595
    %v2657 = vmul.f32 %v2301, %v2595
    %v2658 = vmul.f32 %v2303, %v2596
    %v2659 = vmul.f32 %v2305, %v2596
    %v2660 = vmul.f32 %v2307, %v2597
    %v2661 = vmul.f32 %v2309, %v2597
    %v2662 = vmul.f32 %v2598, %v1113
    %v2663 = vmul.f32 %v2599, %v1114
    %v2664 = vmul.f32 %v2600, %v1113
    %v2665 = vmul.f32 %v2601, %v1114
    %v2666 = vmul.f32 %v2602, %v1113
    %v2667 = vmul.f32 %v2603, %v1114
    %v2668 = vmul.f32 %v2604, %v1113
    %v2669 = vmul.f32 %v2605, %v1114
    %v2670 = vmul.f32 %v2606, %v1113
    %v2671 = vmul.f32 %v2607, %v1114
    %v2672 = vmul.f32 %v2608, %v1113
    %v2673 = vmul.f32 %v2609, %v1114
    %v2674 = vmul.f32 %v2610, %v1113
    %v2675 = vmul.f32 %v2611, %v1114
    %v2676 = vmul.f32 %v2612, %v1113
    %v2677 = vmul.f32 %v2613, %v1114
    %v2678 = vmul.f32 %v2614, %v1113
    %v2679 = vmul.f32 %v2615, %v1114
    %v2680 = vmul.f32 %v2616, %v1113
    %v2681 = vmul.f32 %v2617, %v1114
    %v2682 = vmul.f32 %v2618, %v1113
    %v2683 = vmul.f32 %v2619, %v1114
    %v2684 = vmul.f32 %v2620, %v1113
    %v2685 = vmul.f32 %v2621, %v1114
    %v2686 = vmul.f32 %v2622, %v1113
    %v2687 = vmul.f32 %v2623, %v1114
    %v2688 = vmul.f32 %v2624, %v1113
    %v2689 = vmul.f32 %v2625, %v1114
    %v2690 = vmul.f32 %v2626, %v1113
    %v2691 = vmul.f32 %v2627, %v1114
    %v2692 = vmul.f32 %v2628, %v1113
    %v2693 = vmul.f32 %v2629, %v1114
    %v2694 = vmul.f32 %v2630, %v1115
    %v2695 = vmul.f32 %v2631, %v1116
    %v2696 = vmul.f32 %v2632, %v1115
    %v2697 = vmul.f32 %v2633, %v1116
    %v2698 = vmul.f32 %v2634, %v1115
    %v2699 = vmul.f32 %v2635, %v1116
    %v2700 = vmul.f32 %v2636, %v1115
    %v2701 = vmul.f32 %v2637, %v1116
    %v2702 = vmul.f32 %v2638, %v1115
    %v2703 = vmul.f32 %v2639, %v1116
    %v2704 = vmul.f32 %v2640, %v1115
    %v2705 = vmul.f32 %v2641, %v1116
    %v2706 = vmul.f32 %v2642, %v1115
    %v2707 = vmul.f32 %v2643, %v1116
    %v2708 = vmul.f32 %v2644, %v1115
    %v2709 = vmul.f32 %v2645, %v1116
    %v2710 = vmul.f32 %v2646, %v1115
    %v2711 = vmul.f32 %v2647, %v1116
    %v2712 = vmul.f32 %v2648, %v1115
    %v2713 = vmul.f32 %v2649, %v1116
    %v2714 = vmul.f32 %v2650, %v1115
    %v2715 = vmul.f32 %v2651, %v1116
    %v2716 = vmul.f32 %v2652, %v1115
    %v2717 = vmul.f32 %v2653, %v1116
    %v2718 = vmul.f32 %v2654, %v1115
    %v2719 = vmul.f32 %v2655, %v1116
    %v2720 = vmul.f32 %v2656, %v1115
    %v2721 = vmul.f32 %v2657, %v1116
    %v2722 = vmul.f32 %v2658, %v1115
    %v2723 = vmul.f32 %v2659, %v1116
    %v2724 = vmul.f32 %v2660, %v1115
    %v2725 = vmul.f32 %v2661, %v1116
    %v2726 = vadd.f32 %v2662, %v2663
    %v2727 = vrot.slane %v2726, 4
    %v2728 = vadd.f32 %v2726, %v2727
    %v2729 = vrot.slane %v2728, 2
    %v2730 = vadd.f32 %v2728, %v2729
    %v2731 = vrot.slane %v2730, 1
    %v2732 = vadd.f32 %v2730, %v2731
    %v2733 = vadd.f32 %v2664, %v2665
    %v2734 = vrot.slane %v2733, 4
    %v2735 = vadd.f32 %v2733, %v2734
    %v2736 = vrot.slane %v2735, 2
    %v2737 = vadd.f32 %v2735, %v2736
    %v2738 = vrot.slane %v2737, 1
    %v2739 = vadd.f32 %v2737, %v2738
    %v2740 = vadd.f32 %v2666, %v2667
    %v2741 = vrot.slane %v2740, 4
    %v2742 = vadd.f32 %v2740, %v2741
    %v2743 = vrot.slane %v2742, 2
    %v2744 = vadd.f32 %v2742, %v2743
    %v2745 = vrot.slane %v2744, 1
    %v2746 = vadd.f32 %v2744, %v2745
    %v2747 = vadd.f32 %v2668, %v2669
    %v2748 = vrot.slane %v2747, 4
    %v2749 = vadd.f32 %v2747, %v2748
    %v2750 = vrot.slane %v2749, 2
    %v2751 = vadd.f32 %v2749, %v2750
    %v2752 = vrot.slane %v2751, 1
    %v2753 = vadd.f32 %v2751, %v2752
    %v2754 = vadd.f32 %v2670, %v2671
    %v2755 = vrot.slane %v2754, 4
    %v2756 = vadd.f32 %v2754, %v2755
    %v2757 = vrot.slane %v2756, 2
    %v2758 = vadd.f32 %v2756, %v2757
    %v2759 = vrot.slane %v2758, 1
    %v2760 = vadd.f32 %v2758, %v2759
    %v2761 = vadd.f32 %v2672, %v2673
    %v2762 = vrot.slane %v2761, 4
    %v2763 = vadd.f32 %v2761, %v2762
    %v2764 = vrot.slane %v2763, 2
    %v2765 = vadd.f32 %v2763, %v2764
    %v2766 = vrot.slane %v2765, 1
    %v2767 = vadd.f32 %v2765, %v2766
    %v2768 = vadd.f32 %v2674, %v2675
    %v2769 = vrot.slane %v2768, 4
    %v2770 = vadd.f32 %v2768, %v2769
    %v2771 = vrot.slane %v2770, 2
    %v2772 = vadd.f32 %v2770, %v2771
    %v2773 = vrot.slane %v2772, 1
    %v2774 = vadd.f32 %v2772, %v2773
    %v2775 = vadd.f32 %v2676, %v2677
    %v2776 = vrot.slane %v2775, 4
    %v2777 = vadd.f32 %v2775, %v2776
    %v2778 = vrot.slane %v2777, 2
    %v2779 = vadd.f32 %v2777, %v2778
    %v2780 = vrot.slane %v2779, 1
    %v2781 = vadd.f32 %v2779, %v2780
    %v2782 = vadd.f32 %v2678, %v2679
    %v2783 = vrot.slane %v2782, 4
    %v2784 = vadd.f32 %v2782, %v2783
    %v2785 = vrot.slane %v2784, 2
    %v2786 = vadd.f32 %v2784, %v2785
    %v2787 = vrot.slane %v2786, 1
    %v2788 = vadd.f32 %v2786, %v2787
    %v2789 = vadd.f32 %v2680, %v2681
    %v2790 = vrot.slane %v2789, 4
    %v2791 = vadd.f32 %v2789, %v2790
    %v2792 = vrot.slane %v2791, 2
    %v2793 = vadd.f32 %v2791, %v2792
    %v2794 = vrot.slane %v2793, 1
    %v2795 = vadd.f32 %v2793, %v2794
    %v2796 = vadd.f32 %v2682, %v2683
    %v2797 = vrot.slane %v2796, 4
    %v2798 = vadd.f32 %v2796, %v2797
    %v2799 = vrot.slane %v2798, 2
    %v2800 = vadd.f32 %v2798, %v2799
    %v2801 = vrot.slane %v2800, 1
    %v2802 = vadd.f32 %v2800, %v2801
    %v2803 = vadd.f32 %v2684, %v2685
    %v2804 = vrot.slane %v2803, 4
    %v2805 = vadd.f32 %v2803, %v2804
    %v2806 = vrot.slane %v2805, 2
    %v2807 = vadd.f32 %v2805, %v2806
    %v2808 = vrot.slane %v2807, 1
    %v2809 = vadd.f32 %v2807, %v2808
    %v2810 = vadd.f32 %v2686, %v2687
    %v2811 = vrot.slane %v2810, 4
    %v2812 = vadd.f32 %v2810, %v2811
    %v2813 = vrot.slane %v2812, 2
    %v2814 = vadd.f32 %v2812, %v2813
    %v2815 = vrot.slane %v2814, 1
    %v2816 = vadd.f32 %v2814, %v2815
    %v2817 = vadd.f32 %v2688, %v2689
    %v2818 = vrot.slane %v2817, 4
    %v2819 = vadd.f32 %v2817, %v2818
    %v2820 = vrot.slane %v2819, 2
    %v2821 = vadd.f32 %v2819, %v2820
    %v2822 = vrot.slane %v2821, 1
    %v2823 = vadd.f32 %v2821, %v2822
    %v2824 = vadd.f32 %v2690, %v2691
    %v2825 = vrot.slane %v2824, 4
    %v2826 = vadd.f32 %v2824, %v2825
    %v2827 = vrot.slane %v2826, 2
    %v2828 = vadd.f32 %v2826, %v2827
    %v2829 = vrot.slane %v2828, 1
    %v2830 = vadd.f32 %v2828, %v2829
    %v2831 = vadd.f32 %v2692, %v2693
    %v2832 = vrot.slane %v2831, 4
    %v2833 = vadd.f32 %v2831, %v2832
    %v2834 = vrot.slane %v2833, 2
    %v2835 = vadd.f32 %v2833, %v2834
    %v2836 = vrot.slane %v2835, 1
    %v2837 = vadd.f32 %v2835, %v2836
    %v2838 = vadd.f32 %v2694, %v2695
    %v2839 = vrot.slane %v2838, 4
    %v2840 = vadd.f32 %v2838, %v2839
    %v2841 = vrot.slane %v2840, 2
    %v2842 = vadd.f32 %v2840, %v2841
    %v2843 = vrot.slane %v2842, 1
    %v2844 = vadd.f32 %v2842, %v2843
    %v2845 = vadd.f32 %v2696, %v2697
    %v2846 = vrot.slane %v2845, 4
    %v2847 = vadd.f32 %v2845, %v2846
    %v2848 = vrot.slane %v2847, 2
    %v2849 = vadd.f32 %v2847, %v2848
    %v2850 = vrot.slane %v2849, 1
    %v2851 = vadd.f32 %v2849, %v2850
    %v2852 = vadd.f32 %v2698, %v2699
    %v2853 = vrot.slane %v2852, 4
    %v2854 = vadd.f32 %v2852, %v2853
    %v2855 = vrot.slane %v2854, 2
    %v2856 = vadd.f32 %v2854, %v2855
    %v2857 = vrot.slane %v2856, 1
    %v2858 = vadd.f32 %v2856, %v2857
    %v2859 = vadd.f32 %v2700, %v2701
    %v2860 = vrot.slane %v2859, 4
    %v2861 = vadd.f32 %v2859, %v2860
    %v2862 = vrot.slane %v2861, 2
    %v2863 = vadd.f32 %v2861, %v2862
    %v2864 = vrot.slane %v2863, 1
    %v2865 = vadd.f32 %v2863, %v2864
    %v2866 = vadd.f32 %v2702, %v2703
    %v2867 = vrot.slane %v2866, 4
    %v2868 = vadd.f32 %v2866, %v2867
    %v2869 = vrot.slane %v2868, 2
    %v2870 = vadd.f32 %v2868, %v2869
    %v2871 = vrot.slane %v2870, 1
    %v2872 = vadd.f32 %v2870, %v2871
    %v2873 = vadd.f32 %v2704, %v2705
    %v2874 = vrot.slane %v2873, 4
    %v2875 = vadd.f32 %v2873, %v2874
    %v2876 = vrot.slane %v2875, 2
    %v2877 = vadd.f32 %v2875, %v2876
    %v2878 = vrot.slane %v2877, 1
    %v2879 = vadd.f32 %v2877, %v2878
    %v2880 = vadd.f32 %v2706, %v2707
    %v2881 = vrot.slane %v2880, 4
    %v2882 = vadd.f32 %v2880, %v2881
    %v2883 = vrot.slane %v2882, 2
    %v2884 = vadd.f32 %v2882, %v2883
    %v2885 = vrot.slane %v2884, 1
    %v2886 = vadd.f32 %v2884, %v2885
    %v2887 = vadd.f32 %v2708, %v2709
    %v2888 = vrot.slane %v2887, 4
    %v2889 = vadd.f32 %v2887, %v2888
    %v2890 = vrot.slane %v2889, 2
    %v2891 = vadd.f32 %v2889, %v2890
    %v2892 = vrot.slane %v2891, 1
    %v2893 = vadd.f32 %v2891, %v2892
    %v2894 = vadd.f32 %v2710, %v2711
    %v2895 = vrot.slane %v2894, 4
    %v2896 = vadd.f32 %v2894, %v2895
    %v2897 = vrot.slane %v2896, 2
    %v2898 = vadd.f32 %v2896, %v2897
    %v2899 = vrot.slane %v2898, 1
    %v2900 = vadd.f32 %v2898, %v2899
    %v2901 = vadd.f32 %v2712, %v2713
    %v2902 = vrot.slane %v2901, 4
    %v2903 = vadd.f32 %v2901, %v2902
    %v2904 = vrot.slane %v2903, 2
    %v2905 = vadd.f32 %v2903, %v2904
    %v2906 = vrot.slane %v2905, 1
    %v2907 = vadd.f32 %v2905, %v2906
    %v2908 = vadd.f32 %v2714, %v2715
    %v2909 = vrot.slane %v2908, 4
    %v2910 = vadd.f32 %v2908, %v2909
    %v2911 = vrot.slane %v2910, 2
    %v2912 = vadd.f32 %v2910, %v2911
    %v2913 = vrot.slane %v2912, 1
    %v2914 = vadd.f32 %v2912, %v2913
    %v2915 = vadd.f32 %v2716, %v2717
    %v2916 = vrot.slane %v2915, 4
    %v2917 = vadd.f32 %v2915, %v2916
    %v2918 = vrot.slane %v2917, 2
    %v2919 = vadd.f32 %v2917, %v2918
    %v2920 = vrot.slane %v2919, 1
    %v2921 = vadd.f32 %v2919, %v2920
    %v2922 = vadd.f32 %v2718, %v2719
    %v2923 = vrot.slane %v2922, 4
    %v2924 = vadd.f32 %v2922, %v2923
    %v2925 = vrot.slane %v2924, 2
    %v2926 = vadd.f32 %v2924, %v2925
    %v2927 = vrot.slane %v2926, 1
    %v2928 = vadd.f32 %v2926, %v2927
    %v2929 = vadd.f32 %v2720, %v2721
    %v2930 = vrot.slane %v2929, 4
    %v2931 = vadd.f32 %v2929, %v2930
    %v2932 = vrot.slane %v2931, 2
    %v2933 = vadd.f32 %v2931, %v2932
    %v2934 = vrot.slane %v2933, 1
    %v2935 = vadd.f32 %v2933, %v2934
    %v2936 = vadd.f32 %v2722, %v2723
    %v2937 = vrot.slane %v2936, 4
    %v2938 = vadd.f32 %v2936, %v2937
    %v2939 = vrot.slane %v2938, 2
    %v2940 = vadd.f32 %v2938, %v2939
    %v2941 = vrot.slane %v2940, 1
    %v2942 = vadd.f32 %v2940, %v2941
    %v2943 = vadd.f32 %v2724, %v2725
    %v2944 = vrot.slane %v2943, 4
    %v2945 = vadd.f32 %v2943, %v2944
    %v2946 = vrot.slane %v2945, 2
    %v2947 = vadd.f32 %v2945, %v2946
    %v2948 = vrot.slane %v2947, 1
    %v2949 = vadd.f32 %v2947, %v2948
    %v2950 = vld [vmem:[#allocation4 + $0x6] sm:$0x1]
    %v2951 = vperm.slane %v2950, 0
    %v2952 = vmul.f32 %v2732, %v2951
    %v2953 = vmul.f32 %v2739, %v2951
    %v2954 = vmul.f32 %v2746, %v2951
    %v2955 = vmul.f32 %v2753, %v2951
    %v2956 = vmul.f32 %v2760, %v2951
    %v2957 = vmul.f32 %v2767, %v2951
    %v2958 = vmul.f32 %v2774, %v2951
    %v2959 = vmul.f32 %v2781, %v2951
    %v2960 = vmul.f32 %v2788, %v2951
    %v2961 = vmul.f32 %v2795, %v2951
    %v2962 = vmul.f32 %v2802, %v2951
    %v2963 = vmul.f32 %v2809, %v2951
    %v2964 = vmul.f32 %v2816, %v2951
    %v2965 = vmul.f32 %v2823, %v2951
    %v2966 = vmul.f32 %v2830, %v2951
    %v2967 = vmul.f32 %v2837, %v2951
    %v2968 = vmul.f32 %v2844, %v2951
    %v2969 = vmul.f32 %v2851, %v2951
    %v2970 = vmul.f32 %v2858, %v2951
    %v2971 = vmul.f32 %v2865, %v2951
    %v2972 = vmul.f32 %v2872, %v2951
    %v2973 = vmul.f32 %v2879, %v2951
    %v2974 = vmul.f32 %v2886, %v2951
    %v2975 = vmul.f32 %v2893, %v2951
    %v2976 = vmul.f32 %v2900, %v2951
    %v2977 = vmul.f32 %v2907, %v2951
    %v2978 = vmul.f32 %v2914, %v2951
    %v2979 = vmul.f32 %v2921, %v2951
    %v2980 = vmul.f32 %v2928, %v2951
    %v2981 = vmul.f32 %v2935, %v2951
    %v2982 = vmul.f32 %v2942, %v2951
    %v2983 = vmul.f32 %v2949, %v2951
    %v2984 = vld [vmem:[#allocation4 + $0x7] sm:$0x1]
    %v2985 = vperm.slane %v2984, 0
    %v2986 = vadd.f32 %v2952, %v2985
    %v2987 = vadd.f32 %v2953, %v2985
    %v2988 = vadd.f32 %v2954, %v2985
    %v2989 = vadd.f32 %v2955, %v2985
    %v2990 = vadd.f32 %v2956, %v2985
    %v2991 = vadd.f32 %v2957, %v2985
    %v2992 = vadd.f32 %v2958, %v2985
    %v2993 = vadd.f32 %v2959, %v2985
    %v2994 = vadd.f32 %v2960, %v2985
    %v2995 = vadd.f32 %v2961, %v2985
    %v2996 = vadd.f32 %v2962, %v2985
    %v2997 = vadd.f32 %v2963, %v2985
    %v2998 = vadd.f32 %v2964, %v2985
    %v2999 = vadd.f32 %v2965, %v2985
    %v3000 = vadd.f32 %v2966, %v2985
    %v3001 = vadd.f32 %v2967, %v2985
    %v3002 = vadd.f32 %v2968, %v2985
    %v3003 = vadd.f32 %v2969, %v2985
    %v3004 = vadd.f32 %v2970, %v2985
    %v3005 = vadd.f32 %v2971, %v2985
    %v3006 = vadd.f32 %v2972, %v2985
    %v3007 = vadd.f32 %v2973, %v2985
    %v3008 = vadd.f32 %v2974, %v2985
    %v3009 = vadd.f32 %v2975, %v2985
    %v3010 = vadd.f32 %v2976, %v2985
    %v3011 = vadd.f32 %v2977, %v2985
    %v3012 = vadd.f32 %v2978, %v2985
    %v3013 = vadd.f32 %v2979, %v2985
    %v3014 = vadd.f32 %v2980, %v2985
    %v3015 = vadd.f32 %v2981, %v2985
    %v3016 = vadd.f32 %v2982, %v2985
    %v3017 = vadd.f32 %v2983, %v2985
    %v3018 = vmax.f32 %v2986, 0.0
    %v3019 = vmax.f32 %v2987, 0.0
    %v3020 = vmax.f32 %v2988, 0.0
    %v3021 = vmax.f32 %v2989, 0.0
    %v3022 = vmax.f32 %v2990, 0.0
    %v3023 = vmax.f32 %v2991, 0.0
    %v3024 = vmax.f32 %v2992, 0.0
    %v3025 = vmax.f32 %v2993, 0.0
    %v3026 = vmax.f32 %v2994, 0.0
    %v3027 = vmax.f32 %v2995, 0.0
    %v3028 = vmax.f32 %v2996, 0.0
    %v3029 = vmax.f32 %v2997, 0.0
    %v3030 = vmax.f32 %v2998, 0.0
    %v3031 = vmax.f32 %v2999, 0.0
    %v3032 = vmax.f32 %v3000, 0.0
    %v3033 = vmax.f32 %v3001, 0.0
    %v3034 = vmax.f32 %v3002, 0.0
    %v3035 = vmax.f32 %v3003, 0.0
    %v3036 = vmax.f32 %v3004, 0.0
    %v3037 = vmax.f32 %v3005, 0.0
    %v3038 = vmax.f32 %v3006, 0.0
    %v3039 = vmax.f32 %v3007, 0.0
    %v3040 = vmax.f32 %v3008, 0.0
    %v3041 = vmax.f32 %v3009, 0.0
    %v3042 = vmax.f32 %v3010, 0.0
    %v3043 = vmax.f32 %v3011, 0.0
    %v3044 = vmax.f32 %v3012, 0.0
    %v3045 = vmax.f32 %v3013, 0.0
    %v3046 = vmax.f32 %v3014, 0.0
    %v3047 = vmax.f32 %v3015, 0.0
    %v3048 = vmax.f32 %v3016, 0.0
    %v3049 = vmax.f32 %v3017, 0.0
    %s3050 = scalar_lea.vmem [#allocation6], 256
    %v3051 = vld [vmem:[%s3050] sm:$0xff]
    %v3052 = vld [vmem:[%s3050 + $0x8] sm:$0xff]
    %v3053 = vld [vmem:[%s3050 + $0x10] sm:$0xff]
    %v3054 = vld [vmem:[%s3050 + $0x18] sm:$0xff]
    %v3055 = vld [vmem:[%s3050 + $0x20] sm:$0xff]
    %v3056 = vld [vmem:[%s3050 + $0x28] sm:$0xff]
    %v3057 = vld [vmem:[%s3050 + $0x30] sm:$0xff]
    %v3058 = vld [vmem:[%s3050 + $0x38] sm:$0xff]
    %v3059 = vld [vmem:[%s3050 + $0x40] sm:$0xff]
    %v3060 = vld [vmem:[%s3050 + $0x48] sm:$0xff]
    %v3061 = vld [vmem:[%s3050 + $0x50] sm:$0xff]
    %v3062 = vld [vmem:[%s3050 + $0x58] sm:$0xff]
    %v3063 = vld [vmem:[%s3050 + $0x60] sm:$0xff]
    %v3064 = vld [vmem:[%s3050 + $0x68] sm:$0xff]
    %v3065 = vld [vmem:[%s3050 + $0x70] sm:$0xff]
    %v3066 = vld [vmem:[%s3050 + $0x78] sm:$0xff]
    %v3067 = vld [vmem:[%s3050 + $0x80] sm:$0xff]
    %v3068 = vld [vmem:[%s3050 + $0x88] sm:$0xff]
    %v3069 = vld [vmem:[%s3050 + $0x90] sm:$0xff]
    %v3070 = vld [vmem:[%s3050 + $0x98] sm:$0xff]
    %v3071 = vld [vmem:[%s3050 + $0xa0] sm:$0xff]
    %v3072 = vld [vmem:[%s3050 + $0xa8] sm:$0xff]
    %v3073 = vld [vmem:[%s3050 + $0xb0] sm:$0xff]
    %v3074 = vld [vmem:[%s3050 + $0xb8] sm:$0xff]
    %v3075 = vld [vmem:[%s3050 + $0xc0] sm:$0xff]
    %v3076 = vld [vmem:[%s3050 + $0xc8] sm:$0xff]
    %v3077 = vld [vmem:[%s3050 + $0xd0] sm:$0xff]
    %v3078 = vld [vmem:[%s3050 + $0xd8] sm:$0xff]
    %v3079 = vld [vmem:[%s3050 + $0xe0] sm:$0xff]
    %v3080 = vld [vmem:[%s3050 + $0xe8] sm:$0xff]
    %v3081 = vld [vmem:[%s3050 + $0xf0] sm:$0xff]
    %v3082 = vld [vmem:[%s3050 + $0xf8] sm:$0xff]
    %v3115 = vrot.slane %v3019, 7
    %vm3116 = vcmask 1041409
    %v3117 = vsel %vm3116, %v3115, %v3018
    %v3118 = vrot.slane %v3020, 6
    %vm3119 = vcmask 1042434
    %v3120 = vsel %vm3119, %v3118, %v3117
    %v3121 = vrot.slane %v3021, 5
    %vm3122 = vcmask 1043459
    %v3123 = vsel %vm3122, %v3121, %v3120
    %v3124 = vrot.slane %v3022, 4
    %vm3125 = vcmask 1044484
    %v3126 = vsel %vm3125, %v3124, %v3123
    %v3127 = vrot.slane %v3023, 3
    %vm3128 = vcmask 1045509
    %v3129 = vsel %vm3128, %v3127, %v3126
    %v3130 = vrot.slane %v3024, 2
    %vm3131 = vcmask 1046534
    %v3132 = vsel %vm3131, %v3130, %v3129
    %v3133 = vrot.slane %v3025, 1
    %vm3134 = vcmask 1047559
    %v3135 = vsel %vm3134, %v3133, %v3132
    %v3136 = vrot.slane %v3027, 7
    %v3137 = vsel %vm3116, %v3136, %v3026
    %v3138 = vrot.slane %v3028, 6
    %v3139 = vsel %vm3119, %v3138, %v3137
    %v3140 = vrot.slane %v3029, 5
    %v3141 = vsel %vm3122, %v3140, %v3139
    %v3142 = vrot.slane %v3030, 4
    %v3143 = vsel %vm3125, %v3142, %v3141
    %v3144 = vrot.slane %v3031, 3
    %v3145 = vsel %vm3128, %v3144, %v3143
    %v3146 = vrot.slane %v3032, 2
    %v3147 = vsel %vm3131, %v3146, %v3145
    %v3148 = vrot.slane %v3033, 1
    %v3149 = vsel %vm3134, %v3148, %v3147
    %v3150 = vrot.slane %v3035, 7
    %v3151 = vsel %vm3116, %v3150, %v3034
    %v3152 = vrot.slane %v3036, 6
    %v3153 = vsel %vm3119, %v3152, %v3151
    %v3154 = vrot.slane %v3037, 5
    %v3155 = vsel %vm3122, %v3154, %v3153
    %v3156 = vrot.slane %v3038, 4
    %v3157 = vsel %vm3125, %v3156, %v3155
    %v3158 = vrot.slane %v3039, 3
    %v3159 = vsel %vm3128, %v3158, %v3157
    %v3160 = vrot.slane %v3040, 2
    %v3161 = vsel %vm3131, %v3160, %v3159
    %v3162 = vrot.slane %v3041, 1
    %v3163 = vsel %vm3134, %v3162, %v3161
    %v3164 = vrot.slane %v3043, 7
    %v3165 = vsel %vm3116, %v3164, %v3042
    %v3166 = vrot.slane %v3044, 6
    %v3167 = vsel %vm3119, %v3166, %v3165
    %v3168 = vrot.slane %v3045, 5
    %v3169 = vsel %vm3122, %v3168, %v3167
    %v3170 = vrot.slane %v3046, 4
    %v3171 = vsel %vm3125, %v3170, %v3169
    %v3172 = vrot.slane %v3047, 3
    %v3173 = vsel %vm3128, %v3172, %v3171
    %v3174 = vrot.slane %v3048, 2
    %v3175 = vsel %vm3131, %v3174, %v3173
    %v3176 = vrot.slane %v3049, 1
    %v3177 = vsel %vm3134, %v3176, %v3175
    %3182 = vmatpush.msra.mxu0 %v3081
    %3183 = vmatpush.msra.mxu0 %v3079
    %3184 = vmatpush.msra.mxu0 %v3077
    %3185 = vmatpush.msra.mxu0 %v3075
    %3186 = vmatpush.msra.mxu0 %v3073
    %3187 = vmatpush.msra.mxu0 %v3071
    %3188 = vmatpush.msra.mxu0 %v3069
    %3189 = vmatpush.msra.mxu0 %v3067
    %3190 = vmatpush.msra.mxu0 %v3065
    %3191 = vmatpush.msra.mxu0 %v3063
    %3192 = vmatpush.msra.mxu0 %v3061
    %3193 = vmatpush.msra.mxu0 %v3059
    %3194 = vmatpush.msra.mxu0 %v3057
    %3195 = vmatpush.msra.mxu0 %v3055
    %3196 = vmatpush.msra.mxu0 %v3053
    %3197 = vmatpush.msra.mxu0 %v3051
    %3198 = vmatmul.f32.gmra.mxu0 %v3135
    %v3199 = vpop.f32.mrf.mxu0
    %v3200 = vadd.f32 0.0, %v3199
    %3201 = vmatmul.f32.gmra.mxu0 %v3149
    %v3202 = vpop.f32.mrf.mxu0
    %v3203 = vadd.f32 0.0, %v3202
    %3204 = vmatmul.f32.gmra.mxu0 %v3163
    %v3205 = vpop.f32.mrf.mxu0
    %v3206 = vadd.f32 0.0, %v3205
    %3207 = vmatmul.f32.gmra.mxu0 %v3177
    %v3208 = vpop.f32.mrf.mxu0
    %v3209 = vadd.f32 0.0, %v3208
    %3210 = vdwg.mxu0
    %3211 = vmatpush.msra.mxu0 %v3082
    %3212 = vmatpush.msra.mxu0 %v3080
    %3213 = vmatpush.msra.mxu0 %v3078
    %3214 = vmatpush.msra.mxu0 %v3076
    %3215 = vmatpush.msra.mxu0 %v3074
    %3216 = vmatpush.msra.mxu0 %v3072
    %3217 = vmatpush.msra.mxu0 %v3070
    %3218 = vmatpush.msra.mxu0 %v3068
    %3219 = vmatpush.msra.mxu0 %v3066
    %3220 = vmatpush.msra.mxu0 %v3064
    %3221 = vmatpush.msra.mxu0 %v3062
    %3222 = vmatpush.msra.mxu0 %v3060
    %3223 = vmatpush.msra.mxu0 %v3058
    %3224 = vmatpush.msra.mxu0 %v3056
    %3225 = vmatpush.msra.mxu0 %v3054
    %3226 = vmatpush.msra.mxu0 %v3052
    %3227 = vmatmul.f32.gmra.mxu0 %v3135
    %v3228 = vpop.f32.mrf.mxu0
    %v3229 = vadd.f32 0.0, %v3228
    %3230 = vmatmul.f32.gmra.mxu0 %v3149
    %v3231 = vpop.f32.mrf.mxu0
    %v3232 = vadd.f32 0.0, %v3231
    %3233 = vmatmul.f32.gmra.mxu0 %v3163
    %v3234 = vpop.f32.mrf.mxu0
    %v3235 = vadd.f32 0.0, %v3234
    %3236 = vmatmul.f32.gmra.mxu0 %v3177
    %v3237 = vpop.f32.mrf.mxu0
    %v3238 = vadd.f32 0.0, %v3237
    %3239 = vdwg.mxu0
    %v3240 = vld [vmem:[#allocation4 + $0x8] sm:$0x1]
    %v3241 = vperm.slane %v3240, 0
    %v3242 = vadd.f32 %v3200, %v3241
    %v3243 = vadd.f32 %v3203, %v3241
    %v3244 = vadd.f32 %v3206, %v3241
    %v3245 = vadd.f32 %v3209, %v3241
    %v3246 = vld [vmem:[#allocation4 + $0x9] sm:$0x1]
    %v3247 = vperm.slane %v3246, 0
    %v3248 = vadd.f32 %v3229, %v3247
    %v3249 = vadd.f32 %v3232, %v3247
    %v3250 = vadd.f32 %v3235, %v3247
    %v3251 = vadd.f32 %v3238, %v3247
    %v3256 = vrot.slane %v3248, 1
    %v3257 = vrot.slane %v3248, 2
    %v3258 = vrot.slane %v3248, 3
    %v3259 = vrot.slane %v3248, 4
    %v3260 = vrot.slane %v3248, 5
    %v3261 = vrot.slane %v3248, 6
    %v3262 = vrot.slane %v3248, 7
    %v3263 = vrot.slane %v3249, 1
    %v3264 = vrot.slane %v3249, 2
    %v3265 = vrot.slane %v3249, 3
    %v3266 = vrot.slane %v3249, 4
    %v3267 = vrot.slane %v3249, 5
    %v3268 = vrot.slane %v3249, 6
    %v3269 = vrot.slane %v3249, 7
    %v3270 = vrot.slane %v3250, 1
    %v3271 = vrot.slane %v3250, 2
    %v3272 = vrot.slane %v3250, 3
    %v3273 = vrot.slane %v3250, 4
    %v3274 = vrot.slane %v3250, 5
    %v3275 = vrot.slane %v3250, 6
    %v3276 = vrot.slane %v3250, 7
    %v3277 = vrot.slane %v3251, 1
    %v3278 = vrot.slane %v3251, 2
    %v3279 = vrot.slane %v3251, 3
    %v3280 = vrot.slane %v3251, 4
    %v3281 = vrot.slane %v3251, 5
    %v3282 = vrot.slane %v3251, 6
    %v3283 = vrot.slane %v3251, 7
    %v3284 = vperm.slane %v3248, 0
    %v3285 = vperm.slane %v3256, 0
    %v3286 = vperm.slane %v3257, 0
    %v3287 = vperm.slane %v3258, 0
    %v3288 = vperm.slane %v3259, 0
    %v3289 = vperm.slane %v3260, 0
    %v3290 = vperm.slane %v3261, 0
    %v3291 = vperm.slane %v3262, 0
    %v3292 = vperm.slane %v3249, 0
    %v3293 = vperm.slane %v3263, 0
    %v3294 = vperm.slane %v3264, 0
    %v3295 = vperm.slane %v3265, 0
    %v3296 = vperm.slane %v3266, 0
    %v3297 = vperm.slane %v3267, 0
    %v3298 = vperm.slane %v3268, 0
    %v3299 = vperm.slane %v3269, 0
    %v3300 = vperm.slane %v3250, 0
    %v3301 = vperm.slane %v3270, 0
    %v3302 = vperm.slane %v3271, 0
    %v3303 = vperm.slane %v3272, 0
    %v3304 = vperm.slane %v3273, 0
    %v3305 = vperm.slane %v3274, 0
    %v3306 = vperm.slane %v3275, 0
    %v3307 = vperm.slane %v3276, 0
    %v3308 = vperm.slane %v3251, 0
    %v3309 = vperm.slane %v3277, 0
    %v3310 = vperm.slane %v3278, 0
    %v3311 = vperm.slane %v3279, 0
    %v3312 = vperm.slane %v3280, 0
    %v3313 = vperm.slane %v3281, 0
    %v3314 = vperm.slane %v3282, 0
    %v3315 = vperm.slane %v3283, 0
    %v3348 = vadd.f32 %v3284, %v3242
    %v3349 = vadd.f32 %v3284, %v3243
    %v3350 = vadd.f32 %v3285, %v3242
    %v3351 = vadd.f32 %v3285, %v3243
    %v3352 = vadd.f32 %v3286, %v3242
    %v3353 = vadd.f32 %v3286, %v3243
    %v3354 = vadd.f32 %v3287, %v3242
    %v3355 = vadd.f32 %v3287, %v3243
    %v3356 = vadd.f32 %v3288, %v3242
    %v3357 = vadd.f32 %v3288, %v3243
    %v3358 = vadd.f32 %v3289, %v3242
    %v3359 = vadd.f32 %v3289, %v3243
    %v3360 = vadd.f32 %v3290, %v3242
    %v3361 = vadd.f32 %v3290, %v3243
    %v3362 = vadd.f32 %v3291, %v3242
    %v3363 = vadd.f32 %v3291, %v3243
    %v3364 = vadd.f32 %v3292, %v3242
    %v3365 = vadd.f32 %v3292, %v3243
    %v3366 = vadd.f32 %v3293, %v3242
    %v3367 = vadd.f32 %v3293, %v3243
    %v3368 = vadd.f32 %v3294, %v3242
    %v3369 = vadd.f32 %v3294, %v3243
    %v3370 = vadd.f32 %v3295, %v3242
    %v3371 = vadd.f32 %v3295, %v3243
    %v3372 = vadd.f32 %v3296, %v3242
    %v3373 = vadd.f32 %v3296, %v3243
    %v3374 = vadd.f32 %v3297, %v3242
    %v3375 = vadd.f32 %v3297, %v3243
    %v3376 = vadd.f32 %v3298, %v3242
    %v3377 = vadd.f32 %v3298, %v3243
    %v3378 = vadd.f32 %v3299, %v3242
    %v3379 = vadd.f32 %v3299, %v3243
    %v3380 = vadd.f32 %v3300, %v3244
    %v3381 = vadd.f32 %v3300, %v3245
    %v3382 = vadd.f32 %v3301, %v3244
    %v3383 = vadd.f32 %v3301, %v3245
    %v3384 = vadd.f32 %v3302, %v3244
    %v3385 = vadd.f32 %v3302, %v3245
    %v3386 = vadd.f32 %v3303, %v3244
    %v3387 = vadd.f32 %v3303, %v3245
    %v3388 = vadd.f32 %v3304, %v3244
    %v3389 = vadd.f32 %v3304, %v3245
    %v3390 = vadd.f32 %v3305, %v3244
    %v3391 = vadd.f32 %v3305, %v3245
    %v3392 = vadd.f32 %v3306, %v3244
    %v3393 = vadd.f32 %v3306, %v3245
    %v3394 = vadd.f32 %v3307, %v3244
    %v3395 = vadd.f32 %v3307, %v3245
    %v3396 = vadd.f32 %v3308, %v3244
    %v3397 = vadd.f32 %v3308, %v3245
    %v3398 = vadd.f32 %v3309, %v3244
    %v3399 = vadd.f32 %v3309, %v3245
    %v3400 = vadd.f32 %v3310, %v3244
    %v3401 = vadd.f32 %v3310, %v3245
    %v3402 = vadd.f32 %v3311, %v3244
    %v3403 = vadd.f32 %v3311, %v3245
    %v3404 = vadd.f32 %v3312, %v3244
    %v3405 = vadd.f32 %v3312, %v3245
    %v3406 = vadd.f32 %v3313, %v3244
    %v3407 = vadd.f32 %v3313, %v3245
    %v3408 = vadd.f32 %v3314, %v3244
    %v3409 = vadd.f32 %v3314, %v3245
    %v3410 = vadd.f32 %v3315, %v3244
    %v3411 = vadd.f32 %v3315, %v3245
    %v3412 = vld [vmem:[#allocation4 + $0xa] sm:$0x1]
    %v3413 = vperm.slane %v3412, 0
    %v3414 = vmul.f32 %v545, %v3413
    %v3415 = vmul.f32 %v551, %v3413
    %v3416 = vmul.f32 %v558, %v3413
    %v3417 = vmul.f32 %v564, %v3413
    %v3418 = vmul.f32 %v571, %v3413
    %v3419 = vmul.f32 %v577, %v3413
    %v3420 = vmul.f32 %v584, %v3413
    %v3421 = vmul.f32 %v590, %v3413
    %v3422 = vmul.f32 %v597, %v3413
    %v3423 = vmul.f32 %v603, %v3413
    %v3424 = vmul.f32 %v610, %v3413
    %v3425 = vmul.f32 %v616, %v3413
    %v3426 = vmul.f32 %v623, %v3413
    %v3427 = vmul.f32 %v629, %v3413
    %v3428 = vmul.f32 %v636, %v3413
    %v3429 = vmul.f32 %v642, %v3413
    %v3430 = vmul.f32 %v649, %v3413
    %v3431 = vmul.f32 %v655, %v3413
    %v3432 = vmul.f32 %v662, %v3413
    %v3433 = vmul.f32 %v668, %v3413
    %v3434 = vmul.f32 %v675, %v3413
    %v3435 = vmul.f32 %v681, %v3413
    %v3436 = vmul.f32 %v688, %v3413
    %v3437 = vmul.f32 %v694, %v3413
    %v3438 = vmul.f32 %v701, %v3413
    %v3439 = vmul.f32 %v707, %v3413
    %v3440 = vmul.f32 %v714, %v3413
    %v3441 = vmul.f32 %v720, %v3413
    %v3442 = vmul.f32 %v727, %v3413
    %v3443 = vmul.f32 %v733, %v3413
    %v3444 = vmul.f32 %v740, %v3413
    %v3445 = vmul.f32 %v746, %v3413
    %v3446 = vmul.f32 %v753, %v3413
    %v3447 = vmul.f32 %v759, %v3413
    %v3448 = vmul.f32 %v766, %v3413
    %v3449 = vmul.f32 %v772, %v3413
    %v3450 = vmul.f32 %v779, %v3413
    %v3451 = vmul.f32 %v785, %v3413
    %v3452 = vmul.f32 %v792, %v3413
    %v3453 = vmul.f32 %v798, %v3413
    %v3454 = vmul.f32 %v805, %v3413
    %v3455 = vmul.f32 %v811, %v3413
    %v3456 = vmul.f32 %v818, %v3413
    %v3457 = vmul.f32 %v824, %v3413
    %v3458 = vmul.f32 %v831, %v3413
    %v3459 = vmul.f32 %v837, %v3413
    %v3460 = vmul.f32 %v844, %v3413
    %v3461 = vmul.f32 %v850, %v3413
    %v3462 = vmul.f32 %v857, %v3413
    %v3463 = vmul.f32 %v863, %v3413
    %v3464 = vmul.f32 %v870, %v3413
    %v3465 = vmul.f32 %v876, %v3413
    %v3466 = vmul.f32 %v883, %v3413
    %v3467 = vmul.f32 %v889, %v3413
    %v3468 = vmul.f32 %v896, %v3413
    %v3469 = vmul.f32 %v902, %v3413
    %v3470 = vmul.f32 %v909, %v3413
    %v3471 = vmul.f32 %v915, %v3413
    %v3472 = vmul.f32 %v922, %v3413
    %v3473 = vmul.f32 %v928, %v3413
    %v3474 = vmul.f32 %v935, %v3413
    %v3475 = vmul.f32 %v941, %v3413
    %v3476 = vmul.f32 %v948, %v3413
    %v3477 = vmul.f32 %v954, %v3413
    %v3478 = vadd.f32 %v3348, %v3414
    %v3479 = vadd.f32 %v3349, %v3415
    %v3480 = vadd.f32 %v3350, %v3416
    %v3481 = vadd.f32 %v3351, %v3417
    %v3482 = vadd.f32 %v3352, %v3418
    %v3483 = vadd.f32 %v3353, %v3419
    %v3484 = vadd.f32 %v3354, %v3420
    %v3485 = vadd.f32 %v3355, %v3421
    %v3486 = vadd.f32 %v3356, %v3422
    %v3487 = vadd.f32 %v3357, %v3423
    %v3488 = vadd.f32 %v3358, %v3424
    %v3489 = vadd.f32 %v3359, %v3425
    %v3490 = vadd.f32 %v3360, %v3426
    %v3491 = vadd.f32 %v3361, %v3427
    %v3492 = vadd.f32 %v3362, %v3428
    %v3493 = vadd.f32 %v3363, %v3429
    %v3494 = vadd.f32 %v3364, %v3430
    %v3495 = vadd.f32 %v3365, %v3431
    %v3496 = vadd.f32 %v3366, %v3432
    %v3497 = vadd.f32 %v3367, %v3433
    %v3498 = vadd.f32 %v3368, %v3434
    %v3499 = vadd.f32 %v3369, %v3435
    %v3500 = vadd.f32 %v3370, %v3436
    %v3501 = vadd.f32 %v3371, %v3437
    %v3502 = vadd.f32 %v3372, %v3438
    %v3503 = vadd.f32 %v3373, %v3439
    %v3504 = vadd.f32 %v3374, %v3440
    %v3505 = vadd.f32 %v3375, %v3441
    %v3506 = vadd.f32 %v3376, %v3442
    %v3507 = vadd.f32 %v3377, %v3443
    %v3508 = vadd.f32 %v3378, %v3444
    %v3509 = vadd.f32 %v3379, %v3445
    %v3510 = vadd.f32 %v3380, %v3446
    %v3511 = vadd.f32 %v3381, %v3447
    %v3512 = vadd.f32 %v3382, %v3448
    %v3513 = vadd.f32 %v3383, %v3449
    %v3514 = vadd.f32 %v3384, %v3450
    %v3515 = vadd.f32 %v3385, %v3451
    %v3516 = vadd.f32 %v3386, %v3452
    %v3517 = vadd.f32 %v3387, %v3453
    %v3518 = vadd.f32 %v3388, %v3454
    %v3519 = vadd.f32 %v3389, %v3455
    %v3520 = vadd.f32 %v3390, %v3456
    %v3521 = vadd.f32 %v3391, %v3457
    %v3522 = vadd.f32 %v3392, %v3458
    %v3523 = vadd.f32 %v3393, %v3459
    %v3524 = vadd.f32 %v3394, %v3460
    %v3525 = vadd.f32 %v3395, %v3461
    %v3526 = vadd.f32 %v3396, %v3462
    %v3527 = vadd.f32 %v3397, %v3463
    %v3528 = vadd.f32 %v3398, %v3464
    %v3529 = vadd.f32 %v3399, %v3465
    %v3530 = vadd.f32 %v3400, %v3466
    %v3531 = vadd.f32 %v3401, %v3467
    %v3532 = vadd.f32 %v3402, %v3468
    %v3533 = vadd.f32 %v3403, %v3469
    %v3534 = vadd.f32 %v3404, %v3470
    %v3535 = vadd.f32 %v3405, %v3471
    %v3536 = vadd.f32 %v3406, %v3472
    %v3537 = vadd.f32 %v3407, %v3473
    %v3538 = vadd.f32 %v3408, %v3474
    %v3539 = vadd.f32 %v3409, %v3475
    %v3540 = vadd.f32 %v3410, %v3476
    %v3541 = vadd.f32 %v3411, %v3477
    %vm3542 = vcmp.ge.f32.partialorder %v3478, 0.0
    %vm3543 = vcmp.ge.f32.partialorder %v3479, 0.0
    %vm3544 = vcmp.ge.f32.partialorder %v3480, 0.0
    %vm3545 = vcmp.ge.f32.partialorder %v3481, 0.0
    %vm3546 = vcmp.ge.f32.partialorder %v3482, 0.0
    %vm3547 = vcmp.ge.f32.partialorder %v3483, 0.0
    %vm3548 = vcmp.ge.f32.partialorder %v3484, 0.0
    %vm3549 = vcmp.ge.f32.partialorder %v3485, 0.0
    %vm3550 = vcmp.ge.f32.partialorder %v3486, 0.0
    %vm3551 = vcmp.ge.f32.partialorder %v3487, 0.0
    %vm3552 = vcmp.ge.f32.partialorder %v3488, 0.0
    %vm3553 = vcmp.ge.f32.partialorder %v3489, 0.0
    %vm3554 = vcmp.ge.f32.partialorder %v3490, 0.0
    %vm3555 = vcmp.ge.f32.partialorder %v3491, 0.0
    %vm3556 = vcmp.ge.f32.partialorder %v3492, 0.0
    %vm3557 = vcmp.ge.f32.partialorder %v3493, 0.0
    %vm3558 = vcmp.ge.f32.partialorder %v3494, 0.0
    %vm3559 = vcmp.ge.f32.partialorder %v3495, 0.0
    %vm3560 = vcmp.ge.f32.partialorder %v3496, 0.0
    %vm3561 = vcmp.ge.f32.partialorder %v3497, 0.0
    %vm3562 = vcmp.ge.f32.partialorder %v3498, 0.0
    %vm3563 = vcmp.ge.f32.partialorder %v3499, 0.0
    %vm3564 = vcmp.ge.f32.partialorder %v3500, 0.0
    %vm3565 = vcmp.ge.f32.partialorder %v3501, 0.0
    %vm3566 = vcmp.ge.f32.partialorder %v3502, 0.0
    %vm3567 = vcmp.ge.f32.partialorder %v3503, 0.0
    %vm3568 = vcmp.ge.f32.partialorder %v3504, 0.0
    %vm3569 = vcmp.ge.f32.partialorder %v3505, 0.0
    %vm3570 = vcmp.ge.f32.partialorder %v3506, 0.0
    %vm3571 = vcmp.ge.f32.partialorder %v3507, 0.0
    %vm3572 = vcmp.ge.f32.partialorder %v3508, 0.0
    %vm3573 = vcmp.ge.f32.partialorder %v3509, 0.0
    %vm3574 = vcmp.ge.f32.partialorder %v3510, 0.0
    %vm3575 = vcmp.ge.f32.partialorder %v3511, 0.0
    %vm3576 = vcmp.ge.f32.partialorder %v3512, 0.0
    %vm3577 = vcmp.ge.f32.partialorder %v3513, 0.0
    %vm3578 = vcmp.ge.f32.partialorder %v3514, 0.0
    %vm3579 = vcmp.ge.f32.partialorder %v3515, 0.0
    %vm3580 = vcmp.ge.f32.partialorder %v3516, 0.0
    %vm3581 = vcmp.ge.f32.partialorder %v3517, 0.0
    %vm3582 = vcmp.ge.f32.partialorder %v3518, 0.0
    %vm3583 = vcmp.ge.f32.partialorder %v3519, 0.0
    %vm3584 = vcmp.ge.f32.partialorder %v3520, 0.0
    %vm3585 = vcmp.ge.f32.partialorder %v3521, 0.0
    %vm3586 = vcmp.ge.f32.partialorder %v3522, 0.0
    %vm3587 = vcmp.ge.f32.partialorder %v3523, 0.0
    %vm3588 = vcmp.ge.f32.partialorder %v3524, 0.0
    %vm3589 = vcmp.ge.f32.partialorder %v3525, 0.0
    %vm3590 = vcmp.ge.f32.partialorder %v3526, 0.0
    %vm3591 = vcmp.ge.f32.partialorder %v3527, 0.0
    %vm3592 = vcmp.ge.f32.partialorder %v3528, 0.0
    %vm3593 = vcmp.ge.f32.partialorder %v3529, 0.0
    %vm3594 = vcmp.ge.f32.partialorder %v3530, 0.0
    %vm3595 = vcmp.ge.f32.partialorder %v3531, 0.0
    %vm3596 = vcmp.ge.f32.partialorder %v3532, 0.0
    %vm3597 = vcmp.ge.f32.partialorder %v3533, 0.0
    %vm3598 = vcmp.ge.f32.partialorder %v3534, 0.0
    %vm3599 = vcmp.ge.f32.partialorder %v3535, 0.0
    %vm3600 = vcmp.ge.f32.partialorder %v3536, 0.0
    %vm3601 = vcmp.ge.f32.partialorder %v3537, 0.0
    %vm3602 = vcmp.ge.f32.partialorder %v3538, 0.0
    %vm3603 = vcmp.ge.f32.partialorder %v3539, 0.0
    %vm3604 = vcmp.ge.f32.partialorder %v3540, 0.0
    %vm3605 = vcmp.ge.f32.partialorder %v3541, 0.0
    %v3606 = vmul.f32 %v3478, 0.2
    %v3607 = vmul.f32 %v3479, 0.2
    %v3608 = vmul.f32 %v3480, 0.2
    %v3609 = vmul.f32 %v3481, 0.2
    %v3610 = vmul.f32 %v3482, 0.2
    %v3611 = vmul.f32 %v3483, 0.2
    %v3612 = vmul.f32 %v3484, 0.2
    %v3613 = vmul.f32 %v3485, 0.2
    %v3614 = vmul.f32 %v3486, 0.2
    %v3615 = vmul.f32 %v3487, 0.2
    %v3616 = vmul.f32 %v3488, 0.2
    %v3617 = vmul.f32 %v3489, 0.2
    %v3618 = vmul.f32 %v3490, 0.2
    %v3619 = vmul.f32 %v3491, 0.2
    %v3620 = vmul.f32 %v3492, 0.2
    %v3621 = vmul.f32 %v3493, 0.2
    %v3622 = vmul.f32 %v3494, 0.2
    %v3623 = vmul.f32 %v3495, 0.2
    %v3624 = vmul.f32 %v3496, 0.2
    %v3625 = vmul.f32 %v3497, 0.2
    %v3626 = vmul.f32 %v3498, 0.2
    %v3627 = vmul.f32 %v3499, 0.2
    %v3628 = vmul.f32 %v3500, 0.2
    %v3629 = vmul.f32 %v3501, 0.2
    %v3630 = vmul.f32 %v3502, 0.2
    %v3631 = vmul.f32 %v3503, 0.2
    %v3632 = vmul.f32 %v3504, 0.2
    %v3633 = vmul.f32 %v3505, 0.2
    %v3634 = vmul.f32 %v3506, 0.2
    %v3635 = vmul.f32 %v3507, 0.2
    %v3636 = vmul.f32 %v3508, 0.2
    %v3637 = vmul.f32 %v3509, 0.2
    %v3638 = vmul.f32 %v3510, 0.2
    %v3639 = vmul.f32 %v3511, 0.2
    %v3640 = vmul.f32 %v3512, 0.2
    %v3641 = vmul.f32 %v3513, 0.2
    %v3642 = vmul.f32 %v3514, 0.2
    %v3643 = vmul.f32 %v3515, 0.2
    %v3644 = vmul.f32 %v3516, 0.2
    %v3645 = vmul.f32 %v3517, 0.2
    %v3646 = vmul.f32 %v3518, 0.2
    %v3647 = vmul.f32 %v3519, 0.2
    %v3648 = vmul.f32 %v3520, 0.2
    %v3649 = vmul.f32 %v3521, 0.2
    %v3650 = vmul.f32 %v3522, 0.2
    %v3651 = vmul.f32 %v3523, 0.2
    %v3652 = vmul.f32 %v3524, 0.2
    %v3653 = vmul.f32 %v3525, 0.2
    %v3654 = vmul.f32 %v3526, 0.2
    %v3655 = vmul.f32 %v3527, 0.2
    %v3656 = vmul.f32 %v3528, 0.2
    %v3657 = vmul.f32 %v3529, 0.2
    %v3658 = vmul.f32 %v3530, 0.2
    %v3659 = vmul.f32 %v3531, 0.2
    %v3660 = vmul.f32 %v3532, 0.2
    %v3661 = vmul.f32 %v3533, 0.2
    %v3662 = vmul.f32 %v3534, 0.2
    %v3663 = vmul.f32 %v3535, 0.2
    %v3664 = vmul.f32 %v3536, 0.2
    %v3665 = vmul.f32 %v3537, 0.2
    %v3666 = vmul.f32 %v3538, 0.2
    %v3667 = vmul.f32 %v3539, 0.2
    %v3668 = vmul.f32 %v3540, 0.2
    %v3669 = vmul.f32 %v3541, 0.2
    %v3670 = vsel %vm3542, %v3478, %v3606
    %v3671 = vsel %vm3543, %v3479, %v3607
    %v3672 = vsel %vm3544, %v3480, %v3608
    %v3673 = vsel %vm3545, %v3481, %v3609
    %v3674 = vsel %vm3546, %v3482, %v3610
    %v3675 = vsel %vm3547, %v3483, %v3611
    %v3676 = vsel %vm3548, %v3484, %v3612
    %v3677 = vsel %vm3549, %v3485, %v3613
    %v3678 = vsel %vm3550, %v3486, %v3614
    %v3679 = vsel %vm3551, %v3487, %v3615
    %v3680 = vsel %vm3552, %v3488, %v3616
    %v3681 = vsel %vm3553, %v3489, %v3617
    %v3682 = vsel %vm3554, %v3490, %v3618
    %v3683 = vsel %vm3555, %v3491, %v3619
    %v3684 = vsel %vm3556, %v3492, %v3620
    %v3685 = vsel %vm3557, %v3493, %v3621
    %v3686 = vsel %vm3558, %v3494, %v3622
    %v3687 = vsel %vm3559, %v3495, %v3623
    %v3688 = vsel %vm3560, %v3496, %v3624
    %v3689 = vsel %vm3561, %v3497, %v3625
    %v3690 = vsel %vm3562, %v3498, %v3626
    %v3691 = vsel %vm3563, %v3499, %v3627
    %v3692 = vsel %vm3564, %v3500, %v3628
    %v3693 = vsel %vm3565, %v3501, %v3629
    %v3694 = vsel %vm3566, %v3502, %v3630
    %v3695 = vsel %vm3567, %v3503, %v3631
    %v3696 = vsel %vm3568, %v3504, %v3632
    %v3697 = vsel %vm3569, %v3505, %v3633
    %v3698 = vsel %vm3570, %v3506, %v3634
    %v3699 = vsel %vm3571, %v3507, %v3635
    %v3700 = vsel %vm3572, %v3508, %v3636
    %v3701 = vsel %vm3573, %v3509, %v3637
    %v3702 = vsel %vm3574, %v3510, %v3638
    %v3703 = vsel %vm3575, %v3511, %v3639
    %v3704 = vsel %vm3576, %v3512, %v3640
    %v3705 = vsel %vm3577, %v3513, %v3641
    %v3706 = vsel %vm3578, %v3514, %v3642
    %v3707 = vsel %vm3579, %v3515, %v3643
    %v3708 = vsel %vm3580, %v3516, %v3644
    %v3709 = vsel %vm3581, %v3517, %v3645
    %v3710 = vsel %vm3582, %v3518, %v3646
    %v3711 = vsel %vm3583, %v3519, %v3647
    %v3712 = vsel %vm3584, %v3520, %v3648
    %v3713 = vsel %vm3585, %v3521, %v3649
    %v3714 = vsel %vm3586, %v3522, %v3650
    %v3715 = vsel %vm3587, %v3523, %v3651
    %v3716 = vsel %vm3588, %v3524, %v3652
    %v3717 = vsel %vm3589, %v3525, %v3653
    %v3718 = vsel %vm3590, %v3526, %v3654
    %v3719 = vsel %vm3591, %v3527, %v3655
    %v3720 = vsel %vm3592, %v3528, %v3656
    %v3721 = vsel %vm3593, %v3529, %v3657
    %v3722 = vsel %vm3594, %v3530, %v3658
    %v3723 = vsel %vm3595, %v3531, %v3659
    %v3724 = vsel %vm3596, %v3532, %v3660
    %v3725 = vsel %vm3597, %v3533, %v3661
    %v3726 = vsel %vm3598, %v3534, %v3662
    %v3727 = vsel %vm3599, %v3535, %v3663
    %v3728 = vsel %vm3600, %v3536, %v3664
    %v3729 = vsel %vm3601, %v3537, %v3665
    %v3730 = vsel %vm3602, %v3538, %v3666
    %v3731 = vsel %vm3603, %v3539, %v3667
    %v3732 = vsel %vm3604, %v3540, %v3668
    %v3733 = vsel %vm3605, %v3541, %v3669
    %s3734 = scalar_lea.vmem [#allocation7], 128
    %v3735 = vld [vmem:[%s3734] sm:$0xff]
    %v3736 = vld [vmem:[%s3734 + $0x8] sm:$0xff]
    %v3737 = vld [vmem:[%s3734 + $0x10] sm:$0xff]
    %v3738 = vld [vmem:[%s3734 + $0x18] sm:$0xff]
    %v3739 = vld [vmem:[%s3734 + $0x20] sm:$0xff]
    %v3740 = vld [vmem:[%s3734 + $0x28] sm:$0xff]
    %v3741 = vld [vmem:[%s3734 + $0x30] sm:$0xff]
    %v3742 = vld [vmem:[%s3734 + $0x38] sm:$0xff]
    %v3743 = vld [vmem:[%s3734 + $0x40] sm:$0xff]
    %v3744 = vld [vmem:[%s3734 + $0x48] sm:$0xff]
    %v3745 = vld [vmem:[%s3734 + $0x50] sm:$0xff]
    %v3746 = vld [vmem:[%s3734 + $0x58] sm:$0xff]
    %v3747 = vld [vmem:[%s3734 + $0x60] sm:$0xff]
    %v3748 = vld [vmem:[%s3734 + $0x68] sm:$0xff]
    %v3749 = vld [vmem:[%s3734 + $0x70] sm:$0xff]
    %v3750 = vld [vmem:[%s3734 + $0x78] sm:$0xff]
    %3751 = vmatpush.msra.mxu0 %v3750
    %3752 = vmatpush.msra.mxu0 %v3749
    %3753 = vmatpush.msra.mxu0 %v3748
    %3754 = vmatpush.msra.mxu0 %v3747
    %3755 = vmatpush.msra.mxu0 %v3746
    %3756 = vmatpush.msra.mxu0 %v3745
    %3757 = vmatpush.msra.mxu0 %v3744
    %3758 = vmatpush.msra.mxu0 %v3743
    %3759 = vmatpush.msra.mxu0 %v3742
    %3760 = vmatpush.msra.mxu0 %v3741
    %3761 = vmatpush.msra.mxu0 %v3740
    %3762 = vmatpush.msra.mxu0 %v3739
    %3763 = vmatpush.msra.mxu0 %v3738
    %3764 = vmatpush.msra.mxu0 %v3737
    %3765 = vmatpush.msra.mxu0 %v3736
    %3766 = vmatpush.msra.mxu0 %v3735
    %3767 = vmatmul.f32.gmra.mxu0 %v3670
    %v3768 = vpop.f32.mrf.mxu0
    %v3769 = vadd.f32 0.0, %v3768
    %3770 = vmatmul.f32.gmra.mxu0 %v3671
    %v3771 = vpop.f32.mrf.mxu0
    %v3772 = vadd.f32 0.0, %v3771
    %3773 = vmatmul.f32.gmra.mxu0 %v3672
    %v3774 = vpop.f32.mrf.mxu0
    %v3775 = vadd.f32 0.0, %v3774
    %3776 = vmatmul.f32.gmra.mxu0 %v3673
    %v3777 = vpop.f32.mrf.mxu0
    %v3778 = vadd.f32 0.0, %v3777
    %3779 = vmatmul.f32.gmra.mxu0 %v3674
    %v3780 = vpop.f32.mrf.mxu0
    %v3781 = vadd.f32 0.0, %v3780
    %3782 = vmatmul.f32.gmra.mxu0 %v3675
    %v3783 = vpop.f32.mrf.mxu0
    %v3784 = vadd.f32 0.0, %v3783
    %3785 = vmatmul.f32.gmra.mxu0 %v3676
    %v3786 = vpop.f32.mrf.mxu0
    %v3787 = vadd.f32 0.0, %v3786
    %3788 = vmatmul.f32.gmra.mxu0 %v3677
    %v3789 = vpop.f32.mrf.mxu0
    %v3790 = vadd.f32 0.0, %v3789
    %3791 = vmatmul.f32.gmra.mxu0 %v3678
    %v3792 = vpop.f32.mrf.mxu0
    %v3793 = vadd.f32 0.0, %v3792
    %3794 = vmatmul.f32.gmra.mxu0 %v3679
    %v3795 = vpop.f32.mrf.mxu0
    %v3796 = vadd.f32 0.0, %v3795
    %3797 = vmatmul.f32.gmra.mxu0 %v3680
    %v3798 = vpop.f32.mrf.mxu0
    %v3799 = vadd.f32 0.0, %v3798
    %3800 = vmatmul.f32.gmra.mxu0 %v3681
    %v3801 = vpop.f32.mrf.mxu0
    %v3802 = vadd.f32 0.0, %v3801
    %3803 = vmatmul.f32.gmra.mxu0 %v3682
    %v3804 = vpop.f32.mrf.mxu0
    %v3805 = vadd.f32 0.0, %v3804
    %3806 = vmatmul.f32.gmra.mxu0 %v3683
    %v3807 = vpop.f32.mrf.mxu0
    %v3808 = vadd.f32 0.0, %v3807
    %3809 = vmatmul.f32.gmra.mxu0 %v3684
    %v3810 = vpop.f32.mrf.mxu0
    %v3811 = vadd.f32 0.0, %v3810
    %3812 = vmatmul.f32.gmra.mxu0 %v3685
    %v3813 = vpop.f32.mrf.mxu0
    %v3814 = vadd.f32 0.0, %v3813
    %3815 = vmatmul.f32.gmra.mxu0 %v3686
    %v3816 = vpop.f32.mrf.mxu0
    %v3817 = vadd.f32 0.0, %v3816
    %3818 = vmatmul.f32.gmra.mxu0 %v3687
    %v3819 = vpop.f32.mrf.mxu0
    %v3820 = vadd.f32 0.0, %v3819
    %3821 = vmatmul.f32.gmra.mxu0 %v3688
    %v3822 = vpop.f32.mrf.mxu0
    %v3823 = vadd.f32 0.0, %v3822
    %3824 = vmatmul.f32.gmra.mxu0 %v3689
    %v3825 = vpop.f32.mrf.mxu0
    %v3826 = vadd.f32 0.0, %v3825
    %3827 = vmatmul.f32.gmra.mxu0 %v3690
    %v3828 = vpop.f32.mrf.mxu0
    %v3829 = vadd.f32 0.0, %v3828
    %3830 = vmatmul.f32.gmra.mxu0 %v3691
    %v3831 = vpop.f32.mrf.mxu0
    %v3832 = vadd.f32 0.0, %v3831
    %3833 = vmatmul.f32.gmra.mxu0 %v3692
    %v3834 = vpop.f32.mrf.mxu0
    %v3835 = vadd.f32 0.0, %v3834
    %3836 = vmatmul.f32.gmra.mxu0 %v3693
    %v3837 = vpop.f32.mrf.mxu0
    %v3838 = vadd.f32 0.0, %v3837
    %3839 = vmatmul.f32.gmra.mxu0 %v3694
    %v3840 = vpop.f32.mrf.mxu0
    %v3841 = vadd.f32 0.0, %v3840
    %3842 = vmatmul.f32.gmra.mxu0 %v3695
    %v3843 = vpop.f32.mrf.mxu0
    %v3844 = vadd.f32 0.0, %v3843
    %3845 = vmatmul.f32.gmra.mxu0 %v3696
    %v3846 = vpop.f32.mrf.mxu0
    %v3847 = vadd.f32 0.0, %v3846
    %3848 = vmatmul.f32.gmra.mxu0 %v3697
    %v3849 = vpop.f32.mrf.mxu0
    %v3850 = vadd.f32 0.0, %v3849
    %3851 = vmatmul.f32.gmra.mxu0 %v3698
    %v3852 = vpop.f32.mrf.mxu0
    %v3853 = vadd.f32 0.0, %v3852
    %3854 = vmatmul.f32.gmra.mxu0 %v3699
    %v3855 = vpop.f32.mrf.mxu0
    %v3856 = vadd.f32 0.0, %v3855
    %3857 = vmatmul.f32.gmra.mxu0 %v3700
    %v3858 = vpop.f32.mrf.mxu0
    %v3859 = vadd.f32 0.0, %v3858
    %3860 = vmatmul.f32.gmra.mxu0 %v3701
    %v3861 = vpop.f32.mrf.mxu0
    %v3862 = vadd.f32 0.0, %v3861
    %3863 = vmatmul.f32.gmra.mxu0 %v3702
    %v3864 = vpop.f32.mrf.mxu0
    %v3865 = vadd.f32 0.0, %v3864
    %3866 = vmatmul.f32.gmra.mxu0 %v3703
    %v3867 = vpop.f32.mrf.mxu0
    %v3868 = vadd.f32 0.0, %v3867
    %3869 = vmatmul.f32.gmra.mxu0 %v3704
    %v3870 = vpop.f32.mrf.mxu0
    %v3871 = vadd.f32 0.0, %v3870
    %3872 = vmatmul.f32.gmra.mxu0 %v3705
    %v3873 = vpop.f32.mrf.mxu0
    %v3874 = vadd.f32 0.0, %v3873
    %3875 = vmatmul.f32.gmra.mxu0 %v3706
    %v3876 = vpop.f32.mrf.mxu0
    %v3877 = vadd.f32 0.0, %v3876
    %3878 = vmatmul.f32.gmra.mxu0 %v3707
    %v3879 = vpop.f32.mrf.mxu0
    %v3880 = vadd.f32 0.0, %v3879
    %3881 = vmatmul.f32.gmra.mxu0 %v3708
    %v3882 = vpop.f32.mrf.mxu0
    %v3883 = vadd.f32 0.0, %v3882
    %3884 = vmatmul.f32.gmra.mxu0 %v3709
    %v3885 = vpop.f32.mrf.mxu0
    %v3886 = vadd.f32 0.0, %v3885
    %3887 = vmatmul.f32.gmra.mxu0 %v3710
    %v3888 = vpop.f32.mrf.mxu0
    %v3889 = vadd.f32 0.0, %v3888
    %3890 = vmatmul.f32.gmra.mxu0 %v3711
    %v3891 = vpop.f32.mrf.mxu0
    %v3892 = vadd.f32 0.0, %v3891
    %3893 = vmatmul.f32.gmra.mxu0 %v3712
    %v3894 = vpop.f32.mrf.mxu0
    %v3895 = vadd.f32 0.0, %v3894
    %3896 = vmatmul.f32.gmra.mxu0 %v3713
    %v3897 = vpop.f32.mrf.mxu0
    %v3898 = vadd.f32 0.0, %v3897
    %3899 = vmatmul.f32.gmra.mxu0 %v3714
    %v3900 = vpop.f32.mrf.mxu0
    %v3901 = vadd.f32 0.0, %v3900
    %3902 = vmatmul.f32.gmra.mxu0 %v3715
    %v3903 = vpop.f32.mrf.mxu0
    %v3904 = vadd.f32 0.0, %v3903
    %3905 = vmatmul.f32.gmra.mxu0 %v3716
    %v3906 = vpop.f32.mrf.mxu0
    %v3907 = vadd.f32 0.0, %v3906
    %3908 = vmatmul.f32.gmra.mxu0 %v3717
    %v3909 = vpop.f32.mrf.mxu0
    %v3910 = vadd.f32 0.0, %v3909
    %3911 = vmatmul.f32.gmra.mxu0 %v3718
    %v3912 = vpop.f32.mrf.mxu0
    %v3913 = vadd.f32 0.0, %v3912
    %3914 = vmatmul.f32.gmra.mxu0 %v3719
    %v3915 = vpop.f32.mrf.mxu0
    %v3916 = vadd.f32 0.0, %v3915
    %3917 = vmatmul.f32.gmra.mxu0 %v3720
    %v3918 = vpop.f32.mrf.mxu0
    %v3919 = vadd.f32 0.0, %v3918
    %3920 = vmatmul.f32.gmra.mxu0 %v3721
    %v3921 = vpop.f32.mrf.mxu0
    %v3922 = vadd.f32 0.0, %v3921
    %3923 = vmatmul.f32.gmra.mxu0 %v3722
    %v3924 = vpop.f32.mrf.mxu0
    %v3925 = vadd.f32 0.0, %v3924
    %3926 = vmatmul.f32.gmra.mxu0 %v3723
    %v3927 = vpop.f32.mrf.mxu0
    %v3928 = vadd.f32 0.0, %v3927
    %3929 = vmatmul.f32.gmra.mxu0 %v3724
    %v3930 = vpop.f32.mrf.mxu0
    %v3931 = vadd.f32 0.0, %v3930
    %3932 = vmatmul.f32.gmra.mxu0 %v3725
    %v3933 = vpop.f32.mrf.mxu0
    %v3934 = vadd.f32 0.0, %v3933
    %3935 = vmatmul.f32.gmra.mxu0 %v3726
    %v3936 = vpop.f32.mrf.mxu0
    %v3937 = vadd.f32 0.0, %v3936
    %3938 = vmatmul.f32.gmra.mxu0 %v3727
    %v3939 = vpop.f32.mrf.mxu0
    %v3940 = vadd.f32 0.0, %v3939
    %3941 = vmatmul.f32.gmra.mxu0 %v3728
    %v3942 = vpop.f32.mrf.mxu0
    %v3943 = vadd.f32 0.0, %v3942
    %3944 = vmatmul.f32.gmra.mxu0 %v3729
    %v3945 = vpop.f32.mrf.mxu0
    %v3946 = vadd.f32 0.0, %v3945
    %3947 = vmatmul.f32.gmra.mxu0 %v3730
    %v3948 = vpop.f32.mrf.mxu0
    %v3949 = vadd.f32 0.0, %v3948
    %3950 = vmatmul.f32.gmra.mxu0 %v3731
    %v3951 = vpop.f32.mrf.mxu0
    %v3952 = vadd.f32 0.0, %v3951
    %3953 = vmatmul.f32.gmra.mxu0 %v3732
    %v3954 = vpop.f32.mrf.mxu0
    %v3955 = vadd.f32 0.0, %v3954
    %3956 = vmatmul.f32.gmra.mxu0 %v3733
    %v3957 = vpop.f32.mrf.mxu0
    %v3958 = vadd.f32 0.0, %v3957
    %3959 = vdwg.mxu0
    %v3960 = vadd.f32 %v3769, %v125
    %v3961 = vadd.f32 %v3772, %v131
    %v3962 = vadd.f32 %v3775, %v138
    %v3963 = vadd.f32 %v3778, %v144
    %v3964 = vadd.f32 %v3781, %v151
    %v3965 = vadd.f32 %v3784, %v157
    %v3966 = vadd.f32 %v3787, %v164
    %v3967 = vadd.f32 %v3790, %v170
    %v3968 = vadd.f32 %v3793, %v177
    %v3969 = vadd.f32 %v3796, %v183
    %v3970 = vadd.f32 %v3799, %v190
    %v3971 = vadd.f32 %v3802, %v196
    %v3972 = vadd.f32 %v3805, %v203
    %v3973 = vadd.f32 %v3808, %v209
    %v3974 = vadd.f32 %v3811, %v216
    %v3975 = vadd.f32 %v3814, %v222
    %v3976 = vadd.f32 %v3817, %v229
    %v3977 = vadd.f32 %v3820, %v235
    %v3978 = vadd.f32 %v3823, %v242
    %v3979 = vadd.f32 %v3826, %v248
    %v3980 = vadd.f32 %v3829, %v255
    %v3981 = vadd.f32 %v3832, %v261
    %v3982 = vadd.f32 %v3835, %v268
    %v3983 = vadd.f32 %v3838, %v274
    %v3984 = vadd.f32 %v3841, %v281
    %v3985 = vadd.f32 %v3844, %v287
    %v3986 = vadd.f32 %v3847, %v294
    %v3987 = vadd.f32 %v3850, %v300
    %v3988 = vadd.f32 %v3853, %v307
    %v3989 = vadd.f32 %v3856, %v313
    %v3990 = vadd.f32 %v3859, %v320
    %v3991 = vadd.f32 %v3862, %v326
    %v3992 = vadd.f32 %v3865, %v333
    %v3993 = vadd.f32 %v3868, %v339
    %v3994 = vadd.f32 %v3871, %v346
    %v3995 = vadd.f32 %v3874, %v352
    %v3996 = vadd.f32 %v3877, %v359
    %v3997 = vadd.f32 %v3880, %v365
    %v3998 = vadd.f32 %v3883, %v372
    %v3999 = vadd.f32 %v3886, %v378
    %v4000 = vadd.f32 %v3889, %v385
    %v4001 = vadd.f32 %v3892, %v391
    %v4002 = vadd.f32 %v3895, %v398
    %v4003 = vadd.f32 %v3898, %v404
    %v4004 = vadd.f32 %v3901, %v411
    %v4005 = vadd.f32 %v3904, %v417
    %v4006 = vadd.f32 %v3907, %v424
    %v4007 = vadd.f32 %v3910, %v430
    %v4008 = vadd.f32 %v3913, %v437
    %v4009 = vadd.f32 %v3916, %v443
    %v4010 = vadd.f32 %v3919, %v450
    %v4011 = vadd.f32 %v3922, %v456
    %v4012 = vadd.f32 %v3925, %v463
    %v4013 = vadd.f32 %v3928, %v469
    %v4014 = vadd.f32 %v3931, %v476
    %v4015 = vadd.f32 %v3934, %v482
    %v4016 = vadd.f32 %v3937, %v489
    %v4017 = vadd.f32 %v3940, %v495
    %v4018 = vadd.f32 %v3943, %v502
    %v4019 = vadd.f32 %v3946, %v508
    %v4020 = vadd.f32 %v3949, %v515
    %v4021 = vadd.f32 %v3952, %v521
    %v4022 = vadd.f32 %v3955, %v528
    %v4023 = vadd.f32 %v3958, %v534
    %v4024 = vmax.f32 %v3960, %v3961
    %v4025 = vrot.slane %v4024, 4
    %v4026 = vmax.f32 %v4024, %v4025
    %v4027 = vrot.slane %v4026, 2
    %v4028 = vmax.f32 %v4026, %v4027
    %v4029 = vrot.slane %v4028, 1
    %v4030 = vmax.f32 %v4028, %v4029
    %v4031 = vmax.f32 %v3962, %v3963
    %v4032 = vrot.slane %v4031, 4
    %v4033 = vmax.f32 %v4031, %v4032
    %v4034 = vrot.slane %v4033, 2
    %v4035 = vmax.f32 %v4033, %v4034
    %v4036 = vrot.slane %v4035, 1
    %v4037 = vmax.f32 %v4035, %v4036
    %v4038 = vmax.f32 %v3964, %v3965
    %v4039 = vrot.slane %v4038, 4
    %v4040 = vmax.f32 %v4038, %v4039
    %v4041 = vrot.slane %v4040, 2
    %v4042 = vmax.f32 %v4040, %v4041
    %v4043 = vrot.slane %v4042, 1
    %v4044 = vmax.f32 %v4042, %v4043
    %v4045 = vmax.f32 %v3966, %v3967
    %v4046 = vrot.slane %v4045, 4
    %v4047 = vmax.f32 %v4045, %v4046
    %v4048 = vrot.slane %v4047, 2
    %v4049 = vmax.f32 %v4047, %v4048
    %v4050 = vrot.slane %v4049, 1
    %v4051 = vmax.f32 %v4049, %v4050
    %v4052 = vmax.f32 %v3968, %v3969
    %v4053 = vrot.slane %v4052, 4
    %v4054 = vmax.f32 %v4052, %v4053
    %v4055 = vrot.slane %v4054, 2
    %v4056 = vmax.f32 %v4054, %v4055
    %v4057 = vrot.slane %v4056, 1
    %v4058 = vmax.f32 %v4056, %v4057
    %v4059 = vmax.f32 %v3970, %v3971
    %v4060 = vrot.slane %v4059, 4
    %v4061 = vmax.f32 %v4059, %v4060
    %v4062 = vrot.slane %v4061, 2
    %v4063 = vmax.f32 %v4061, %v4062
    %v4064 = vrot.slane %v4063, 1
    %v4065 = vmax.f32 %v4063, %v4064
    %v4066 = vmax.f32 %v3972, %v3973
    %v4067 = vrot.slane %v4066, 4
    %v4068 = vmax.f32 %v4066, %v4067
    %v4069 = vrot.slane %v4068, 2
    %v4070 = vmax.f32 %v4068, %v4069
    %v4071 = vrot.slane %v4070, 1
    %v4072 = vmax.f32 %v4070, %v4071
    %v4073 = vmax.f32 %v3974, %v3975
    %v4074 = vrot.slane %v4073, 4
    %v4075 = vmax.f32 %v4073, %v4074
    %v4076 = vrot.slane %v4075, 2
    %v4077 = vmax.f32 %v4075, %v4076
    %v4078 = vrot.slane %v4077, 1
    %v4079 = vmax.f32 %v4077, %v4078
    %v4080 = vmax.f32 %v3976, %v3977
    %v4081 = vrot.slane %v4080, 4
    %v4082 = vmax.f32 %v4080, %v4081
    %v4083 = vrot.slane %v4082, 2
    %v4084 = vmax.f32 %v4082, %v4083
    %v4085 = vrot.slane %v4084, 1
    %v4086 = vmax.f32 %v4084, %v4085
    %v4087 = vmax.f32 %v3978, %v3979
    %v4088 = vrot.slane %v4087, 4
    %v4089 = vmax.f32 %v4087, %v4088
    %v4090 = vrot.slane %v4089, 2
    %v4091 = vmax.f32 %v4089, %v4090
    %v4092 = vrot.slane %v4091, 1
    %v4093 = vmax.f32 %v4091, %v4092
    %v4094 = vmax.f32 %v3980, %v3981
    %v4095 = vrot.slane %v4094, 4
    %v4096 = vmax.f32 %v4094, %v4095
    %v4097 = vrot.slane %v4096, 2
    %v4098 = vmax.f32 %v4096, %v4097
    %v4099 = vrot.slane %v4098, 1
    %v4100 = vmax.f32 %v4098, %v4099
    %v4101 = vmax.f32 %v3982, %v3983
    %v4102 = vrot.slane %v4101, 4
    %v4103 = vmax.f32 %v4101, %v4102
    %v4104 = vrot.slane %v4103, 2
    %v4105 = vmax.f32 %v4103, %v4104
    %v4106 = vrot.slane %v4105, 1
    %v4107 = vmax.f32 %v4105, %v4106
    %v4108 = vmax.f32 %v3984, %v3985
    %v4109 = vrot.slane %v4108, 4
    %v4110 = vmax.f32 %v4108, %v4109
    %v4111 = vrot.slane %v4110, 2
    %v4112 = vmax.f32 %v4110, %v4111
    %v4113 = vrot.slane %v4112, 1
    %v4114 = vmax.f32 %v4112, %v4113
    %v4115 = vmax.f32 %v3986, %v3987
    %v4116 = vrot.slane %v4115, 4
    %v4117 = vmax.f32 %v4115, %v4116
    %v4118 = vrot.slane %v4117, 2
    %v4119 = vmax.f32 %v4117, %v4118
    %v4120 = vrot.slane %v4119, 1
    %v4121 = vmax.f32 %v4119, %v4120
    %v4122 = vmax.f32 %v3988, %v3989
    %v4123 = vrot.slane %v4122, 4
    %v4124 = vmax.f32 %v4122, %v4123
    %v4125 = vrot.slane %v4124, 2
    %v4126 = vmax.f32 %v4124, %v4125
    %v4127 = vrot.slane %v4126, 1
    %v4128 = vmax.f32 %v4126, %v4127
    %v4129 = vmax.f32 %v3990, %v3991
    %v4130 = vrot.slane %v4129, 4
    %v4131 = vmax.f32 %v4129, %v4130
    %v4132 = vrot.slane %v4131, 2
    %v4133 = vmax.f32 %v4131, %v4132
    %v4134 = vrot.slane %v4133, 1
    %v4135 = vmax.f32 %v4133, %v4134
    %v4136 = vmax.f32 %v3992, %v3993
    %v4137 = vrot.slane %v4136, 4
    %v4138 = vmax.f32 %v4136, %v4137
    %v4139 = vrot.slane %v4138, 2
    %v4140 = vmax.f32 %v4138, %v4139
    %v4141 = vrot.slane %v4140, 1
    %v4142 = vmax.f32 %v4140, %v4141
    %v4143 = vmax.f32 %v3994, %v3995
    %v4144 = vrot.slane %v4143, 4
    %v4145 = vmax.f32 %v4143, %v4144
    %v4146 = vrot.slane %v4145, 2
    %v4147 = vmax.f32 %v4145, %v4146
    %v4148 = vrot.slane %v4147, 1
    %v4149 = vmax.f32 %v4147, %v4148
    %v4150 = vmax.f32 %v3996, %v3997
    %v4151 = vrot.slane %v4150, 4
    %v4152 = vmax.f32 %v4150, %v4151
    %v4153 = vrot.slane %v4152, 2
    %v4154 = vmax.f32 %v4152, %v4153
    %v4155 = vrot.slane %v4154, 1
    %v4156 = vmax.f32 %v4154, %v4155
    %v4157 = vmax.f32 %v3998, %v3999
    %v4158 = vrot.slane %v4157, 4
    %v4159 = vmax.f32 %v4157, %v4158
    %v4160 = vrot.slane %v4159, 2
    %v4161 = vmax.f32 %v4159, %v4160
    %v4162 = vrot.slane %v4161, 1
    %v4163 = vmax.f32 %v4161, %v4162
    %v4164 = vmax.f32 %v4000, %v4001
    %v4165 = vrot.slane %v4164, 4
    %v4166 = vmax.f32 %v4164, %v4165
    %v4167 = vrot.slane %v4166, 2
    %v4168 = vmax.f32 %v4166, %v4167
    %v4169 = vrot.slane %v4168, 1
    %v4170 = vmax.f32 %v4168, %v4169
    %v4171 = vmax.f32 %v4002, %v4003
    %v4172 = vrot.slane %v4171, 4
    %v4173 = vmax.f32 %v4171, %v4172
    %v4174 = vrot.slane %v4173, 2
    %v4175 = vmax.f32 %v4173, %v4174
    %v4176 = vrot.slane %v4175, 1
    %v4177 = vmax.f32 %v4175, %v4176
    %v4178 = vmax.f32 %v4004, %v4005
    %v4179 = vrot.slane %v4178, 4
    %v4180 = vmax.f32 %v4178, %v4179
    %v4181 = vrot.slane %v4180, 2
    %v4182 = vmax.f32 %v4180, %v4181
    %v4183 = vrot.slane %v4182, 1
    %v4184 = vmax.f32 %v4182, %v4183
    %v4185 = vmax.f32 %v4006, %v4007
    %v4186 = vrot.slane %v4185, 4
    %v4187 = vmax.f32 %v4185, %v4186
    %v4188 = vrot.slane %v4187, 2
    %v4189 = vmax.f32 %v4187, %v4188
    %v4190 = vrot.slane %v4189, 1
    %v4191 = vmax.f32 %v4189, %v4190
    %v4192 = vmax.f32 %v4008, %v4009
    %v4193 = vrot.slane %v4192, 4
    %v4194 = vmax.f32 %v4192, %v4193
    %v4195 = vrot.slane %v4194, 2
    %v4196 = vmax.f32 %v4194, %v4195
    %v4197 = vrot.slane %v4196, 1
    %v4198 = vmax.f32 %v4196, %v4197
    %v4199 = vmax.f32 %v4010, %v4011
    %v4200 = vrot.slane %v4199, 4
    %v4201 = vmax.f32 %v4199, %v4200
    %v4202 = vrot.slane %v4201, 2
    %v4203 = vmax.f32 %v4201, %v4202
    %v4204 = vrot.slane %v4203, 1
    %v4205 = vmax.f32 %v4203, %v4204
    %v4206 = vmax.f32 %v4012, %v4013
    %v4207 = vrot.slane %v4206, 4
    %v4208 = vmax.f32 %v4206, %v4207
    %v4209 = vrot.slane %v4208, 2
    %v4210 = vmax.f32 %v4208, %v4209
    %v4211 = vrot.slane %v4210, 1
    %v4212 = vmax.f32 %v4210, %v4211
    %v4213 = vmax.f32 %v4014, %v4015
    %v4214 = vrot.slane %v4213, 4
    %v4215 = vmax.f32 %v4213, %v4214
    %v4216 = vrot.slane %v4215, 2
    %v4217 = vmax.f32 %v4215, %v4216
    %v4218 = vrot.slane %v4217, 1
    %v4219 = vmax.f32 %v4217, %v4218
    %v4220 = vmax.f32 %v4016, %v4017
    %v4221 = vrot.slane %v4220, 4
    %v4222 = vmax.f32 %v4220, %v4221
    %v4223 = vrot.slane %v4222, 2
    %v4224 = vmax.f32 %v4222, %v4223
    %v4225 = vrot.slane %v4224, 1
    %v4226 = vmax.f32 %v4224, %v4225
    %v4227 = vmax.f32 %v4018, %v4019
    %v4228 = vrot.slane %v4227, 4
    %v4229 = vmax.f32 %v4227, %v4228
    %v4230 = vrot.slane %v4229, 2
    %v4231 = vmax.f32 %v4229, %v4230
    %v4232 = vrot.slane %v4231, 1
    %v4233 = vmax.f32 %v4231, %v4232
    %v4234 = vmax.f32 %v4020, %v4021
    %v4235 = vrot.slane %v4234, 4
    %v4236 = vmax.f32 %v4234, %v4235
    %v4237 = vrot.slane %v4236, 2
    %v4238 = vmax.f32 %v4236, %v4237
    %v4239 = vrot.slane %v4238, 1
    %v4240 = vmax.f32 %v4238, %v4239
    %v4241 = vmax.f32 %v4022, %v4023
    %v4242 = vrot.slane %v4241, 4
    %v4243 = vmax.f32 %v4241, %v4242
    %v4244 = vrot.slane %v4243, 2
    %v4245 = vmax.f32 %v4243, %v4244
    %v4246 = vrot.slane %v4245, 1
    %v4247 = vmax.f32 %v4245, %v4246
    %v4248 = vsub.f32 %v3960, %v4030
    %v4249 = vsub.f32 %v3961, %v4030
    %v4250 = vsub.f32 %v3962, %v4037
    %v4251 = vsub.f32 %v3963, %v4037
    %v4252 = vsub.f32 %v3964, %v4044
    %v4253 = vsub.f32 %v3965, %v4044
    %v4254 = vsub.f32 %v3966, %v4051
    %v4255 = vsub.f32 %v3967, %v4051
    %v4256 = vsub.f32 %v3968, %v4058
    %v4257 = vsub.f32 %v3969, %v4058
    %v4258 = vsub.f32 %v3970, %v4065
    %v4259 = vsub.f32 %v3971, %v4065
    %v4260 = vsub.f32 %v3972, %v4072
    %v4261 = vsub.f32 %v3973, %v4072
    %v4262 = vsub.f32 %v3974, %v4079
    %v4263 = vsub.f32 %v3975, %v4079
    %v4264 = vsub.f32 %v3976, %v4086
    %v4265 = vsub.f32 %v3977, %v4086
    %v4266 = vsub.f32 %v3978, %v4093
    %v4267 = vsub.f32 %v3979, %v4093
    %v4268 = vsub.f32 %v3980, %v4100
    %v4269 = vsub.f32 %v3981, %v4100
    %v4270 = vsub.f32 %v3982, %v4107
    %v4271 = vsub.f32 %v3983, %v4107
    %v4272 = vsub.f32 %v3984, %v4114
    %v4273 = vsub.f32 %v3985, %v4114
    %v4274 = vsub.f32 %v3986, %v4121
    %v4275 = vsub.f32 %v3987, %v4121
    %v4276 = vsub.f32 %v3988, %v4128
    %v4277 = vsub.f32 %v3989, %v4128
    %v4278 = vsub.f32 %v3990, %v4135
    %v4279 = vsub.f32 %v3991, %v4135
    %v4280 = vsub.f32 %v3992, %v4142
    %v4281 = vsub.f32 %v3993, %v4142
    %v4282 = vsub.f32 %v3994, %v4149
    %v4283 = vsub.f32 %v3995, %v4149
    %v4284 = vsub.f32 %v3996, %v4156
    %v4285 = vsub.f32 %v3997, %v4156
    %v4286 = vsub.f32 %v3998, %v4163
    %v4287 = vsub.f32 %v3999, %v4163
    %v4288 = vsub.f32 %v4000, %v4170
    %v4289 = vsub.f32 %v4001, %v4170
    %v4290 = vsub.f32 %v4002, %v4177
    %v4291 = vsub.f32 %v4003, %v4177
    %v4292 = vsub.f32 %v4004, %v4184
    %v4293 = vsub.f32 %v4005, %v4184
    %v4294 = vsub.f32 %v4006, %v4191
    %v4295 = vsub.f32 %v4007, %v4191
    %v4296 = vsub.f32 %v4008, %v4198
    %v4297 = vsub.f32 %v4009, %v4198
    %v4298 = vsub.f32 %v4010, %v4205
    %v4299 = vsub.f32 %v4011, %v4205
    %v4300 = vsub.f32 %v4012, %v4212
    %v4301 = vsub.f32 %v4013, %v4212
    %v4302 = vsub.f32 %v4014, %v4219
    %v4303 = vsub.f32 %v4015, %v4219
    %v4304 = vsub.f32 %v4016, %v4226
    %v4305 = vsub.f32 %v4017, %v4226
    %v4306 = vsub.f32 %v4018, %v4233
    %v4307 = vsub.f32 %v4019, %v4233
    %v4308 = vsub.f32 %v4020, %v4240
    %v4309 = vsub.f32 %v4021, %v4240
    %v4310 = vsub.f32 %v4022, %v4247
    %v4311 = vsub.f32 %v4023, %v4247
    %v4312 = vmul.f32 %v4248, 1.442695
    %v4313 = vpow.pop %v4312
    %v4314 = vmul.f32 %v4249, 1.442695
    %v4315 = vpow.pop %v4314
    %v4316 = vmul.f32 %v4250, 1.442695
    %v4317 = vpow.pop %v4316
    %v4318 = vmul.f32 %v4251, 1.442695
    %v4319 = vpow.pop %v4318
    %v4320 = vmul.f32 %v4252, 1.442695
    %v4321 = vpow.pop %v4320
    %v4322 = vmul.f32 %v4253, 1.442695
    %v4323 = vpow.pop %v4322
    %v4324 = vmul.f32 %v4254, 1.442695
    %v4325 = vpow.pop %v4324
    %v4326 = vmul.f32 %v4255, 1.442695
    %v4327 = vpow.pop %v4326
    %v4328 = vmul.f32 %v4256, 1.442695
    %v4329 = vpow.pop %v4328
    %v4330 = vmul.f32 %v4257, 1.442695
    %v4331 = vpow.pop %v4330
    %v4332 = vmul.f32 %v4258, 1.442695
    %v4333 = vpow.pop %v4332
    %v4334 = vmul.f32 %v4259, 1.442695
    %v4335 = vpow.pop %v4334
    %v4336 = vmul.f32 %v4260, 1.442695
    %v4337 = vpow.pop %v4336
    %v4338 = vmul.f32 %v4261, 1.442695
    %v4339 = vpow.pop %v4338
    %v4340 = vmul.f32 %v4262, 1.442695
    %v4341 = vpow.pop %v4340
    %v4342 = vmul.f32 %v4263, 1.442695
    %v4343 = vpow.pop %v4342
    %v4344 = vmul.f32 %v4264, 1.442695
    %v4345 = vpow.pop %v4344
    %v4346 = vmul.f32 %v4265, 1.442695
    %v4347 = vpow.pop %v4346
    %v4348 = vmul.f32 %v4266, 1.442695
    %v4349 = vpow.pop %v4348
    %v4350 = vmul.f32 %v4267, 1.442695
    %v4351 = vpow.pop %v4350
    %v4352 = vmul.f32 %v4268, 1.442695
    %v4353 = vpow.pop %v4352
    %v4354 = vmul.f32 %v4269, 1.442695
    %v4355 = vpow.pop %v4354
    %v4356 = vmul.f32 %v4270, 1.442695
    %v4357 = vpow.pop %v4356
    %v4358 = vmul.f32 %v4271, 1.442695
    %v4359 = vpow.pop %v4358
    %v4360 = vmul.f32 %v4272, 1.442695
    %v4361 = vpow.pop %v4360
    %v4362 = vmul.f32 %v4273, 1.442695
    %v4363 = vpow.pop %v4362
    %v4364 = vmul.f32 %v4274, 1.442695
    %v4365 = vpow.pop %v4364
    %v4366 = vmul.f32 %v4275, 1.442695
    %v4367 = vpow.pop %v4366
    %v4368 = vmul.f32 %v4276, 1.442695
    %v4369 = vpow.pop %v4368
    %v4370 = vmul.f32 %v4277, 1.442695
    %v4371 = vpow.pop %v4370
    %v4372 = vmul.f32 %v4278, 1.442695
    %v4373 = vpow.pop %v4372
    %v4374 = vmul.f32 %v4279, 1.442695
    %v4375 = vpow.pop %v4374
    %v4376 = vmul.f32 %v4280, 1.442695
    %v4377 = vpow.pop %v4376
    %v4378 = vmul.f32 %v4281, 1.442695
    %v4379 = vpow.pop %v4378
    %v4380 = vmul.f32 %v4282, 1.442695
    %v4381 = vpow.pop %v4380
    %v4382 = vmul.f32 %v4283, 1.442695
    %v4383 = vpow.pop %v4382
    %v4384 = vmul.f32 %v4284, 1.442695
    %v4385 = vpow.pop %v4384
    %v4386 = vmul.f32 %v4285, 1.442695
    %v4387 = vpow.pop %v4386
    %v4388 = vmul.f32 %v4286, 1.442695
    %v4389 = vpow.pop %v4388
    %v4390 = vmul.f32 %v4287, 1.442695
    %v4391 = vpow.pop %v4390
    %v4392 = vmul.f32 %v4288, 1.442695
    %v4393 = vpow.pop %v4392
    %v4394 = vmul.f32 %v4289, 1.442695
    %v4395 = vpow.pop %v4394
    %v4396 = vmul.f32 %v4290, 1.442695
    %v4397 = vpow.pop %v4396
    %v4398 = vmul.f32 %v4291, 1.442695
    %v4399 = vpow.pop %v4398
    %v4400 = vmul.f32 %v4292, 1.442695
    %v4401 = vpow.pop %v4400
    %v4402 = vmul.f32 %v4293, 1.442695
    %v4403 = vpow.pop %v4402
    %v4404 = vmul.f32 %v4294, 1.442695
    %v4405 = vpow.pop %v4404
    %v4406 = vmul.f32 %v4295, 1.442695
    %v4407 = vpow.pop %v4406
    %v4408 = vmul.f32 %v4296, 1.442695
    %v4409 = vpow.pop %v4408
    %v4410 = vmul.f32 %v4297, 1.442695
    %v4411 = vpow.pop %v4410
    %v4412 = vmul.f32 %v4298, 1.442695
    %v4413 = vpow.pop %v4412
    %v4414 = vmul.f32 %v4299, 1.442695
    %v4415 = vpow.pop %v4414
    %v4416 = vmul.f32 %v4300, 1.442695
    %v4417 = vpow.pop %v4416
    %v4418 = vmul.f32 %v4301, 1.442695
    %v4419 = vpow.pop %v4418
    %v4420 = vmul.f32 %v4302, 1.442695
    %v4421 = vpow.pop %v4420
    %v4422 = vmul.f32 %v4303, 1.442695
    %v4423 = vpow.pop %v4422
    %v4424 = vmul.f32 %v4304, 1.442695
    %v4425 = vpow.pop %v4424
    %v4426 = vmul.f32 %v4305, 1.442695
    %v4427 = vpow.pop %v4426
    %v4428 = vmul.f32 %v4306, 1.442695
    %v4429 = vpow.pop %v4428
    %v4430 = vmul.f32 %v4307, 1.442695
    %v4431 = vpow.pop %v4430
    %v4432 = vmul.f32 %v4308, 1.442695
    %v4433 = vpow.pop %v4432
    %v4434 = vmul.f32 %v4309, 1.442695
    %v4435 = vpow.pop %v4434
    %v4436 = vmul.f32 %v4310, 1.442695
    %v4437 = vpow.pop %v4436
    %v4438 = vmul.f32 %v4311, 1.442695
    %v4439 = vpow.pop %v4438
    %v4440 = vadd.f32 %v4313, %v4315
    %v4441 = vrot.slane %v4440, 4
    %v4442 = vadd.f32 %v4440, %v4441
    %v4443 = vrot.slane %v4442, 2
    %v4444 = vadd.f32 %v4442, %v4443
    %v4445 = vrot.slane %v4444, 1
    %v4446 = vadd.f32 %v4444, %v4445
    %v4447 = vadd.f32 %v4317, %v4319
    %v4448 = vrot.slane %v4447, 4
    %v4449 = vadd.f32 %v4447, %v4448
    %v4450 = vrot.slane %v4449, 2
    %v4451 = vadd.f32 %v4449, %v4450
    %v4452 = vrot.slane %v4451, 1
    %v4453 = vadd.f32 %v4451, %v4452
    %v4454 = vadd.f32 %v4321, %v4323
    %v4455 = vrot.slane %v4454, 4
    %v4456 = vadd.f32 %v4454, %v4455
    %v4457 = vrot.slane %v4456, 2
    %v4458 = vadd.f32 %v4456, %v4457
    %v4459 = vrot.slane %v4458, 1
    %v4460 = vadd.f32 %v4458, %v4459
    %v4461 = vadd.f32 %v4325, %v4327
    %v4462 = vrot.slane %v4461, 4
    %v4463 = vadd.f32 %v4461, %v4462
    %v4464 = vrot.slane %v4463, 2
    %v4465 = vadd.f32 %v4463, %v4464
    %v4466 = vrot.slane %v4465, 1
    %v4467 = vadd.f32 %v4465, %v4466
    %v4468 = vadd.f32 %v4329, %v4331
    %v4469 = vrot.slane %v4468, 4
    %v4470 = vadd.f32 %v4468, %v4469
    %v4471 = vrot.slane %v4470, 2
    %v4472 = vadd.f32 %v4470, %v4471
    %v4473 = vrot.slane %v4472, 1
    %v4474 = vadd.f32 %v4472, %v4473
    %v4475 = vadd.f32 %v4333, %v4335
    %v4476 = vrot.slane %v4475, 4
    %v4477 = vadd.f32 %v4475, %v4476
    %v4478 = vrot.slane %v4477, 2
    %v4479 = vadd.f32 %v4477, %v4478
    %v4480 = vrot.slane %v4479, 1
    %v4481 = vadd.f32 %v4479, %v4480
    %v4482 = vadd.f32 %v4337, %v4339
    %v4483 = vrot.slane %v4482, 4
    %v4484 = vadd.f32 %v4482, %v4483
    %v4485 = vrot.slane %v4484, 2
    %v4486 = vadd.f32 %v4484, %v4485
    %v4487 = vrot.slane %v4486, 1
    %v4488 = vadd.f32 %v4486, %v4487
    %v4489 = vadd.f32 %v4341, %v4343
    %v4490 = vrot.slane %v4489, 4
    %v4491 = vadd.f32 %v4489, %v4490
    %v4492 = vrot.slane %v4491, 2
    %v4493 = vadd.f32 %v4491, %v4492
    %v4494 = vrot.slane %v4493, 1
    %v4495 = vadd.f32 %v4493, %v4494
    %v4496 = vadd.f32 %v4345, %v4347
    %v4497 = vrot.slane %v4496, 4
    %v4498 = vadd.f32 %v4496, %v4497
    %v4499 = vrot.slane %v4498, 2
    %v4500 = vadd.f32 %v4498, %v4499
    %v4501 = vrot.slane %v4500, 1
    %v4502 = vadd.f32 %v4500, %v4501
    %v4503 = vadd.f32 %v4349, %v4351
    %v4504 = vrot.slane %v4503, 4
    %v4505 = vadd.f32 %v4503, %v4504
    %v4506 = vrot.slane %v4505, 2
    %v4507 = vadd.f32 %v4505, %v4506
    %v4508 = vrot.slane %v4507, 1
    %v4509 = vadd.f32 %v4507, %v4508
    %v4510 = vadd.f32 %v4353, %v4355
    %v4511 = vrot.slane %v4510, 4
    %v4512 = vadd.f32 %v4510, %v4511
    %v4513 = vrot.slane %v4512, 2
    %v4514 = vadd.f32 %v4512, %v4513
    %v4515 = vrot.slane %v4514, 1
    %v4516 = vadd.f32 %v4514, %v4515
    %v4517 = vadd.f32 %v4357, %v4359
    %v4518 = vrot.slane %v4517, 4
    %v4519 = vadd.f32 %v4517, %v4518
    %v4520 = vrot.slane %v4519, 2
    %v4521 = vadd.f32 %v4519, %v4520
    %v4522 = vrot.slane %v4521, 1
    %v4523 = vadd.f32 %v4521, %v4522
    %v4524 = vadd.f32 %v4361, %v4363
    %v4525 = vrot.slane %v4524, 4
    %v4526 = vadd.f32 %v4524, %v4525
    %v4527 = vrot.slane %v4526, 2
    %v4528 = vadd.f32 %v4526, %v4527
    %v4529 = vrot.slane %v4528, 1
    %v4530 = vadd.f32 %v4528, %v4529
    %v4531 = vadd.f32 %v4365, %v4367
    %v4532 = vrot.slane %v4531, 4
    %v4533 = vadd.f32 %v4531, %v4532
    %v4534 = vrot.slane %v4533, 2
    %v4535 = vadd.f32 %v4533, %v4534
    %v4536 = vrot.slane %v4535, 1
    %v4537 = vadd.f32 %v4535, %v4536
    %v4538 = vadd.f32 %v4369, %v4371
    %v4539 = vrot.slane %v4538, 4
    %v4540 = vadd.f32 %v4538, %v4539
    %v4541 = vrot.slane %v4540, 2
    %v4542 = vadd.f32 %v4540, %v4541
    %v4543 = vrot.slane %v4542, 1
    %v4544 = vadd.f32 %v4542, %v4543
    %v4545 = vadd.f32 %v4373, %v4375
    %v4546 = vrot.slane %v4545, 4
    %v4547 = vadd.f32 %v4545, %v4546
    %v4548 = vrot.slane %v4547, 2
    %v4549 = vadd.f32 %v4547, %v4548
    %v4550 = vrot.slane %v4549, 1
    %v4551 = vadd.f32 %v4549, %v4550
    %v4552 = vadd.f32 %v4377, %v4379
    %v4553 = vrot.slane %v4552, 4
    %v4554 = vadd.f32 %v4552, %v4553
    %v4555 = vrot.slane %v4554, 2
    %v4556 = vadd.f32 %v4554, %v4555
    %v4557 = vrot.slane %v4556, 1
    %v4558 = vadd.f32 %v4556, %v4557
    %v4559 = vadd.f32 %v4381, %v4383
    %v4560 = vrot.slane %v4559, 4
    %v4561 = vadd.f32 %v4559, %v4560
    %v4562 = vrot.slane %v4561, 2
    %v4563 = vadd.f32 %v4561, %v4562
    %v4564 = vrot.slane %v4563, 1
    %v4565 = vadd.f32 %v4563, %v4564
    %v4566 = vadd.f32 %v4385, %v4387
    %v4567 = vrot.slane %v4566, 4
    %v4568 = vadd.f32 %v4566, %v4567
    %v4569 = vrot.slane %v4568, 2
    %v4570 = vadd.f32 %v4568, %v4569
    %v4571 = vrot.slane %v4570, 1
    %v4572 = vadd.f32 %v4570, %v4571
    %v4573 = vadd.f32 %v4389, %v4391
    %v4574 = vrot.slane %v4573, 4
    %v4575 = vadd.f32 %v4573, %v4574
    %v4576 = vrot.slane %v4575, 2
    %v4577 = vadd.f32 %v4575, %v4576
    %v4578 = vrot.slane %v4577, 1
    %v4579 = vadd.f32 %v4577, %v4578
    %v4580 = vadd.f32 %v4393, %v4395
    %v4581 = vrot.slane %v4580, 4
    %v4582 = vadd.f32 %v4580, %v4581
    %v4583 = vrot.slane %v4582, 2
    %v4584 = vadd.f32 %v4582, %v4583
    %v4585 = vrot.slane %v4584, 1
    %v4586 = vadd.f32 %v4584, %v4585
    %v4587 = vadd.f32 %v4397, %v4399
    %v4588 = vrot.slane %v4587, 4
    %v4589 = vadd.f32 %v4587, %v4588
    %v4590 = vrot.slane %v4589, 2
    %v4591 = vadd.f32 %v4589, %v4590
    %v4592 = vrot.slane %v4591, 1
    %v4593 = vadd.f32 %v4591, %v4592
    %v4594 = vadd.f32 %v4401, %v4403
    %v4595 = vrot.slane %v4594, 4
    %v4596 = vadd.f32 %v4594, %v4595
    %v4597 = vrot.slane %v4596, 2
    %v4598 = vadd.f32 %v4596, %v4597
    %v4599 = vrot.slane %v4598, 1
    %v4600 = vadd.f32 %v4598, %v4599
    %v4601 = vadd.f32 %v4405, %v4407
    %v4602 = vrot.slane %v4601, 4
    %v4603 = vadd.f32 %v4601, %v4602
    %v4604 = vrot.slane %v4603, 2
    %v4605 = vadd.f32 %v4603, %v4604
    %v4606 = vrot.slane %v4605, 1
    %v4607 = vadd.f32 %v4605, %v4606
    %v4608 = vadd.f32 %v4409, %v4411
    %v4609 = vrot.slane %v4608, 4
    %v4610 = vadd.f32 %v4608, %v4609
    %v4611 = vrot.slane %v4610, 2
    %v4612 = vadd.f32 %v4610, %v4611
    %v4613 = vrot.slane %v4612, 1
    %v4614 = vadd.f32 %v4612, %v4613
    %v4615 = vadd.f32 %v4413, %v4415
    %v4616 = vrot.slane %v4615, 4
    %v4617 = vadd.f32 %v4615, %v4616
    %v4618 = vrot.slane %v4617, 2
    %v4619 = vadd.f32 %v4617, %v4618
    %v4620 = vrot.slane %v4619, 1
    %v4621 = vadd.f32 %v4619, %v4620
    %v4622 = vadd.f32 %v4417, %v4419
    %v4623 = vrot.slane %v4622, 4
    %v4624 = vadd.f32 %v4622, %v4623
    %v4625 = vrot.slane %v4624, 2
    %v4626 = vadd.f32 %v4624, %v4625
    %v4627 = vrot.slane %v4626, 1
    %v4628 = vadd.f32 %v4626, %v4627
    %v4629 = vadd.f32 %v4421, %v4423
    %v4630 = vrot.slane %v4629, 4
    %v4631 = vadd.f32 %v4629, %v4630
    %v4632 = vrot.slane %v4631, 2
    %v4633 = vadd.f32 %v4631, %v4632
    %v4634 = vrot.slane %v4633, 1
    %v4635 = vadd.f32 %v4633, %v4634
    %v4636 = vadd.f32 %v4425, %v4427
    %v4637 = vrot.slane %v4636, 4
    %v4638 = vadd.f32 %v4636, %v4637
    %v4639 = vrot.slane %v4638, 2
    %v4640 = vadd.f32 %v4638, %v4639
    %v4641 = vrot.slane %v4640, 1
    %v4642 = vadd.f32 %v4640, %v4641
    %v4643 = vadd.f32 %v4429, %v4431
    %v4644 = vrot.slane %v4643, 4
    %v4645 = vadd.f32 %v4643, %v4644
    %v4646 = vrot.slane %v4645, 2
    %v4647 = vadd.f32 %v4645, %v4646
    %v4648 = vrot.slane %v4647, 1
    %v4649 = vadd.f32 %v4647, %v4648
    %v4650 = vadd.f32 %v4433, %v4435
    %v4651 = vrot.slane %v4650, 4
    %v4652 = vadd.f32 %v4650, %v4651
    %v4653 = vrot.slane %v4652, 2
    %v4654 = vadd.f32 %v4652, %v4653
    %v4655 = vrot.slane %v4654, 1
    %v4656 = vadd.f32 %v4654, %v4655
    %v4657 = vadd.f32 %v4437, %v4439
    %v4658 = vrot.slane %v4657, 4
    %v4659 = vadd.f32 %v4657, %v4658
    %v4660 = vrot.slane %v4659, 2
    %v4661 = vadd.f32 %v4659, %v4660
    %v4662 = vrot.slane %v4661, 1
    %v4663 = vadd.f32 %v4661, %v4662
    %v4664 = vmax.f32 %v4446, 1e-20
    %v4665 = vmax.f32 %v4453, 1e-20
    %v4666 = vmax.f32 %v4460, 1e-20
    %v4667 = vmax.f32 %v4467, 1e-20
    %v4668 = vmax.f32 %v4474, 1e-20
    %v4669 = vmax.f32 %v4481, 1e-20
    %v4670 = vmax.f32 %v4488, 1e-20
    %v4671 = vmax.f32 %v4495, 1e-20
    %v4672 = vmax.f32 %v4502, 1e-20
    %v4673 = vmax.f32 %v4509, 1e-20
    %v4674 = vmax.f32 %v4516, 1e-20
    %v4675 = vmax.f32 %v4523, 1e-20
    %v4676 = vmax.f32 %v4530, 1e-20
    %v4677 = vmax.f32 %v4537, 1e-20
    %v4678 = vmax.f32 %v4544, 1e-20
    %v4679 = vmax.f32 %v4551, 1e-20
    %v4680 = vmax.f32 %v4558, 1e-20
    %v4681 = vmax.f32 %v4565, 1e-20
    %v4682 = vmax.f32 %v4572, 1e-20
    %v4683 = vmax.f32 %v4579, 1e-20
    %v4684 = vmax.f32 %v4586, 1e-20
    %v4685 = vmax.f32 %v4593, 1e-20
    %v4686 = vmax.f32 %v4600, 1e-20
    %v4687 = vmax.f32 %v4607, 1e-20
    %v4688 = vmax.f32 %v4614, 1e-20
    %v4689 = vmax.f32 %v4621, 1e-20
    %v4690 = vmax.f32 %v4628, 1e-20
    %v4691 = vmax.f32 %v4635, 1e-20
    %v4692 = vmax.f32 %v4642, 1e-20
    %v4693 = vmax.f32 %v4649, 1e-20
    %v4694 = vmax.f32 %v4656, 1e-20
    %v4695 = vmax.f32 %v4663, 1e-20
    %v4696 = vrcp.pop %v4664
    %v4697 = vrcp.pop %v4665
    %v4698 = vrcp.pop %v4666
    %v4699 = vrcp.pop %v4667
    %v4700 = vrcp.pop %v4668
    %v4701 = vrcp.pop %v4669
    %v4702 = vrcp.pop %v4670
    %v4703 = vrcp.pop %v4671
    %v4704 = vrcp.pop %v4672
    %v4705 = vrcp.pop %v4673
    %v4706 = vrcp.pop %v4674
    %v4707 = vrcp.pop %v4675
    %v4708 = vrcp.pop %v4676
    %v4709 = vrcp.pop %v4677
    %v4710 = vrcp.pop %v4678
    %v4711 = vrcp.pop %v4679
    %v4712 = vrcp.pop %v4680
    %v4713 = vrcp.pop %v4681
    %v4714 = vrcp.pop %v4682
    %v4715 = vrcp.pop %v4683
    %v4716 = vrcp.pop %v4684
    %v4717 = vrcp.pop %v4685
    %v4718 = vrcp.pop %v4686
    %v4719 = vrcp.pop %v4687
    %v4720 = vrcp.pop %v4688
    %v4721 = vrcp.pop %v4689
    %v4722 = vrcp.pop %v4690
    %v4723 = vrcp.pop %v4691
    %v4724 = vrcp.pop %v4692
    %v4725 = vrcp.pop %v4693
    %v4726 = vrcp.pop %v4694
    %v4727 = vrcp.pop %v4695
    %v4728 = vmul.f32 %v4313, %v4696
    %v4729 = vmul.f32 %v4315, %v4696
    %v4730 = vmul.f32 %v4317, %v4697
    %v4731 = vmul.f32 %v4319, %v4697
    %v4732 = vmul.f32 %v4321, %v4698
    %v4733 = vmul.f32 %v4323, %v4698
    %v4734 = vmul.f32 %v4325, %v4699
    %v4735 = vmul.f32 %v4327, %v4699
    %v4736 = vmul.f32 %v4329, %v4700
    %v4737 = vmul.f32 %v4331, %v4700
    %v4738 = vmul.f32 %v4333, %v4701
    %v4739 = vmul.f32 %v4335, %v4701
    %v4740 = vmul.f32 %v4337, %v4702
    %v4741 = vmul.f32 %v4339, %v4702
    %v4742 = vmul.f32 %v4341, %v4703
    %v4743 = vmul.f32 %v4343, %v4703
    %v4744 = vmul.f32 %v4345, %v4704
    %v4745 = vmul.f32 %v4347, %v4704
    %v4746 = vmul.f32 %v4349, %v4705
    %v4747 = vmul.f32 %v4351, %v4705
    %v4748 = vmul.f32 %v4353, %v4706
    %v4749 = vmul.f32 %v4355, %v4706
    %v4750 = vmul.f32 %v4357, %v4707
    %v4751 = vmul.f32 %v4359, %v4707
    %v4752 = vmul.f32 %v4361, %v4708
    %v4753 = vmul.f32 %v4363, %v4708
    %v4754 = vmul.f32 %v4365, %v4709
    %v4755 = vmul.f32 %v4367, %v4709
    %v4756 = vmul.f32 %v4369, %v4710
    %v4757 = vmul.f32 %v4371, %v4710
    %v4758 = vmul.f32 %v4373, %v4711
    %v4759 = vmul.f32 %v4375, %v4711
    %v4760 = vmul.f32 %v4377, %v4712
    %v4761 = vmul.f32 %v4379, %v4712
    %v4762 = vmul.f32 %v4381, %v4713
    %v4763 = vmul.f32 %v4383, %v4713
    %v4764 = vmul.f32 %v4385, %v4714
    %v4765 = vmul.f32 %v4387, %v4714
    %v4766 = vmul.f32 %v4389, %v4715
    %v4767 = vmul.f32 %v4391, %v4715
    %v4768 = vmul.f32 %v4393, %v4716
    %v4769 = vmul.f32 %v4395, %v4716
    %v4770 = vmul.f32 %v4397, %v4717
    %v4771 = vmul.f32 %v4399, %v4717
    %v4772 = vmul.f32 %v4401, %v4718
    %v4773 = vmul.f32 %v4403, %v4718
    %v4774 = vmul.f32 %v4405, %v4719
    %v4775 = vmul.f32 %v4407, %v4719
    %v4776 = vmul.f32 %v4409, %v4720
    %v4777 = vmul.f32 %v4411, %v4720
    %v4778 = vmul.f32 %v4413, %v4721
    %v4779 = vmul.f32 %v4415, %v4721
    %v4780 = vmul.f32 %v4417, %v4722
    %v4781 = vmul.f32 %v4419, %v4722
    %v4782 = vmul.f32 %v4421, %v4723
    %v4783 = vmul.f32 %v4423, %v4723
    %v4784 = vmul.f32 %v4425, %v4724
    %v4785 = vmul.f32 %v4427, %v4724
    %v4786 = vmul.f32 %v4429, %v4725
    %v4787 = vmul.f32 %v4431, %v4725
    %v4788 = vmul.f32 %v4433, %v4726
    %v4789 = vmul.f32 %v4435, %v4726
    %v4790 = vmul.f32 %v4437, %v4727
    %v4791 = vmul.f32 %v4439, %v4727
    %v4792 = vmul.f32 %v4728, %v3242
    %v4793 = vmul.f32 %v4729, %v3243
    %v4794 = vmul.f32 %v4730, %v3242
    %v4795 = vmul.f32 %v4731, %v3243
    %v4796 = vmul.f32 %v4732, %v3242
    %v4797 = vmul.f32 %v4733, %v3243
    %v4798 = vmul.f32 %v4734, %v3242
    %v4799 = vmul.f32 %v4735, %v3243
    %v4800 = vmul.f32 %v4736, %v3242
    %v4801 = vmul.f32 %v4737, %v3243
    %v4802 = vmul.f32 %v4738, %v3242
    %v4803 = vmul.f32 %v4739, %v3243
    %v4804 = vmul.f32 %v4740, %v3242
    %v4805 = vmul.f32 %v4741, %v3243
    %v4806 = vmul.f32 %v4742, %v3242
    %v4807 = vmul.f32 %v4743, %v3243
    %v4808 = vmul.f32 %v4744, %v3242
    %v4809 = vmul.f32 %v4745, %v3243
    %v4810 = vmul.f32 %v4746, %v3242
    %v4811 = vmul.f32 %v4747, %v3243
    %v4812 = vmul.f32 %v4748, %v3242
    %v4813 = vmul.f32 %v4749, %v3243
    %v4814 = vmul.f32 %v4750, %v3242
    %v4815 = vmul.f32 %v4751, %v3243
    %v4816 = vmul.f32 %v4752, %v3242
    %v4817 = vmul.f32 %v4753, %v3243
    %v4818 = vmul.f32 %v4754, %v3242
    %v4819 = vmul.f32 %v4755, %v3243
    %v4820 = vmul.f32 %v4756, %v3242
    %v4821 = vmul.f32 %v4757, %v3243
    %v4822 = vmul.f32 %v4758, %v3242
    %v4823 = vmul.f32 %v4759, %v3243
    %v4824 = vmul.f32 %v4760, %v3244
    %v4825 = vmul.f32 %v4761, %v3245
    %v4826 = vmul.f32 %v4762, %v3244
    %v4827 = vmul.f32 %v4763, %v3245
    %v4828 = vmul.f32 %v4764, %v3244
    %v4829 = vmul.f32 %v4765, %v3245
    %v4830 = vmul.f32 %v4766, %v3244
    %v4831 = vmul.f32 %v4767, %v3245
    %v4832 = vmul.f32 %v4768, %v3244
    %v4833 = vmul.f32 %v4769, %v3245
    %v4834 = vmul.f32 %v4770, %v3244
    %v4835 = vmul.f32 %v4771, %v3245
    %v4836 = vmul.f32 %v4772, %v3244
    %v4837 = vmul.f32 %v4773, %v3245
    %v4838 = vmul.f32 %v4774, %v3244
    %v4839 = vmul.f32 %v4775, %v3245
    %v4840 = vmul.f32 %v4776, %v3244
    %v4841 = vmul.f32 %v4777, %v3245
    %v4842 = vmul.f32 %v4778, %v3244
    %v4843 = vmul.f32 %v4779, %v3245
    %v4844 = vmul.f32 %v4780, %v3244
    %v4845 = vmul.f32 %v4781, %v3245
    %v4846 = vmul.f32 %v4782, %v3244
    %v4847 = vmul.f32 %v4783, %v3245
    %v4848 = vmul.f32 %v4784, %v3244
    %v4849 = vmul.f32 %v4785, %v3245
    %v4850 = vmul.f32 %v4786, %v3244
    %v4851 = vmul.f32 %v4787, %v3245
    %v4852 = vmul.f32 %v4788, %v3244
    %v4853 = vmul.f32 %v4789, %v3245
    %v4854 = vmul.f32 %v4790, %v3244
    %v4855 = vmul.f32 %v4791, %v3245
    %v4856 = vadd.f32 %v4792, %v4793
    %v4857 = vrot.slane %v4856, 4
    %v4858 = vadd.f32 %v4856, %v4857
    %v4859 = vrot.slane %v4858, 2
    %v4860 = vadd.f32 %v4858, %v4859
    %v4861 = vrot.slane %v4860, 1
    %v4862 = vadd.f32 %v4860, %v4861
    %v4863 = vadd.f32 %v4794, %v4795
    %v4864 = vrot.slane %v4863, 4
    %v4865 = vadd.f32 %v4863, %v4864
    %v4866 = vrot.slane %v4865, 2
    %v4867 = vadd.f32 %v4865, %v4866
    %v4868 = vrot.slane %v4867, 1
    %v4869 = vadd.f32 %v4867, %v4868
    %v4870 = vadd.f32 %v4796, %v4797
    %v4871 = vrot.slane %v4870, 4
    %v4872 = vadd.f32 %v4870, %v4871
    %v4873 = vrot.slane %v4872, 2
    %v4874 = vadd.f32 %v4872, %v4873
    %v4875 = vrot.slane %v4874, 1
    %v4876 = vadd.f32 %v4874, %v4875
    %v4877 = vadd.f32 %v4798, %v4799
    %v4878 = vrot.slane %v4877, 4
    %v4879 = vadd.f32 %v4877, %v4878
    %v4880 = vrot.slane %v4879, 2
    %v4881 = vadd.f32 %v4879, %v4880
    %v4882 = vrot.slane %v4881, 1
    %v4883 = vadd.f32 %v4881, %v4882
    %v4884 = vadd.f32 %v4800, %v4801
    %v4885 = vrot.slane %v4884, 4
    %v4886 = vadd.f32 %v4884, %v4885
    %v4887 = vrot.slane %v4886, 2
    %v4888 = vadd.f32 %v4886, %v4887
    %v4889 = vrot.slane %v4888, 1
    %v4890 = vadd.f32 %v4888, %v4889
    %v4891 = vadd.f32 %v4802, %v4803
    %v4892 = vrot.slane %v4891, 4
    %v4893 = vadd.f32 %v4891, %v4892
    %v4894 = vrot.slane %v4893, 2
    %v4895 = vadd.f32 %v4893, %v4894
    %v4896 = vrot.slane %v4895, 1
    %v4897 = vadd.f32 %v4895, %v4896
    %v4898 = vadd.f32 %v4804, %v4805
    %v4899 = vrot.slane %v4898, 4
    %v4900 = vadd.f32 %v4898, %v4899
    %v4901 = vrot.slane %v4900, 2
    %v4902 = vadd.f32 %v4900, %v4901
    %v4903 = vrot.slane %v4902, 1
    %v4904 = vadd.f32 %v4902, %v4903
    %v4905 = vadd.f32 %v4806, %v4807
    %v4906 = vrot.slane %v4905, 4
    %v4907 = vadd.f32 %v4905, %v4906
    %v4908 = vrot.slane %v4907, 2
    %v4909 = vadd.f32 %v4907, %v4908
    %v4910 = vrot.slane %v4909, 1
    %v4911 = vadd.f32 %v4909, %v4910
    %v4912 = vadd.f32 %v4808, %v4809
    %v4913 = vrot.slane %v4912, 4
    %v4914 = vadd.f32 %v4912, %v4913
    %v4915 = vrot.slane %v4914, 2
    %v4916 = vadd.f32 %v4914, %v4915
    %v4917 = vrot.slane %v4916, 1
    %v4918 = vadd.f32 %v4916, %v4917
    %v4919 = vadd.f32 %v4810, %v4811
    %v4920 = vrot.slane %v4919, 4
    %v4921 = vadd.f32 %v4919, %v4920
    %v4922 = vrot.slane %v4921, 2
    %v4923 = vadd.f32 %v4921, %v4922
    %v4924 = vrot.slane %v4923, 1
    %v4925 = vadd.f32 %v4923, %v4924
    %v4926 = vadd.f32 %v4812, %v4813
    %v4927 = vrot.slane %v4926, 4
    %v4928 = vadd.f32 %v4926, %v4927
    %v4929 = vrot.slane %v4928, 2
    %v4930 = vadd.f32 %v4928, %v4929
    %v4931 = vrot.slane %v4930, 1
    %v4932 = vadd.f32 %v4930, %v4931
    %v4933 = vadd.f32 %v4814, %v4815
    %v4934 = vrot.slane %v4933, 4
    %v4935 = vadd.f32 %v4933, %v4934
    %v4936 = vrot.slane %v4935, 2
    %v4937 = vadd.f32 %v4935, %v4936
    %v4938 = vrot.slane %v4937, 1
    %v4939 = vadd.f32 %v4937, %v4938
    %v4940 = vadd.f32 %v4816, %v4817
    %v4941 = vrot.slane %v4940, 4
    %v4942 = vadd.f32 %v4940, %v4941
    %v4943 = vrot.slane %v4942, 2
    %v4944 = vadd.f32 %v4942, %v4943
    %v4945 = vrot.slane %v4944, 1
    %v4946 = vadd.f32 %v4944, %v4945
    %v4947 = vadd.f32 %v4818, %v4819
    %v4948 = vrot.slane %v4947, 4
    %v4949 = vadd.f32 %v4947, %v4948
    %v4950 = vrot.slane %v4949, 2
    %v4951 = vadd.f32 %v4949, %v4950
    %v4952 = vrot.slane %v4951, 1
    %v4953 = vadd.f32 %v4951, %v4952
    %v4954 = vadd.f32 %v4820, %v4821
    %v4955 = vrot.slane %v4954, 4
    %v4956 = vadd.f32 %v4954, %v4955
    %v4957 = vrot.slane %v4956, 2
    %v4958 = vadd.f32 %v4956, %v4957
    %v4959 = vrot.slane %v4958, 1
    %v4960 = vadd.f32 %v4958, %v4959
    %v4961 = vadd.f32 %v4822, %v4823
    %v4962 = vrot.slane %v4961, 4
    %v4963 = vadd.f32 %v4961, %v4962
    %v4964 = vrot.slane %v4963, 2
    %v4965 = vadd.f32 %v4963, %v4964
    %v4966 = vrot.slane %v4965, 1
    %v4967 = vadd.f32 %v4965, %v4966
    %v4968 = vadd.f32 %v4824, %v4825
    %v4969 = vrot.slane %v4968, 4
    %v4970 = vadd.f32 %v4968, %v4969
    %v4971 = vrot.slane %v4970, 2
    %v4972 = vadd.f32 %v4970, %v4971
    %v4973 = vrot.slane %v4972, 1
    %v4974 = vadd.f32 %v4972, %v4973
    %v4975 = vadd.f32 %v4826, %v4827
    %v4976 = vrot.slane %v4975, 4
    %v4977 = vadd.f32 %v4975, %v4976
    %v4978 = vrot.slane %v4977, 2
    %v4979 = vadd.f32 %v4977, %v4978
    %v4980 = vrot.slane %v4979, 1
    %v4981 = vadd.f32 %v4979, %v4980
    %v4982 = vadd.f32 %v4828, %v4829
    %v4983 = vrot.slane %v4982, 4
    %v4984 = vadd.f32 %v4982, %v4983
    %v4985 = vrot.slane %v4984, 2
    %v4986 = vadd.f32 %v4984, %v4985
    %v4987 = vrot.slane %v4986, 1
    %v4988 = vadd.f32 %v4986, %v4987
    %v4989 = vadd.f32 %v4830, %v4831
    %v4990 = vrot.slane %v4989, 4
    %v4991 = vadd.f32 %v4989, %v4990
    %v4992 = vrot.slane %v4991, 2
    %v4993 = vadd.f32 %v4991, %v4992
    %v4994 = vrot.slane %v4993, 1
    %v4995 = vadd.f32 %v4993, %v4994
    %v4996 = vadd.f32 %v4832, %v4833
    %v4997 = vrot.slane %v4996, 4
    %v4998 = vadd.f32 %v4996, %v4997
    %v4999 = vrot.slane %v4998, 2
    %v5000 = vadd.f32 %v4998, %v4999
    %v5001 = vrot.slane %v5000, 1
    %v5002 = vadd.f32 %v5000, %v5001
    %v5003 = vadd.f32 %v4834, %v4835
    %v5004 = vrot.slane %v5003, 4
    %v5005 = vadd.f32 %v5003, %v5004
    %v5006 = vrot.slane %v5005, 2
    %v5007 = vadd.f32 %v5005, %v5006
    %v5008 = vrot.slane %v5007, 1
    %v5009 = vadd.f32 %v5007, %v5008
    %v5010 = vadd.f32 %v4836, %v4837
    %v5011 = vrot.slane %v5010, 4
    %v5012 = vadd.f32 %v5010, %v5011
    %v5013 = vrot.slane %v5012, 2
    %v5014 = vadd.f32 %v5012, %v5013
    %v5015 = vrot.slane %v5014, 1
    %v5016 = vadd.f32 %v5014, %v5015
    %v5017 = vadd.f32 %v4838, %v4839
    %v5018 = vrot.slane %v5017, 4
    %v5019 = vadd.f32 %v5017, %v5018
    %v5020 = vrot.slane %v5019, 2
    %v5021 = vadd.f32 %v5019, %v5020
    %v5022 = vrot.slane %v5021, 1
    %v5023 = vadd.f32 %v5021, %v5022
    %v5024 = vadd.f32 %v4840, %v4841
    %v5025 = vrot.slane %v5024, 4
    %v5026 = vadd.f32 %v5024, %v5025
    %v5027 = vrot.slane %v5026, 2
    %v5028 = vadd.f32 %v5026, %v5027
    %v5029 = vrot.slane %v5028, 1
    %v5030 = vadd.f32 %v5028, %v5029
    %v5031 = vadd.f32 %v4842, %v4843
    %v5032 = vrot.slane %v5031, 4
    %v5033 = vadd.f32 %v5031, %v5032
    %v5034 = vrot.slane %v5033, 2
    %v5035 = vadd.f32 %v5033, %v5034
    %v5036 = vrot.slane %v5035, 1
    %v5037 = vadd.f32 %v5035, %v5036
    %v5038 = vadd.f32 %v4844, %v4845
    %v5039 = vrot.slane %v5038, 4
    %v5040 = vadd.f32 %v5038, %v5039
    %v5041 = vrot.slane %v5040, 2
    %v5042 = vadd.f32 %v5040, %v5041
    %v5043 = vrot.slane %v5042, 1
    %v5044 = vadd.f32 %v5042, %v5043
    %v5045 = vadd.f32 %v4846, %v4847
    %v5046 = vrot.slane %v5045, 4
    %v5047 = vadd.f32 %v5045, %v5046
    %v5048 = vrot.slane %v5047, 2
    %v5049 = vadd.f32 %v5047, %v5048
    %v5050 = vrot.slane %v5049, 1
    %v5051 = vadd.f32 %v5049, %v5050
    %v5052 = vadd.f32 %v4848, %v4849
    %v5053 = vrot.slane %v5052, 4
    %v5054 = vadd.f32 %v5052, %v5053
    %v5055 = vrot.slane %v5054, 2
    %v5056 = vadd.f32 %v5054, %v5055
    %v5057 = vrot.slane %v5056, 1
    %v5058 = vadd.f32 %v5056, %v5057
    %v5059 = vadd.f32 %v4850, %v4851
    %v5060 = vrot.slane %v5059, 4
    %v5061 = vadd.f32 %v5059, %v5060
    %v5062 = vrot.slane %v5061, 2
    %v5063 = vadd.f32 %v5061, %v5062
    %v5064 = vrot.slane %v5063, 1
    %v5065 = vadd.f32 %v5063, %v5064
    %v5066 = vadd.f32 %v4852, %v4853
    %v5067 = vrot.slane %v5066, 4
    %v5068 = vadd.f32 %v5066, %v5067
    %v5069 = vrot.slane %v5068, 2
    %v5070 = vadd.f32 %v5068, %v5069
    %v5071 = vrot.slane %v5070, 1
    %v5072 = vadd.f32 %v5070, %v5071
    %v5073 = vadd.f32 %v4854, %v4855
    %v5074 = vrot.slane %v5073, 4
    %v5075 = vadd.f32 %v5073, %v5074
    %v5076 = vrot.slane %v5075, 2
    %v5077 = vadd.f32 %v5075, %v5076
    %v5078 = vrot.slane %v5077, 1
    %v5079 = vadd.f32 %v5077, %v5078
    %v5080 = vld [vmem:[#allocation4 + $0xb] sm:$0x1]
    %v5081 = vperm.slane %v5080, 0
    %v5082 = vmul.f32 %v4862, %v5081
    %v5083 = vmul.f32 %v4869, %v5081
    %v5084 = vmul.f32 %v4876, %v5081
    %v5085 = vmul.f32 %v4883, %v5081
    %v5086 = vmul.f32 %v4890, %v5081
    %v5087 = vmul.f32 %v4897, %v5081
    %v5088 = vmul.f32 %v4904, %v5081
    %v5089 = vmul.f32 %v4911, %v5081
    %v5090 = vmul.f32 %v4918, %v5081
    %v5091 = vmul.f32 %v4925, %v5081
    %v5092 = vmul.f32 %v4932, %v5081
    %v5093 = vmul.f32 %v4939, %v5081
    %v5094 = vmul.f32 %v4946, %v5081
    %v5095 = vmul.f32 %v4953, %v5081
    %v5096 = vmul.f32 %v4960, %v5081
    %v5097 = vmul.f32 %v4967, %v5081
    %v5098 = vmul.f32 %v4974, %v5081
    %v5099 = vmul.f32 %v4981, %v5081
    %v5100 = vmul.f32 %v4988, %v5081
    %v5101 = vmul.f32 %v4995, %v5081
    %v5102 = vmul.f32 %v5002, %v5081
    %v5103 = vmul.f32 %v5009, %v5081
    %v5104 = vmul.f32 %v5016, %v5081
    %v5105 = vmul.f32 %v5023, %v5081
    %v5106 = vmul.f32 %v5030, %v5081
    %v5107 = vmul.f32 %v5037, %v5081
    %v5108 = vmul.f32 %v5044, %v5081
    %v5109 = vmul.f32 %v5051, %v5081
    %v5110 = vmul.f32 %v5058, %v5081
    %v5111 = vmul.f32 %v5065, %v5081
    %v5112 = vmul.f32 %v5072, %v5081
    %v5113 = vmul.f32 %v5079, %v5081
    %v5114 = vld [vmem:[#allocation4 + $0xc] sm:$0x1]
    %v5115 = vperm.slane %v5114, 0
    %v5116 = vadd.f32 %v5082, %v5115
    %v5117 = vadd.f32 %v5083, %v5115
    %v5118 = vadd.f32 %v5084, %v5115
    %v5119 = vadd.f32 %v5085, %v5115
    %v5120 = vadd.f32 %v5086, %v5115
    %v5121 = vadd.f32 %v5087, %v5115
    %v5122 = vadd.f32 %v5088, %v5115
    %v5123 = vadd.f32 %v5089, %v5115
    %v5124 = vadd.f32 %v5090, %v5115
    %v5125 = vadd.f32 %v5091, %v5115
    %v5126 = vadd.f32 %v5092, %v5115
    %v5127 = vadd.f32 %v5093, %v5115
    %v5128 = vadd.f32 %v5094, %v5115
    %v5129 = vadd.f32 %v5095, %v5115
    %v5130 = vadd.f32 %v5096, %v5115
    %v5131 = vadd.f32 %v5097, %v5115
    %v5132 = vadd.f32 %v5098, %v5115
    %v5133 = vadd.f32 %v5099, %v5115
    %v5134 = vadd.f32 %v5100, %v5115
    %v5135 = vadd.f32 %v5101, %v5115
    %v5136 = vadd.f32 %v5102, %v5115
    %v5137 = vadd.f32 %v5103, %v5115
    %v5138 = vadd.f32 %v5104, %v5115
    %v5139 = vadd.f32 %v5105, %v5115
    %v5140 = vadd.f32 %v5106, %v5115
    %v5141 = vadd.f32 %v5107, %v5115
    %v5142 = vadd.f32 %v5108, %v5115
    %v5143 = vadd.f32 %v5109, %v5115
    %v5144 = vadd.f32 %v5110, %v5115
    %v5145 = vadd.f32 %v5111, %v5115
    %v5146 = vadd.f32 %v5112, %v5115
    %v5147 = vadd.f32 %v5113, %v5115
    %v5148 = vadd.f32 %v5116, %v3018
    %v5149 = vadd.f32 %v5117, %v3019
    %v5150 = vadd.f32 %v5118, %v3020
    %v5151 = vadd.f32 %v5119, %v3021
    %v5152 = vadd.f32 %v5120, %v3022
    %v5153 = vadd.f32 %v5121, %v3023
    %v5154 = vadd.f32 %v5122, %v3024
    %v5155 = vadd.f32 %v5123, %v3025
    %v5156 = vadd.f32 %v5124, %v3026
    %v5157 = vadd.f32 %v5125, %v3027
    %v5158 = vadd.f32 %v5126, %v3028
    %v5159 = vadd.f32 %v5127, %v3029
    %v5160 = vadd.f32 %v5128, %v3030
    %v5161 = vadd.f32 %v5129, %v3031
    %v5162 = vadd.f32 %v5130, %v3032
    %v5163 = vadd.f32 %v5131, %v3033
    %v5164 = vadd.f32 %v5132, %v3034
    %v5165 = vadd.f32 %v5133, %v3035
    %v5166 = vadd.f32 %v5134, %v3036
    %v5167 = vadd.f32 %v5135, %v3037
    %v5168 = vadd.f32 %v5136, %v3038
    %v5169 = vadd.f32 %v5137, %v3039
    %v5170 = vadd.f32 %v5138, %v3040
    %v5171 = vadd.f32 %v5139, %v3041
    %v5172 = vadd.f32 %v5140, %v3042
    %v5173 = vadd.f32 %v5141, %v3043
    %v5174 = vadd.f32 %v5142, %v3044
    %v5175 = vadd.f32 %v5143, %v3045
    %v5176 = vadd.f32 %v5144, %v3046
    %v5177 = vadd.f32 %v5145, %v3047
    %v5178 = vadd.f32 %v5146, %v3048
    %v5179 = vadd.f32 %v5147, %v3049
    %v5180 = vmax.f32 %v5148, 0.0
    %v5181 = vmax.f32 %v5149, 0.0
    %v5182 = vmax.f32 %v5150, 0.0
    %v5183 = vmax.f32 %v5151, 0.0
    %v5184 = vmax.f32 %v5152, 0.0
    %v5185 = vmax.f32 %v5153, 0.0
    %v5186 = vmax.f32 %v5154, 0.0
    %v5187 = vmax.f32 %v5155, 0.0
    %v5188 = vmax.f32 %v5156, 0.0
    %v5189 = vmax.f32 %v5157, 0.0
    %v5190 = vmax.f32 %v5158, 0.0
    %v5191 = vmax.f32 %v5159, 0.0
    %v5192 = vmax.f32 %v5160, 0.0
    %v5193 = vmax.f32 %v5161, 0.0
    %v5194 = vmax.f32 %v5162, 0.0
    %v5195 = vmax.f32 %v5163, 0.0
    %v5196 = vmax.f32 %v5164, 0.0
    %v5197 = vmax.f32 %v5165, 0.0
    %v5198 = vmax.f32 %v5166, 0.0
    %v5199 = vmax.f32 %v5167, 0.0
    %v5200 = vmax.f32 %v5168, 0.0
    %v5201 = vmax.f32 %v5169, 0.0
    %v5202 = vmax.f32 %v5170, 0.0
    %v5203 = vmax.f32 %v5171, 0.0
    %v5204 = vmax.f32 %v5172, 0.0
    %v5205 = vmax.f32 %v5173, 0.0
    %v5206 = vmax.f32 %v5174, 0.0
    %v5207 = vmax.f32 %v5175, 0.0
    %v5208 = vmax.f32 %v5176, 0.0
    %v5209 = vmax.f32 %v5177, 0.0
    %v5210 = vmax.f32 %v5178, 0.0
    %v5211 = vmax.f32 %v5179, 0.0
    %s5212 = scalar_lea.vmem [#allocation6], 512
    %v5213 = vld [vmem:[%s5212] sm:$0xff]
    %v5214 = vld [vmem:[%s5212 + $0x8] sm:$0xff]
    %v5215 = vld [vmem:[%s5212 + $0x10] sm:$0xff]
    %v5216 = vld [vmem:[%s5212 + $0x18] sm:$0xff]
    %v5217 = vld [vmem:[%s5212 + $0x20] sm:$0xff]
    %v5218 = vld [vmem:[%s5212 + $0x28] sm:$0xff]
    %v5219 = vld [vmem:[%s5212 + $0x30] sm:$0xff]
    %v5220 = vld [vmem:[%s5212 + $0x38] sm:$0xff]
    %v5221 = vld [vmem:[%s5212 + $0x40] sm:$0xff]
    %v5222 = vld [vmem:[%s5212 + $0x48] sm:$0xff]
    %v5223 = vld [vmem:[%s5212 + $0x50] sm:$0xff]
    %v5224 = vld [vmem:[%s5212 + $0x58] sm:$0xff]
    %v5225 = vld [vmem:[%s5212 + $0x60] sm:$0xff]
    %v5226 = vld [vmem:[%s5212 + $0x68] sm:$0xff]
    %v5227 = vld [vmem:[%s5212 + $0x70] sm:$0xff]
    %v5228 = vld [vmem:[%s5212 + $0x78] sm:$0xff]
    %v5229 = vld [vmem:[%s5212 + $0x80] sm:$0xff]
    %v5230 = vld [vmem:[%s5212 + $0x88] sm:$0xff]
    %v5231 = vld [vmem:[%s5212 + $0x90] sm:$0xff]
    %v5232 = vld [vmem:[%s5212 + $0x98] sm:$0xff]
    %v5233 = vld [vmem:[%s5212 + $0xa0] sm:$0xff]
    %v5234 = vld [vmem:[%s5212 + $0xa8] sm:$0xff]
    %v5235 = vld [vmem:[%s5212 + $0xb0] sm:$0xff]
    %v5236 = vld [vmem:[%s5212 + $0xb8] sm:$0xff]
    %v5237 = vld [vmem:[%s5212 + $0xc0] sm:$0xff]
    %v5238 = vld [vmem:[%s5212 + $0xc8] sm:$0xff]
    %v5239 = vld [vmem:[%s5212 + $0xd0] sm:$0xff]
    %v5240 = vld [vmem:[%s5212 + $0xd8] sm:$0xff]
    %v5241 = vld [vmem:[%s5212 + $0xe0] sm:$0xff]
    %v5242 = vld [vmem:[%s5212 + $0xe8] sm:$0xff]
    %v5243 = vld [vmem:[%s5212 + $0xf0] sm:$0xff]
    %v5244 = vld [vmem:[%s5212 + $0xf8] sm:$0xff]
    %v5277 = vrot.slane %v5181, 7
    %v5278 = vsel %vm3116, %v5277, %v5180
    %v5279 = vrot.slane %v5182, 6
    %v5280 = vsel %vm3119, %v5279, %v5278
    %v5281 = vrot.slane %v5183, 5
    %v5282 = vsel %vm3122, %v5281, %v5280
    %v5283 = vrot.slane %v5184, 4
    %v5284 = vsel %vm3125, %v5283, %v5282
    %v5285 = vrot.slane %v5185, 3
    %v5286 = vsel %vm3128, %v5285, %v5284
    %v5287 = vrot.slane %v5186, 2
    %v5288 = vsel %vm3131, %v5287, %v5286
    %v5289 = vrot.slane %v5187, 1
    %v5290 = vsel %vm3134, %v5289, %v5288
    %v5291 = vrot.slane %v5189, 7
    %v5292 = vsel %vm3116, %v5291, %v5188
    %v5293 = vrot.slane %v5190, 6
    %v5294 = vsel %vm3119, %v5293, %v5292
    %v5295 = vrot.slane %v5191, 5
    %v5296 = vsel %vm3122, %v5295, %v5294
    %v5297 = vrot.slane %v5192, 4
    %v5298 = vsel %vm3125, %v5297, %v5296
    %v5299 = vrot.slane %v5193, 3
    %v5300 = vsel %vm3128, %v5299, %v5298
    %v5301 = vrot.slane %v5194, 2
    %v5302 = vsel %vm3131, %v5301, %v5300
    %v5303 = vrot.slane %v5195, 1
    %v5304 = vsel %vm3134, %v5303, %v5302
    %v5305 = vrot.slane %v5197, 7
    %v5306 = vsel %vm3116, %v5305, %v5196
    %v5307 = vrot.slane %v5198, 6
    %v5308 = vsel %vm3119, %v5307, %v5306
    %v5309 = vrot.slane %v5199, 5
    %v5310 = vsel %vm3122, %v5309, %v5308
    %v5311 = vrot.slane %v5200, 4
    %v5312 = vsel %vm3125, %v5311, %v5310
    %v5313 = vrot.slane %v5201, 3
    %v5314 = vsel %vm3128, %v5313, %v5312
    %v5315 = vrot.slane %v5202, 2
    %v5316 = vsel %vm3131, %v5315, %v5314
    %v5317 = vrot.slane %v5203, 1
    %v5318 = vsel %vm3134, %v5317, %v5316
    %v5319 = vrot.slane %v5205, 7
    %v5320 = vsel %vm3116, %v5319, %v5204
    %v5321 = vrot.slane %v5206, 6
    %v5322 = vsel %vm3119, %v5321, %v5320
    %v5323 = vrot.slane %v5207, 5
    %v5324 = vsel %vm3122, %v5323, %v5322
    %v5325 = vrot.slane %v5208, 4
    %v5326 = vsel %vm3125, %v5325, %v5324
    %v5327 = vrot.slane %v5209, 3
    %v5328 = vsel %vm3128, %v5327, %v5326
    %v5329 = vrot.slane %v5210, 2
    %v5330 = vsel %vm3131, %v5329, %v5328
    %v5331 = vrot.slane %v5211, 1
    %v5332 = vsel %vm3134, %v5331, %v5330
    %5337 = vmatpush.msra.mxu0 %v5243
    %5338 = vmatpush.msra.mxu0 %v5241
    %5339 = vmatpush.msra.mxu0 %v5239
    %5340 = vmatpush.msra.mxu0 %v5237
    %5341 = vmatpush.msra.mxu0 %v5235
    %5342 = vmatpush.msra.mxu0 %v5233
    %5343 = vmatpush.msra.mxu0 %v5231
    %5344 = vmatpush.msra.mxu0 %v5229
    %5345 = vmatpush.msra.mxu0 %v5227
    %5346 = vmatpush.msra.mxu0 %v5225
    %5347 = vmatpush.msra.mxu0 %v5223
    %5348 = vmatpush.msra.mxu0 %v5221
    %5349 = vmatpush.msra.mxu0 %v5219
    %5350 = vmatpush.msra.mxu0 %v5217
    %5351 = vmatpush.msra.mxu0 %v5215
    %5352 = vmatpush.msra.mxu0 %v5213
    %5353 = vmatmul.f32.gmra.mxu0 %v5290
    %v5354 = vpop.f32.mrf.mxu0
    %v5355 = vadd.f32 0.0, %v5354
    %5356 = vmatmul.f32.gmra.mxu0 %v5304
    %v5357 = vpop.f32.mrf.mxu0
    %v5358 = vadd.f32 0.0, %v5357
    %5359 = vmatmul.f32.gmra.mxu0 %v5318
    %v5360 = vpop.f32.mrf.mxu0
    %v5361 = vadd.f32 0.0, %v5360
    %5362 = vmatmul.f32.gmra.mxu0 %v5332
    %v5363 = vpop.f32.mrf.mxu0
    %v5364 = vadd.f32 0.0, %v5363
    %5365 = vdwg.mxu0
    %5366 = vmatpush.msra.mxu0 %v5244
    %5367 = vmatpush.msra.mxu0 %v5242
    %5368 = vmatpush.msra.mxu0 %v5240
    %5369 = vmatpush.msra.mxu0 %v5238
    %5370 = vmatpush.msra.mxu0 %v5236
    %5371 = vmatpush.msra.mxu0 %v5234
    %5372 = vmatpush.msra.mxu0 %v5232
    %5373 = vmatpush.msra.mxu0 %v5230
    %5374 = vmatpush.msra.mxu0 %v5228
    %5375 = vmatpush.msra.mxu0 %v5226
    %5376 = vmatpush.msra.mxu0 %v5224
    %5377 = vmatpush.msra.mxu0 %v5222
    %5378 = vmatpush.msra.mxu0 %v5220
    %5379 = vmatpush.msra.mxu0 %v5218
    %5380 = vmatpush.msra.mxu0 %v5216
    %5381 = vmatpush.msra.mxu0 %v5214
    %5382 = vmatmul.f32.gmra.mxu0 %v5290
    %v5383 = vpop.f32.mrf.mxu0
    %v5384 = vadd.f32 0.0, %v5383
    %5385 = vmatmul.f32.gmra.mxu0 %v5304
    %v5386 = vpop.f32.mrf.mxu0
    %v5387 = vadd.f32 0.0, %v5386
    %5388 = vmatmul.f32.gmra.mxu0 %v5318
    %v5389 = vpop.f32.mrf.mxu0
    %v5390 = vadd.f32 0.0, %v5389
    %5391 = vmatmul.f32.gmra.mxu0 %v5332
    %v5392 = vpop.f32.mrf.mxu0
    %v5393 = vadd.f32 0.0, %v5392
    %5394 = vdwg.mxu0
    %v5395 = vld [vmem:[#allocation4 + $0xd] sm:$0x1]
    %v5396 = vperm.slane %v5395, 0
    %v5397 = vadd.f32 %v5355, %v5396
    %v5398 = vadd.f32 %v5358, %v5396
    %v5399 = vadd.f32 %v5361, %v5396
    %v5400 = vadd.f32 %v5364, %v5396
    %v5401 = vld [vmem:[#allocation4 + $0xe] sm:$0x1]
    %v5402 = vperm.slane %v5401, 0
    %v5403 = vadd.f32 %v5384, %v5402
    %v5404 = vadd.f32 %v5387, %v5402
    %v5405 = vadd.f32 %v5390, %v5402
    %v5406 = vadd.f32 %v5393, %v5402
    %v5411 = vrot.slane %v5403, 1
    %v5412 = vrot.slane %v5403, 2
    %v5413 = vrot.slane %v5403, 3
    %v5414 = vrot.slane %v5403, 4
    %v5415 = vrot.slane %v5403, 5
    %v5416 = vrot.slane %v5403, 6
    %v5417 = vrot.slane %v5403, 7
    %v5418 = vrot.slane %v5404, 1
    %v5419 = vrot.slane %v5404, 2
    %v5420 = vrot.slane %v5404, 3
    %v5421 = vrot.slane %v5404, 4
    %v5422 = vrot.slane %v5404, 5
    %v5423 = vrot.slane %v5404, 6
    %v5424 = vrot.slane %v5404, 7
    %v5425 = vrot.slane %v5405, 1
    %v5426 = vrot.slane %v5405, 2
    %v5427 = vrot.slane %v5405, 3
    %v5428 = vrot.slane %v5405, 4
    %v5429 = vrot.slane %v5405, 5
    %v5430 = vrot.slane %v5405, 6
    %v5431 = vrot.slane %v5405, 7
    %v5432 = vrot.slane %v5406, 1
    %v5433 = vrot.slane %v5406, 2
    %v5434 = vrot.slane %v5406, 3
    %v5435 = vrot.slane %v5406, 4
    %v5436 = vrot.slane %v5406, 5
    %v5437 = vrot.slane %v5406, 6
    %v5438 = vrot.slane %v5406, 7
    %v5439 = vperm.slane %v5403, 0
    %v5440 = vperm.slane %v5411, 0
    %v5441 = vperm.slane %v5412, 0
    %v5442 = vperm.slane %v5413, 0
    %v5443 = vperm.slane %v5414, 0
    %v5444 = vperm.slane %v5415, 0
    %v5445 = vperm.slane %v5416, 0
    %v5446 = vperm.slane %v5417, 0
    %v5447 = vperm.slane %v5404, 0
    %v5448 = vperm.slane %v5418, 0
    %v5449 = vperm.slane %v5419, 0
    %v5450 = vperm.slane %v5420, 0
    %v5451 = vperm.slane %v5421, 0
    %v5452 = vperm.slane %v5422, 0
    %v5453 = vperm.slane %v5423, 0
    %v5454 = vperm.slane %v5424, 0
    %v5455 = vperm.slane %v5405, 0
    %v5456 = vperm.slane %v5425, 0
    %v5457 = vperm.slane %v5426, 0
    %v5458 = vperm.slane %v5427, 0
    %v5459 = vperm.slane %v5428, 0
    %v5460 = vperm.slane %v5429, 0
    %v5461 = vperm.slane %v5430, 0
    %v5462 = vperm.slane %v5431, 0
    %v5463 = vperm.slane %v5406, 0
    %v5464 = vperm.slane %v5432, 0
    %v5465 = vperm.slane %v5433, 0
    %v5466 = vperm.slane %v5434, 0
    %v5467 = vperm.slane %v5435, 0
    %v5468 = vperm.slane %v5436, 0
    %v5469 = vperm.slane %v5437, 0
    %v5470 = vperm.slane %v5438, 0
    %v5503 = vadd.f32 %v5439, %v5397
    %v5504 = vadd.f32 %v5439, %v5398
    %v5505 = vadd.f32 %v5440, %v5397
    %v5506 = vadd.f32 %v5440, %v5398
    %v5507 = vadd.f32 %v5441, %v5397
    %v5508 = vadd.f32 %v5441, %v5398
    %v5509 = vadd.f32 %v5442, %v5397
    %v5510 = vadd.f32 %v5442, %v5398
    %v5511 = vadd.f32 %v5443, %v5397
    %v5512 = vadd.f32 %v5443, %v5398
    %v5513 = vadd.f32 %v5444, %v5397
    %v5514 = vadd.f32 %v5444, %v5398
    %v5515 = vadd.f32 %v5445, %v5397
    %v5516 = vadd.f32 %v5445, %v5398
    %v5517 = vadd.f32 %v5446, %v5397
    %v5518 = vadd.f32 %v5446, %v5398
    %v5519 = vadd.f32 %v5447, %v5397
    %v5520 = vadd.f32 %v5447, %v5398
    %v5521 = vadd.f32 %v5448, %v5397
    %v5522 = vadd.f32 %v5448, %v5398
    %v5523 = vadd.f32 %v5449, %v5397
    %v5524 = vadd.f32 %v5449, %v5398
    %v5525 = vadd.f32 %v5450, %v5397
    %v5526 = vadd.f32 %v5450, %v5398
    %v5527 = vadd.f32 %v5451, %v5397
    %v5528 = vadd.f32 %v5451, %v5398
    %v5529 = vadd.f32 %v5452, %v5397
    %v5530 = vadd.f32 %v5452, %v5398
    %v5531 = vadd.f32 %v5453, %v5397
    %v5532 = vadd.f32 %v5453, %v5398
    %v5533 = vadd.f32 %v5454, %v5397
    %v5534 = vadd.f32 %v5454, %v5398
    %v5535 = vadd.f32 %v5455, %v5399
    %v5536 = vadd.f32 %v5455, %v5400
    %v5537 = vadd.f32 %v5456, %v5399
    %v5538 = vadd.f32 %v5456, %v5400
    %v5539 = vadd.f32 %v5457, %v5399
    %v5540 = vadd.f32 %v5457, %v5400
    %v5541 = vadd.f32 %v5458, %v5399
    %v5542 = vadd.f32 %v5458, %v5400
    %v5543 = vadd.f32 %v5459, %v5399
    %v5544 = vadd.f32 %v5459, %v5400
    %v5545 = vadd.f32 %v5460, %v5399
    %v5546 = vadd.f32 %v5460, %v5400
    %v5547 = vadd.f32 %v5461, %v5399
    %v5548 = vadd.f32 %v5461, %v5400
    %v5549 = vadd.f32 %v5462, %v5399
    %v5550 = vadd.f32 %v5462, %v5400
    %v5551 = vadd.f32 %v5463, %v5399
    %v5552 = vadd.f32 %v5463, %v5400
    %v5553 = vadd.f32 %v5464, %v5399
    %v5554 = vadd.f32 %v5464, %v5400
    %v5555 = vadd.f32 %v5465, %v5399
    %v5556 = vadd.f32 %v5465, %v5400
    %v5557 = vadd.f32 %v5466, %v5399
    %v5558 = vadd.f32 %v5466, %v5400
    %v5559 = vadd.f32 %v5467, %v5399
    %v5560 = vadd.f32 %v5467, %v5400
    %v5561 = vadd.f32 %v5468, %v5399
    %v5562 = vadd.f32 %v5468, %v5400
    %v5563 = vadd.f32 %v5469, %v5399
    %v5564 = vadd.f32 %v5469, %v5400
    %v5565 = vadd.f32 %v5470, %v5399
    %v5566 = vadd.f32 %v5470, %v5400
    %v5567 = vld [vmem:[#allocation4 + $0xf] sm:$0x1]
    %v5568 = vperm.slane %v5567, 0
    %v5569 = vmul.f32 %v545, %v5568
    %v5570 = vmul.f32 %v551, %v5568
    %v5571 = vmul.f32 %v558, %v5568
    %v5572 = vmul.f32 %v564, %v5568
    %v5573 = vmul.f32 %v571, %v5568
    %v5574 = vmul.f32 %v577, %v5568
    %v5575 = vmul.f32 %v584, %v5568
    %v5576 = vmul.f32 %v590, %v5568
    %v5577 = vmul.f32 %v597, %v5568
    %v5578 = vmul.f32 %v603, %v5568
    %v5579 = vmul.f32 %v610, %v5568
    %v5580 = vmul.f32 %v616, %v5568
    %v5581 = vmul.f32 %v623, %v5568
    %v5582 = vmul.f32 %v629, %v5568
    %v5583 = vmul.f32 %v636, %v5568
    %v5584 = vmul.f32 %v642, %v5568
    %v5585 = vmul.f32 %v649, %v5568
    %v5586 = vmul.f32 %v655, %v5568
    %v5587 = vmul.f32 %v662, %v5568
    %v5588 = vmul.f32 %v668, %v5568
    %v5589 = vmul.f32 %v675, %v5568
    %v5590 = vmul.f32 %v681, %v5568
    %v5591 = vmul.f32 %v688, %v5568
    %v5592 = vmul.f32 %v694, %v5568
    %v5593 = vmul.f32 %v701, %v5568
    %v5594 = vmul.f32 %v707, %v5568
    %v5595 = vmul.f32 %v714, %v5568
    %v5596 = vmul.f32 %v720, %v5568
    %v5597 = vmul.f32 %v727, %v5568
    %v5598 = vmul.f32 %v733, %v5568
    %v5599 = vmul.f32 %v740, %v5568
    %v5600 = vmul.f32 %v746, %v5568
    %v5601 = vmul.f32 %v753, %v5568
    %v5602 = vmul.f32 %v759, %v5568
    %v5603 = vmul.f32 %v766, %v5568
    %v5604 = vmul.f32 %v772, %v5568
    %v5605 = vmul.f32 %v779, %v5568
    %v5606 = vmul.f32 %v785, %v5568
    %v5607 = vmul.f32 %v792, %v5568
    %v5608 = vmul.f32 %v798, %v5568
    %v5609 = vmul.f32 %v805, %v5568
    %v5610 = vmul.f32 %v811, %v5568
    %v5611 = vmul.f32 %v818, %v5568
    %v5612 = vmul.f32 %v824, %v5568
    %v5613 = vmul.f32 %v831, %v5568
    %v5614 = vmul.f32 %v837, %v5568
    %v5615 = vmul.f32 %v844, %v5568
    %v5616 = vmul.f32 %v850, %v5568
    %v5617 = vmul.f32 %v857, %v5568
    %v5618 = vmul.f32 %v863, %v5568
    %v5619 = vmul.f32 %v870, %v5568
    %v5620 = vmul.f32 %v876, %v5568
    %v5621 = vmul.f32 %v883, %v5568
    %v5622 = vmul.f32 %v889, %v5568
    %v5623 = vmul.f32 %v896, %v5568
    %v5624 = vmul.f32 %v902, %v5568
    %v5625 = vmul.f32 %v909, %v5568
    %v5626 = vmul.f32 %v915, %v5568
    %v5627 = vmul.f32 %v922, %v5568
    %v5628 = vmul.f32 %v928, %v5568
    %v5629 = vmul.f32 %v935, %v5568
    %v5630 = vmul.f32 %v941, %v5568
    %v5631 = vmul.f32 %v948, %v5568
    %v5632 = vmul.f32 %v954, %v5568
    %v5633 = vadd.f32 %v5503, %v5569
    %v5634 = vadd.f32 %v5504, %v5570
    %v5635 = vadd.f32 %v5505, %v5571
    %v5636 = vadd.f32 %v5506, %v5572
    %v5637 = vadd.f32 %v5507, %v5573
    %v5638 = vadd.f32 %v5508, %v5574
    %v5639 = vadd.f32 %v5509, %v5575
    %v5640 = vadd.f32 %v5510, %v5576
    %v5641 = vadd.f32 %v5511, %v5577
    %v5642 = vadd.f32 %v5512, %v5578
    %v5643 = vadd.f32 %v5513, %v5579
    %v5644 = vadd.f32 %v5514, %v5580
    %v5645 = vadd.f32 %v5515, %v5581
    %v5646 = vadd.f32 %v5516, %v5582
    %v5647 = vadd.f32 %v5517, %v5583
    %v5648 = vadd.f32 %v5518, %v5584
    %v5649 = vadd.f32 %v5519, %v5585
    %v5650 = vadd.f32 %v5520, %v5586
    %v5651 = vadd.f32 %v5521, %v5587
    %v5652 = vadd.f32 %v5522, %v5588
    %v5653 = vadd.f32 %v5523, %v5589
    %v5654 = vadd.f32 %v5524, %v5590
    %v5655 = vadd.f32 %v5525, %v5591
    %v5656 = vadd.f32 %v5526, %v5592
    %v5657 = vadd.f32 %v5527, %v5593
    %v5658 = vadd.f32 %v5528, %v5594
    %v5659 = vadd.f32 %v5529, %v5595
    %v5660 = vadd.f32 %v5530, %v5596
    %v5661 = vadd.f32 %v5531, %v5597
    %v5662 = vadd.f32 %v5532, %v5598
    %v5663 = vadd.f32 %v5533, %v5599
    %v5664 = vadd.f32 %v5534, %v5600
    %v5665 = vadd.f32 %v5535, %v5601
    %v5666 = vadd.f32 %v5536, %v5602
    %v5667 = vadd.f32 %v5537, %v5603
    %v5668 = vadd.f32 %v5538, %v5604
    %v5669 = vadd.f32 %v5539, %v5605
    %v5670 = vadd.f32 %v5540, %v5606
    %v5671 = vadd.f32 %v5541, %v5607
    %v5672 = vadd.f32 %v5542, %v5608
    %v5673 = vadd.f32 %v5543, %v5609
    %v5674 = vadd.f32 %v5544, %v5610
    %v5675 = vadd.f32 %v5545, %v5611
    %v5676 = vadd.f32 %v5546, %v5612
    %v5677 = vadd.f32 %v5547, %v5613
    %v5678 = vadd.f32 %v5548, %v5614
    %v5679 = vadd.f32 %v5549, %v5615
    %v5680 = vadd.f32 %v5550, %v5616
    %v5681 = vadd.f32 %v5551, %v5617
    %v5682 = vadd.f32 %v5552, %v5618
    %v5683 = vadd.f32 %v5553, %v5619
    %v5684 = vadd.f32 %v5554, %v5620
    %v5685 = vadd.f32 %v5555, %v5621
    %v5686 = vadd.f32 %v5556, %v5622
    %v5687 = vadd.f32 %v5557, %v5623
    %v5688 = vadd.f32 %v5558, %v5624
    %v5689 = vadd.f32 %v5559, %v5625
    %v5690 = vadd.f32 %v5560, %v5626
    %v5691 = vadd.f32 %v5561, %v5627
    %v5692 = vadd.f32 %v5562, %v5628
    %v5693 = vadd.f32 %v5563, %v5629
    %v5694 = vadd.f32 %v5564, %v5630
    %v5695 = vadd.f32 %v5565, %v5631
    %v5696 = vadd.f32 %v5566, %v5632
    %vm5697 = vcmp.ge.f32.partialorder %v5633, 0.0
    %vm5698 = vcmp.ge.f32.partialorder %v5634, 0.0
    %vm5699 = vcmp.ge.f32.partialorder %v5635, 0.0
    %vm5700 = vcmp.ge.f32.partialorder %v5636, 0.0
    %vm5701 = vcmp.ge.f32.partialorder %v5637, 0.0
    %vm5702 = vcmp.ge.f32.partialorder %v5638, 0.0
    %vm5703 = vcmp.ge.f32.partialorder %v5639, 0.0
    %vm5704 = vcmp.ge.f32.partialorder %v5640, 0.0
    %vm5705 = vcmp.ge.f32.partialorder %v5641, 0.0
    %vm5706 = vcmp.ge.f32.partialorder %v5642, 0.0
    %vm5707 = vcmp.ge.f32.partialorder %v5643, 0.0
    %vm5708 = vcmp.ge.f32.partialorder %v5644, 0.0
    %vm5709 = vcmp.ge.f32.partialorder %v5645, 0.0
    %vm5710 = vcmp.ge.f32.partialorder %v5646, 0.0
    %vm5711 = vcmp.ge.f32.partialorder %v5647, 0.0
    %vm5712 = vcmp.ge.f32.partialorder %v5648, 0.0
    %vm5713 = vcmp.ge.f32.partialorder %v5649, 0.0
    %vm5714 = vcmp.ge.f32.partialorder %v5650, 0.0
    %vm5715 = vcmp.ge.f32.partialorder %v5651, 0.0
    %vm5716 = vcmp.ge.f32.partialorder %v5652, 0.0
    %vm5717 = vcmp.ge.f32.partialorder %v5653, 0.0
    %vm5718 = vcmp.ge.f32.partialorder %v5654, 0.0
    %vm5719 = vcmp.ge.f32.partialorder %v5655, 0.0
    %vm5720 = vcmp.ge.f32.partialorder %v5656, 0.0
    %vm5721 = vcmp.ge.f32.partialorder %v5657, 0.0
    %vm5722 = vcmp.ge.f32.partialorder %v5658, 0.0
    %vm5723 = vcmp.ge.f32.partialorder %v5659, 0.0
    %vm5724 = vcmp.ge.f32.partialorder %v5660, 0.0
    %vm5725 = vcmp.ge.f32.partialorder %v5661, 0.0
    %vm5726 = vcmp.ge.f32.partialorder %v5662, 0.0
    %vm5727 = vcmp.ge.f32.partialorder %v5663, 0.0
    %vm5728 = vcmp.ge.f32.partialorder %v5664, 0.0
    %vm5729 = vcmp.ge.f32.partialorder %v5665, 0.0
    %vm5730 = vcmp.ge.f32.partialorder %v5666, 0.0
    %vm5731 = vcmp.ge.f32.partialorder %v5667, 0.0
    %vm5732 = vcmp.ge.f32.partialorder %v5668, 0.0
    %vm5733 = vcmp.ge.f32.partialorder %v5669, 0.0
    %vm5734 = vcmp.ge.f32.partialorder %v5670, 0.0
    %vm5735 = vcmp.ge.f32.partialorder %v5671, 0.0
    %vm5736 = vcmp.ge.f32.partialorder %v5672, 0.0
    %vm5737 = vcmp.ge.f32.partialorder %v5673, 0.0
    %vm5738 = vcmp.ge.f32.partialorder %v5674, 0.0
    %vm5739 = vcmp.ge.f32.partialorder %v5675, 0.0
    %vm5740 = vcmp.ge.f32.partialorder %v5676, 0.0
    %vm5741 = vcmp.ge.f32.partialorder %v5677, 0.0
    %vm5742 = vcmp.ge.f32.partialorder %v5678, 0.0
    %vm5743 = vcmp.ge.f32.partialorder %v5679, 0.0
    %vm5744 = vcmp.ge.f32.partialorder %v5680, 0.0
    %vm5745 = vcmp.ge.f32.partialorder %v5681, 0.0
    %vm5746 = vcmp.ge.f32.partialorder %v5682, 0.0
    %vm5747 = vcmp.ge.f32.partialorder %v5683, 0.0
    %vm5748 = vcmp.ge.f32.partialorder %v5684, 0.0
    %vm5749 = vcmp.ge.f32.partialorder %v5685, 0.0
    %vm5750 = vcmp.ge.f32.partialorder %v5686, 0.0
    %vm5751 = vcmp.ge.f32.partialorder %v5687, 0.0
    %vm5752 = vcmp.ge.f32.partialorder %v5688, 0.0
    %vm5753 = vcmp.ge.f32.partialorder %v5689, 0.0
    %vm5754 = vcmp.ge.f32.partialorder %v5690, 0.0
    %vm5755 = vcmp.ge.f32.partialorder %v5691, 0.0
    %vm5756 = vcmp.ge.f32.partialorder %v5692, 0.0
    %vm5757 = vcmp.ge.f32.partialorder %v5693, 0.0
    %vm5758 = vcmp.ge.f32.partialorder %v5694, 0.0
    %vm5759 = vcmp.ge.f32.partialorder %v5695, 0.0
    %vm5760 = vcmp.ge.f32.partialorder %v5696, 0.0
    %v5761 = vmul.f32 %v5633, 0.2
    %v5762 = vmul.f32 %v5634, 0.2
    %v5763 = vmul.f32 %v5635, 0.2
    %v5764 = vmul.f32 %v5636, 0.2
    %v5765 = vmul.f32 %v5637, 0.2
    %v5766 = vmul.f32 %v5638, 0.2
    %v5767 = vmul.f32 %v5639, 0.2
    %v5768 = vmul.f32 %v5640, 0.2
    %v5769 = vmul.f32 %v5641, 0.2
    %v5770 = vmul.f32 %v5642, 0.2
    %v5771 = vmul.f32 %v5643, 0.2
    %v5772 = vmul.f32 %v5644, 0.2
    %v5773 = vmul.f32 %v5645, 0.2
    %v5774 = vmul.f32 %v5646, 0.2
    %v5775 = vmul.f32 %v5647, 0.2
    %v5776 = vmul.f32 %v5648, 0.2
    %v5777 = vmul.f32 %v5649, 0.2
    %v5778 = vmul.f32 %v5650, 0.2
    %v5779 = vmul.f32 %v5651, 0.2
    %v5780 = vmul.f32 %v5652, 0.2
    %v5781 = vmul.f32 %v5653, 0.2
    %v5782 = vmul.f32 %v5654, 0.2
    %v5783 = vmul.f32 %v5655, 0.2
    %v5784 = vmul.f32 %v5656, 0.2
    %v5785 = vmul.f32 %v5657, 0.2
    %v5786 = vmul.f32 %v5658, 0.2
    %v5787 = vmul.f32 %v5659, 0.2
    %v5788 = vmul.f32 %v5660, 0.2
    %v5789 = vmul.f32 %v5661, 0.2
    %v5790 = vmul.f32 %v5662, 0.2
    %v5791 = vmul.f32 %v5663, 0.2
    %v5792 = vmul.f32 %v5664, 0.2
    %v5793 = vmul.f32 %v5665, 0.2
    %v5794 = vmul.f32 %v5666, 0.2
    %v5795 = vmul.f32 %v5667, 0.2
    %v5796 = vmul.f32 %v5668, 0.2
    %v5797 = vmul.f32 %v5669, 0.2
    %v5798 = vmul.f32 %v5670, 0.2
    %v5799 = vmul.f32 %v5671, 0.2
    %v5800 = vmul.f32 %v5672, 0.2
    %v5801 = vmul.f32 %v5673, 0.2
    %v5802 = vmul.f32 %v5674, 0.2
    %v5803 = vmul.f32 %v5675, 0.2
    %v5804 = vmul.f32 %v5676, 0.2
    %v5805 = vmul.f32 %v5677, 0.2
    %v5806 = vmul.f32 %v5678, 0.2
    %v5807 = vmul.f32 %v5679, 0.2
    %v5808 = vmul.f32 %v5680, 0.2
    %v5809 = vmul.f32 %v5681, 0.2
    %v5810 = vmul.f32 %v5682, 0.2
    %v5811 = vmul.f32 %v5683, 0.2
    %v5812 = vmul.f32 %v5684, 0.2
    %v5813 = vmul.f32 %v5685, 0.2
    %v5814 = vmul.f32 %v5686, 0.2
    %v5815 = vmul.f32 %v5687, 0.2
    %v5816 = vmul.f32 %v5688, 0.2
    %v5817 = vmul.f32 %v5689, 0.2
    %v5818 = vmul.f32 %v5690, 0.2
    %v5819 = vmul.f32 %v5691, 0.2
    %v5820 = vmul.f32 %v5692, 0.2
    %v5821 = vmul.f32 %v5693, 0.2
    %v5822 = vmul.f32 %v5694, 0.2
    %v5823 = vmul.f32 %v5695, 0.2
    %v5824 = vmul.f32 %v5696, 0.2
    %v5825 = vsel %vm5697, %v5633, %v5761
    %v5826 = vsel %vm5698, %v5634, %v5762
    %v5827 = vsel %vm5699, %v5635, %v5763
    %v5828 = vsel %vm5700, %v5636, %v5764
    %v5829 = vsel %vm5701, %v5637, %v5765
    %v5830 = vsel %vm5702, %v5638, %v5766
    %v5831 = vsel %vm5703, %v5639, %v5767
    %v5832 = vsel %vm5704, %v5640, %v5768
    %v5833 = vsel %vm5705, %v5641, %v5769
    %v5834 = vsel %vm5706, %v5642, %v5770
    %v5835 = vsel %vm5707, %v5643, %v5771
    %v5836 = vsel %vm5708, %v5644, %v5772
    %v5837 = vsel %vm5709, %v5645, %v5773
    %v5838 = vsel %vm5710, %v5646, %v5774
    %v5839 = vsel %vm5711, %v5647, %v5775
    %v5840 = vsel %vm5712, %v5648, %v5776
    %v5841 = vsel %vm5713, %v5649, %v5777
    %v5842 = vsel %vm5714, %v5650, %v5778
    %v5843 = vsel %vm5715, %v5651, %v5779
    %v5844 = vsel %vm5716, %v5652, %v5780
    %v5845 = vsel %vm5717, %v5653, %v5781
    %v5846 = vsel %vm5718, %v5654, %v5782
    %v5847 = vsel %vm5719, %v5655, %v5783
    %v5848 = vsel %vm5720, %v5656, %v5784
    %v5849 = vsel %vm5721, %v5657, %v5785
    %v5850 = vsel %vm5722, %v5658, %v5786
    %v5851 = vsel %vm5723, %v5659, %v5787
    %v5852 = vsel %vm5724, %v5660, %v5788
    %v5853 = vsel %vm5725, %v5661, %v5789
    %v5854 = vsel %vm5726, %v5662, %v5790
    %v5855 = vsel %vm5727, %v5663, %v5791
    %v5856 = vsel %vm5728, %v5664, %v5792
    %v5857 = vsel %vm5729, %v5665, %v5793
    %v5858 = vsel %vm5730, %v5666, %v5794
    %v5859 = vsel %vm5731, %v5667, %v5795
    %v5860 = vsel %vm5732, %v5668, %v5796
    %v5861 = vsel %vm5733, %v5669, %v5797
    %v5862 = vsel %vm5734, %v5670, %v5798
    %v5863 = vsel %vm5735, %v5671, %v5799
    %v5864 = vsel %vm5736, %v5672, %v5800
    %v5865 = vsel %vm5737, %v5673, %v5801
    %v5866 = vsel %vm5738, %v5674, %v5802
    %v5867 = vsel %vm5739, %v5675, %v5803
    %v5868 = vsel %vm5740, %v5676, %v5804
    %v5869 = vsel %vm5741, %v5677, %v5805
    %v5870 = vsel %vm5742, %v5678, %v5806
    %v5871 = vsel %vm5743, %v5679, %v5807
    %v5872 = vsel %vm5744, %v5680, %v5808
    %v5873 = vsel %vm5745, %v5681, %v5809
    %v5874 = vsel %vm5746, %v5682, %v5810
    %v5875 = vsel %vm5747, %v5683, %v5811
    %v5876 = vsel %vm5748, %v5684, %v5812
    %v5877 = vsel %vm5749, %v5685, %v5813
    %v5878 = vsel %vm5750, %v5686, %v5814
    %v5879 = vsel %vm5751, %v5687, %v5815
    %v5880 = vsel %vm5752, %v5688, %v5816
    %v5881 = vsel %vm5753, %v5689, %v5817
    %v5882 = vsel %vm5754, %v5690, %v5818
    %v5883 = vsel %vm5755, %v5691, %v5819
    %v5884 = vsel %vm5756, %v5692, %v5820
    %v5885 = vsel %vm5757, %v5693, %v5821
    %v5886 = vsel %vm5758, %v5694, %v5822
    %v5887 = vsel %vm5759, %v5695, %v5823
    %v5888 = vsel %vm5760, %v5696, %v5824
    %s5889 = scalar_lea.vmem [#allocation7], 256
    %v5890 = vld [vmem:[%s5889] sm:$0xff]
    %v5891 = vld [vmem:[%s5889 + $0x8] sm:$0xff]
    %v5892 = vld [vmem:[%s5889 + $0x10] sm:$0xff]
    %v5893 = vld [vmem:[%s5889 + $0x18] sm:$0xff]
    %v5894 = vld [vmem:[%s5889 + $0x20] sm:$0xff]
    %v5895 = vld [vmem:[%s5889 + $0x28] sm:$0xff]
    %v5896 = vld [vmem:[%s5889 + $0x30] sm:$0xff]
    %v5897 = vld [vmem:[%s5889 + $0x38] sm:$0xff]
    %v5898 = vld [vmem:[%s5889 + $0x40] sm:$0xff]
    %v5899 = vld [vmem:[%s5889 + $0x48] sm:$0xff]
    %v5900 = vld [vmem:[%s5889 + $0x50] sm:$0xff]
    %v5901 = vld [vmem:[%s5889 + $0x58] sm:$0xff]
    %v5902 = vld [vmem:[%s5889 + $0x60] sm:$0xff]
    %v5903 = vld [vmem:[%s5889 + $0x68] sm:$0xff]
    %v5904 = vld [vmem:[%s5889 + $0x70] sm:$0xff]
    %v5905 = vld [vmem:[%s5889 + $0x78] sm:$0xff]
    %5906 = vmatpush.msra.mxu0 %v5905
    %5907 = vmatpush.msra.mxu0 %v5904
    %5908 = vmatpush.msra.mxu0 %v5903
    %5909 = vmatpush.msra.mxu0 %v5902
    %5910 = vmatpush.msra.mxu0 %v5901
    %5911 = vmatpush.msra.mxu0 %v5900
    %5912 = vmatpush.msra.mxu0 %v5899
    %5913 = vmatpush.msra.mxu0 %v5898
    %5914 = vmatpush.msra.mxu0 %v5897
    %5915 = vmatpush.msra.mxu0 %v5896
    %5916 = vmatpush.msra.mxu0 %v5895
    %5917 = vmatpush.msra.mxu0 %v5894
    %5918 = vmatpush.msra.mxu0 %v5893
    %5919 = vmatpush.msra.mxu0 %v5892
    %5920 = vmatpush.msra.mxu0 %v5891
    %5921 = vmatpush.msra.mxu0 %v5890
    %5922 = vmatmul.f32.gmra.mxu0 %v5825
    %v5923 = vpop.f32.mrf.mxu0
    %v5924 = vadd.f32 0.0, %v5923
    %5925 = vmatmul.f32.gmra.mxu0 %v5826
    %v5926 = vpop.f32.mrf.mxu0
    %v5927 = vadd.f32 0.0, %v5926
    %5928 = vmatmul.f32.gmra.mxu0 %v5827
    %v5929 = vpop.f32.mrf.mxu0
    %v5930 = vadd.f32 0.0, %v5929
    %5931 = vmatmul.f32.gmra.mxu0 %v5828
    %v5932 = vpop.f32.mrf.mxu0
    %v5933 = vadd.f32 0.0, %v5932
    %5934 = vmatmul.f32.gmra.mxu0 %v5829
    %v5935 = vpop.f32.mrf.mxu0
    %v5936 = vadd.f32 0.0, %v5935
    %5937 = vmatmul.f32.gmra.mxu0 %v5830
    %v5938 = vpop.f32.mrf.mxu0
    %v5939 = vadd.f32 0.0, %v5938
    %5940 = vmatmul.f32.gmra.mxu0 %v5831
    %v5941 = vpop.f32.mrf.mxu0
    %v5942 = vadd.f32 0.0, %v5941
    %5943 = vmatmul.f32.gmra.mxu0 %v5832
    %v5944 = vpop.f32.mrf.mxu0
    %v5945 = vadd.f32 0.0, %v5944
    %5946 = vmatmul.f32.gmra.mxu0 %v5833
    %v5947 = vpop.f32.mrf.mxu0
    %v5948 = vadd.f32 0.0, %v5947
    %5949 = vmatmul.f32.gmra.mxu0 %v5834
    %v5950 = vpop.f32.mrf.mxu0
    %v5951 = vadd.f32 0.0, %v5950
    %5952 = vmatmul.f32.gmra.mxu0 %v5835
    %v5953 = vpop.f32.mrf.mxu0
    %v5954 = vadd.f32 0.0, %v5953
    %5955 = vmatmul.f32.gmra.mxu0 %v5836
    %v5956 = vpop.f32.mrf.mxu0
    %v5957 = vadd.f32 0.0, %v5956
    %5958 = vmatmul.f32.gmra.mxu0 %v5837
    %v5959 = vpop.f32.mrf.mxu0
    %v5960 = vadd.f32 0.0, %v5959
    %5961 = vmatmul.f32.gmra.mxu0 %v5838
    %v5962 = vpop.f32.mrf.mxu0
    %v5963 = vadd.f32 0.0, %v5962
    %5964 = vmatmul.f32.gmra.mxu0 %v5839
    %v5965 = vpop.f32.mrf.mxu0
    %v5966 = vadd.f32 0.0, %v5965
    %5967 = vmatmul.f32.gmra.mxu0 %v5840
    %v5968 = vpop.f32.mrf.mxu0
    %v5969 = vadd.f32 0.0, %v5968
    %5970 = vmatmul.f32.gmra.mxu0 %v5841
    %v5971 = vpop.f32.mrf.mxu0
    %v5972 = vadd.f32 0.0, %v5971
    %5973 = vmatmul.f32.gmra.mxu0 %v5842
    %v5974 = vpop.f32.mrf.mxu0
    %v5975 = vadd.f32 0.0, %v5974
    %5976 = vmatmul.f32.gmra.mxu0 %v5843
    %v5977 = vpop.f32.mrf.mxu0
    %v5978 = vadd.f32 0.0, %v5977
    %5979 = vmatmul.f32.gmra.mxu0 %v5844
    %v5980 = vpop.f32.mrf.mxu0
    %v5981 = vadd.f32 0.0, %v5980
    %5982 = vmatmul.f32.gmra.mxu0 %v5845
    %v5983 = vpop.f32.mrf.mxu0
    %v5984 = vadd.f32 0.0, %v5983
    %5985 = vmatmul.f32.gmra.mxu0 %v5846
    %v5986 = vpop.f32.mrf.mxu0
    %v5987 = vadd.f32 0.0, %v5986
    %5988 = vmatmul.f32.gmra.mxu0 %v5847
    %v5989 = vpop.f32.mrf.mxu0
    %v5990 = vadd.f32 0.0, %v5989
    %5991 = vmatmul.f32.gmra.mxu0 %v5848
    %v5992 = vpop.f32.mrf.mxu0
    %v5993 = vadd.f32 0.0, %v5992
    %5994 = vmatmul.f32.gmra.mxu0 %v5849
    %v5995 = vpop.f32.mrf.mxu0
    %v5996 = vadd.f32 0.0, %v5995
    %5997 = vmatmul.f32.gmra.mxu0 %v5850
    %v5998 = vpop.f32.mrf.mxu0
    %v5999 = vadd.f32 0.0, %v5998
    %6000 = vmatmul.f32.gmra.mxu0 %v5851
    %v6001 = vpop.f32.mrf.mxu0
    %v6002 = vadd.f32 0.0, %v6001
    %6003 = vmatmul.f32.gmra.mxu0 %v5852
    %v6004 = vpop.f32.mrf.mxu0
    %v6005 = vadd.f32 0.0, %v6004
    %6006 = vmatmul.f32.gmra.mxu0 %v5853
    %v6007 = vpop.f32.mrf.mxu0
    %v6008 = vadd.f32 0.0, %v6007
    %6009 = vmatmul.f32.gmra.mxu0 %v5854
    %v6010 = vpop.f32.mrf.mxu0
    %v6011 = vadd.f32 0.0, %v6010
    %6012 = vmatmul.f32.gmra.mxu0 %v5855
    %v6013 = vpop.f32.mrf.mxu0
    %v6014 = vadd.f32 0.0, %v6013
    %6015 = vmatmul.f32.gmra.mxu0 %v5856
    %v6016 = vpop.f32.mrf.mxu0
    %v6017 = vadd.f32 0.0, %v6016
    %6018 = vmatmul.f32.gmra.mxu0 %v5857
    %v6019 = vpop.f32.mrf.mxu0
    %v6020 = vadd.f32 0.0, %v6019
    %6021 = vmatmul.f32.gmra.mxu0 %v5858
    %v6022 = vpop.f32.mrf.mxu0
    %v6023 = vadd.f32 0.0, %v6022
    %6024 = vmatmul.f32.gmra.mxu0 %v5859
    %v6025 = vpop.f32.mrf.mxu0
    %v6026 = vadd.f32 0.0, %v6025
    %6027 = vmatmul.f32.gmra.mxu0 %v5860
    %v6028 = vpop.f32.mrf.mxu0
    %v6029 = vadd.f32 0.0, %v6028
    %6030 = vmatmul.f32.gmra.mxu0 %v5861
    %v6031 = vpop.f32.mrf.mxu0
    %v6032 = vadd.f32 0.0, %v6031
    %6033 = vmatmul.f32.gmra.mxu0 %v5862
    %v6034 = vpop.f32.mrf.mxu0
    %v6035 = vadd.f32 0.0, %v6034
    %6036 = vmatmul.f32.gmra.mxu0 %v5863
    %v6037 = vpop.f32.mrf.mxu0
    %v6038 = vadd.f32 0.0, %v6037
    %6039 = vmatmul.f32.gmra.mxu0 %v5864
    %v6040 = vpop.f32.mrf.mxu0
    %v6041 = vadd.f32 0.0, %v6040
    %6042 = vmatmul.f32.gmra.mxu0 %v5865
    %v6043 = vpop.f32.mrf.mxu0
    %v6044 = vadd.f32 0.0, %v6043
    %6045 = vmatmul.f32.gmra.mxu0 %v5866
    %v6046 = vpop.f32.mrf.mxu0
    %v6047 = vadd.f32 0.0, %v6046
    %6048 = vmatmul.f32.gmra.mxu0 %v5867
    %v6049 = vpop.f32.mrf.mxu0
    %v6050 = vadd.f32 0.0, %v6049
    %6051 = vmatmul.f32.gmra.mxu0 %v5868
    %v6052 = vpop.f32.mrf.mxu0
    %v6053 = vadd.f32 0.0, %v6052
    %6054 = vmatmul.f32.gmra.mxu0 %v5869
    %v6055 = vpop.f32.mrf.mxu0
    %v6056 = vadd.f32 0.0, %v6055
    %6057 = vmatmul.f32.gmra.mxu0 %v5870
    %v6058 = vpop.f32.mrf.mxu0
    %v6059 = vadd.f32 0.0, %v6058
    %6060 = vmatmul.f32.gmra.mxu0 %v5871
    %v6061 = vpop.f32.mrf.mxu0
    %v6062 = vadd.f32 0.0, %v6061
    %6063 = vmatmul.f32.gmra.mxu0 %v5872
    %v6064 = vpop.f32.mrf.mxu0
    %v6065 = vadd.f32 0.0, %v6064
    %6066 = vmatmul.f32.gmra.mxu0 %v5873
    %v6067 = vpop.f32.mrf.mxu0
    %v6068 = vadd.f32 0.0, %v6067
    %6069 = vmatmul.f32.gmra.mxu0 %v5874
    %v6070 = vpop.f32.mrf.mxu0
    %v6071 = vadd.f32 0.0, %v6070
    %6072 = vmatmul.f32.gmra.mxu0 %v5875
    %v6073 = vpop.f32.mrf.mxu0
    %v6074 = vadd.f32 0.0, %v6073
    %6075 = vmatmul.f32.gmra.mxu0 %v5876
    %v6076 = vpop.f32.mrf.mxu0
    %v6077 = vadd.f32 0.0, %v6076
    %6078 = vmatmul.f32.gmra.mxu0 %v5877
    %v6079 = vpop.f32.mrf.mxu0
    %v6080 = vadd.f32 0.0, %v6079
    %6081 = vmatmul.f32.gmra.mxu0 %v5878
    %v6082 = vpop.f32.mrf.mxu0
    %v6083 = vadd.f32 0.0, %v6082
    %6084 = vmatmul.f32.gmra.mxu0 %v5879
    %v6085 = vpop.f32.mrf.mxu0
    %v6086 = vadd.f32 0.0, %v6085
    %6087 = vmatmul.f32.gmra.mxu0 %v5880
    %v6088 = vpop.f32.mrf.mxu0
    %v6089 = vadd.f32 0.0, %v6088
    %6090 = vmatmul.f32.gmra.mxu0 %v5881
    %v6091 = vpop.f32.mrf.mxu0
    %v6092 = vadd.f32 0.0, %v6091
    %6093 = vmatmul.f32.gmra.mxu0 %v5882
    %v6094 = vpop.f32.mrf.mxu0
    %v6095 = vadd.f32 0.0, %v6094
    %6096 = vmatmul.f32.gmra.mxu0 %v5883
    %v6097 = vpop.f32.mrf.mxu0
    %v6098 = vadd.f32 0.0, %v6097
    %6099 = vmatmul.f32.gmra.mxu0 %v5884
    %v6100 = vpop.f32.mrf.mxu0
    %v6101 = vadd.f32 0.0, %v6100
    %6102 = vmatmul.f32.gmra.mxu0 %v5885
    %v6103 = vpop.f32.mrf.mxu0
    %v6104 = vadd.f32 0.0, %v6103
    %6105 = vmatmul.f32.gmra.mxu0 %v5886
    %v6106 = vpop.f32.mrf.mxu0
    %v6107 = vadd.f32 0.0, %v6106
    %6108 = vmatmul.f32.gmra.mxu0 %v5887
    %v6109 = vpop.f32.mrf.mxu0
    %v6110 = vadd.f32 0.0, %v6109
    %6111 = vmatmul.f32.gmra.mxu0 %v5888
    %v6112 = vpop.f32.mrf.mxu0
    %v6113 = vadd.f32 0.0, %v6112
    %6114 = vdwg.mxu0
    %v6115 = vadd.f32 %v5924, %v125
    %v6116 = vadd.f32 %v5927, %v131
    %v6117 = vadd.f32 %v5930, %v138
    %v6118 = vadd.f32 %v5933, %v144
    %v6119 = vadd.f32 %v5936, %v151
    %v6120 = vadd.f32 %v5939, %v157
    %v6121 = vadd.f32 %v5942, %v164
    %v6122 = vadd.f32 %v5945, %v170
    %v6123 = vadd.f32 %v5948, %v177
    %v6124 = vadd.f32 %v5951, %v183
    %v6125 = vadd.f32 %v5954, %v190
    %v6126 = vadd.f32 %v5957, %v196
    %v6127 = vadd.f32 %v5960, %v203
    %v6128 = vadd.f32 %v5963, %v209
    %v6129 = vadd.f32 %v5966, %v216
    %v6130 = vadd.f32 %v5969, %v222
    %v6131 = vadd.f32 %v5972, %v229
    %v6132 = vadd.f32 %v5975, %v235
    %v6133 = vadd.f32 %v5978, %v242
    %v6134 = vadd.f32 %v5981, %v248
    %v6135 = vadd.f32 %v5984, %v255
    %v6136 = vadd.f32 %v5987, %v261
    %v6137 = vadd.f32 %v5990, %v268
    %v6138 = vadd.f32 %v5993, %v274
    %v6139 = vadd.f32 %v5996, %v281
    %v6140 = vadd.f32 %v5999, %v287
    %v6141 = vadd.f32 %v6002, %v294
    %v6142 = vadd.f32 %v6005, %v300
    %v6143 = vadd.f32 %v6008, %v307
    %v6144 = vadd.f32 %v6011, %v313
    %v6145 = vadd.f32 %v6014, %v320
    %v6146 = vadd.f32 %v6017, %v326
    %v6147 = vadd.f32 %v6020, %v333
    %v6148 = vadd.f32 %v6023, %v339
    %v6149 = vadd.f32 %v6026, %v346
    %v6150 = vadd.f32 %v6029, %v352
    %v6151 = vadd.f32 %v6032, %v359
    %v6152 = vadd.f32 %v6035, %v365
    %v6153 = vadd.f32 %v6038, %v372
    %v6154 = vadd.f32 %v6041, %v378
    %v6155 = vadd.f32 %v6044, %v385
    %v6156 = vadd.f32 %v6047, %v391
    %v6157 = vadd.f32 %v6050, %v398
    %v6158 = vadd.f32 %v6053, %v404
    %v6159 = vadd.f32 %v6056, %v411
    %v6160 = vadd.f32 %v6059, %v417
    %v6161 = vadd.f32 %v6062, %v424
    %v6162 = vadd.f32 %v6065, %v430
    %v6163 = vadd.f32 %v6068, %v437
    %v6164 = vadd.f32 %v6071, %v443
    %v6165 = vadd.f32 %v6074, %v450
    %v6166 = vadd.f32 %v6077, %v456
    %v6167 = vadd.f32 %v6080, %v463
    %v6168 = vadd.f32 %v6083, %v469
    %v6169 = vadd.f32 %v6086, %v476
    %v6170 = vadd.f32 %v6089, %v482
    %v6171 = vadd.f32 %v6092, %v489
    %v6172 = vadd.f32 %v6095, %v495
    %v6173 = vadd.f32 %v6098, %v502
    %v6174 = vadd.f32 %v6101, %v508
    %v6175 = vadd.f32 %v6104, %v515
    %v6176 = vadd.f32 %v6107, %v521
    %v6177 = vadd.f32 %v6110, %v528
    %v6178 = vadd.f32 %v6113, %v534
    %v6179 = vmax.f32 %v6115, %v6116
    %v6180 = vrot.slane %v6179, 4
    %v6181 = vmax.f32 %v6179, %v6180
    %v6182 = vrot.slane %v6181, 2
    %v6183 = vmax.f32 %v6181, %v6182
    %v6184 = vrot.slane %v6183, 1
    %v6185 = vmax.f32 %v6183, %v6184
    %v6186 = vmax.f32 %v6117, %v6118
    %v6187 = vrot.slane %v6186, 4
    %v6188 = vmax.f32 %v6186, %v6187
    %v6189 = vrot.slane %v6188, 2
    %v6190 = vmax.f32 %v6188, %v6189
    %v6191 = vrot.slane %v6190, 1
    %v6192 = vmax.f32 %v6190, %v6191
    %v6193 = vmax.f32 %v6119, %v6120
    %v6194 = vrot.slane %v6193, 4
    %v6195 = vmax.f32 %v6193, %v6194
    %v6196 = vrot.slane %v6195, 2
    %v6197 = vmax.f32 %v6195, %v6196
    %v6198 = vrot.slane %v6197, 1
    %v6199 = vmax.f32 %v6197, %v6198
    %v6200 = vmax.f32 %v6121, %v6122
    %v6201 = vrot.slane %v6200, 4
    %v6202 = vmax.f32 %v6200, %v6201
    %v6203 = vrot.slane %v6202, 2
    %v6204 = vmax.f32 %v6202, %v6203
    %v6205 = vrot.slane %v6204, 1
    %v6206 = vmax.f32 %v6204, %v6205
    %v6207 = vmax.f32 %v6123, %v6124
    %v6208 = vrot.slane %v6207, 4
    %v6209 = vmax.f32 %v6207, %v6208
    %v6210 = vrot.slane %v6209, 2
    %v6211 = vmax.f32 %v6209, %v6210
    %v6212 = vrot.slane %v6211, 1
    %v6213 = vmax.f32 %v6211, %v6212
    %v6214 = vmax.f32 %v6125, %v6126
    %v6215 = vrot.slane %v6214, 4
    %v6216 = vmax.f32 %v6214, %v6215
    %v6217 = vrot.slane %v6216, 2
    %v6218 = vmax.f32 %v6216, %v6217
    %v6219 = vrot.slane %v6218, 1
    %v6220 = vmax.f32 %v6218, %v6219
    %v6221 = vmax.f32 %v6127, %v6128
    %v6222 = vrot.slane %v6221, 4
    %v6223 = vmax.f32 %v6221, %v6222
    %v6224 = vrot.slane %v6223, 2
    %v6225 = vmax.f32 %v6223, %v6224
    %v6226 = vrot.slane %v6225, 1
    %v6227 = vmax.f32 %v6225, %v6226
    %v6228 = vmax.f32 %v6129, %v6130
    %v6229 = vrot.slane %v6228, 4
    %v6230 = vmax.f32 %v6228, %v6229
    %v6231 = vrot.slane %v6230, 2
    %v6232 = vmax.f32 %v6230, %v6231
    %v6233 = vrot.slane %v6232, 1
    %v6234 = vmax.f32 %v6232, %v6233
    %v6235 = vmax.f32 %v6131, %v6132
    %v6236 = vrot.slane %v6235, 4
    %v6237 = vmax.f32 %v6235, %v6236
    %v6238 = vrot.slane %v6237, 2
    %v6239 = vmax.f32 %v6237, %v6238
    %v6240 = vrot.slane %v6239, 1
    %v6241 = vmax.f32 %v6239, %v6240
    %v6242 = vmax.f32 %v6133, %v6134
    %v6243 = vrot.slane %v6242, 4
    %v6244 = vmax.f32 %v6242, %v6243
    %v6245 = vrot.slane %v6244, 2
    %v6246 = vmax.f32 %v6244, %v6245
    %v6247 = vrot.slane %v6246, 1
    %v6248 = vmax.f32 %v6246, %v6247
    %v6249 = vmax.f32 %v6135, %v6136
    %v6250 = vrot.slane %v6249, 4
    %v6251 = vmax.f32 %v6249, %v6250
    %v6252 = vrot.slane %v6251, 2
    %v6253 = vmax.f32 %v6251, %v6252
    %v6254 = vrot.slane %v6253, 1
    %v6255 = vmax.f32 %v6253, %v6254
    %v6256 = vmax.f32 %v6137, %v6138
    %v6257 = vrot.slane %v6256, 4
    %v6258 = vmax.f32 %v6256, %v6257
    %v6259 = vrot.slane %v6258, 2
    %v6260 = vmax.f32 %v6258, %v6259
    %v6261 = vrot.slane %v6260, 1
    %v6262 = vmax.f32 %v6260, %v6261
    %v6263 = vmax.f32 %v6139, %v6140
    %v6264 = vrot.slane %v6263, 4
    %v6265 = vmax.f32 %v6263, %v6264
    %v6266 = vrot.slane %v6265, 2
    %v6267 = vmax.f32 %v6265, %v6266
    %v6268 = vrot.slane %v6267, 1
    %v6269 = vmax.f32 %v6267, %v6268
    %v6270 = vmax.f32 %v6141, %v6142
    %v6271 = vrot.slane %v6270, 4
    %v6272 = vmax.f32 %v6270, %v6271
    %v6273 = vrot.slane %v6272, 2
    %v6274 = vmax.f32 %v6272, %v6273
    %v6275 = vrot.slane %v6274, 1
    %v6276 = vmax.f32 %v6274, %v6275
    %v6277 = vmax.f32 %v6143, %v6144
    %v6278 = vrot.slane %v6277, 4
    %v6279 = vmax.f32 %v6277, %v6278
    %v6280 = vrot.slane %v6279, 2
    %v6281 = vmax.f32 %v6279, %v6280
    %v6282 = vrot.slane %v6281, 1
    %v6283 = vmax.f32 %v6281, %v6282
    %v6284 = vmax.f32 %v6145, %v6146
    %v6285 = vrot.slane %v6284, 4
    %v6286 = vmax.f32 %v6284, %v6285
    %v6287 = vrot.slane %v6286, 2
    %v6288 = vmax.f32 %v6286, %v6287
    %v6289 = vrot.slane %v6288, 1
    %v6290 = vmax.f32 %v6288, %v6289
    %v6291 = vmax.f32 %v6147, %v6148
    %v6292 = vrot.slane %v6291, 4
    %v6293 = vmax.f32 %v6291, %v6292
    %v6294 = vrot.slane %v6293, 2
    %v6295 = vmax.f32 %v6293, %v6294
    %v6296 = vrot.slane %v6295, 1
    %v6297 = vmax.f32 %v6295, %v6296
    %v6298 = vmax.f32 %v6149, %v6150
    %v6299 = vrot.slane %v6298, 4
    %v6300 = vmax.f32 %v6298, %v6299
    %v6301 = vrot.slane %v6300, 2
    %v6302 = vmax.f32 %v6300, %v6301
    %v6303 = vrot.slane %v6302, 1
    %v6304 = vmax.f32 %v6302, %v6303
    %v6305 = vmax.f32 %v6151, %v6152
    %v6306 = vrot.slane %v6305, 4
    %v6307 = vmax.f32 %v6305, %v6306
    %v6308 = vrot.slane %v6307, 2
    %v6309 = vmax.f32 %v6307, %v6308
    %v6310 = vrot.slane %v6309, 1
    %v6311 = vmax.f32 %v6309, %v6310
    %v6312 = vmax.f32 %v6153, %v6154
    %v6313 = vrot.slane %v6312, 4
    %v6314 = vmax.f32 %v6312, %v6313
    %v6315 = vrot.slane %v6314, 2
    %v6316 = vmax.f32 %v6314, %v6315
    %v6317 = vrot.slane %v6316, 1
    %v6318 = vmax.f32 %v6316, %v6317
    %v6319 = vmax.f32 %v6155, %v6156
    %v6320 = vrot.slane %v6319, 4
    %v6321 = vmax.f32 %v6319, %v6320
    %v6322 = vrot.slane %v6321, 2
    %v6323 = vmax.f32 %v6321, %v6322
    %v6324 = vrot.slane %v6323, 1
    %v6325 = vmax.f32 %v6323, %v6324
    %v6326 = vmax.f32 %v6157, %v6158
    %v6327 = vrot.slane %v6326, 4
    %v6328 = vmax.f32 %v6326, %v6327
    %v6329 = vrot.slane %v6328, 2
    %v6330 = vmax.f32 %v6328, %v6329
    %v6331 = vrot.slane %v6330, 1
    %v6332 = vmax.f32 %v6330, %v6331
    %v6333 = vmax.f32 %v6159, %v6160
    %v6334 = vrot.slane %v6333, 4
    %v6335 = vmax.f32 %v6333, %v6334
    %v6336 = vrot.slane %v6335, 2
    %v6337 = vmax.f32 %v6335, %v6336
    %v6338 = vrot.slane %v6337, 1
    %v6339 = vmax.f32 %v6337, %v6338
    %v6340 = vmax.f32 %v6161, %v6162
    %v6341 = vrot.slane %v6340, 4
    %v6342 = vmax.f32 %v6340, %v6341
    %v6343 = vrot.slane %v6342, 2
    %v6344 = vmax.f32 %v6342, %v6343
    %v6345 = vrot.slane %v6344, 1
    %v6346 = vmax.f32 %v6344, %v6345
    %v6347 = vmax.f32 %v6163, %v6164
    %v6348 = vrot.slane %v6347, 4
    %v6349 = vmax.f32 %v6347, %v6348
    %v6350 = vrot.slane %v6349, 2
    %v6351 = vmax.f32 %v6349, %v6350
    %v6352 = vrot.slane %v6351, 1
    %v6353 = vmax.f32 %v6351, %v6352
    %v6354 = vmax.f32 %v6165, %v6166
    %v6355 = vrot.slane %v6354, 4
    %v6356 = vmax.f32 %v6354, %v6355
    %v6357 = vrot.slane %v6356, 2
    %v6358 = vmax.f32 %v6356, %v6357
    %v6359 = vrot.slane %v6358, 1
    %v6360 = vmax.f32 %v6358, %v6359
    %v6361 = vmax.f32 %v6167, %v6168
    %v6362 = vrot.slane %v6361, 4
    %v6363 = vmax.f32 %v6361, %v6362
    %v6364 = vrot.slane %v6363, 2
    %v6365 = vmax.f32 %v6363, %v6364
    %v6366 = vrot.slane %v6365, 1
    %v6367 = vmax.f32 %v6365, %v6366
    %v6368 = vmax.f32 %v6169, %v6170
    %v6369 = vrot.slane %v6368, 4
    %v6370 = vmax.f32 %v6368, %v6369
    %v6371 = vrot.slane %v6370, 2
    %v6372 = vmax.f32 %v6370, %v6371
    %v6373 = vrot.slane %v6372, 1
    %v6374 = vmax.f32 %v6372, %v6373
    %v6375 = vmax.f32 %v6171, %v6172
    %v6376 = vrot.slane %v6375, 4
    %v6377 = vmax.f32 %v6375, %v6376
    %v6378 = vrot.slane %v6377, 2
    %v6379 = vmax.f32 %v6377, %v6378
    %v6380 = vrot.slane %v6379, 1
    %v6381 = vmax.f32 %v6379, %v6380
    %v6382 = vmax.f32 %v6173, %v6174
    %v6383 = vrot.slane %v6382, 4
    %v6384 = vmax.f32 %v6382, %v6383
    %v6385 = vrot.slane %v6384, 2
    %v6386 = vmax.f32 %v6384, %v6385
    %v6387 = vrot.slane %v6386, 1
    %v6388 = vmax.f32 %v6386, %v6387
    %v6389 = vmax.f32 %v6175, %v6176
    %v6390 = vrot.slane %v6389, 4
    %v6391 = vmax.f32 %v6389, %v6390
    %v6392 = vrot.slane %v6391, 2
    %v6393 = vmax.f32 %v6391, %v6392
    %v6394 = vrot.slane %v6393, 1
    %v6395 = vmax.f32 %v6393, %v6394
    %v6396 = vmax.f32 %v6177, %v6178
    %v6397 = vrot.slane %v6396, 4
    %v6398 = vmax.f32 %v6396, %v6397
    %v6399 = vrot.slane %v6398, 2
    %v6400 = vmax.f32 %v6398, %v6399
    %v6401 = vrot.slane %v6400, 1
    %v6402 = vmax.f32 %v6400, %v6401
    %v6403 = vsub.f32 %v6115, %v6185
    %v6404 = vsub.f32 %v6116, %v6185
    %v6405 = vsub.f32 %v6117, %v6192
    %v6406 = vsub.f32 %v6118, %v6192
    %v6407 = vsub.f32 %v6119, %v6199
    %v6408 = vsub.f32 %v6120, %v6199
    %v6409 = vsub.f32 %v6121, %v6206
    %v6410 = vsub.f32 %v6122, %v6206
    %v6411 = vsub.f32 %v6123, %v6213
    %v6412 = vsub.f32 %v6124, %v6213
    %v6413 = vsub.f32 %v6125, %v6220
    %v6414 = vsub.f32 %v6126, %v6220
    %v6415 = vsub.f32 %v6127, %v6227
    %v6416 = vsub.f32 %v6128, %v6227
    %v6417 = vsub.f32 %v6129, %v6234
    %v6418 = vsub.f32 %v6130, %v6234
    %v6419 = vsub.f32 %v6131, %v6241
    %v6420 = vsub.f32 %v6132, %v6241
    %v6421 = vsub.f32 %v6133, %v6248
    %v6422 = vsub.f32 %v6134, %v6248
    %v6423 = vsub.f32 %v6135, %v6255
    %v6424 = vsub.f32 %v6136, %v6255
    %v6425 = vsub.f32 %v6137, %v6262
    %v6426 = vsub.f32 %v6138, %v6262
    %v6427 = vsub.f32 %v6139, %v6269
    %v6428 = vsub.f32 %v6140, %v6269
    %v6429 = vsub.f32 %v6141, %v6276
    %v6430 = vsub.f32 %v6142, %v6276
    %v6431 = vsub.f32 %v6143, %v6283
    %v6432 = vsub.f32 %v6144, %v6283
    %v6433 = vsub.f32 %v6145, %v6290
    %v6434 = vsub.f32 %v6146, %v6290
    %v6435 = vsub.f32 %v6147, %v6297
    %v6436 = vsub.f32 %v6148, %v6297
    %v6437 = vsub.f32 %v6149, %v6304
    %v6438 = vsub.f32 %v6150, %v6304
    %v6439 = vsub.f32 %v6151, %v6311
    %v6440 = vsub.f32 %v6152, %v6311
    %v6441 = vsub.f32 %v6153, %v6318
    %v6442 = vsub.f32 %v6154, %v6318
    %v6443 = vsub.f32 %v6155, %v6325
    %v6444 = vsub.f32 %v6156, %v6325
    %v6445 = vsub.f32 %v6157, %v6332
    %v6446 = vsub.f32 %v6158, %v6332
    %v6447 = vsub.f32 %v6159, %v6339
    %v6448 = vsub.f32 %v6160, %v6339
    %v6449 = vsub.f32 %v6161, %v6346
    %v6450 = vsub.f32 %v6162, %v6346
    %v6451 = vsub.f32 %v6163, %v6353
    %v6452 = vsub.f32 %v6164, %v6353
    %v6453 = vsub.f32 %v6165, %v6360
    %v6454 = vsub.f32 %v6166, %v6360
    %v6455 = vsub.f32 %v6167, %v6367
    %v6456 = vsub.f32 %v6168, %v6367
    %v6457 = vsub.f32 %v6169, %v6374
    %v6458 = vsub.f32 %v6170, %v6374
    %v6459 = vsub.f32 %v6171, %v6381
    %v6460 = vsub.f32 %v6172, %v6381
    %v6461 = vsub.f32 %v6173, %v6388
    %v6462 = vsub.f32 %v6174, %v6388
    %v6463 = vsub.f32 %v6175, %v6395
    %v6464 = vsub.f32 %v6176, %v6395
    %v6465 = vsub.f32 %v6177, %v6402
    %v6466 = vsub.f32 %v6178, %v6402
    %v6467 = vmul.f32 %v6403, 1.442695
    %v6468 = vpow.pop %v6467
    %v6469 = vmul.f32 %v6404, 1.442695
    %v6470 = vpow.pop %v6469
    %v6471 = vmul.f32 %v6405, 1.442695
    %v6472 = vpow.pop %v6471
    %v6473 = vmul.f32 %v6406, 1.442695
    %v6474 = vpow.pop %v6473
    %v6475 = vmul.f32 %v6407, 1.442695
    %v6476 = vpow.pop %v6475
    %v6477 = vmul.f32 %v6408, 1.442695
    %v6478 = vpow.pop %v6477
    %v6479 = vmul.f32 %v6409, 1.442695
    %v6480 = vpow.pop %v6479
    %v6481 = vmul.f32 %v6410, 1.442695
    %v6482 = vpow.pop %v6481
    %v6483 = vmul.f32 %v6411, 1.442695
    %v6484 = vpow.pop %v6483
    %v6485 = vmul.f32 %v6412, 1.442695
    %v6486 = vpow.pop %v6485
    %v6487 = vmul.f32 %v6413, 1.442695
    %v6488 = vpow.pop %v6487
    %v6489 = vmul.f32 %v6414, 1.442695
    %v6490 = vpow.pop %v6489
    %v6491 = vmul.f32 %v6415, 1.442695
    %v6492 = vpow.pop %v6491
    %v6493 = vmul.f32 %v6416, 1.442695
    %v6494 = vpow.pop %v6493
    %v6495 = vmul.f32 %v6417, 1.442695
    %v6496 = vpow.pop %v6495
    %v6497 = vmul.f32 %v6418, 1.442695
    %v6498 = vpow.pop %v6497
    %v6499 = vmul.f32 %v6419, 1.442695
    %v6500 = vpow.pop %v6499
    %v6501 = vmul.f32 %v6420, 1.442695
    %v6502 = vpow.pop %v6501
    %v6503 = vmul.f32 %v6421, 1.442695
    %v6504 = vpow.pop %v6503
    %v6505 = vmul.f32 %v6422, 1.442695
    %v6506 = vpow.pop %v6505
    %v6507 = vmul.f32 %v6423, 1.442695
    %v6508 = vpow.pop %v6507
    %v6509 = vmul.f32 %v6424, 1.442695
    %v6510 = vpow.pop %v6509
    %v6511 = vmul.f32 %v6425, 1.442695
    %v6512 = vpow.pop %v6511
    %v6513 = vmul.f32 %v6426, 1.442695
    %v6514 = vpow.pop %v6513
    %v6515 = vmul.f32 %v6427, 1.442695
    %v6516 = vpow.pop %v6515
    %v6517 = vmul.f32 %v6428, 1.442695
    %v6518 = vpow.pop %v6517
    %v6519 = vmul.f32 %v6429, 1.442695
    %v6520 = vpow.pop %v6519
    %v6521 = vmul.f32 %v6430, 1.442695
    %v6522 = vpow.pop %v6521
    %v6523 = vmul.f32 %v6431, 1.442695
    %v6524 = vpow.pop %v6523
    %v6525 = vmul.f32 %v6432, 1.442695
    %v6526 = vpow.pop %v6525
    %v6527 = vmul.f32 %v6433, 1.442695
    %v6528 = vpow.pop %v6527
    %v6529 = vmul.f32 %v6434, 1.442695
    %v6530 = vpow.pop %v6529
    %v6531 = vmul.f32 %v6435, 1.442695
    %v6532 = vpow.pop %v6531
    %v6533 = vmul.f32 %v6436, 1.442695
    %v6534 = vpow.pop %v6533
    %v6535 = vmul.f32 %v6437, 1.442695
    %v6536 = vpow.pop %v6535
    %v6537 = vmul.f32 %v6438, 1.442695
    %v6538 = vpow.pop %v6537
    %v6539 = vmul.f32 %v6439, 1.442695
    %v6540 = vpow.pop %v6539
    %v6541 = vmul.f32 %v6440, 1.442695
    %v6542 = vpow.pop %v6541
    %v6543 = vmul.f32 %v6441, 1.442695
    %v6544 = vpow.pop %v6543
    %v6545 = vmul.f32 %v6442, 1.442695
    %v6546 = vpow.pop %v6545
    %v6547 = vmul.f32 %v6443, 1.442695
    %v6548 = vpow.pop %v6547
    %v6549 = vmul.f32 %v6444, 1.442695
    %v6550 = vpow.pop %v6549
    %v6551 = vmul.f32 %v6445, 1.442695
    %v6552 = vpow.pop %v6551
    %v6553 = vmul.f32 %v6446, 1.442695
    %v6554 = vpow.pop %v6553
    %v6555 = vmul.f32 %v6447, 1.442695
    %v6556 = vpow.pop %v6555
    %v6557 = vmul.f32 %v6448, 1.442695
    %v6558 = vpow.pop %v6557
    %v6559 = vmul.f32 %v6449, 1.442695
    %v6560 = vpow.pop %v6559
    %v6561 = vmul.f32 %v6450, 1.442695
    %v6562 = vpow.pop %v6561
    %v6563 = vmul.f32 %v6451, 1.442695
    %v6564 = vpow.pop %v6563
    %v6565 = vmul.f32 %v6452, 1.442695
    %v6566 = vpow.pop %v6565
    %v6567 = vmul.f32 %v6453, 1.442695
    %v6568 = vpow.pop %v6567
    %v6569 = vmul.f32 %v6454, 1.442695
    %v6570 = vpow.pop %v6569
    %v6571 = vmul.f32 %v6455, 1.442695
    %v6572 = vpow.pop %v6571
    %v6573 = vmul.f32 %v6456, 1.442695
    %v6574 = vpow.pop %v6573
    %v6575 = vmul.f32 %v6457, 1.442695
    %v6576 = vpow.pop %v6575
    %v6577 = vmul.f32 %v6458, 1.442695
    %v6578 = vpow.pop %v6577
    %v6579 = vmul.f32 %v6459, 1.442695
    %v6580 = vpow.pop %v6579
    %v6581 = vmul.f32 %v6460, 1.442695
    %v6582 = vpow.pop %v6581
    %v6583 = vmul.f32 %v6461, 1.442695
    %v6584 = vpow.pop %v6583
    %v6585 = vmul.f32 %v6462, 1.442695
    %v6586 = vpow.pop %v6585
    %v6587 = vmul.f32 %v6463, 1.442695
    %v6588 = vpow.pop %v6587
    %v6589 = vmul.f32 %v6464, 1.442695
    %v6590 = vpow.pop %v6589
    %v6591 = vmul.f32 %v6465, 1.442695
    %v6592 = vpow.pop %v6591
    %v6593 = vmul.f32 %v6466, 1.442695
    %v6594 = vpow.pop %v6593
    %v6595 = vadd.f32 %v6468, %v6470
    %v6596 = vrot.slane %v6595, 4
    %v6597 = vadd.f32 %v6595, %v6596
    %v6598 = vrot.slane %v6597, 2
    %v6599 = vadd.f32 %v6597, %v6598
    %v6600 = vrot.slane %v6599, 1
    %v6601 = vadd.f32 %v6599, %v6600
    %v6602 = vadd.f32 %v6472, %v6474
    %v6603 = vrot.slane %v6602, 4
    %v6604 = vadd.f32 %v6602, %v6603
    %v6605 = vrot.slane %v6604, 2
    %v6606 = vadd.f32 %v6604, %v6605
    %v6607 = vrot.slane %v6606, 1
    %v6608 = vadd.f32 %v6606, %v6607
    %v6609 = vadd.f32 %v6476, %v6478
    %v6610 = vrot.slane %v6609, 4
    %v6611 = vadd.f32 %v6609, %v6610
    %v6612 = vrot.slane %v6611, 2
    %v6613 = vadd.f32 %v6611, %v6612
    %v6614 = vrot.slane %v6613, 1
    %v6615 = vadd.f32 %v6613, %v6614
    %v6616 = vadd.f32 %v6480, %v6482
    %v6617 = vrot.slane %v6616, 4
    %v6618 = vadd.f32 %v6616, %v6617
    %v6619 = vrot.slane %v6618, 2
    %v6620 = vadd.f32 %v6618, %v6619
    %v6621 = vrot.slane %v6620, 1
    %v6622 = vadd.f32 %v6620, %v6621
    %v6623 = vadd.f32 %v6484, %v6486
    %v6624 = vrot.slane %v6623, 4
    %v6625 = vadd.f32 %v6623, %v6624
    %v6626 = vrot.slane %v6625, 2
    %v6627 = vadd.f32 %v6625, %v6626
    %v6628 = vrot.slane %v6627, 1
    %v6629 = vadd.f32 %v6627, %v6628
    %v6630 = vadd.f32 %v6488, %v6490
    %v6631 = vrot.slane %v6630, 4
    %v6632 = vadd.f32 %v6630, %v6631
    %v6633 = vrot.slane %v6632, 2
    %v6634 = vadd.f32 %v6632, %v6633
    %v6635 = vrot.slane %v6634, 1
    %v6636 = vadd.f32 %v6634, %v6635
    %v6637 = vadd.f32 %v6492, %v6494
    %v6638 = vrot.slane %v6637, 4
    %v6639 = vadd.f32 %v6637, %v6638
    %v6640 = vrot.slane %v6639, 2
    %v6641 = vadd.f32 %v6639, %v6640
    %v6642 = vrot.slane %v6641, 1
    %v6643 = vadd.f32 %v6641, %v6642
    %v6644 = vadd.f32 %v6496, %v6498
    %v6645 = vrot.slane %v6644, 4
    %v6646 = vadd.f32 %v6644, %v6645
    %v6647 = vrot.slane %v6646, 2
    %v6648 = vadd.f32 %v6646, %v6647
    %v6649 = vrot.slane %v6648, 1
    %v6650 = vadd.f32 %v6648, %v6649
    %v6651 = vadd.f32 %v6500, %v6502
    %v6652 = vrot.slane %v6651, 4
    %v6653 = vadd.f32 %v6651, %v6652
    %v6654 = vrot.slane %v6653, 2
    %v6655 = vadd.f32 %v6653, %v6654
    %v6656 = vrot.slane %v6655, 1
    %v6657 = vadd.f32 %v6655, %v6656
    %v6658 = vadd.f32 %v6504, %v6506
    %v6659 = vrot.slane %v6658, 4
    %v6660 = vadd.f32 %v6658, %v6659
    %v6661 = vrot.slane %v6660, 2
    %v6662 = vadd.f32 %v6660, %v6661
    %v6663 = vrot.slane %v6662, 1
    %v6664 = vadd.f32 %v6662, %v6663
    %v6665 = vadd.f32 %v6508, %v6510
    %v6666 = vrot.slane %v6665, 4
    %v6667 = vadd.f32 %v6665, %v6666
    %v6668 = vrot.slane %v6667, 2
    %v6669 = vadd.f32 %v6667, %v6668
    %v6670 = vrot.slane %v6669, 1
    %v6671 = vadd.f32 %v6669, %v6670
    %v6672 = vadd.f32 %v6512, %v6514
    %v6673 = vrot.slane %v6672, 4
    %v6674 = vadd.f32 %v6672, %v6673
    %v6675 = vrot.slane %v6674, 2
    %v6676 = vadd.f32 %v6674, %v6675
    %v6677 = vrot.slane %v6676, 1
    %v6678 = vadd.f32 %v6676, %v6677
    %v6679 = vadd.f32 %v6516, %v6518
    %v6680 = vrot.slane %v6679, 4
    %v6681 = vadd.f32 %v6679, %v6680
    %v6682 = vrot.slane %v6681, 2
    %v6683 = vadd.f32 %v6681, %v6682
    %v6684 = vrot.slane %v6683, 1
    %v6685 = vadd.f32 %v6683, %v6684
    %v6686 = vadd.f32 %v6520, %v6522
    %v6687 = vrot.slane %v6686, 4
    %v6688 = vadd.f32 %v6686, %v6687
    %v6689 = vrot.slane %v6688, 2
    %v6690 = vadd.f32 %v6688, %v6689
    %v6691 = vrot.slane %v6690, 1
    %v6692 = vadd.f32 %v6690, %v6691
    %v6693 = vadd.f32 %v6524, %v6526
    %v6694 = vrot.slane %v6693, 4
    %v6695 = vadd.f32 %v6693, %v6694
    %v6696 = vrot.slane %v6695, 2
    %v6697 = vadd.f32 %v6695, %v6696
    %v6698 = vrot.slane %v6697, 1
    %v6699 = vadd.f32 %v6697, %v6698
    %v6700 = vadd.f32 %v6528, %v6530
    %v6701 = vrot.slane %v6700, 4
    %v6702 = vadd.f32 %v6700, %v6701
    %v6703 = vrot.slane %v6702, 2
    %v6704 = vadd.f32 %v6702, %v6703
    %v6705 = vrot.slane %v6704, 1
    %v6706 = vadd.f32 %v6704, %v6705
    %v6707 = vadd.f32 %v6532, %v6534
    %v6708 = vrot.slane %v6707, 4
    %v6709 = vadd.f32 %v6707, %v6708
    %v6710 = vrot.slane %v6709, 2
    %v6711 = vadd.f32 %v6709, %v6710
    %v6712 = vrot.slane %v6711, 1
    %v6713 = vadd.f32 %v6711, %v6712
    %v6714 = vadd.f32 %v6536, %v6538
    %v6715 = vrot.slane %v6714, 4
    %v6716 = vadd.f32 %v6714, %v6715
    %v6717 = vrot.slane %v6716, 2
    %v6718 = vadd.f32 %v6716, %v6717
    %v6719 = vrot.slane %v6718, 1
    %v6720 = vadd.f32 %v6718, %v6719
    %v6721 = vadd.f32 %v6540, %v6542
    %v6722 = vrot.slane %v6721, 4
    %v6723 = vadd.f32 %v6721, %v6722
    %v6724 = vrot.slane %v6723, 2
    %v6725 = vadd.f32 %v6723, %v6724
    %v6726 = vrot.slane %v6725, 1
    %v6727 = vadd.f32 %v6725, %v6726
    %v6728 = vadd.f32 %v6544, %v6546
    %v6729 = vrot.slane %v6728, 4
    %v6730 = vadd.f32 %v6728, %v6729
    %v6731 = vrot.slane %v6730, 2
    %v6732 = vadd.f32 %v6730, %v6731
    %v6733 = vrot.slane %v6732, 1
    %v6734 = vadd.f32 %v6732, %v6733
    %v6735 = vadd.f32 %v6548, %v6550
    %v6736 = vrot.slane %v6735, 4
    %v6737 = vadd.f32 %v6735, %v6736
    %v6738 = vrot.slane %v6737, 2
    %v6739 = vadd.f32 %v6737, %v6738
    %v6740 = vrot.slane %v6739, 1
    %v6741 = vadd.f32 %v6739, %v6740
    %v6742 = vadd.f32 %v6552, %v6554
    %v6743 = vrot.slane %v6742, 4
    %v6744 = vadd.f32 %v6742, %v6743
    %v6745 = vrot.slane %v6744, 2
    %v6746 = vadd.f32 %v6744, %v6745
    %v6747 = vrot.slane %v6746, 1
    %v6748 = vadd.f32 %v6746, %v6747
    %v6749 = vadd.f32 %v6556, %v6558
    %v6750 = vrot.slane %v6749, 4
    %v6751 = vadd.f32 %v6749, %v6750
    %v6752 = vrot.slane %v6751, 2
    %v6753 = vadd.f32 %v6751, %v6752
    %v6754 = vrot.slane %v6753, 1
    %v6755 = vadd.f32 %v6753, %v6754
    %v6756 = vadd.f32 %v6560, %v6562
    %v6757 = vrot.slane %v6756, 4
    %v6758 = vadd.f32 %v6756, %v6757
    %v6759 = vrot.slane %v6758, 2
    %v6760 = vadd.f32 %v6758, %v6759
    %v6761 = vrot.slane %v6760, 1
    %v6762 = vadd.f32 %v6760, %v6761
    %v6763 = vadd.f32 %v6564, %v6566
    %v6764 = vrot.slane %v6763, 4
    %v6765 = vadd.f32 %v6763, %v6764
    %v6766 = vrot.slane %v6765, 2
    %v6767 = vadd.f32 %v6765, %v6766
    %v6768 = vrot.slane %v6767, 1
    %v6769 = vadd.f32 %v6767, %v6768
    %v6770 = vadd.f32 %v6568, %v6570
    %v6771 = vrot.slane %v6770, 4
    %v6772 = vadd.f32 %v6770, %v6771
    %v6773 = vrot.slane %v6772, 2
    %v6774 = vadd.f32 %v6772, %v6773
    %v6775 = vrot.slane %v6774, 1
    %v6776 = vadd.f32 %v6774, %v6775
    %v6777 = vadd.f32 %v6572, %v6574
    %v6778 = vrot.slane %v6777, 4
    %v6779 = vadd.f32 %v6777, %v6778
    %v6780 = vrot.slane %v6779, 2
    %v6781 = vadd.f32 %v6779, %v6780
    %v6782 = vrot.slane %v6781, 1
    %v6783 = vadd.f32 %v6781, %v6782
    %v6784 = vadd.f32 %v6576, %v6578
    %v6785 = vrot.slane %v6784, 4
    %v6786 = vadd.f32 %v6784, %v6785
    %v6787 = vrot.slane %v6786, 2
    %v6788 = vadd.f32 %v6786, %v6787
    %v6789 = vrot.slane %v6788, 1
    %v6790 = vadd.f32 %v6788, %v6789
    %v6791 = vadd.f32 %v6580, %v6582
    %v6792 = vrot.slane %v6791, 4
    %v6793 = vadd.f32 %v6791, %v6792
    %v6794 = vrot.slane %v6793, 2
    %v6795 = vadd.f32 %v6793, %v6794
    %v6796 = vrot.slane %v6795, 1
    %v6797 = vadd.f32 %v6795, %v6796
    %v6798 = vadd.f32 %v6584, %v6586
    %v6799 = vrot.slane %v6798, 4
    %v6800 = vadd.f32 %v6798, %v6799
    %v6801 = vrot.slane %v6800, 2
    %v6802 = vadd.f32 %v6800, %v6801
    %v6803 = vrot.slane %v6802, 1
    %v6804 = vadd.f32 %v6802, %v6803
    %v6805 = vadd.f32 %v6588, %v6590
    %v6806 = vrot.slane %v6805, 4
    %v6807 = vadd.f32 %v6805, %v6806
    %v6808 = vrot.slane %v6807, 2
    %v6809 = vadd.f32 %v6807, %v6808
    %v6810 = vrot.slane %v6809, 1
    %v6811 = vadd.f32 %v6809, %v6810
    %v6812 = vadd.f32 %v6592, %v6594
    %v6813 = vrot.slane %v6812, 4
    %v6814 = vadd.f32 %v6812, %v6813
    %v6815 = vrot.slane %v6814, 2
    %v6816 = vadd.f32 %v6814, %v6815
    %v6817 = vrot.slane %v6816, 1
    %v6818 = vadd.f32 %v6816, %v6817
    %v6819 = vmax.f32 %v6601, 1e-20
    %v6820 = vmax.f32 %v6608, 1e-20
    %v6821 = vmax.f32 %v6615, 1e-20
    %v6822 = vmax.f32 %v6622, 1e-20
    %v6823 = vmax.f32 %v6629, 1e-20
    %v6824 = vmax.f32 %v6636, 1e-20
    %v6825 = vmax.f32 %v6643, 1e-20
    %v6826 = vmax.f32 %v6650, 1e-20
    %v6827 = vmax.f32 %v6657, 1e-20
    %v6828 = vmax.f32 %v6664, 1e-20
    %v6829 = vmax.f32 %v6671, 1e-20
    %v6830 = vmax.f32 %v6678, 1e-20
    %v6831 = vmax.f32 %v6685, 1e-20
    %v6832 = vmax.f32 %v6692, 1e-20
    %v6833 = vmax.f32 %v6699, 1e-20
    %v6834 = vmax.f32 %v6706, 1e-20
    %v6835 = vmax.f32 %v6713, 1e-20
    %v6836 = vmax.f32 %v6720, 1e-20
    %v6837 = vmax.f32 %v6727, 1e-20
    %v6838 = vmax.f32 %v6734, 1e-20
    %v6839 = vmax.f32 %v6741, 1e-20
    %v6840 = vmax.f32 %v6748, 1e-20
    %v6841 = vmax.f32 %v6755, 1e-20
    %v6842 = vmax.f32 %v6762, 1e-20
    %v6843 = vmax.f32 %v6769, 1e-20
    %v6844 = vmax.f32 %v6776, 1e-20
    %v6845 = vmax.f32 %v6783, 1e-20
    %v6846 = vmax.f32 %v6790, 1e-20
    %v6847 = vmax.f32 %v6797, 1e-20
    %v6848 = vmax.f32 %v6804, 1e-20
    %v6849 = vmax.f32 %v6811, 1e-20
    %v6850 = vmax.f32 %v6818, 1e-20
    %v6851 = vrcp.pop %v6819
    %v6852 = vrcp.pop %v6820
    %v6853 = vrcp.pop %v6821
    %v6854 = vrcp.pop %v6822
    %v6855 = vrcp.pop %v6823
    %v6856 = vrcp.pop %v6824
    %v6857 = vrcp.pop %v6825
    %v6858 = vrcp.pop %v6826
    %v6859 = vrcp.pop %v6827
    %v6860 = vrcp.pop %v6828
    %v6861 = vrcp.pop %v6829
    %v6862 = vrcp.pop %v6830
    %v6863 = vrcp.pop %v6831
    %v6864 = vrcp.pop %v6832
    %v6865 = vrcp.pop %v6833
    %v6866 = vrcp.pop %v6834
    %v6867 = vrcp.pop %v6835
    %v6868 = vrcp.pop %v6836
    %v6869 = vrcp.pop %v6837
    %v6870 = vrcp.pop %v6838
    %v6871 = vrcp.pop %v6839
    %v6872 = vrcp.pop %v6840
    %v6873 = vrcp.pop %v6841
    %v6874 = vrcp.pop %v6842
    %v6875 = vrcp.pop %v6843
    %v6876 = vrcp.pop %v6844
    %v6877 = vrcp.pop %v6845
    %v6878 = vrcp.pop %v6846
    %v6879 = vrcp.pop %v6847
    %v6880 = vrcp.pop %v6848
    %v6881 = vrcp.pop %v6849
    %v6882 = vrcp.pop %v6850
    %v6883 = vmul.f32 %v6468, %v6851
    %v6884 = vmul.f32 %v6470, %v6851
    %v6885 = vmul.f32 %v6472, %v6852
    %v6886 = vmul.f32 %v6474, %v6852
    %v6887 = vmul.f32 %v6476, %v6853
    %v6888 = vmul.f32 %v6478, %v6853
    %v6889 = vmul.f32 %v6480, %v6854
    %v6890 = vmul.f32 %v6482, %v6854
    %v6891 = vmul.f32 %v6484, %v6855
    %v6892 = vmul.f32 %v6486, %v6855
    %v6893 = vmul.f32 %v6488, %v6856
    %v6894 = vmul.f32 %v6490, %v6856
    %v6895 = vmul.f32 %v6492, %v6857
    %v6896 = vmul.f32 %v6494, %v6857
    %v6897 = vmul.f32 %v6496, %v6858
    %v6898 = vmul.f32 %v6498, %v6858
    %v6899 = vmul.f32 %v6500, %v6859
    %v6900 = vmul.f32 %v6502, %v6859
    %v6901 = vmul.f32 %v6504, %v6860
    %v6902 = vmul.f32 %v6506, %v6860
    %v6903 = vmul.f32 %v6508, %v6861
    %v6904 = vmul.f32 %v6510, %v6861
    %v6905 = vmul.f32 %v6512, %v6862
    %v6906 = vmul.f32 %v6514, %v6862
    %v6907 = vmul.f32 %v6516, %v6863
    %v6908 = vmul.f32 %v6518, %v6863
    %v6909 = vmul.f32 %v6520, %v6864
    %v6910 = vmul.f32 %v6522, %v6864
    %v6911 = vmul.f32 %v6524, %v6865
    %v6912 = vmul.f32 %v6526, %v6865
    %v6913 = vmul.f32 %v6528, %v6866
    %v6914 = vmul.f32 %v6530, %v6866
    %v6915 = vmul.f32 %v6532, %v6867
    %v6916 = vmul.f32 %v6534, %v6867
    %v6917 = vmul.f32 %v6536, %v6868
    %v6918 = vmul.f32 %v6538, %v6868
    %v6919 = vmul.f32 %v6540, %v6869
    %v6920 = vmul.f32 %v6542, %v6869
    %v6921 = vmul.f32 %v6544, %v6870
    %v6922 = vmul.f32 %v6546, %v6870
    %v6923 = vmul.f32 %v6548, %v6871
    %v6924 = vmul.f32 %v6550, %v6871
    %v6925 = vmul.f32 %v6552, %v6872
    %v6926 = vmul.f32 %v6554, %v6872
    %v6927 = vmul.f32 %v6556, %v6873
    %v6928 = vmul.f32 %v6558, %v6873
    %v6929 = vmul.f32 %v6560, %v6874
    %v6930 = vmul.f32 %v6562, %v6874
    %v6931 = vmul.f32 %v6564, %v6875
    %v6932 = vmul.f32 %v6566, %v6875
    %v6933 = vmul.f32 %v6568, %v6876
    %v6934 = vmul.f32 %v6570, %v6876
    %v6935 = vmul.f32 %v6572, %v6877
    %v6936 = vmul.f32 %v6574, %v6877
    %v6937 = vmul.f32 %v6576, %v6878
    %v6938 = vmul.f32 %v6578, %v6878
    %v6939 = vmul.f32 %v6580, %v6879
    %v6940 = vmul.f32 %v6582, %v6879
    %v6941 = vmul.f32 %v6584, %v6880
    %v6942 = vmul.f32 %v6586, %v6880
    %v6943 = vmul.f32 %v6588, %v6881
    %v6944 = vmul.f32 %v6590, %v6881
    %v6945 = vmul.f32 %v6592, %v6882
    %v6946 = vmul.f32 %v6594, %v6882
    %v6947 = vmul.f32 %v6883, %v5397
    %v6948 = vmul.f32 %v6884, %v5398
    %v6949 = vmul.f32 %v6885, %v5397
    %v6950 = vmul.f32 %v6886, %v5398
    %v6951 = vmul.f32 %v6887, %v5397
    %v6952 = vmul.f32 %v6888, %v5398
    %v6953 = vmul.f32 %v6889, %v5397
    %v6954 = vmul.f32 %v6890, %v5398
    %v6955 = vmul.f32 %v6891, %v5397
    %v6956 = vmul.f32 %v6892, %v5398
    %v6957 = vmul.f32 %v6893, %v5397
    %v6958 = vmul.f32 %v6894, %v5398
    %v6959 = vmul.f32 %v6895, %v5397
    %v6960 = vmul.f32 %v6896, %v5398
    %v6961 = vmul.f32 %v6897, %v5397
    %v6962 = vmul.f32 %v6898, %v5398
    %v6963 = vmul.f32 %v6899, %v5397
    %v6964 = vmul.f32 %v6900, %v5398
    %v6965 = vmul.f32 %v6901, %v5397
    %v6966 = vmul.f32 %v6902, %v5398
    %v6967 = vmul.f32 %v6903, %v5397
    %v6968 = vmul.f32 %v6904, %v5398
    %v6969 = vmul.f32 %v6905, %v5397
    %v6970 = vmul.f32 %v6906, %v5398
    %v6971 = vmul.f32 %v6907, %v5397
    %v6972 = vmul.f32 %v6908, %v5398
    %v6973 = vmul.f32 %v6909, %v5397
    %v6974 = vmul.f32 %v6910, %v5398
    %v6975 = vmul.f32 %v6911, %v5397
    %v6976 = vmul.f32 %v6912, %v5398
    %v6977 = vmul.f32 %v6913, %v5397
    %v6978 = vmul.f32 %v6914, %v5398
    %v6979 = vmul.f32 %v6915, %v5399
    %v6980 = vmul.f32 %v6916, %v5400
    %v6981 = vmul.f32 %v6917, %v5399
    %v6982 = vmul.f32 %v6918, %v5400
    %v6983 = vmul.f32 %v6919, %v5399
    %v6984 = vmul.f32 %v6920, %v5400
    %v6985 = vmul.f32 %v6921, %v5399
    %v6986 = vmul.f32 %v6922, %v5400
    %v6987 = vmul.f32 %v6923, %v5399
    %v6988 = vmul.f32 %v6924, %v5400
    %v6989 = vmul.f32 %v6925, %v5399
    %v6990 = vmul.f32 %v6926, %v5400
    %v6991 = vmul.f32 %v6927, %v5399
    %v6992 = vmul.f32 %v6928, %v5400
    %v6993 = vmul.f32 %v6929, %v5399
    %v6994 = vmul.f32 %v6930, %v5400
    %v6995 = vmul.f32 %v6931, %v5399
    %v6996 = vmul.f32 %v6932, %v5400
    %v6997 = vmul.f32 %v6933, %v5399
    %v6998 = vmul.f32 %v6934, %v5400
    %v6999 = vmul.f32 %v6935, %v5399
    %v7000 = vmul.f32 %v6936, %v5400
    %v7001 = vmul.f32 %v6937, %v5399
    %v7002 = vmul.f32 %v6938, %v5400
    %v7003 = vmul.f32 %v6939, %v5399
    %v7004 = vmul.f32 %v6940, %v5400
    %v7005 = vmul.f32 %v6941, %v5399
    %v7006 = vmul.f32 %v6942, %v5400
    %v7007 = vmul.f32 %v6943, %v5399
    %v7008 = vmul.f32 %v6944, %v5400
    %v7009 = vmul.f32 %v6945, %v5399
    %v7010 = vmul.f32 %v6946, %v5400
    %v7011 = vadd.f32 %v6947, %v6948
    %v7012 = vrot.slane %v7011, 4
    %v7013 = vadd.f32 %v7011, %v7012
    %v7014 = vrot.slane %v7013, 2
    %v7015 = vadd.f32 %v7013, %v7014
    %v7016 = vrot.slane %v7015, 1
    %v7017 = vadd.f32 %v7015, %v7016
    %v7018 = vadd.f32 %v6949, %v6950
    %v7019 = vrot.slane %v7018, 4
    %v7020 = vadd.f32 %v7018, %v7019
    %v7021 = vrot.slane %v7020, 2
    %v7022 = vadd.f32 %v7020, %v7021
    %v7023 = vrot.slane %v7022, 1
    %v7024 = vadd.f32 %v7022, %v7023
    %v7025 = vadd.f32 %v6951, %v6952
    %v7026 = vrot.slane %v7025, 4
    %v7027 = vadd.f32 %v7025, %v7026
    %v7028 = vrot.slane %v7027, 2
    %v7029 = vadd.f32 %v7027, %v7028
    %v7030 = vrot.slane %v7029, 1
    %v7031 = vadd.f32 %v7029, %v7030
    %v7032 = vadd.f32 %v6953, %v6954
    %v7033 = vrot.slane %v7032, 4
    %v7034 = vadd.f32 %v7032, %v7033
    %v7035 = vrot.slane %v7034, 2
    %v7036 = vadd.f32 %v7034, %v7035
    %v7037 = vrot.slane %v7036, 1
    %v7038 = vadd.f32 %v7036, %v7037
    %v7039 = vadd.f32 %v6955, %v6956
    %v7040 = vrot.slane %v7039, 4
    %v7041 = vadd.f32 %v7039, %v7040
    %v7042 = vrot.slane %v7041, 2
    %v7043 = vadd.f32 %v7041, %v7042
    %v7044 = vrot.slane %v7043, 1
    %v7045 = vadd.f32 %v7043, %v7044
    %v7046 = vadd.f32 %v6957, %v6958
    %v7047 = vrot.slane %v7046, 4
    %v7048 = vadd.f32 %v7046, %v7047
    %v7049 = vrot.slane %v7048, 2
    %v7050 = vadd.f32 %v7048, %v7049
    %v7051 = vrot.slane %v7050, 1
    %v7052 = vadd.f32 %v7050, %v7051
    %v7053 = vadd.f32 %v6959, %v6960
    %v7054 = vrot.slane %v7053, 4
    %v7055 = vadd.f32 %v7053, %v7054
    %v7056 = vrot.slane %v7055, 2
    %v7057 = vadd.f32 %v7055, %v7056
    %v7058 = vrot.slane %v7057, 1
    %v7059 = vadd.f32 %v7057, %v7058
    %v7060 = vadd.f32 %v6961, %v6962
    %v7061 = vrot.slane %v7060, 4
    %v7062 = vadd.f32 %v7060, %v7061
    %v7063 = vrot.slane %v7062, 2
    %v7064 = vadd.f32 %v7062, %v7063
    %v7065 = vrot.slane %v7064, 1
    %v7066 = vadd.f32 %v7064, %v7065
    %v7067 = vadd.f32 %v6963, %v6964
    %v7068 = vrot.slane %v7067, 4
    %v7069 = vadd.f32 %v7067, %v7068
    %v7070 = vrot.slane %v7069, 2
    %v7071 = vadd.f32 %v7069, %v7070
    %v7072 = vrot.slane %v7071, 1
    %v7073 = vadd.f32 %v7071, %v7072
    %v7074 = vadd.f32 %v6965, %v6966
    %v7075 = vrot.slane %v7074, 4
    %v7076 = vadd.f32 %v7074, %v7075
    %v7077 = vrot.slane %v7076, 2
    %v7078 = vadd.f32 %v7076, %v7077
    %v7079 = vrot.slane %v7078, 1
    %v7080 = vadd.f32 %v7078, %v7079
    %v7081 = vadd.f32 %v6967, %v6968
    %v7082 = vrot.slane %v7081, 4
    %v7083 = vadd.f32 %v7081, %v7082
    %v7084 = vrot.slane %v7083, 2
    %v7085 = vadd.f32 %v7083, %v7084
    %v7086 = vrot.slane %v7085, 1
    %v7087 = vadd.f32 %v7085, %v7086
    %v7088 = vadd.f32 %v6969, %v6970
    %v7089 = vrot.slane %v7088, 4
    %v7090 = vadd.f32 %v7088, %v7089
    %v7091 = vrot.slane %v7090, 2
    %v7092 = vadd.f32 %v7090, %v7091
    %v7093 = vrot.slane %v7092, 1
    %v7094 = vadd.f32 %v7092, %v7093
    %v7095 = vadd.f32 %v6971, %v6972
    %v7096 = vrot.slane %v7095, 4
    %v7097 = vadd.f32 %v7095, %v7096
    %v7098 = vrot.slane %v7097, 2
    %v7099 = vadd.f32 %v7097, %v7098
    %v7100 = vrot.slane %v7099, 1
    %v7101 = vadd.f32 %v7099, %v7100
    %v7102 = vadd.f32 %v6973, %v6974
    %v7103 = vrot.slane %v7102, 4
    %v7104 = vadd.f32 %v7102, %v7103
    %v7105 = vrot.slane %v7104, 2
    %v7106 = vadd.f32 %v7104, %v7105
    %v7107 = vrot.slane %v7106, 1
    %v7108 = vadd.f32 %v7106, %v7107
    %v7109 = vadd.f32 %v6975, %v6976
    %v7110 = vrot.slane %v7109, 4
    %v7111 = vadd.f32 %v7109, %v7110
    %v7112 = vrot.slane %v7111, 2
    %v7113 = vadd.f32 %v7111, %v7112
    %v7114 = vrot.slane %v7113, 1
    %v7115 = vadd.f32 %v7113, %v7114
    %v7116 = vadd.f32 %v6977, %v6978
    %v7117 = vrot.slane %v7116, 4
    %v7118 = vadd.f32 %v7116, %v7117
    %v7119 = vrot.slane %v7118, 2
    %v7120 = vadd.f32 %v7118, %v7119
    %v7121 = vrot.slane %v7120, 1
    %v7122 = vadd.f32 %v7120, %v7121
    %v7123 = vadd.f32 %v6979, %v6980
    %v7124 = vrot.slane %v7123, 4
    %v7125 = vadd.f32 %v7123, %v7124
    %v7126 = vrot.slane %v7125, 2
    %v7127 = vadd.f32 %v7125, %v7126
    %v7128 = vrot.slane %v7127, 1
    %v7129 = vadd.f32 %v7127, %v7128
    %v7130 = vadd.f32 %v6981, %v6982
    %v7131 = vrot.slane %v7130, 4
    %v7132 = vadd.f32 %v7130, %v7131
    %v7133 = vrot.slane %v7132, 2
    %v7134 = vadd.f32 %v7132, %v7133
    %v7135 = vrot.slane %v7134, 1
    %v7136 = vadd.f32 %v7134, %v7135
    %v7137 = vadd.f32 %v6983, %v6984
    %v7138 = vrot.slane %v7137, 4
    %v7139 = vadd.f32 %v7137, %v7138
    %v7140 = vrot.slane %v7139, 2
    %v7141 = vadd.f32 %v7139, %v7140
    %v7142 = vrot.slane %v7141, 1
    %v7143 = vadd.f32 %v7141, %v7142
    %v7144 = vadd.f32 %v6985, %v6986
    %v7145 = vrot.slane %v7144, 4
    %v7146 = vadd.f32 %v7144, %v7145
    %v7147 = vrot.slane %v7146, 2
    %v7148 = vadd.f32 %v7146, %v7147
    %v7149 = vrot.slane %v7148, 1
    %v7150 = vadd.f32 %v7148, %v7149
    %v7151 = vadd.f32 %v6987, %v6988
    %v7152 = vrot.slane %v7151, 4
    %v7153 = vadd.f32 %v7151, %v7152
    %v7154 = vrot.slane %v7153, 2
    %v7155 = vadd.f32 %v7153, %v7154
    %v7156 = vrot.slane %v7155, 1
    %v7157 = vadd.f32 %v7155, %v7156
    %v7158 = vadd.f32 %v6989, %v6990
    %v7159 = vrot.slane %v7158, 4
    %v7160 = vadd.f32 %v7158, %v7159
    %v7161 = vrot.slane %v7160, 2
    %v7162 = vadd.f32 %v7160, %v7161
    %v7163 = vrot.slane %v7162, 1
    %v7164 = vadd.f32 %v7162, %v7163
    %v7165 = vadd.f32 %v6991, %v6992
    %v7166 = vrot.slane %v7165, 4
    %v7167 = vadd.f32 %v7165, %v7166
    %v7168 = vrot.slane %v7167, 2
    %v7169 = vadd.f32 %v7167, %v7168
    %v7170 = vrot.slane %v7169, 1
    %v7171 = vadd.f32 %v7169, %v7170
    %v7172 = vadd.f32 %v6993, %v6994
    %v7173 = vrot.slane %v7172, 4
    %v7174 = vadd.f32 %v7172, %v7173
    %v7175 = vrot.slane %v7174, 2
    %v7176 = vadd.f32 %v7174, %v7175
    %v7177 = vrot.slane %v7176, 1
    %v7178 = vadd.f32 %v7176, %v7177
    %v7179 = vadd.f32 %v6995, %v6996
    %v7180 = vrot.slane %v7179, 4
    %v7181 = vadd.f32 %v7179, %v7180
    %v7182 = vrot.slane %v7181, 2
    %v7183 = vadd.f32 %v7181, %v7182
    %v7184 = vrot.slane %v7183, 1
    %v7185 = vadd.f32 %v7183, %v7184
    %v7186 = vadd.f32 %v6997, %v6998
    %v7187 = vrot.slane %v7186, 4
    %v7188 = vadd.f32 %v7186, %v7187
    %v7189 = vrot.slane %v7188, 2
    %v7190 = vadd.f32 %v7188, %v7189
    %v7191 = vrot.slane %v7190, 1
    %v7192 = vadd.f32 %v7190, %v7191
    %v7193 = vadd.f32 %v6999, %v7000
    %v7194 = vrot.slane %v7193, 4
    %v7195 = vadd.f32 %v7193, %v7194
    %v7196 = vrot.slane %v7195, 2
    %v7197 = vadd.f32 %v7195, %v7196
    %v7198 = vrot.slane %v7197, 1
    %v7199 = vadd.f32 %v7197, %v7198
    %v7200 = vadd.f32 %v7001, %v7002
    %v7201 = vrot.slane %v7200, 4
    %v7202 = vadd.f32 %v7200, %v7201
    %v7203 = vrot.slane %v7202, 2
    %v7204 = vadd.f32 %v7202, %v7203
    %v7205 = vrot.slane %v7204, 1
    %v7206 = vadd.f32 %v7204, %v7205
    %v7207 = vadd.f32 %v7003, %v7004
    %v7208 = vrot.slane %v7207, 4
    %v7209 = vadd.f32 %v7207, %v7208
    %v7210 = vrot.slane %v7209, 2
    %v7211 = vadd.f32 %v7209, %v7210
    %v7212 = vrot.slane %v7211, 1
    %v7213 = vadd.f32 %v7211, %v7212
    %v7214 = vadd.f32 %v7005, %v7006
    %v7215 = vrot.slane %v7214, 4
    %v7216 = vadd.f32 %v7214, %v7215
    %v7217 = vrot.slane %v7216, 2
    %v7218 = vadd.f32 %v7216, %v7217
    %v7219 = vrot.slane %v7218, 1
    %v7220 = vadd.f32 %v7218, %v7219
    %v7221 = vadd.f32 %v7007, %v7008
    %v7222 = vrot.slane %v7221, 4
    %v7223 = vadd.f32 %v7221, %v7222
    %v7224 = vrot.slane %v7223, 2
    %v7225 = vadd.f32 %v7223, %v7224
    %v7226 = vrot.slane %v7225, 1
    %v7227 = vadd.f32 %v7225, %v7226
    %v7228 = vadd.f32 %v7009, %v7010
    %v7229 = vrot.slane %v7228, 4
    %v7230 = vadd.f32 %v7228, %v7229
    %v7231 = vrot.slane %v7230, 2
    %v7232 = vadd.f32 %v7230, %v7231
    %v7233 = vrot.slane %v7232, 1
    %v7234 = vadd.f32 %v7232, %v7233
    %v7235 = vld [vmem:[#allocation4 + $0x10] sm:$0x1]
    %v7236 = vperm.slane %v7235, 0
    %v7237 = vmul.f32 %v7017, %v7236
    %v7238 = vmul.f32 %v7024, %v7236
    %v7239 = vmul.f32 %v7031, %v7236
    %v7240 = vmul.f32 %v7038, %v7236
    %v7241 = vmul.f32 %v7045, %v7236
    %v7242 = vmul.f32 %v7052, %v7236
    %v7243 = vmul.f32 %v7059, %v7236
    %v7244 = vmul.f32 %v7066, %v7236
    %v7245 = vmul.f32 %v7073, %v7236
    %v7246 = vmul.f32 %v7080, %v7236
    %v7247 = vmul.f32 %v7087, %v7236
    %v7248 = vmul.f32 %v7094, %v7236
    %v7249 = vmul.f32 %v7101, %v7236
    %v7250 = vmul.f32 %v7108, %v7236
    %v7251 = vmul.f32 %v7115, %v7236
    %v7252 = vmul.f32 %v7122, %v7236
    %v7253 = vmul.f32 %v7129, %v7236
    %v7254 = vmul.f32 %v7136, %v7236
    %v7255 = vmul.f32 %v7143, %v7236
    %v7256 = vmul.f32 %v7150, %v7236
    %v7257 = vmul.f32 %v7157, %v7236
    %v7258 = vmul.f32 %v7164, %v7236
    %v7259 = vmul.f32 %v7171, %v7236
    %v7260 = vmul.f32 %v7178, %v7236
    %v7261 = vmul.f32 %v7185, %v7236
    %v7262 = vmul.f32 %v7192, %v7236
    %v7263 = vmul.f32 %v7199, %v7236
    %v7264 = vmul.f32 %v7206, %v7236
    %v7265 = vmul.f32 %v7213, %v7236
    %v7266 = vmul.f32 %v7220, %v7236
    %v7267 = vmul.f32 %v7227, %v7236
    %v7268 = vmul.f32 %v7234, %v7236
    %v7269 = vld [vmem:[#allocation4 + $0x11] sm:$0x1]
    %v7270 = vperm.slane %v7269, 0
    %v7271 = vadd.f32 %v7237, %v7270
    %v7272 = vadd.f32 %v7238, %v7270
    %v7273 = vadd.f32 %v7239, %v7270
    %v7274 = vadd.f32 %v7240, %v7270
    %v7275 = vadd.f32 %v7241, %v7270
    %v7276 = vadd.f32 %v7242, %v7270
    %v7277 = vadd.f32 %v7243, %v7270
    %v7278 = vadd.f32 %v7244, %v7270
    %v7279 = vadd.f32 %v7245, %v7270
    %v7280 = vadd.f32 %v7246, %v7270
    %v7281 = vadd.f32 %v7247, %v7270
    %v7282 = vadd.f32 %v7248, %v7270
    %v7283 = vadd.f32 %v7249, %v7270
    %v7284 = vadd.f32 %v7250, %v7270
    %v7285 = vadd.f32 %v7251, %v7270
    %v7286 = vadd.f32 %v7252, %v7270
    %v7287 = vadd.f32 %v7253, %v7270
    %v7288 = vadd.f32 %v7254, %v7270
    %v7289 = vadd.f32 %v7255, %v7270
    %v7290 = vadd.f32 %v7256, %v7270
    %v7291 = vadd.f32 %v7257, %v7270
    %v7292 = vadd.f32 %v7258, %v7270
    %v7293 = vadd.f32 %v7259, %v7270
    %v7294 = vadd.f32 %v7260, %v7270
    %v7295 = vadd.f32 %v7261, %v7270
    %v7296 = vadd.f32 %v7262, %v7270
    %v7297 = vadd.f32 %v7263, %v7270
    %v7298 = vadd.f32 %v7264, %v7270
    %v7299 = vadd.f32 %v7265, %v7270
    %v7300 = vadd.f32 %v7266, %v7270
    %v7301 = vadd.f32 %v7267, %v7270
    %v7302 = vadd.f32 %v7268, %v7270
    %v7303 = vadd.f32 %v7271, %v5180
    %v7304 = vadd.f32 %v7272, %v5181
    %v7305 = vadd.f32 %v7273, %v5182
    %v7306 = vadd.f32 %v7274, %v5183
    %v7307 = vadd.f32 %v7275, %v5184
    %v7308 = vadd.f32 %v7276, %v5185
    %v7309 = vadd.f32 %v7277, %v5186
    %v7310 = vadd.f32 %v7278, %v5187
    %v7311 = vadd.f32 %v7279, %v5188
    %v7312 = vadd.f32 %v7280, %v5189
    %v7313 = vadd.f32 %v7281, %v5190
    %v7314 = vadd.f32 %v7282, %v5191
    %v7315 = vadd.f32 %v7283, %v5192
    %v7316 = vadd.f32 %v7284, %v5193
    %v7317 = vadd.f32 %v7285, %v5194
    %v7318 = vadd.f32 %v7286, %v5195
    %v7319 = vadd.f32 %v7287, %v5196
    %v7320 = vadd.f32 %v7288, %v5197
    %v7321 = vadd.f32 %v7289, %v5198
    %v7322 = vadd.f32 %v7290, %v5199
    %v7323 = vadd.f32 %v7291, %v5200
    %v7324 = vadd.f32 %v7292, %v5201
    %v7325 = vadd.f32 %v7293, %v5202
    %v7326 = vadd.f32 %v7294, %v5203
    %v7327 = vadd.f32 %v7295, %v5204
    %v7328 = vadd.f32 %v7296, %v5205
    %v7329 = vadd.f32 %v7297, %v5206
    %v7330 = vadd.f32 %v7298, %v5207
    %v7331 = vadd.f32 %v7299, %v5208
    %v7332 = vadd.f32 %v7300, %v5209
    %v7333 = vadd.f32 %v7301, %v5210
    %v7334 = vadd.f32 %v7302, %v5211
    %v7335 = vmax.f32 %v7303, 0.0
    %v7336 = vmax.f32 %v7304, 0.0
    %v7337 = vmax.f32 %v7305, 0.0
    %v7338 = vmax.f32 %v7306, 0.0
    %v7339 = vmax.f32 %v7307, 0.0
    %v7340 = vmax.f32 %v7308, 0.0
    %v7341 = vmax.f32 %v7309, 0.0
    %v7342 = vmax.f32 %v7310, 0.0
    %v7343 = vmax.f32 %v7311, 0.0
    %v7344 = vmax.f32 %v7312, 0.0
    %v7345 = vmax.f32 %v7313, 0.0
    %v7346 = vmax.f32 %v7314, 0.0
    %v7347 = vmax.f32 %v7315, 0.0
    %v7348 = vmax.f32 %v7316, 0.0
    %v7349 = vmax.f32 %v7317, 0.0
    %v7350 = vmax.f32 %v7318, 0.0
    %v7351 = vmax.f32 %v7319, 0.0
    %v7352 = vmax.f32 %v7320, 0.0
    %v7353 = vmax.f32 %v7321, 0.0
    %v7354 = vmax.f32 %v7322, 0.0
    %v7355 = vmax.f32 %v7323, 0.0
    %v7356 = vmax.f32 %v7324, 0.0
    %v7357 = vmax.f32 %v7325, 0.0
    %v7358 = vmax.f32 %v7326, 0.0
    %v7359 = vmax.f32 %v7327, 0.0
    %v7360 = vmax.f32 %v7328, 0.0
    %v7361 = vmax.f32 %v7329, 0.0
    %v7362 = vmax.f32 %v7330, 0.0
    %v7363 = vmax.f32 %v7331, 0.0
    %v7364 = vmax.f32 %v7332, 0.0
    %v7365 = vmax.f32 %v7333, 0.0
    %v7366 = vmax.f32 %v7334, 0.0
    %s7367 = scalar_lea.vmem [#allocation6], 768
    %v7368 = vld [vmem:[%s7367] sm:$0xff]
    %v7369 = vld [vmem:[%s7367 + $0x8] sm:$0xff]
    %v7370 = vld [vmem:[%s7367 + $0x10] sm:$0xff]
    %v7371 = vld [vmem:[%s7367 + $0x18] sm:$0xff]
    %v7372 = vld [vmem:[%s7367 + $0x20] sm:$0xff]
    %v7373 = vld [vmem:[%s7367 + $0x28] sm:$0xff]
    %v7374 = vld [vmem:[%s7367 + $0x30] sm:$0xff]
    %v7375 = vld [vmem:[%s7367 + $0x38] sm:$0xff]
    %v7376 = vld [vmem:[%s7367 + $0x40] sm:$0xff]
    %v7377 = vld [vmem:[%s7367 + $0x48] sm:$0xff]
    %v7378 = vld [vmem:[%s7367 + $0x50] sm:$0xff]
    %v7379 = vld [vmem:[%s7367 + $0x58] sm:$0xff]
    %v7380 = vld [vmem:[%s7367 + $0x60] sm:$0xff]
    %v7381 = vld [vmem:[%s7367 + $0x68] sm:$0xff]
    %v7382 = vld [vmem:[%s7367 + $0x70] sm:$0xff]
    %v7383 = vld [vmem:[%s7367 + $0x78] sm:$0xff]
    %v7384 = vld [vmem:[%s7367 + $0x80] sm:$0xff]
    %v7385 = vld [vmem:[%s7367 + $0x88] sm:$0xff]
    %v7386 = vld [vmem:[%s7367 + $0x90] sm:$0xff]
    %v7387 = vld [vmem:[%s7367 + $0x98] sm:$0xff]
    %v7388 = vld [vmem:[%s7367 + $0xa0] sm:$0xff]
    %v7389 = vld [vmem:[%s7367 + $0xa8] sm:$0xff]
    %v7390 = vld [vmem:[%s7367 + $0xb0] sm:$0xff]
    %v7391 = vld [vmem:[%s7367 + $0xb8] sm:$0xff]
    %v7392 = vld [vmem:[%s7367 + $0xc0] sm:$0xff]
    %v7393 = vld [vmem:[%s7367 + $0xc8] sm:$0xff]
    %v7394 = vld [vmem:[%s7367 + $0xd0] sm:$0xff]
    %v7395 = vld [vmem:[%s7367 + $0xd8] sm:$0xff]
    %v7396 = vld [vmem:[%s7367 + $0xe0] sm:$0xff]
    %v7397 = vld [vmem:[%s7367 + $0xe8] sm:$0xff]
    %v7398 = vld [vmem:[%s7367 + $0xf0] sm:$0xff]
    %v7399 = vld [vmem:[%s7367 + $0xf8] sm:$0xff]
    %v7432 = vrot.slane %v7336, 7
    %v7433 = vsel %vm3116, %v7432, %v7335
    %v7434 = vrot.slane %v7337, 6
    %v7435 = vsel %vm3119, %v7434, %v7433
    %v7436 = vrot.slane %v7338, 5
    %v7437 = vsel %vm3122, %v7436, %v7435
    %v7438 = vrot.slane %v7339, 4
    %v7439 = vsel %vm3125, %v7438, %v7437
    %v7440 = vrot.slane %v7340, 3
    %v7441 = vsel %vm3128, %v7440, %v7439
    %v7442 = vrot.slane %v7341, 2
    %v7443 = vsel %vm3131, %v7442, %v7441
    %v7444 = vrot.slane %v7342, 1
    %v7445 = vsel %vm3134, %v7444, %v7443
    %v7446 = vrot.slane %v7344, 7
    %v7447 = vsel %vm3116, %v7446, %v7343
    %v7448 = vrot.slane %v7345, 6
    %v7449 = vsel %vm3119, %v7448, %v7447
    %v7450 = vrot.slane %v7346, 5
    %v7451 = vsel %vm3122, %v7450, %v7449
    %v7452 = vrot.slane %v7347, 4
    %v7453 = vsel %vm3125, %v7452, %v7451
    %v7454 = vrot.slane %v7348, 3
    %v7455 = vsel %vm3128, %v7454, %v7453
    %v7456 = vrot.slane %v7349, 2
    %v7457 = vsel %vm3131, %v7456, %v7455
    %v7458 = vrot.slane %v7350, 1
    %v7459 = vsel %vm3134, %v7458, %v7457
    %v7460 = vrot.slane %v7352, 7
    %v7461 = vsel %vm3116, %v7460, %v7351
    %v7462 = vrot.slane %v7353, 6
    %v7463 = vsel %vm3119, %v7462, %v7461
    %v7464 = vrot.slane %v7354, 5
    %v7465 = vsel %vm3122, %v7464, %v7463
    %v7466 = vrot.slane %v7355, 4
    %v7467 = vsel %vm3125, %v7466, %v7465
    %v7468 = vrot.slane %v7356, 3
    %v7469 = vsel %vm3128, %v7468, %v7467
    %v7470 = vrot.slane %v7357, 2
    %v7471 = vsel %vm3131, %v7470, %v7469
    %v7472 = vrot.slane %v7358, 1
    %v7473 = vsel %vm3134, %v7472, %v7471
    %v7474 = vrot.slane %v7360, 7
    %v7475 = vsel %vm3116, %v7474, %v7359
    %v7476 = vrot.slane %v7361, 6
    %v7477 = vsel %vm3119, %v7476, %v7475
    %v7478 = vrot.slane %v7362, 5
    %v7479 = vsel %vm3122, %v7478, %v7477
    %v7480 = vrot.slane %v7363, 4
    %v7481 = vsel %vm3125, %v7480, %v7479
    %v7482 = vrot.slane %v7364, 3
    %v7483 = vsel %vm3128, %v7482, %v7481
    %v7484 = vrot.slane %v7365, 2
    %v7485 = vsel %vm3131, %v7484, %v7483
    %v7486 = vrot.slane %v7366, 1
    %v7487 = vsel %vm3134, %v7486, %v7485
    %7492 = vmatpush.msra.mxu0 %v7398
    %7493 = vmatpush.msra.mxu0 %v7396
    %7494 = vmatpush.msra.mxu0 %v7394
    %7495 = vmatpush.msra.mxu0 %v7392
    %7496 = vmatpush.msra.mxu0 %v7390
    %7497 = vmatpush.msra.mxu0 %v7388
    %7498 = vmatpush.msra.mxu0 %v7386
    %7499 = vmatpush.msra.mxu0 %v7384
    %7500 = vmatpush.msra.mxu0 %v7382
    %7501 = vmatpush.msra.mxu0 %v7380
    %7502 = vmatpush.msra.mxu0 %v7378
    %7503 = vmatpush.msra.mxu0 %v7376
    %7504 = vmatpush.msra.mxu0 %v7374
    %7505 = vmatpush.msra.mxu0 %v7372
    %7506 = vmatpush.msra.mxu0 %v7370
    %7507 = vmatpush.msra.mxu0 %v7368
    %7508 = vmatmul.f32.gmra.mxu0 %v7445
    %v7509 = vpop.f32.mrf.mxu0
    %v7510 = vadd.f32 0.0, %v7509
    %7511 = vmatmul.f32.gmra.mxu0 %v7459
    %v7512 = vpop.f32.mrf.mxu0
    %v7513 = vadd.f32 0.0, %v7512
    %7514 = vmatmul.f32.gmra.mxu0 %v7473
    %v7515 = vpop.f32.mrf.mxu0
    %v7516 = vadd.f32 0.0, %v7515
    %7517 = vmatmul.f32.gmra.mxu0 %v7487
    %v7518 = vpop.f32.mrf.mxu0
    %v7519 = vadd.f32 0.0, %v7518
    %7520 = vdwg.mxu0
    %7521 = vmatpush.msra.mxu0 %v7399
    %7522 = vmatpush.msra.mxu0 %v7397
    %7523 = vmatpush.msra.mxu0 %v7395
    %7524 = vmatpush.msra.mxu0 %v7393
    %7525 = vmatpush.msra.mxu0 %v7391
    %7526 = vmatpush.msra.mxu0 %v7389
    %7527 = vmatpush.msra.mxu0 %v7387
    %7528 = vmatpush.msra.mxu0 %v7385
    %7529 = vmatpush.msra.mxu0 %v7383
    %7530 = vmatpush.msra.mxu0 %v7381
    %7531 = vmatpush.msra.mxu0 %v7379
    %7532 = vmatpush.msra.mxu0 %v7377
    %7533 = vmatpush.msra.mxu0 %v7375
    %7534 = vmatpush.msra.mxu0 %v7373
    %7535 = vmatpush.msra.mxu0 %v7371
    %7536 = vmatpush.msra.mxu0 %v7369
    %7537 = vmatmul.f32.gmra.mxu0 %v7445
    %v7538 = vpop.f32.mrf.mxu0
    %v7539 = vadd.f32 0.0, %v7538
    %7540 = vmatmul.f32.gmra.mxu0 %v7459
    %v7541 = vpop.f32.mrf.mxu0
    %v7542 = vadd.f32 0.0, %v7541
    %7543 = vmatmul.f32.gmra.mxu0 %v7473
    %v7544 = vpop.f32.mrf.mxu0
    %v7545 = vadd.f32 0.0, %v7544
    %7546 = vmatmul.f32.gmra.mxu0 %v7487
    %v7547 = vpop.f32.mrf.mxu0
    %v7548 = vadd.f32 0.0, %v7547
    %7549 = vdwg.mxu0
    %v7550 = vld [vmem:[#allocation4 + $0x12] sm:$0x1]
    %v7551 = vperm.slane %v7550, 0
    %v7552 = vadd.f32 %v7510, %v7551
    %v7553 = vadd.f32 %v7513, %v7551
    %v7554 = vadd.f32 %v7516, %v7551
    %v7555 = vadd.f32 %v7519, %v7551
    %v7556 = vld [vmem:[#allocation4 + $0x13] sm:$0x1]
    %v7557 = vperm.slane %v7556, 0
    %v7558 = vadd.f32 %v7539, %v7557
    %v7559 = vadd.f32 %v7542, %v7557
    %v7560 = vadd.f32 %v7545, %v7557
    %v7561 = vadd.f32 %v7548, %v7557
    %v7566 = vrot.slane %v7558, 1
    %v7567 = vrot.slane %v7558, 2
    %v7568 = vrot.slane %v7558, 3
    %v7569 = vrot.slane %v7558, 4
    %v7570 = vrot.slane %v7558, 5
    %v7571 = vrot.slane %v7558, 6
    %v7572 = vrot.slane %v7558, 7
    %v7573 = vrot.slane %v7559, 1
    %v7574 = vrot.slane %v7559, 2
    %v7575 = vrot.slane %v7559, 3
    %v7576 = vrot.slane %v7559, 4
    %v7577 = vrot.slane %v7559, 5
    %v7578 = vrot.slane %v7559, 6
    %v7579 = vrot.slane %v7559, 7
    %v7580 = vrot.slane %v7560, 1
    %v7581 = vrot.slane %v7560, 2
    %v7582 = vrot.slane %v7560, 3
    %v7583 = vrot.slane %v7560, 4
    %v7584 = vrot.slane %v7560, 5
    %v7585 = vrot.slane %v7560, 6
    %v7586 = vrot.slane %v7560, 7
    %v7587 = vrot.slane %v7561, 1
    %v7588 = vrot.slane %v7561, 2
    %v7589 = vrot.slane %v7561, 3
    %v7590 = vrot.slane %v7561, 4
    %v7591 = vrot.slane %v7561, 5
    %v7592 = vrot.slane %v7561, 6
    %v7593 = vrot.slane %v7561, 7
    %v7594 = vperm.slane %v7558, 0
    %v7595 = vperm.slane %v7566, 0
    %v7596 = vperm.slane %v7567, 0
    %v7597 = vperm.slane %v7568, 0
    %v7598 = vperm.slane %v7569, 0
    %v7599 = vperm.slane %v7570, 0
    %v7600 = vperm.slane %v7571, 0
    %v7601 = vperm.slane %v7572, 0
    %v7602 = vperm.slane %v7559, 0
    %v7603 = vperm.slane %v7573, 0
    %v7604 = vperm.slane %v7574, 0
    %v7605 = vperm.slane %v7575, 0
    %v7606 = vperm.slane %v7576, 0
    %v7607 = vperm.slane %v7577, 0
    %v7608 = vperm.slane %v7578, 0
    %v7609 = vperm.slane %v7579, 0
    %v7610 = vperm.slane %v7560, 0
    %v7611 = vperm.slane %v7580, 0
    %v7612 = vperm.slane %v7581, 0
    %v7613 = vperm.slane %v7582, 0
    %v7614 = vperm.slane %v7583, 0
    %v7615 = vperm.slane %v7584, 0
    %v7616 = vperm.slane %v7585, 0
    %v7617 = vperm.slane %v7586, 0
    %v7618 = vperm.slane %v7561, 0
    %v7619 = vperm.slane %v7587, 0
    %v7620 = vperm.slane %v7588, 0
    %v7621 = vperm.slane %v7589, 0
    %v7622 = vperm.slane %v7590, 0
    %v7623 = vperm.slane %v7591, 0
    %v7624 = vperm.slane %v7592, 0
    %v7625 = vperm.slane %v7593, 0
    %v7658 = vadd.f32 %v7594, %v7552
    %v7659 = vadd.f32 %v7594, %v7553
    %v7660 = vadd.f32 %v7595, %v7552
    %v7661 = vadd.f32 %v7595, %v7553
    %v7662 = vadd.f32 %v7596, %v7552
    %v7663 = vadd.f32 %v7596, %v7553
    %v7664 = vadd.f32 %v7597, %v7552
    %v7665 = vadd.f32 %v7597, %v7553
    %v7666 = vadd.f32 %v7598, %v7552
    %v7667 = vadd.f32 %v7598, %v7553
    %v7668 = vadd.f32 %v7599, %v7552
    %v7669 = vadd.f32 %v7599, %v7553
    %v7670 = vadd.f32 %v7600, %v7552
    %v7671 = vadd.f32 %v7600, %v7553
    %v7672 = vadd.f32 %v7601, %v7552
    %v7673 = vadd.f32 %v7601, %v7553
    %v7674 = vadd.f32 %v7602, %v7552
    %v7675 = vadd.f32 %v7602, %v7553
    %v7676 = vadd.f32 %v7603, %v7552
    %v7677 = vadd.f32 %v7603, %v7553
    %v7678 = vadd.f32 %v7604, %v7552
    %v7679 = vadd.f32 %v7604, %v7553
    %v7680 = vadd.f32 %v7605, %v7552
    %v7681 = vadd.f32 %v7605, %v7553
    %v7682 = vadd.f32 %v7606, %v7552
    %v7683 = vadd.f32 %v7606, %v7553
    %v7684 = vadd.f32 %v7607, %v7552
    %v7685 = vadd.f32 %v7607, %v7553
    %v7686 = vadd.f32 %v7608, %v7552
    %v7687 = vadd.f32 %v7608, %v7553
    %v7688 = vadd.f32 %v7609, %v7552
    %v7689 = vadd.f32 %v7609, %v7553
    %v7690 = vadd.f32 %v7610, %v7554
    %v7691 = vadd.f32 %v7610, %v7555
    %v7692 = vadd.f32 %v7611, %v7554
    %v7693 = vadd.f32 %v7611, %v7555
    %v7694 = vadd.f32 %v7612, %v7554
    %v7695 = vadd.f32 %v7612, %v7555
    %v7696 = vadd.f32 %v7613, %v7554
    %v7697 = vadd.f32 %v7613, %v7555
    %v7698 = vadd.f32 %v7614, %v7554
    %v7699 = vadd.f32 %v7614, %v7555
    %v7700 = vadd.f32 %v7615, %v7554
    %v7701 = vadd.f32 %v7615, %v7555
    %v7702 = vadd.f32 %v7616, %v7554
    %v7703 = vadd.f32 %v7616, %v7555
    %v7704 = vadd.f32 %v7617, %v7554
    %v7705 = vadd.f32 %v7617, %v7555
    %v7706 = vadd.f32 %v7618, %v7554
    %v7707 = vadd.f32 %v7618, %v7555
    %v7708 = vadd.f32 %v7619, %v7554
    %v7709 = vadd.f32 %v7619, %v7555
    %v7710 = vadd.f32 %v7620, %v7554
    %v7711 = vadd.f32 %v7620, %v7555
    %v7712 = vadd.f32 %v7621, %v7554
    %v7713 = vadd.f32 %v7621, %v7555
    %v7714 = vadd.f32 %v7622, %v7554
    %v7715 = vadd.f32 %v7622, %v7555
    %v7716 = vadd.f32 %v7623, %v7554
    %v7717 = vadd.f32 %v7623, %v7555
    %v7718 = vadd.f32 %v7624, %v7554
    %v7719 = vadd.f32 %v7624, %v7555
    %v7720 = vadd.f32 %v7625, %v7554
    %v7721 = vadd.f32 %v7625, %v7555
    %v7722 = vld [vmem:[#allocation4 + $0x14] sm:$0x1]
    %v7723 = vperm.slane %v7722, 0
    %v7724 = vmul.f32 %v545, %v7723
    %v7725 = vmul.f32 %v551, %v7723
    %v7726 = vmul.f32 %v558, %v7723
    %v7727 = vmul.f32 %v564, %v7723
    %v7728 = vmul.f32 %v571, %v7723
    %v7729 = vmul.f32 %v577, %v7723
    %v7730 = vmul.f32 %v584, %v7723
    %v7731 = vmul.f32 %v590, %v7723
    %v7732 = vmul.f32 %v597, %v7723
    %v7733 = vmul.f32 %v603, %v7723
    %v7734 = vmul.f32 %v610, %v7723
    %v7735 = vmul.f32 %v616, %v7723
    %v7736 = vmul.f32 %v623, %v7723
    %v7737 = vmul.f32 %v629, %v7723
    %v7738 = vmul.f32 %v636, %v7723
    %v7739 = vmul.f32 %v642, %v7723
    %v7740 = vmul.f32 %v649, %v7723
    %v7741 = vmul.f32 %v655, %v7723
    %v7742 = vmul.f32 %v662, %v7723
    %v7743 = vmul.f32 %v668, %v7723
    %v7744 = vmul.f32 %v675, %v7723
    %v7745 = vmul.f32 %v681, %v7723
    %v7746 = vmul.f32 %v688, %v7723
    %v7747 = vmul.f32 %v694, %v7723
    %v7748 = vmul.f32 %v701, %v7723
    %v7749 = vmul.f32 %v707, %v7723
    %v7750 = vmul.f32 %v714, %v7723
    %v7751 = vmul.f32 %v720, %v7723
    %v7752 = vmul.f32 %v727, %v7723
    %v7753 = vmul.f32 %v733, %v7723
    %v7754 = vmul.f32 %v740, %v7723
    %v7755 = vmul.f32 %v746, %v7723
    %v7756 = vmul.f32 %v753, %v7723
    %v7757 = vmul.f32 %v759, %v7723
    %v7758 = vmul.f32 %v766, %v7723
    %v7759 = vmul.f32 %v772, %v7723
    %v7760 = vmul.f32 %v779, %v7723
    %v7761 = vmul.f32 %v785, %v7723
    %v7762 = vmul.f32 %v792, %v7723
    %v7763 = vmul.f32 %v798, %v7723
    %v7764 = vmul.f32 %v805, %v7723
    %v7765 = vmul.f32 %v811, %v7723
    %v7766 = vmul.f32 %v818, %v7723
    %v7767 = vmul.f32 %v824, %v7723
    %v7768 = vmul.f32 %v831, %v7723
    %v7769 = vmul.f32 %v837, %v7723
    %v7770 = vmul.f32 %v844, %v7723
    %v7771 = vmul.f32 %v850, %v7723
    %v7772 = vmul.f32 %v857, %v7723
    %v7773 = vmul.f32 %v863, %v7723
    %v7774 = vmul.f32 %v870, %v7723
    %v7775 = vmul.f32 %v876, %v7723
    %v7776 = vmul.f32 %v883, %v7723
    %v7777 = vmul.f32 %v889, %v7723
    %v7778 = vmul.f32 %v896, %v7723
    %v7779 = vmul.f32 %v902, %v7723
    %v7780 = vmul.f32 %v909, %v7723
    %v7781 = vmul.f32 %v915, %v7723
    %v7782 = vmul.f32 %v922, %v7723
    %v7783 = vmul.f32 %v928, %v7723
    %v7784 = vmul.f32 %v935, %v7723
    %v7785 = vmul.f32 %v941, %v7723
    %v7786 = vmul.f32 %v948, %v7723
    %v7787 = vmul.f32 %v954, %v7723
    %v7788 = vadd.f32 %v7658, %v7724
    %v7789 = vadd.f32 %v7659, %v7725
    %v7790 = vadd.f32 %v7660, %v7726
    %v7791 = vadd.f32 %v7661, %v7727
    %v7792 = vadd.f32 %v7662, %v7728
    %v7793 = vadd.f32 %v7663, %v7729
    %v7794 = vadd.f32 %v7664, %v7730
    %v7795 = vadd.f32 %v7665, %v7731
    %v7796 = vadd.f32 %v7666, %v7732
    %v7797 = vadd.f32 %v7667, %v7733
    %v7798 = vadd.f32 %v7668, %v7734
    %v7799 = vadd.f32 %v7669, %v7735
    %v7800 = vadd.f32 %v7670, %v7736
    %v7801 = vadd.f32 %v7671, %v7737
    %v7802 = vadd.f32 %v7672, %v7738
    %v7803 = vadd.f32 %v7673, %v7739
    %v7804 = vadd.f32 %v7674, %v7740
    %v7805 = vadd.f32 %v7675, %v7741
    %v7806 = vadd.f32 %v7676, %v7742
    %v7807 = vadd.f32 %v7677, %v7743
    %v7808 = vadd.f32 %v7678, %v7744
    %v7809 = vadd.f32 %v7679, %v7745
    %v7810 = vadd.f32 %v7680, %v7746
    %v7811 = vadd.f32 %v7681, %v7747
    %v7812 = vadd.f32 %v7682, %v7748
    %v7813 = vadd.f32 %v7683, %v7749
    %v7814 = vadd.f32 %v7684, %v7750
    %v7815 = vadd.f32 %v7685, %v7751
    %v7816 = vadd.f32 %v7686, %v7752
    %v7817 = vadd.f32 %v7687, %v7753
    %v7818 = vadd.f32 %v7688, %v7754
    %v7819 = vadd.f32 %v7689, %v7755
    %v7820 = vadd.f32 %v7690, %v7756
    %v7821 = vadd.f32 %v7691, %v7757
    %v7822 = vadd.f32 %v7692, %v7758
    %v7823 = vadd.f32 %v7693, %v7759
    %v7824 = vadd.f32 %v7694, %v7760
    %v7825 = vadd.f32 %v7695, %v7761
    %v7826 = vadd.f32 %v7696, %v7762
    %v7827 = vadd.f32 %v7697, %v7763
    %v7828 = vadd.f32 %v7698, %v7764
    %v7829 = vadd.f32 %v7699, %v7765
    %v7830 = vadd.f32 %v7700, %v7766
    %v7831 = vadd.f32 %v7701, %v7767
    %v7832 = vadd.f32 %v7702, %v7768
    %v7833 = vadd.f32 %v7703, %v7769
    %v7834 = vadd.f32 %v7704, %v7770
    %v7835 = vadd.f32 %v7705, %v7771
    %v7836 = vadd.f32 %v7706, %v7772
    %v7837 = vadd.f32 %v7707, %v7773
    %v7838 = vadd.f32 %v7708, %v7774
    %v7839 = vadd.f32 %v7709, %v7775
    %v7840 = vadd.f32 %v7710, %v7776
    %v7841 = vadd.f32 %v7711, %v7777
    %v7842 = vadd.f32 %v7712, %v7778
    %v7843 = vadd.f32 %v7713, %v7779
    %v7844 = vadd.f32 %v7714, %v7780
    %v7845 = vadd.f32 %v7715, %v7781
    %v7846 = vadd.f32 %v7716, %v7782
    %v7847 = vadd.f32 %v7717, %v7783
    %v7848 = vadd.f32 %v7718, %v7784
    %v7849 = vadd.f32 %v7719, %v7785
    %v7850 = vadd.f32 %v7720, %v7786
    %v7851 = vadd.f32 %v7721, %v7787
    %vm7852 = vcmp.ge.f32.partialorder %v7788, 0.0
    %vm7853 = vcmp.ge.f32.partialorder %v7789, 0.0
    %vm7854 = vcmp.ge.f32.partialorder %v7790, 0.0
    %vm7855 = vcmp.ge.f32.partialorder %v7791, 0.0
    %vm7856 = vcmp.ge.f32.partialorder %v7792, 0.0
    %vm7857 = vcmp.ge.f32.partialorder %v7793, 0.0
    %vm7858 = vcmp.ge.f32.partialorder %v7794, 0.0
    %vm7859 = vcmp.ge.f32.partialorder %v7795, 0.0
    %vm7860 = vcmp.ge.f32.partialorder %v7796, 0.0
    %vm7861 = vcmp.ge.f32.partialorder %v7797, 0.0
    %vm7862 = vcmp.ge.f32.partialorder %v7798, 0.0
    %vm7863 = vcmp.ge.f32.partialorder %v7799, 0.0
    %vm7864 = vcmp.ge.f32.partialorder %v7800, 0.0
    %vm7865 = vcmp.ge.f32.partialorder %v7801, 0.0
    %vm7866 = vcmp.ge.f32.partialorder %v7802, 0.0
    %vm7867 = vcmp.ge.f32.partialorder %v7803, 0.0
    %vm7868 = vcmp.ge.f32.partialorder %v7804, 0.0
    %vm7869 = vcmp.ge.f32.partialorder %v7805, 0.0
    %vm7870 = vcmp.ge.f32.partialorder %v7806, 0.0
    %vm7871 = vcmp.ge.f32.partialorder %v7807, 0.0
    %vm7872 = vcmp.ge.f32.partialorder %v7808, 0.0
    %vm7873 = vcmp.ge.f32.partialorder %v7809, 0.0
    %vm7874 = vcmp.ge.f32.partialorder %v7810, 0.0
    %vm7875 = vcmp.ge.f32.partialorder %v7811, 0.0
    %vm7876 = vcmp.ge.f32.partialorder %v7812, 0.0
    %vm7877 = vcmp.ge.f32.partialorder %v7813, 0.0
    %vm7878 = vcmp.ge.f32.partialorder %v7814, 0.0
    %vm7879 = vcmp.ge.f32.partialorder %v7815, 0.0
    %vm7880 = vcmp.ge.f32.partialorder %v7816, 0.0
    %vm7881 = vcmp.ge.f32.partialorder %v7817, 0.0
    %vm7882 = vcmp.ge.f32.partialorder %v7818, 0.0
    %vm7883 = vcmp.ge.f32.partialorder %v7819, 0.0
    %vm7884 = vcmp.ge.f32.partialorder %v7820, 0.0
    %vm7885 = vcmp.ge.f32.partialorder %v7821, 0.0
    %vm7886 = vcmp.ge.f32.partialorder %v7822, 0.0
    %vm7887 = vcmp.ge.f32.partialorder %v7823, 0.0
    %vm7888 = vcmp.ge.f32.partialorder %v7824, 0.0
    %vm7889 = vcmp.ge.f32.partialorder %v7825, 0.0
    %vm7890 = vcmp.ge.f32.partialorder %v7826, 0.0
    %vm7891 = vcmp.ge.f32.partialorder %v7827, 0.0
    %vm7892 = vcmp.ge.f32.partialorder %v7828, 0.0
    %vm7893 = vcmp.ge.f32.partialorder %v7829, 0.0
    %vm7894 = vcmp.ge.f32.partialorder %v7830, 0.0
    %vm7895 = vcmp.ge.f32.partialorder %v7831, 0.0
    %vm7896 = vcmp.ge.f32.partialorder %v7832, 0.0
    %vm7897 = vcmp.ge.f32.partialorder %v7833, 0.0
    %vm7898 = vcmp.ge.f32.partialorder %v7834, 0.0
    %vm7899 = vcmp.ge.f32.partialorder %v7835, 0.0
    %vm7900 = vcmp.ge.f32.partialorder %v7836, 0.0
    %vm7901 = vcmp.ge.f32.partialorder %v7837, 0.0
    %vm7902 = vcmp.ge.f32.partialorder %v7838, 0.0
    %vm7903 = vcmp.ge.f32.partialorder %v7839, 0.0
    %vm7904 = vcmp.ge.f32.partialorder %v7840, 0.0
    %vm7905 = vcmp.ge.f32.partialorder %v7841, 0.0
    %vm7906 = vcmp.ge.f32.partialorder %v7842, 0.0
    %vm7907 = vcmp.ge.f32.partialorder %v7843, 0.0
    %vm7908 = vcmp.ge.f32.partialorder %v7844, 0.0
    %vm7909 = vcmp.ge.f32.partialorder %v7845, 0.0
    %vm7910 = vcmp.ge.f32.partialorder %v7846, 0.0
    %vm7911 = vcmp.ge.f32.partialorder %v7847, 0.0
    %vm7912 = vcmp.ge.f32.partialorder %v7848, 0.0
    %vm7913 = vcmp.ge.f32.partialorder %v7849, 0.0
    %vm7914 = vcmp.ge.f32.partialorder %v7850, 0.0
    %vm7915 = vcmp.ge.f32.partialorder %v7851, 0.0
    %v7916 = vmul.f32 %v7788, 0.2
    %v7917 = vmul.f32 %v7789, 0.2
    %v7918 = vmul.f32 %v7790, 0.2
    %v7919 = vmul.f32 %v7791, 0.2
    %v7920 = vmul.f32 %v7792, 0.2
    %v7921 = vmul.f32 %v7793, 0.2
    %v7922 = vmul.f32 %v7794, 0.2
    %v7923 = vmul.f32 %v7795, 0.2
    %v7924 = vmul.f32 %v7796, 0.2
    %v7925 = vmul.f32 %v7797, 0.2
    %v7926 = vmul.f32 %v7798, 0.2
    %v7927 = vmul.f32 %v7799, 0.2
    %v7928 = vmul.f32 %v7800, 0.2
    %v7929 = vmul.f32 %v7801, 0.2
    %v7930 = vmul.f32 %v7802, 0.2
    %v7931 = vmul.f32 %v7803, 0.2
    %v7932 = vmul.f32 %v7804, 0.2
    %v7933 = vmul.f32 %v7805, 0.2
    %v7934 = vmul.f32 %v7806, 0.2
    %v7935 = vmul.f32 %v7807, 0.2
    %v7936 = vmul.f32 %v7808, 0.2
    %v7937 = vmul.f32 %v7809, 0.2
    %v7938 = vmul.f32 %v7810, 0.2
    %v7939 = vmul.f32 %v7811, 0.2
    %v7940 = vmul.f32 %v7812, 0.2
    %v7941 = vmul.f32 %v7813, 0.2
    %v7942 = vmul.f32 %v7814, 0.2
    %v7943 = vmul.f32 %v7815, 0.2
    %v7944 = vmul.f32 %v7816, 0.2
    %v7945 = vmul.f32 %v7817, 0.2
    %v7946 = vmul.f32 %v7818, 0.2
    %v7947 = vmul.f32 %v7819, 0.2
    %v7948 = vmul.f32 %v7820, 0.2
    %v7949 = vmul.f32 %v7821, 0.2
    %v7950 = vmul.f32 %v7822, 0.2
    %v7951 = vmul.f32 %v7823, 0.2
    %v7952 = vmul.f32 %v7824, 0.2
    %v7953 = vmul.f32 %v7825, 0.2
    %v7954 = vmul.f32 %v7826, 0.2
    %v7955 = vmul.f32 %v7827, 0.2
    %v7956 = vmul.f32 %v7828, 0.2
    %v7957 = vmul.f32 %v7829, 0.2
    %v7958 = vmul.f32 %v7830, 0.2
    %v7959 = vmul.f32 %v7831, 0.2
    %v7960 = vmul.f32 %v7832, 0.2
    %v7961 = vmul.f32 %v7833, 0.2
    %v7962 = vmul.f32 %v7834, 0.2
    %v7963 = vmul.f32 %v7835, 0.2
    %v7964 = vmul.f32 %v7836, 0.2
    %v7965 = vmul.f32 %v7837, 0.2
    %v7966 = vmul.f32 %v7838, 0.2
    %v7967 = vmul.f32 %v7839, 0.2
    %v7968 = vmul.f32 %v7840, 0.2
    %v7969 = vmul.f32 %v7841, 0.2
    %v7970 = vmul.f32 %v7842, 0.2
    %v7971 = vmul.f32 %v7843, 0.2
    %v7972 = vmul.f32 %v7844, 0.2
    %v7973 = vmul.f32 %v7845, 0.2
    %v7974 = vmul.f32 %v7846, 0.2
    %v7975 = vmul.f32 %v7847, 0.2
    %v7976 = vmul.f32 %v7848, 0.2
    %v7977 = vmul.f32 %v7849, 0.2
    %v7978 = vmul.f32 %v7850, 0.2
    %v7979 = vmul.f32 %v7851, 0.2
    %v7980 = vsel %vm7852, %v7788, %v7916
    %v7981 = vsel %vm7853, %v7789, %v7917
    %v7982 = vsel %vm7854, %v7790, %v7918
    %v7983 = vsel %vm7855, %v7791, %v7919
    %v7984 = vsel %vm7856, %v7792, %v7920
    %v7985 = vsel %vm7857, %v7793, %v7921
    %v7986 = vsel %vm7858, %v7794, %v7922
    %v7987 = vsel %vm7859, %v7795, %v7923
    %v7988 = vsel %vm7860, %v7796, %v7924
    %v7989 = vsel %vm7861, %v7797, %v7925
    %v7990 = vsel %vm7862, %v7798, %v7926
    %v7991 = vsel %vm7863, %v7799, %v7927
    %v7992 = vsel %vm7864, %v7800, %v7928
    %v7993 = vsel %vm7865, %v7801, %v7929
    %v7994 = vsel %vm7866, %v7802, %v7930
    %v7995 = vsel %vm7867, %v7803, %v7931
    %v7996 = vsel %vm7868, %v7804, %v7932
    %v7997 = vsel %vm7869, %v7805, %v7933
    %v7998 = vsel %vm7870, %v7806, %v7934
    %v7999 = vsel %vm7871, %v7807, %v7935
    %v8000 = vsel %vm7872, %v7808, %v7936
    %v8001 = vsel %vm7873, %v7809, %v7937
    %v8002 = vsel %vm7874, %v7810, %v7938
    %v8003 = vsel %vm7875, %v7811, %v7939
    %v8004 = vsel %vm7876, %v7812, %v7940
    %v8005 = vsel %vm7877, %v7813, %v7941
    %v8006 = vsel %vm7878, %v7814, %v7942
    %v8007 = vsel %vm7879, %v7815, %v7943
    %v8008 = vsel %vm7880, %v7816, %v7944
    %v8009 = vsel %vm7881, %v7817, %v7945
    %v8010 = vsel %vm7882, %v7818, %v7946
    %v8011 = vsel %vm7883, %v7819, %v7947
    %v8012 = vsel %vm7884, %v7820, %v7948
    %v8013 = vsel %vm7885, %v7821, %v7949
    %v8014 = vsel %vm7886, %v7822, %v7950
    %v8015 = vsel %vm7887, %v7823, %v7951
    %v8016 = vsel %vm7888, %v7824, %v7952
    %v8017 = vsel %vm7889, %v7825, %v7953
    %v8018 = vsel %vm7890, %v7826, %v7954
    %v8019 = vsel %vm7891, %v7827, %v7955
    %v8020 = vsel %vm7892, %v7828, %v7956
    %v8021 = vsel %vm7893, %v7829, %v7957
    %v8022 = vsel %vm7894, %v7830, %v7958
    %v8023 = vsel %vm7895, %v7831, %v7959
    %v8024 = vsel %vm7896, %v7832, %v7960
    %v8025 = vsel %vm7897, %v7833, %v7961
    %v8026 = vsel %vm7898, %v7834, %v7962
    %v8027 = vsel %vm7899, %v7835, %v7963
    %v8028 = vsel %vm7900, %v7836, %v7964
    %v8029 = vsel %vm7901, %v7837, %v7965
    %v8030 = vsel %vm7902, %v7838, %v7966
    %v8031 = vsel %vm7903, %v7839, %v7967
    %v8032 = vsel %vm7904, %v7840, %v7968
    %v8033 = vsel %vm7905, %v7841, %v7969
    %v8034 = vsel %vm7906, %v7842, %v7970
    %v8035 = vsel %vm7907, %v7843, %v7971
    %v8036 = vsel %vm7908, %v7844, %v7972
    %v8037 = vsel %vm7909, %v7845, %v7973
    %v8038 = vsel %vm7910, %v7846, %v7974
    %v8039 = vsel %vm7911, %v7847, %v7975
    %v8040 = vsel %vm7912, %v7848, %v7976
    %v8041 = vsel %vm7913, %v7849, %v7977
    %v8042 = vsel %vm7914, %v7850, %v7978
    %v8043 = vsel %vm7915, %v7851, %v7979
    %s8044 = scalar_lea.vmem [#allocation7], 384
    %v8045 = vld [vmem:[%s8044] sm:$0xff]
    %v8046 = vld [vmem:[%s8044 + $0x8] sm:$0xff]
    %v8047 = vld [vmem:[%s8044 + $0x10] sm:$0xff]
    %v8048 = vld [vmem:[%s8044 + $0x18] sm:$0xff]
    %v8049 = vld [vmem:[%s8044 + $0x20] sm:$0xff]
    %v8050 = vld [vmem:[%s8044 + $0x28] sm:$0xff]
    %v8051 = vld [vmem:[%s8044 + $0x30] sm:$0xff]
    %v8052 = vld [vmem:[%s8044 + $0x38] sm:$0xff]
    %v8053 = vld [vmem:[%s8044 + $0x40] sm:$0xff]
    %v8054 = vld [vmem:[%s8044 + $0x48] sm:$0xff]
    %v8055 = vld [vmem:[%s8044 + $0x50] sm:$0xff]
    %v8056 = vld [vmem:[%s8044 + $0x58] sm:$0xff]
    %v8057 = vld [vmem:[%s8044 + $0x60] sm:$0xff]
    %v8058 = vld [vmem:[%s8044 + $0x68] sm:$0xff]
    %v8059 = vld [vmem:[%s8044 + $0x70] sm:$0xff]
    %v8060 = vld [vmem:[%s8044 + $0x78] sm:$0xff]
    %8061 = vmatpush.msra.mxu0 %v8060
    %8062 = vmatpush.msra.mxu0 %v8059
    %8063 = vmatpush.msra.mxu0 %v8058
    %8064 = vmatpush.msra.mxu0 %v8057
    %8065 = vmatpush.msra.mxu0 %v8056
    %8066 = vmatpush.msra.mxu0 %v8055
    %8067 = vmatpush.msra.mxu0 %v8054
    %8068 = vmatpush.msra.mxu0 %v8053
    %8069 = vmatpush.msra.mxu0 %v8052
    %8070 = vmatpush.msra.mxu0 %v8051
    %8071 = vmatpush.msra.mxu0 %v8050
    %8072 = vmatpush.msra.mxu0 %v8049
    %8073 = vmatpush.msra.mxu0 %v8048
    %8074 = vmatpush.msra.mxu0 %v8047
    %8075 = vmatpush.msra.mxu0 %v8046
    %8076 = vmatpush.msra.mxu0 %v8045
    %8077 = vmatmul.f32.gmra.mxu0 %v7980
    %v8078 = vpop.f32.mrf.mxu0
    %v8079 = vadd.f32 0.0, %v8078
    %8080 = vmatmul.f32.gmra.mxu0 %v7981
    %v8081 = vpop.f32.mrf.mxu0
    %v8082 = vadd.f32 0.0, %v8081
    %8083 = vmatmul.f32.gmra.mxu0 %v7982
    %v8084 = vpop.f32.mrf.mxu0
    %v8085 = vadd.f32 0.0, %v8084
    %8086 = vmatmul.f32.gmra.mxu0 %v7983
    %v8087 = vpop.f32.mrf.mxu0
    %v8088 = vadd.f32 0.0, %v8087
    %8089 = vmatmul.f32.gmra.mxu0 %v7984
    %v8090 = vpop.f32.mrf.mxu0
    %v8091 = vadd.f32 0.0, %v8090
    %8092 = vmatmul.f32.gmra.mxu0 %v7985
    %v8093 = vpop.f32.mrf.mxu0
    %v8094 = vadd.f32 0.0, %v8093
    %8095 = vmatmul.f32.gmra.mxu0 %v7986
    %v8096 = vpop.f32.mrf.mxu0
    %v8097 = vadd.f32 0.0, %v8096
    %8098 = vmatmul.f32.gmra.mxu0 %v7987
    %v8099 = vpop.f32.mrf.mxu0
    %v8100 = vadd.f32 0.0, %v8099
    %8101 = vmatmul.f32.gmra.mxu0 %v7988
    %v8102 = vpop.f32.mrf.mxu0
    %v8103 = vadd.f32 0.0, %v8102
    %8104 = vmatmul.f32.gmra.mxu0 %v7989
    %v8105 = vpop.f32.mrf.mxu0
    %v8106 = vadd.f32 0.0, %v8105
    %8107 = vmatmul.f32.gmra.mxu0 %v7990
    %v8108 = vpop.f32.mrf.mxu0
    %v8109 = vadd.f32 0.0, %v8108
    %8110 = vmatmul.f32.gmra.mxu0 %v7991
    %v8111 = vpop.f32.mrf.mxu0
    %v8112 = vadd.f32 0.0, %v8111
    %8113 = vmatmul.f32.gmra.mxu0 %v7992
    %v8114 = vpop.f32.mrf.mxu0
    %v8115 = vadd.f32 0.0, %v8114
    %8116 = vmatmul.f32.gmra.mxu0 %v7993
    %v8117 = vpop.f32.mrf.mxu0
    %v8118 = vadd.f32 0.0, %v8117
    %8119 = vmatmul.f32.gmra.mxu0 %v7994
    %v8120 = vpop.f32.mrf.mxu0
    %v8121 = vadd.f32 0.0, %v8120
    %8122 = vmatmul.f32.gmra.mxu0 %v7995
    %v8123 = vpop.f32.mrf.mxu0
    %v8124 = vadd.f32 0.0, %v8123
    %8125 = vmatmul.f32.gmra.mxu0 %v7996
    %v8126 = vpop.f32.mrf.mxu0
    %v8127 = vadd.f32 0.0, %v8126
    %8128 = vmatmul.f32.gmra.mxu0 %v7997
    %v8129 = vpop.f32.mrf.mxu0
    %v8130 = vadd.f32 0.0, %v8129
    %8131 = vmatmul.f32.gmra.mxu0 %v7998
    %v8132 = vpop.f32.mrf.mxu0
    %v8133 = vadd.f32 0.0, %v8132
    %8134 = vmatmul.f32.gmra.mxu0 %v7999
    %v8135 = vpop.f32.mrf.mxu0
    %v8136 = vadd.f32 0.0, %v8135
    %8137 = vmatmul.f32.gmra.mxu0 %v8000
    %v8138 = vpop.f32.mrf.mxu0
    %v8139 = vadd.f32 0.0, %v8138
    %8140 = vmatmul.f32.gmra.mxu0 %v8001
    %v8141 = vpop.f32.mrf.mxu0
    %v8142 = vadd.f32 0.0, %v8141
    %8143 = vmatmul.f32.gmra.mxu0 %v8002
    %v8144 = vpop.f32.mrf.mxu0
    %v8145 = vadd.f32 0.0, %v8144
    %8146 = vmatmul.f32.gmra.mxu0 %v8003
    %v8147 = vpop.f32.mrf.mxu0
    %v8148 = vadd.f32 0.0, %v8147
    %8149 = vmatmul.f32.gmra.mxu0 %v8004
    %v8150 = vpop.f32.mrf.mxu0
    %v8151 = vadd.f32 0.0, %v8150
    %8152 = vmatmul.f32.gmra.mxu0 %v8005
    %v8153 = vpop.f32.mrf.mxu0
    %v8154 = vadd.f32 0.0, %v8153
    %8155 = vmatmul.f32.gmra.mxu0 %v8006
    %v8156 = vpop.f32.mrf.mxu0
    %v8157 = vadd.f32 0.0, %v8156
    %8158 = vmatmul.f32.gmra.mxu0 %v8007
    %v8159 = vpop.f32.mrf.mxu0
    %v8160 = vadd.f32 0.0, %v8159
    %8161 = vmatmul.f32.gmra.mxu0 %v8008
    %v8162 = vpop.f32.mrf.mxu0
    %v8163 = vadd.f32 0.0, %v8162
    %8164 = vmatmul.f32.gmra.mxu0 %v8009
    %v8165 = vpop.f32.mrf.mxu0
    %v8166 = vadd.f32 0.0, %v8165
    %8167 = vmatmul.f32.gmra.mxu0 %v8010
    %v8168 = vpop.f32.mrf.mxu0
    %v8169 = vadd.f32 0.0, %v8168
    %8170 = vmatmul.f32.gmra.mxu0 %v8011
    %v8171 = vpop.f32.mrf.mxu0
    %v8172 = vadd.f32 0.0, %v8171
    %8173 = vmatmul.f32.gmra.mxu0 %v8012
    %v8174 = vpop.f32.mrf.mxu0
    %v8175 = vadd.f32 0.0, %v8174
    %8176 = vmatmul.f32.gmra.mxu0 %v8013
    %v8177 = vpop.f32.mrf.mxu0
    %v8178 = vadd.f32 0.0, %v8177
    %8179 = vmatmul.f32.gmra.mxu0 %v8014
    %v8180 = vpop.f32.mrf.mxu0
    %v8181 = vadd.f32 0.0, %v8180
    %8182 = vmatmul.f32.gmra.mxu0 %v8015
    %v8183 = vpop.f32.mrf.mxu0
    %v8184 = vadd.f32 0.0, %v8183
    %8185 = vmatmul.f32.gmra.mxu0 %v8016
    %v8186 = vpop.f32.mrf.mxu0
    %v8187 = vadd.f32 0.0, %v8186
    %8188 = vmatmul.f32.gmra.mxu0 %v8017
    %v8189 = vpop.f32.mrf.mxu0
    %v8190 = vadd.f32 0.0, %v8189
    %8191 = vmatmul.f32.gmra.mxu0 %v8018
    %v8192 = vpop.f32.mrf.mxu0
    %v8193 = vadd.f32 0.0, %v8192
    %8194 = vmatmul.f32.gmra.mxu0 %v8019
    %v8195 = vpop.f32.mrf.mxu0
    %v8196 = vadd.f32 0.0, %v8195
    %8197 = vmatmul.f32.gmra.mxu0 %v8020
    %v8198 = vpop.f32.mrf.mxu0
    %v8199 = vadd.f32 0.0, %v8198
    %8200 = vmatmul.f32.gmra.mxu0 %v8021
    %v8201 = vpop.f32.mrf.mxu0
    %v8202 = vadd.f32 0.0, %v8201
    %8203 = vmatmul.f32.gmra.mxu0 %v8022
    %v8204 = vpop.f32.mrf.mxu0
    %v8205 = vadd.f32 0.0, %v8204
    %8206 = vmatmul.f32.gmra.mxu0 %v8023
    %v8207 = vpop.f32.mrf.mxu0
    %v8208 = vadd.f32 0.0, %v8207
    %8209 = vmatmul.f32.gmra.mxu0 %v8024
    %v8210 = vpop.f32.mrf.mxu0
    %v8211 = vadd.f32 0.0, %v8210
    %8212 = vmatmul.f32.gmra.mxu0 %v8025
    %v8213 = vpop.f32.mrf.mxu0
    %v8214 = vadd.f32 0.0, %v8213
    %8215 = vmatmul.f32.gmra.mxu0 %v8026
    %v8216 = vpop.f32.mrf.mxu0
    %v8217 = vadd.f32 0.0, %v8216
    %8218 = vmatmul.f32.gmra.mxu0 %v8027
    %v8219 = vpop.f32.mrf.mxu0
    %v8220 = vadd.f32 0.0, %v8219
    %8221 = vmatmul.f32.gmra.mxu0 %v8028
    %v8222 = vpop.f32.mrf.mxu0
    %v8223 = vadd.f32 0.0, %v8222
    %8224 = vmatmul.f32.gmra.mxu0 %v8029
    %v8225 = vpop.f32.mrf.mxu0
    %v8226 = vadd.f32 0.0, %v8225
    %8227 = vmatmul.f32.gmra.mxu0 %v8030
    %v8228 = vpop.f32.mrf.mxu0
    %v8229 = vadd.f32 0.0, %v8228
    %8230 = vmatmul.f32.gmra.mxu0 %v8031
    %v8231 = vpop.f32.mrf.mxu0
    %v8232 = vadd.f32 0.0, %v8231
    %8233 = vmatmul.f32.gmra.mxu0 %v8032
    %v8234 = vpop.f32.mrf.mxu0
    %v8235 = vadd.f32 0.0, %v8234
    %8236 = vmatmul.f32.gmra.mxu0 %v8033
    %v8237 = vpop.f32.mrf.mxu0
    %v8238 = vadd.f32 0.0, %v8237
    %8239 = vmatmul.f32.gmra.mxu0 %v8034
    %v8240 = vpop.f32.mrf.mxu0
    %v8241 = vadd.f32 0.0, %v8240
    %8242 = vmatmul.f32.gmra.mxu0 %v8035
    %v8243 = vpop.f32.mrf.mxu0
    %v8244 = vadd.f32 0.0, %v8243
    %8245 = vmatmul.f32.gmra.mxu0 %v8036
    %v8246 = vpop.f32.mrf.mxu0
    %v8247 = vadd.f32 0.0, %v8246
    %8248 = vmatmul.f32.gmra.mxu0 %v8037
    %v8249 = vpop.f32.mrf.mxu0
    %v8250 = vadd.f32 0.0, %v8249
    %8251 = vmatmul.f32.gmra.mxu0 %v8038
    %v8252 = vpop.f32.mrf.mxu0
    %v8253 = vadd.f32 0.0, %v8252
    %8254 = vmatmul.f32.gmra.mxu0 %v8039
    %v8255 = vpop.f32.mrf.mxu0
    %v8256 = vadd.f32 0.0, %v8255
    %8257 = vmatmul.f32.gmra.mxu0 %v8040
    %v8258 = vpop.f32.mrf.mxu0
    %v8259 = vadd.f32 0.0, %v8258
    %8260 = vmatmul.f32.gmra.mxu0 %v8041
    %v8261 = vpop.f32.mrf.mxu0
    %v8262 = vadd.f32 0.0, %v8261
    %8263 = vmatmul.f32.gmra.mxu0 %v8042
    %v8264 = vpop.f32.mrf.mxu0
    %v8265 = vadd.f32 0.0, %v8264
    %8266 = vmatmul.f32.gmra.mxu0 %v8043
    %v8267 = vpop.f32.mrf.mxu0
    %v8268 = vadd.f32 0.0, %v8267
    %8269 = vdwg.mxu0
    %v8270 = vadd.f32 %v8079, %v125
    %v8271 = vadd.f32 %v8082, %v131
    %v8272 = vadd.f32 %v8085, %v138
    %v8273 = vadd.f32 %v8088, %v144
    %v8274 = vadd.f32 %v8091, %v151
    %v8275 = vadd.f32 %v8094, %v157
    %v8276 = vadd.f32 %v8097, %v164
    %v8277 = vadd.f32 %v8100, %v170
    %v8278 = vadd.f32 %v8103, %v177
    %v8279 = vadd.f32 %v8106, %v183
    %v8280 = vadd.f32 %v8109, %v190
    %v8281 = vadd.f32 %v8112, %v196
    %v8282 = vadd.f32 %v8115, %v203
    %v8283 = vadd.f32 %v8118, %v209
    %v8284 = vadd.f32 %v8121, %v216
    %v8285 = vadd.f32 %v8124, %v222
    %v8286 = vadd.f32 %v8127, %v229
    %v8287 = vadd.f32 %v8130, %v235
    %v8288 = vadd.f32 %v8133, %v242
    %v8289 = vadd.f32 %v8136, %v248
    %v8290 = vadd.f32 %v8139, %v255
    %v8291 = vadd.f32 %v8142, %v261
    %v8292 = vadd.f32 %v8145, %v268
    %v8293 = vadd.f32 %v8148, %v274
    %v8294 = vadd.f32 %v8151, %v281
    %v8295 = vadd.f32 %v8154, %v287
    %v8296 = vadd.f32 %v8157, %v294
    %v8297 = vadd.f32 %v8160, %v300
    %v8298 = vadd.f32 %v8163, %v307
    %v8299 = vadd.f32 %v8166, %v313
    %v8300 = vadd.f32 %v8169, %v320
    %v8301 = vadd.f32 %v8172, %v326
    %v8302 = vadd.f32 %v8175, %v333
    %v8303 = vadd.f32 %v8178, %v339
    %v8304 = vadd.f32 %v8181, %v346
    %v8305 = vadd.f32 %v8184, %v352
    %v8306 = vadd.f32 %v8187, %v359
    %v8307 = vadd.f32 %v8190, %v365
    %v8308 = vadd.f32 %v8193, %v372
    %v8309 = vadd.f32 %v8196, %v378
    %v8310 = vadd.f32 %v8199, %v385
    %v8311 = vadd.f32 %v8202, %v391
    %v8312 = vadd.f32 %v8205, %v398
    %v8313 = vadd.f32 %v8208, %v404
    %v8314 = vadd.f32 %v8211, %v411
    %v8315 = vadd.f32 %v8214, %v417
    %v8316 = vadd.f32 %v8217, %v424
    %v8317 = vadd.f32 %v8220, %v430
    %v8318 = vadd.f32 %v8223, %v437
    %v8319 = vadd.f32 %v8226, %v443
    %v8320 = vadd.f32 %v8229, %v450
    %v8321 = vadd.f32 %v8232, %v456
    %v8322 = vadd.f32 %v8235, %v463
    %v8323 = vadd.f32 %v8238, %v469
    %v8324 = vadd.f32 %v8241, %v476
    %v8325 = vadd.f32 %v8244, %v482
    %v8326 = vadd.f32 %v8247, %v489
    %v8327 = vadd.f32 %v8250, %v495
    %v8328 = vadd.f32 %v8253, %v502
    %v8329 = vadd.f32 %v8256, %v508
    %v8330 = vadd.f32 %v8259, %v515
    %v8331 = vadd.f32 %v8262, %v521
    %v8332 = vadd.f32 %v8265, %v528
    %v8333 = vadd.f32 %v8268, %v534
    %v8334 = vmax.f32 %v8270, %v8271
    %v8335 = vrot.slane %v8334, 4
    %v8336 = vmax.f32 %v8334, %v8335
    %v8337 = vrot.slane %v8336, 2
    %v8338 = vmax.f32 %v8336, %v8337
    %v8339 = vrot.slane %v8338, 1
    %v8340 = vmax.f32 %v8338, %v8339
    %v8341 = vmax.f32 %v8272, %v8273
    %v8342 = vrot.slane %v8341, 4
    %v8343 = vmax.f32 %v8341, %v8342
    %v8344 = vrot.slane %v8343, 2
    %v8345 = vmax.f32 %v8343, %v8344
    %v8346 = vrot.slane %v8345, 1
    %v8347 = vmax.f32 %v8345, %v8346
    %v8348 = vmax.f32 %v8274, %v8275
    %v8349 = vrot.slane %v8348, 4
    %v8350 = vmax.f32 %v8348, %v8349
    %v8351 = vrot.slane %v8350, 2
    %v8352 = vmax.f32 %v8350, %v8351
    %v8353 = vrot.slane %v8352, 1
    %v8354 = vmax.f32 %v8352, %v8353
    %v8355 = vmax.f32 %v8276, %v8277
    %v8356 = vrot.slane %v8355, 4
    %v8357 = vmax.f32 %v8355, %v8356
    %v8358 = vrot.slane %v8357, 2
    %v8359 = vmax.f32 %v8357, %v8358
    %v8360 = vrot.slane %v8359, 1
    %v8361 = vmax.f32 %v8359, %v8360
    %v8362 = vmax.f32 %v8278, %v8279
    %v8363 = vrot.slane %v8362, 4
    %v8364 = vmax.f32 %v8362, %v8363
    %v8365 = vrot.slane %v8364, 2
    %v8366 = vmax.f32 %v8364, %v8365
    %v8367 = vrot.slane %v8366, 1
    %v8368 = vmax.f32 %v8366, %v8367
    %v8369 = vmax.f32 %v8280, %v8281
    %v8370 = vrot.slane %v8369, 4
    %v8371 = vmax.f32 %v8369, %v8370
    %v8372 = vrot.slane %v8371, 2
    %v8373 = vmax.f32 %v8371, %v8372
    %v8374 = vrot.slane %v8373, 1
    %v8375 = vmax.f32 %v8373, %v8374
    %v8376 = vmax.f32 %v8282, %v8283
    %v8377 = vrot.slane %v8376, 4
    %v8378 = vmax.f32 %v8376, %v8377
    %v8379 = vrot.slane %v8378, 2
    %v8380 = vmax.f32 %v8378, %v8379
    %v8381 = vrot.slane %v8380, 1
    %v8382 = vmax.f32 %v8380, %v8381
    %v8383 = vmax.f32 %v8284, %v8285
    %v8384 = vrot.slane %v8383, 4
    %v8385 = vmax.f32 %v8383, %v8384
    %v8386 = vrot.slane %v8385, 2
    %v8387 = vmax.f32 %v8385, %v8386
    %v8388 = vrot.slane %v8387, 1
    %v8389 = vmax.f32 %v8387, %v8388
    %v8390 = vmax.f32 %v8286, %v8287
    %v8391 = vrot.slane %v8390, 4
    %v8392 = vmax.f32 %v8390, %v8391
    %v8393 = vrot.slane %v8392, 2
    %v8394 = vmax.f32 %v8392, %v8393
    %v8395 = vrot.slane %v8394, 1
    %v8396 = vmax.f32 %v8394, %v8395
    %v8397 = vmax.f32 %v8288, %v8289
    %v8398 = vrot.slane %v8397, 4
    %v8399 = vmax.f32 %v8397, %v8398
    %v8400 = vrot.slane %v8399, 2
    %v8401 = vmax.f32 %v8399, %v8400
    %v8402 = vrot.slane %v8401, 1
    %v8403 = vmax.f32 %v8401, %v8402
    %v8404 = vmax.f32 %v8290, %v8291
    %v8405 = vrot.slane %v8404, 4
    %v8406 = vmax.f32 %v8404, %v8405
    %v8407 = vrot.slane %v8406, 2
    %v8408 = vmax.f32 %v8406, %v8407
    %v8409 = vrot.slane %v8408, 1
    %v8410 = vmax.f32 %v8408, %v8409
    %v8411 = vmax.f32 %v8292, %v8293
    %v8412 = vrot.slane %v8411, 4
    %v8413 = vmax.f32 %v8411, %v8412
    %v8414 = vrot.slane %v8413, 2
    %v8415 = vmax.f32 %v8413, %v8414
    %v8416 = vrot.slane %v8415, 1
    %v8417 = vmax.f32 %v8415, %v8416
    %v8418 = vmax.f32 %v8294, %v8295
    %v8419 = vrot.slane %v8418, 4
    %v8420 = vmax.f32 %v8418, %v8419
    %v8421 = vrot.slane %v8420, 2
    %v8422 = vmax.f32 %v8420, %v8421
    %v8423 = vrot.slane %v8422, 1
    %v8424 = vmax.f32 %v8422, %v8423
    %v8425 = vmax.f32 %v8296, %v8297
    %v8426 = vrot.slane %v8425, 4
    %v8427 = vmax.f32 %v8425, %v8426
    %v8428 = vrot.slane %v8427, 2
    %v8429 = vmax.f32 %v8427, %v8428
    %v8430 = vrot.slane %v8429, 1
    %v8431 = vmax.f32 %v8429, %v8430
    %v8432 = vmax.f32 %v8298, %v8299
    %v8433 = vrot.slane %v8432, 4
    %v8434 = vmax.f32 %v8432, %v8433
    %v8435 = vrot.slane %v8434, 2
    %v8436 = vmax.f32 %v8434, %v8435
    %v8437 = vrot.slane %v8436, 1
    %v8438 = vmax.f32 %v8436, %v8437
    %v8439 = vmax.f32 %v8300, %v8301
    %v8440 = vrot.slane %v8439, 4
    %v8441 = vmax.f32 %v8439, %v8440
    %v8442 = vrot.slane %v8441, 2
    %v8443 = vmax.f32 %v8441, %v8442
    %v8444 = vrot.slane %v8443, 1
    %v8445 = vmax.f32 %v8443, %v8444
    %v8446 = vmax.f32 %v8302, %v8303
    %v8447 = vrot.slane %v8446, 4
    %v8448 = vmax.f32 %v8446, %v8447
    %v8449 = vrot.slane %v8448, 2
    %v8450 = vmax.f32 %v8448, %v8449
    %v8451 = vrot.slane %v8450, 1
    %v8452 = vmax.f32 %v8450, %v8451
    %v8453 = vmax.f32 %v8304, %v8305
    %v8454 = vrot.slane %v8453, 4
    %v8455 = vmax.f32 %v8453, %v8454
    %v8456 = vrot.slane %v8455, 2
    %v8457 = vmax.f32 %v8455, %v8456
    %v8458 = vrot.slane %v8457, 1
    %v8459 = vmax.f32 %v8457, %v8458
    %v8460 = vmax.f32 %v8306, %v8307
    %v8461 = vrot.slane %v8460, 4
    %v8462 = vmax.f32 %v8460, %v8461
    %v8463 = vrot.slane %v8462, 2
    %v8464 = vmax.f32 %v8462, %v8463
    %v8465 = vrot.slane %v8464, 1
    %v8466 = vmax.f32 %v8464, %v8465
    %v8467 = vmax.f32 %v8308, %v8309
    %v8468 = vrot.slane %v8467, 4
    %v8469 = vmax.f32 %v8467, %v8468
    %v8470 = vrot.slane %v8469, 2
    %v8471 = vmax.f32 %v8469, %v8470
    %v8472 = vrot.slane %v8471, 1
    %v8473 = vmax.f32 %v8471, %v8472
    %v8474 = vmax.f32 %v8310, %v8311
    %v8475 = vrot.slane %v8474, 4
    %v8476 = vmax.f32 %v8474, %v8475
    %v8477 = vrot.slane %v8476, 2
    %v8478 = vmax.f32 %v8476, %v8477
    %v8479 = vrot.slane %v8478, 1
    %v8480 = vmax.f32 %v8478, %v8479
    %v8481 = vmax.f32 %v8312, %v8313
    %v8482 = vrot.slane %v8481, 4
    %v8483 = vmax.f32 %v8481, %v8482
    %v8484 = vrot.slane %v8483, 2
    %v8485 = vmax.f32 %v8483, %v8484
    %v8486 = vrot.slane %v8485, 1
    %v8487 = vmax.f32 %v8485, %v8486
    %v8488 = vmax.f32 %v8314, %v8315
    %v8489 = vrot.slane %v8488, 4
    %v8490 = vmax.f32 %v8488, %v8489
    %v8491 = vrot.slane %v8490, 2
    %v8492 = vmax.f32 %v8490, %v8491
    %v8493 = vrot.slane %v8492, 1
    %v8494 = vmax.f32 %v8492, %v8493
    %v8495 = vmax.f32 %v8316, %v8317
    %v8496 = vrot.slane %v8495, 4
    %v8497 = vmax.f32 %v8495, %v8496
    %v8498 = vrot.slane %v8497, 2
    %v8499 = vmax.f32 %v8497, %v8498
    %v8500 = vrot.slane %v8499, 1
    %v8501 = vmax.f32 %v8499, %v8500
    %v8502 = vmax.f32 %v8318, %v8319
    %v8503 = vrot.slane %v8502, 4
    %v8504 = vmax.f32 %v8502, %v8503
    %v8505 = vrot.slane %v8504, 2
    %v8506 = vmax.f32 %v8504, %v8505
    %v8507 = vrot.slane %v8506, 1
    %v8508 = vmax.f32 %v8506, %v8507
    %v8509 = vmax.f32 %v8320, %v8321
    %v8510 = vrot.slane %v8509, 4
    %v8511 = vmax.f32 %v8509, %v8510
    %v8512 = vrot.slane %v8511, 2
    %v8513 = vmax.f32 %v8511, %v8512
    %v8514 = vrot.slane %v8513, 1
    %v8515 = vmax.f32 %v8513, %v8514
    %v8516 = vmax.f32 %v8322, %v8323
    %v8517 = vrot.slane %v8516, 4
    %v8518 = vmax.f32 %v8516, %v8517
    %v8519 = vrot.slane %v8518, 2
    %v8520 = vmax.f32 %v8518, %v8519
    %v8521 = vrot.slane %v8520, 1
    %v8522 = vmax.f32 %v8520, %v8521
    %v8523 = vmax.f32 %v8324, %v8325
    %v8524 = vrot.slane %v8523, 4
    %v8525 = vmax.f32 %v8523, %v8524
    %v8526 = vrot.slane %v8525, 2
    %v8527 = vmax.f32 %v8525, %v8526
    %v8528 = vrot.slane %v8527, 1
    %v8529 = vmax.f32 %v8527, %v8528
    %v8530 = vmax.f32 %v8326, %v8327
    %v8531 = vrot.slane %v8530, 4
    %v8532 = vmax.f32 %v8530, %v8531
    %v8533 = vrot.slane %v8532, 2
    %v8534 = vmax.f32 %v8532, %v8533
    %v8535 = vrot.slane %v8534, 1
    %v8536 = vmax.f32 %v8534, %v8535
    %v8537 = vmax.f32 %v8328, %v8329
    %v8538 = vrot.slane %v8537, 4
    %v8539 = vmax.f32 %v8537, %v8538
    %v8540 = vrot.slane %v8539, 2
    %v8541 = vmax.f32 %v8539, %v8540
    %v8542 = vrot.slane %v8541, 1
    %v8543 = vmax.f32 %v8541, %v8542
    %v8544 = vmax.f32 %v8330, %v8331
    %v8545 = vrot.slane %v8544, 4
    %v8546 = vmax.f32 %v8544, %v8545
    %v8547 = vrot.slane %v8546, 2
    %v8548 = vmax.f32 %v8546, %v8547
    %v8549 = vrot.slane %v8548, 1
    %v8550 = vmax.f32 %v8548, %v8549
    %v8551 = vmax.f32 %v8332, %v8333
    %v8552 = vrot.slane %v8551, 4
    %v8553 = vmax.f32 %v8551, %v8552
    %v8554 = vrot.slane %v8553, 2
    %v8555 = vmax.f32 %v8553, %v8554
    %v8556 = vrot.slane %v8555, 1
    %v8557 = vmax.f32 %v8555, %v8556
    %v8558 = vsub.f32 %v8270, %v8340
    %v8559 = vsub.f32 %v8271, %v8340
    %v8560 = vsub.f32 %v8272, %v8347
    %v8561 = vsub.f32 %v8273, %v8347
    %v8562 = vsub.f32 %v8274, %v8354
    %v8563 = vsub.f32 %v8275, %v8354
    %v8564 = vsub.f32 %v8276, %v8361
    %v8565 = vsub.f32 %v8277, %v8361
    %v8566 = vsub.f32 %v8278, %v8368
    %v8567 = vsub.f32 %v8279, %v8368
    %v8568 = vsub.f32 %v8280, %v8375
    %v8569 = vsub.f32 %v8281, %v8375
    %v8570 = vsub.f32 %v8282, %v8382
    %v8571 = vsub.f32 %v8283, %v8382
    %v8572 = vsub.f32 %v8284, %v8389
    %v8573 = vsub.f32 %v8285, %v8389
    %v8574 = vsub.f32 %v8286, %v8396
    %v8575 = vsub.f32 %v8287, %v8396
    %v8576 = vsub.f32 %v8288, %v8403
    %v8577 = vsub.f32 %v8289, %v8403
    %v8578 = vsub.f32 %v8290, %v8410
    %v8579 = vsub.f32 %v8291, %v8410
    %v8580 = vsub.f32 %v8292, %v8417
    %v8581 = vsub.f32 %v8293, %v8417
    %v8582 = vsub.f32 %v8294, %v8424
    %v8583 = vsub.f32 %v8295, %v8424
    %v8584 = vsub.f32 %v8296, %v8431
    %v8585 = vsub.f32 %v8297, %v8431
    %v8586 = vsub.f32 %v8298, %v8438
    %v8587 = vsub.f32 %v8299, %v8438
    %v8588 = vsub.f32 %v8300, %v8445
    %v8589 = vsub.f32 %v8301, %v8445
    %v8590 = vsub.f32 %v8302, %v8452
    %v8591 = vsub.f32 %v8303, %v8452
    %v8592 = vsub.f32 %v8304, %v8459
    %v8593 = vsub.f32 %v8305, %v8459
    %v8594 = vsub.f32 %v8306, %v8466
    %v8595 = vsub.f32 %v8307, %v8466
    %v8596 = vsub.f32 %v8308, %v8473
    %v8597 = vsub.f32 %v8309, %v8473
    %v8598 = vsub.f32 %v8310, %v8480
    %v8599 = vsub.f32 %v8311, %v8480
    %v8600 = vsub.f32 %v8312, %v8487
    %v8601 = vsub.f32 %v8313, %v8487
    %v8602 = vsub.f32 %v8314, %v8494
    %v8603 = vsub.f32 %v8315, %v8494
    %v8604 = vsub.f32 %v8316, %v8501
    %v8605 = vsub.f32 %v8317, %v8501
    %v8606 = vsub.f32 %v8318, %v8508
    %v8607 = vsub.f32 %v8319, %v8508
    %v8608 = vsub.f32 %v8320, %v8515
    %v8609 = vsub.f32 %v8321, %v8515
    %v8610 = vsub.f32 %v8322, %v8522
    %v8611 = vsub.f32 %v8323, %v8522
    %v8612 = vsub.f32 %v8324, %v8529
    %v8613 = vsub.f32 %v8325, %v8529
    %v8614 = vsub.f32 %v8326, %v8536
    %v8615 = vsub.f32 %v8327, %v8536
    %v8616 = vsub.f32 %v8328, %v8543
    %v8617 = vsub.f32 %v8329, %v8543
    %v8618 = vsub.f32 %v8330, %v8550
    %v8619 = vsub.f32 %v8331, %v8550
    %v8620 = vsub.f32 %v8332, %v8557
    %v8621 = vsub.f32 %v8333, %v8557
    %v8622 = vmul.f32 %v8558, 1.442695
    %v8623 = vpow.pop %v8622
    %v8624 = vmul.f32 %v8559, 1.442695
    %v8625 = vpow.pop %v8624
    %v8626 = vmul.f32 %v8560, 1.442695
    %v8627 = vpow.pop %v8626
    %v8628 = vmul.f32 %v8561, 1.442695
    %v8629 = vpow.pop %v8628
    %v8630 = vmul.f32 %v8562, 1.442695
    %v8631 = vpow.pop %v8630
    %v8632 = vmul.f32 %v8563, 1.442695
    %v8633 = vpow.pop %v8632
    %v8634 = vmul.f32 %v8564, 1.442695
    %v8635 = vpow.pop %v8634
    %v8636 = vmul.f32 %v8565, 1.442695
    %v8637 = vpow.pop %v8636
    %v8638 = vmul.f32 %v8566, 1.442695
    %v8639 = vpow.pop %v8638
    %v8640 = vmul.f32 %v8567, 1.442695
    %v8641 = vpow.pop %v8640
    %v8642 = vmul.f32 %v8568, 1.442695
    %v8643 = vpow.pop %v8642
    %v8644 = vmul.f32 %v8569, 1.442695
    %v8645 = vpow.pop %v8644
    %v8646 = vmul.f32 %v8570, 1.442695
    %v8647 = vpow.pop %v8646
    %v8648 = vmul.f32 %v8571, 1.442695
    %v8649 = vpow.pop %v8648
    %v8650 = vmul.f32 %v8572, 1.442695
    %v8651 = vpow.pop %v8650
    %v8652 = vmul.f32 %v8573, 1.442695
    %v8653 = vpow.pop %v8652
    %v8654 = vmul.f32 %v8574, 1.442695
    %v8655 = vpow.pop %v8654
    %v8656 = vmul.f32 %v8575, 1.442695
    %v8657 = vpow.pop %v8656
    %v8658 = vmul.f32 %v8576, 1.442695
    %v8659 = vpow.pop %v8658
    %v8660 = vmul.f32 %v8577, 1.442695
    %v8661 = vpow.pop %v8660
    %v8662 = vmul.f32 %v8578, 1.442695
    %v8663 = vpow.pop %v8662
    %v8664 = vmul.f32 %v8579, 1.442695
    %v8665 = vpow.pop %v8664
    %v8666 = vmul.f32 %v8580, 1.442695
    %v8667 = vpow.pop %v8666
    %v8668 = vmul.f32 %v8581, 1.442695
    %v8669 = vpow.pop %v8668
    %v8670 = vmul.f32 %v8582, 1.442695
    %v8671 = vpow.pop %v8670
    %v8672 = vmul.f32 %v8583, 1.442695
    %v8673 = vpow.pop %v8672
    %v8674 = vmul.f32 %v8584, 1.442695
    %v8675 = vpow.pop %v8674
    %v8676 = vmul.f32 %v8585, 1.442695
    %v8677 = vpow.pop %v8676
    %v8678 = vmul.f32 %v8586, 1.442695
    %v8679 = vpow.pop %v8678
    %v8680 = vmul.f32 %v8587, 1.442695
    %v8681 = vpow.pop %v8680
    %v8682 = vmul.f32 %v8588, 1.442695
    %v8683 = vpow.pop %v8682
    %v8684 = vmul.f32 %v8589, 1.442695
    %v8685 = vpow.pop %v8684
    %v8686 = vmul.f32 %v8590, 1.442695
    %v8687 = vpow.pop %v8686
    %v8688 = vmul.f32 %v8591, 1.442695
    %v8689 = vpow.pop %v8688
    %v8690 = vmul.f32 %v8592, 1.442695
    %v8691 = vpow.pop %v8690
    %v8692 = vmul.f32 %v8593, 1.442695
    %v8693 = vpow.pop %v8692
    %v8694 = vmul.f32 %v8594, 1.442695
    %v8695 = vpow.pop %v8694
    %v8696 = vmul.f32 %v8595, 1.442695
    %v8697 = vpow.pop %v8696
    %v8698 = vmul.f32 %v8596, 1.442695
    %v8699 = vpow.pop %v8698
    %v8700 = vmul.f32 %v8597, 1.442695
    %v8701 = vpow.pop %v8700
    %v8702 = vmul.f32 %v8598, 1.442695
    %v8703 = vpow.pop %v8702
    %v8704 = vmul.f32 %v8599, 1.442695
    %v8705 = vpow.pop %v8704
    %v8706 = vmul.f32 %v8600, 1.442695
    %v8707 = vpow.pop %v8706
    %v8708 = vmul.f32 %v8601, 1.442695
    %v8709 = vpow.pop %v8708
    %v8710 = vmul.f32 %v8602, 1.442695
    %v8711 = vpow.pop %v8710
    %v8712 = vmul.f32 %v8603, 1.442695
    %v8713 = vpow.pop %v8712
    %v8714 = vmul.f32 %v8604, 1.442695
    %v8715 = vpow.pop %v8714
    %v8716 = vmul.f32 %v8605, 1.442695
    %v8717 = vpow.pop %v8716
    %v8718 = vmul.f32 %v8606, 1.442695
    %v8719 = vpow.pop %v8718
    %v8720 = vmul.f32 %v8607, 1.442695
    %v8721 = vpow.pop %v8720
    %v8722 = vmul.f32 %v8608, 1.442695
    %v8723 = vpow.pop %v8722
    %v8724 = vmul.f32 %v8609, 1.442695
    %v8725 = vpow.pop %v8724
    %v8726 = vmul.f32 %v8610, 1.442695
    %v8727 = vpow.pop %v8726
    %v8728 = vmul.f32 %v8611, 1.442695
    %v8729 = vpow.pop %v8728
    %v8730 = vmul.f32 %v8612, 1.442695
    %v8731 = vpow.pop %v8730
    %v8732 = vmul.f32 %v8613, 1.442695
    %v8733 = vpow.pop %v8732
    %v8734 = vmul.f32 %v8614, 1.442695
    %v8735 = vpow.pop %v8734
    %v8736 = vmul.f32 %v8615, 1.442695
    %v8737 = vpow.pop %v8736
    %v8738 = vmul.f32 %v8616, 1.442695
    %v8739 = vpow.pop %v8738
    %v8740 = vmul.f32 %v8617, 1.442695
    %v8741 = vpow.pop %v8740
    %v8742 = vmul.f32 %v8618, 1.442695
    %v8743 = vpow.pop %v8742
    %v8744 = vmul.f32 %v8619, 1.442695
    %v8745 = vpow.pop %v8744
    %v8746 = vmul.f32 %v8620, 1.442695
    %v8747 = vpow.pop %v8746
    %v8748 = vmul.f32 %v8621, 1.442695
    %v8749 = vpow.pop %v8748
    %v8750 = vadd.f32 %v8623, %v8625
    %v8751 = vrot.slane %v8750, 4
    %v8752 = vadd.f32 %v8750, %v8751
    %v8753 = vrot.slane %v8752, 2
    %v8754 = vadd.f32 %v8752, %v8753
    %v8755 = vrot.slane %v8754, 1
    %v8756 = vadd.f32 %v8754, %v8755
    %v8757 = vadd.f32 %v8627, %v8629
    %v8758 = vrot.slane %v8757, 4
    %v8759 = vadd.f32 %v8757, %v8758
    %v8760 = vrot.slane %v8759, 2
    %v8761 = vadd.f32 %v8759, %v8760
    %v8762 = vrot.slane %v8761, 1
    %v8763 = vadd.f32 %v8761, %v8762
    %v8764 = vadd.f32 %v8631, %v8633
    %v8765 = vrot.slane %v8764, 4
    %v8766 = vadd.f32 %v8764, %v8765
    %v8767 = vrot.slane %v8766, 2
    %v8768 = vadd.f32 %v8766, %v8767
    %v8769 = vrot.slane %v8768, 1
    %v8770 = vadd.f32 %v8768, %v8769
    %v8771 = vadd.f32 %v8635, %v8637
    %v8772 = vrot.slane %v8771, 4
    %v8773 = vadd.f32 %v8771, %v8772
    %v8774 = vrot.slane %v8773, 2
    %v8775 = vadd.f32 %v8773, %v8774
    %v8776 = vrot.slane %v8775, 1
    %v8777 = vadd.f32 %v8775, %v8776
    %v8778 = vadd.f32 %v8639, %v8641
    %v8779 = vrot.slane %v8778, 4
    %v8780 = vadd.f32 %v8778, %v8779
    %v8781 = vrot.slane %v8780, 2
    %v8782 = vadd.f32 %v8780, %v8781
    %v8783 = vrot.slane %v8782, 1
    %v8784 = vadd.f32 %v8782, %v8783
    %v8785 = vadd.f32 %v8643, %v8645
    %v8786 = vrot.slane %v8785, 4
    %v8787 = vadd.f32 %v8785, %v8786
    %v8788 = vrot.slane %v8787, 2
    %v8789 = vadd.f32 %v8787, %v8788
    %v8790 = vrot.slane %v8789, 1
    %v8791 = vadd.f32 %v8789, %v8790
    %v8792 = vadd.f32 %v8647, %v8649
    %v8793 = vrot.slane %v8792, 4
    %v8794 = vadd.f32 %v8792, %v8793
    %v8795 = vrot.slane %v8794, 2
    %v8796 = vadd.f32 %v8794, %v8795
    %v8797 = vrot.slane %v8796, 1
    %v8798 = vadd.f32 %v8796, %v8797
    %v8799 = vadd.f32 %v8651, %v8653
    %v8800 = vrot.slane %v8799, 4
    %v8801 = vadd.f32 %v8799, %v8800
    %v8802 = vrot.slane %v8801, 2
    %v8803 = vadd.f32 %v8801, %v8802
    %v8804 = vrot.slane %v8803, 1
    %v8805 = vadd.f32 %v8803, %v8804
    %v8806 = vadd.f32 %v8655, %v8657
    %v8807 = vrot.slane %v8806, 4
    %v8808 = vadd.f32 %v8806, %v8807
    %v8809 = vrot.slane %v8808, 2
    %v8810 = vadd.f32 %v8808, %v8809
    %v8811 = vrot.slane %v8810, 1
    %v8812 = vadd.f32 %v8810, %v8811
    %v8813 = vadd.f32 %v8659, %v8661
    %v8814 = vrot.slane %v8813, 4
    %v8815 = vadd.f32 %v8813, %v8814
    %v8816 = vrot.slane %v8815, 2
    %v8817 = vadd.f32 %v8815, %v8816
    %v8818 = vrot.slane %v8817, 1
    %v8819 = vadd.f32 %v8817, %v8818
    %v8820 = vadd.f32 %v8663, %v8665
    %v8821 = vrot.slane %v8820, 4
    %v8822 = vadd.f32 %v8820, %v8821
    %v8823 = vrot.slane %v8822, 2
    %v8824 = vadd.f32 %v8822, %v8823
    %v8825 = vrot.slane %v8824, 1
    %v8826 = vadd.f32 %v8824, %v8825
    %v8827 = vadd.f32 %v8667, %v8669
    %v8828 = vrot.slane %v8827, 4
    %v8829 = vadd.f32 %v8827, %v8828
    %v8830 = vrot.slane %v8829, 2
    %v8831 = vadd.f32 %v8829, %v8830
    %v8832 = vrot.slane %v8831, 1
    %v8833 = vadd.f32 %v8831, %v8832
    %v8834 = vadd.f32 %v8671, %v8673
    %v8835 = vrot.slane %v8834, 4
    %v8836 = vadd.f32 %v8834, %v8835
    %v8837 = vrot.slane %v8836, 2
    %v8838 = vadd.f32 %v8836, %v8837
    %v8839 = vrot.slane %v8838, 1
    %v8840 = vadd.f32 %v8838, %v8839
    %v8841 = vadd.f32 %v8675, %v8677
    %v8842 = vrot.slane %v8841, 4
    %v8843 = vadd.f32 %v8841, %v8842
    %v8844 = vrot.slane %v8843, 2
    %v8845 = vadd.f32 %v8843, %v8844
    %v8846 = vrot.slane %v8845, 1
    %v8847 = vadd.f32 %v8845, %v8846
    %v8848 = vadd.f32 %v8679, %v8681
    %v8849 = vrot.slane %v8848, 4
    %v8850 = vadd.f32 %v8848, %v8849
    %v8851 = vrot.slane %v8850, 2
    %v8852 = vadd.f32 %v8850, %v8851
    %v8853 = vrot.slane %v8852, 1
    %v8854 = vadd.f32 %v8852, %v8853
    %v8855 = vadd.f32 %v8683, %v8685
    %v8856 = vrot.slane %v8855, 4
    %v8857 = vadd.f32 %v8855, %v8856
    %v8858 = vrot.slane %v8857, 2
    %v8859 = vadd.f32 %v8857, %v8858
    %v8860 = vrot.slane %v8859, 1
    %v8861 = vadd.f32 %v8859, %v8860
    %v8862 = vadd.f32 %v8687, %v8689
    %v8863 = vrot.slane %v8862, 4
    %v8864 = vadd.f32 %v8862, %v8863
    %v8865 = vrot.slane %v8864, 2
    %v8866 = vadd.f32 %v8864, %v8865
    %v8867 = vrot.slane %v8866, 1
    %v8868 = vadd.f32 %v8866, %v8867
    %v8869 = vadd.f32 %v8691, %v8693
    %v8870 = vrot.slane %v8869, 4
    %v8871 = vadd.f32 %v8869, %v8870
    %v8872 = vrot.slane %v8871, 2
    %v8873 = vadd.f32 %v8871, %v8872
    %v8874 = vrot.slane %v8873, 1
    %v8875 = vadd.f32 %v8873, %v8874
    %v8876 = vadd.f32 %v8695, %v8697
    %v8877 = vrot.slane %v8876, 4
    %v8878 = vadd.f32 %v8876, %v8877
    %v8879 = vrot.slane %v8878, 2
    %v8880 = vadd.f32 %v8878, %v8879
    %v8881 = vrot.slane %v8880, 1
    %v8882 = vadd.f32 %v8880, %v8881
    %v8883 = vadd.f32 %v8699, %v8701
    %v8884 = vrot.slane %v8883, 4
    %v8885 = vadd.f32 %v8883, %v8884
    %v8886 = vrot.slane %v8885, 2
    %v8887 = vadd.f32 %v8885, %v8886
    %v8888 = vrot.slane %v8887, 1
    %v8889 = vadd.f32 %v8887, %v8888
    %v8890 = vadd.f32 %v8703, %v8705
    %v8891 = vrot.slane %v8890, 4
    %v8892 = vadd.f32 %v8890, %v8891
    %v8893 = vrot.slane %v8892, 2
    %v8894 = vadd.f32 %v8892, %v8893
    %v8895 = vrot.slane %v8894, 1
    %v8896 = vadd.f32 %v8894, %v8895
    %v8897 = vadd.f32 %v8707, %v8709
    %v8898 = vrot.slane %v8897, 4
    %v8899 = vadd.f32 %v8897, %v8898
    %v8900 = vrot.slane %v8899, 2
    %v8901 = vadd.f32 %v8899, %v8900
    %v8902 = vrot.slane %v8901, 1
    %v8903 = vadd.f32 %v8901, %v8902
    %v8904 = vadd.f32 %v8711, %v8713
    %v8905 = vrot.slane %v8904, 4
    %v8906 = vadd.f32 %v8904, %v8905
    %v8907 = vrot.slane %v8906, 2
    %v8908 = vadd.f32 %v8906, %v8907
    %v8909 = vrot.slane %v8908, 1
    %v8910 = vadd.f32 %v8908, %v8909
    %v8911 = vadd.f32 %v8715, %v8717
    %v8912 = vrot.slane %v8911, 4
    %v8913 = vadd.f32 %v8911, %v8912
    %v8914 = vrot.slane %v8913, 2
    %v8915 = vadd.f32 %v8913, %v8914
    %v8916 = vrot.slane %v8915, 1
    %v8917 = vadd.f32 %v8915, %v8916
    %v8918 = vadd.f32 %v8719, %v8721
    %v8919 = vrot.slane %v8918, 4
    %v8920 = vadd.f32 %v8918, %v8919
    %v8921 = vrot.slane %v8920, 2
    %v8922 = vadd.f32 %v8920, %v8921
    %v8923 = vrot.slane %v8922, 1
    %v8924 = vadd.f32 %v8922, %v8923
    %v8925 = vadd.f32 %v8723, %v8725
    %v8926 = vrot.slane %v8925, 4
    %v8927 = vadd.f32 %v8925, %v8926
    %v8928 = vrot.slane %v8927, 2
    %v8929 = vadd.f32 %v8927, %v8928
    %v8930 = vrot.slane %v8929, 1
    %v8931 = vadd.f32 %v8929, %v8930
    %v8932 = vadd.f32 %v8727, %v8729
    %v8933 = vrot.slane %v8932, 4
    %v8934 = vadd.f32 %v8932, %v8933
    %v8935 = vrot.slane %v8934, 2
    %v8936 = vadd.f32 %v8934, %v8935
    %v8937 = vrot.slane %v8936, 1
    %v8938 = vadd.f32 %v8936, %v8937
    %v8939 = vadd.f32 %v8731, %v8733
    %v8940 = vrot.slane %v8939, 4
    %v8941 = vadd.f32 %v8939, %v8940
    %v8942 = vrot.slane %v8941, 2
    %v8943 = vadd.f32 %v8941, %v8942
    %v8944 = vrot.slane %v8943, 1
    %v8945 = vadd.f32 %v8943, %v8944
    %v8946 = vadd.f32 %v8735, %v8737
    %v8947 = vrot.slane %v8946, 4
    %v8948 = vadd.f32 %v8946, %v8947
    %v8949 = vrot.slane %v8948, 2
    %v8950 = vadd.f32 %v8948, %v8949
    %v8951 = vrot.slane %v8950, 1
    %v8952 = vadd.f32 %v8950, %v8951
    %v8953 = vadd.f32 %v8739, %v8741
    %v8954 = vrot.slane %v8953, 4
    %v8955 = vadd.f32 %v8953, %v8954
    %v8956 = vrot.slane %v8955, 2
    %v8957 = vadd.f32 %v8955, %v8956
    %v8958 = vrot.slane %v8957, 1
    %v8959 = vadd.f32 %v8957, %v8958
    %v8960 = vadd.f32 %v8743, %v8745
    %v8961 = vrot.slane %v8960, 4
    %v8962 = vadd.f32 %v8960, %v8961
    %v8963 = vrot.slane %v8962, 2
    %v8964 = vadd.f32 %v8962, %v8963
    %v8965 = vrot.slane %v8964, 1
    %v8966 = vadd.f32 %v8964, %v8965
    %v8967 = vadd.f32 %v8747, %v8749
    %v8968 = vrot.slane %v8967, 4
    %v8969 = vadd.f32 %v8967, %v8968
    %v8970 = vrot.slane %v8969, 2
    %v8971 = vadd.f32 %v8969, %v8970
    %v8972 = vrot.slane %v8971, 1
    %v8973 = vadd.f32 %v8971, %v8972
    %v8974 = vmax.f32 %v8756, 1e-20
    %v8975 = vmax.f32 %v8763, 1e-20
    %v8976 = vmax.f32 %v8770, 1e-20
    %v8977 = vmax.f32 %v8777, 1e-20
    %v8978 = vmax.f32 %v8784, 1e-20
    %v8979 = vmax.f32 %v8791, 1e-20
    %v8980 = vmax.f32 %v8798, 1e-20
    %v8981 = vmax.f32 %v8805, 1e-20
    %v8982 = vmax.f32 %v8812, 1e-20
    %v8983 = vmax.f32 %v8819, 1e-20
    %v8984 = vmax.f32 %v8826, 1e-20
    %v8985 = vmax.f32 %v8833, 1e-20
    %v8986 = vmax.f32 %v8840, 1e-20
    %v8987 = vmax.f32 %v8847, 1e-20
    %v8988 = vmax.f32 %v8854, 1e-20
    %v8989 = vmax.f32 %v8861, 1e-20
    %v8990 = vmax.f32 %v8868, 1e-20
    %v8991 = vmax.f32 %v8875, 1e-20
    %v8992 = vmax.f32 %v8882, 1e-20
    %v8993 = vmax.f32 %v8889, 1e-20
    %v8994 = vmax.f32 %v8896, 1e-20
    %v8995 = vmax.f32 %v8903, 1e-20
    %v8996 = vmax.f32 %v8910, 1e-20
    %v8997 = vmax.f32 %v8917, 1e-20
    %v8998 = vmax.f32 %v8924, 1e-20
    %v8999 = vmax.f32 %v8931, 1e-20
    %v9000 = vmax.f32 %v8938, 1e-20
    %v9001 = vmax.f32 %v8945, 1e-20
    %v9002 = vmax.f32 %v8952, 1e-20
    %v9003 = vmax.f32 %v8959, 1e-20
    %v9004 = vmax.f32 %v8966, 1e-20
    %v9005 = vmax.f32 %v8973, 1e-20
    %v9006 = vrcp.pop %v8974
    %v9007 = vrcp.pop %v8975
    %v9008 = vrcp.pop %v8976
    %v9009 = vrcp.pop %v8977
    %v9010 = vrcp.pop %v8978
    %v9011 = vrcp.pop %v8979
    %v9012 = vrcp.pop %v8980
    %v9013 = vrcp.pop %v8981
    %v9014 = vrcp.pop %v8982
    %v9015 = vrcp.pop %v8983
    %v9016 = vrcp.pop %v8984
    %v9017 = vrcp.pop %v8985
    %v9018 = vrcp.pop %v8986
    %v9019 = vrcp.pop %v8987
    %v9020 = vrcp.pop %v8988
    %v9021 = vrcp.pop %v8989
    %v9022 = vrcp.pop %v8990
    %v9023 = vrcp.pop %v8991
    %v9024 = vrcp.pop %v8992
    %v9025 = vrcp.pop %v8993
    %v9026 = vrcp.pop %v8994
    %v9027 = vrcp.pop %v8995
    %v9028 = vrcp.pop %v8996
    %v9029 = vrcp.pop %v8997
    %v9030 = vrcp.pop %v8998
    %v9031 = vrcp.pop %v8999
    %v9032 = vrcp.pop %v9000
    %v9033 = vrcp.pop %v9001
    %v9034 = vrcp.pop %v9002
    %v9035 = vrcp.pop %v9003
    %v9036 = vrcp.pop %v9004
    %v9037 = vrcp.pop %v9005
    %v9038 = vmul.f32 %v8623, %v9006
    %v9039 = vmul.f32 %v8625, %v9006
    %v9040 = vmul.f32 %v8627, %v9007
    %v9041 = vmul.f32 %v8629, %v9007
    %v9042 = vmul.f32 %v8631, %v9008
    %v9043 = vmul.f32 %v8633, %v9008
    %v9044 = vmul.f32 %v8635, %v9009
    %v9045 = vmul.f32 %v8637, %v9009
    %v9046 = vmul.f32 %v8639, %v9010
    %v9047 = vmul.f32 %v8641, %v9010
    %v9048 = vmul.f32 %v8643, %v9011
    %v9049 = vmul.f32 %v8645, %v9011
    %v9050 = vmul.f32 %v8647, %v9012
    %v9051 = vmul.f32 %v8649, %v9012
    %v9052 = vmul.f32 %v8651, %v9013
    %v9053 = vmul.f32 %v8653, %v9013
    %v9054 = vmul.f32 %v8655, %v9014
    %v9055 = vmul.f32 %v8657, %v9014
    %v9056 = vmul.f32 %v8659, %v9015
    %v9057 = vmul.f32 %v8661, %v9015
    %v9058 = vmul.f32 %v8663, %v9016
    %v9059 = vmul.f32 %v8665, %v9016
    %v9060 = vmul.f32 %v8667, %v9017
    %v9061 = vmul.f32 %v8669, %v9017
    %v9062 = vmul.f32 %v8671, %v9018
    %v9063 = vmul.f32 %v8673, %v9018
    %v9064 = vmul.f32 %v8675, %v9019
    %v9065 = vmul.f32 %v8677, %v9019
    %v9066 = vmul.f32 %v8679, %v9020
    %v9067 = vmul.f32 %v8681, %v9020
    %v9068 = vmul.f32 %v8683, %v9021
    %v9069 = vmul.f32 %v8685, %v9021
    %v9070 = vmul.f32 %v8687, %v9022
    %v9071 = vmul.f32 %v8689, %v9022
    %v9072 = vmul.f32 %v8691, %v9023
    %v9073 = vmul.f32 %v8693, %v9023
    %v9074 = vmul.f32 %v8695, %v9024
    %v9075 = vmul.f32 %v8697, %v9024
    %v9076 = vmul.f32 %v8699, %v9025
    %v9077 = vmul.f32 %v8701, %v9025
    %v9078 = vmul.f32 %v8703, %v9026
    %v9079 = vmul.f32 %v8705, %v9026
    %v9080 = vmul.f32 %v8707, %v9027
    %v9081 = vmul.f32 %v8709, %v9027
    %v9082 = vmul.f32 %v8711, %v9028
    %v9083 = vmul.f32 %v8713, %v9028
    %v9084 = vmul.f32 %v8715, %v9029
    %v9085 = vmul.f32 %v8717, %v9029
    %v9086 = vmul.f32 %v8719, %v9030
    %v9087 = vmul.f32 %v8721, %v9030
    %v9088 = vmul.f32 %v8723, %v9031
    %v9089 = vmul.f32 %v8725, %v9031
    %v9090 = vmul.f32 %v8727, %v9032
    %v9091 = vmul.f32 %v8729, %v9032
    %v9092 = vmul.f32 %v8731, %v9033
    %v9093 = vmul.f32 %v8733, %v9033
    %v9094 = vmul.f32 %v8735, %v9034
    %v9095 = vmul.f32 %v8737, %v9034
    %v9096 = vmul.f32 %v8739, %v9035
    %v9097 = vmul.f32 %v8741, %v9035
    %v9098 = vmul.f32 %v8743, %v9036
    %v9099 = vmul.f32 %v8745, %v9036
    %v9100 = vmul.f32 %v8747, %v9037
    %v9101 = vmul.f32 %v8749, %v9037
    %v9102 = vmul.f32 %v9038, %v7552
    %v9103 = vmul.f32 %v9039, %v7553
    %v9104 = vmul.f32 %v9040, %v7552
    %v9105 = vmul.f32 %v9041, %v7553
    %v9106 = vmul.f32 %v9042, %v7552
    %v9107 = vmul.f32 %v9043, %v7553
    %v9108 = vmul.f32 %v9044, %v7552
    %v9109 = vmul.f32 %v9045, %v7553
    %v9110 = vmul.f32 %v9046, %v7552
    %v9111 = vmul.f32 %v9047, %v7553
    %v9112 = vmul.f32 %v9048, %v7552
    %v9113 = vmul.f32 %v9049, %v7553
    %v9114 = vmul.f32 %v9050, %v7552
    %v9115 = vmul.f32 %v9051, %v7553
    %v9116 = vmul.f32 %v9052, %v7552
    %v9117 = vmul.f32 %v9053, %v7553
    %v9118 = vmul.f32 %v9054, %v7552
    %v9119 = vmul.f32 %v9055, %v7553
    %v9120 = vmul.f32 %v9056, %v7552
    %v9121 = vmul.f32 %v9057, %v7553
    %v9122 = vmul.f32 %v9058, %v7552
    %v9123 = vmul.f32 %v9059, %v7553
    %v9124 = vmul.f32 %v9060, %v7552
    %v9125 = vmul.f32 %v9061, %v7553
    %v9126 = vmul.f32 %v9062, %v7552
    %v9127 = vmul.f32 %v9063, %v7553
    %v9128 = vmul.f32 %v9064, %v7552
    %v9129 = vmul.f32 %v9065, %v7553
    %v9130 = vmul.f32 %v9066, %v7552
    %v9131 = vmul.f32 %v9067, %v7553
    %v9132 = vmul.f32 %v9068, %v7552
    %v9133 = vmul.f32 %v9069, %v7553
    %v9134 = vmul.f32 %v9070, %v7554
    %v9135 = vmul.f32 %v9071, %v7555
    %v9136 = vmul.f32 %v9072, %v7554
    %v9137 = vmul.f32 %v9073, %v7555
    %v9138 = vmul.f32 %v9074, %v7554
    %v9139 = vmul.f32 %v9075, %v7555
    %v9140 = vmul.f32 %v9076, %v7554
    %v9141 = vmul.f32 %v9077, %v7555
    %v9142 = vmul.f32 %v9078, %v7554
    %v9143 = vmul.f32 %v9079, %v7555
    %v9144 = vmul.f32 %v9080, %v7554
    %v9145 = vmul.f32 %v9081, %v7555
    %v9146 = vmul.f32 %v9082, %v7554
    %v9147 = vmul.f32 %v9083, %v7555
    %v9148 = vmul.f32 %v9084, %v7554
    %v9149 = vmul.f32 %v9085, %v7555
    %v9150 = vmul.f32 %v9086, %v7554
    %v9151 = vmul.f32 %v9087, %v7555
    %v9152 = vmul.f32 %v9088, %v7554
    %v9153 = vmul.f32 %v9089, %v7555
    %v9154 = vmul.f32 %v9090, %v7554
    %v9155 = vmul.f32 %v9091, %v7555
    %v9156 = vmul.f32 %v9092, %v7554
    %v9157 = vmul.f32 %v9093, %v7555
    %v9158 = vmul.f32 %v9094, %v7554
    %v9159 = vmul.f32 %v9095, %v7555
    %v9160 = vmul.f32 %v9096, %v7554
    %v9161 = vmul.f32 %v9097, %v7555
    %v9162 = vmul.f32 %v9098, %v7554
    %v9163 = vmul.f32 %v9099, %v7555
    %v9164 = vmul.f32 %v9100, %v7554
    %v9165 = vmul.f32 %v9101, %v7555
    %v9166 = vadd.f32 %v9102, %v9103
    %v9167 = vrot.slane %v9166, 4
    %v9168 = vadd.f32 %v9166, %v9167
    %v9169 = vrot.slane %v9168, 2
    %v9170 = vadd.f32 %v9168, %v9169
    %v9171 = vrot.slane %v9170, 1
    %v9172 = vadd.f32 %v9170, %v9171
    %v9173 = vadd.f32 %v9104, %v9105
    %v9174 = vrot.slane %v9173, 4
    %v9175 = vadd.f32 %v9173, %v9174
    %v9176 = vrot.slane %v9175, 2
    %v9177 = vadd.f32 %v9175, %v9176
    %v9178 = vrot.slane %v9177, 1
    %v9179 = vadd.f32 %v9177, %v9178
    %v9180 = vadd.f32 %v9106, %v9107
    %v9181 = vrot.slane %v9180, 4
    %v9182 = vadd.f32 %v9180, %v9181
    %v9183 = vrot.slane %v9182, 2
    %v9184 = vadd.f32 %v9182, %v9183
    %v9185 = vrot.slane %v9184, 1
    %v9186 = vadd.f32 %v9184, %v9185
    %v9187 = vadd.f32 %v9108, %v9109
    %v9188 = vrot.slane %v9187, 4
    %v9189 = vadd.f32 %v9187, %v9188
    %v9190 = vrot.slane %v9189, 2
    %v9191 = vadd.f32 %v9189, %v9190
    %v9192 = vrot.slane %v9191, 1
    %v9193 = vadd.f32 %v9191, %v9192
    %v9194 = vadd.f32 %v9110, %v9111
    %v9195 = vrot.slane %v9194, 4
    %v9196 = vadd.f32 %v9194, %v9195
    %v9197 = vrot.slane %v9196, 2
    %v9198 = vadd.f32 %v9196, %v9197
    %v9199 = vrot.slane %v9198, 1
    %v9200 = vadd.f32 %v9198, %v9199
    %v9201 = vadd.f32 %v9112, %v9113
    %v9202 = vrot.slane %v9201, 4
    %v9203 = vadd.f32 %v9201, %v9202
    %v9204 = vrot.slane %v9203, 2
    %v9205 = vadd.f32 %v9203, %v9204
    %v9206 = vrot.slane %v9205, 1
    %v9207 = vadd.f32 %v9205, %v9206
    %v9208 = vadd.f32 %v9114, %v9115
    %v9209 = vrot.slane %v9208, 4
    %v9210 = vadd.f32 %v9208, %v9209
    %v9211 = vrot.slane %v9210, 2
    %v9212 = vadd.f32 %v9210, %v9211
    %v9213 = vrot.slane %v9212, 1
    %v9214 = vadd.f32 %v9212, %v9213
    %v9215 = vadd.f32 %v9116, %v9117
    %v9216 = vrot.slane %v9215, 4
    %v9217 = vadd.f32 %v9215, %v9216
    %v9218 = vrot.slane %v9217, 2
    %v9219 = vadd.f32 %v9217, %v9218
    %v9220 = vrot.slane %v9219, 1
    %v9221 = vadd.f32 %v9219, %v9220
    %v9222 = vadd.f32 %v9118, %v9119
    %v9223 = vrot.slane %v9222, 4
    %v9224 = vadd.f32 %v9222, %v9223
    %v9225 = vrot.slane %v9224, 2
    %v9226 = vadd.f32 %v9224, %v9225
    %v9227 = vrot.slane %v9226, 1
    %v9228 = vadd.f32 %v9226, %v9227
    %v9229 = vadd.f32 %v9120, %v9121
    %v9230 = vrot.slane %v9229, 4
    %v9231 = vadd.f32 %v9229, %v9230
    %v9232 = vrot.slane %v9231, 2
    %v9233 = vadd.f32 %v9231, %v9232
    %v9234 = vrot.slane %v9233, 1
    %v9235 = vadd.f32 %v9233, %v9234
    %v9236 = vadd.f32 %v9122, %v9123
    %v9237 = vrot.slane %v9236, 4
    %v9238 = vadd.f32 %v9236, %v9237
    %v9239 = vrot.slane %v9238, 2
    %v9240 = vadd.f32 %v9238, %v9239
    %v9241 = vrot.slane %v9240, 1
    %v9242 = vadd.f32 %v9240, %v9241
    %v9243 = vadd.f32 %v9124, %v9125
    %v9244 = vrot.slane %v9243, 4
    %v9245 = vadd.f32 %v9243, %v9244
    %v9246 = vrot.slane %v9245, 2
    %v9247 = vadd.f32 %v9245, %v9246
    %v9248 = vrot.slane %v9247, 1
    %v9249 = vadd.f32 %v9247, %v9248
    %v9250 = vadd.f32 %v9126, %v9127
    %v9251 = vrot.slane %v9250, 4
    %v9252 = vadd.f32 %v9250, %v9251
    %v9253 = vrot.slane %v9252, 2
    %v9254 = vadd.f32 %v9252, %v9253
    %v9255 = vrot.slane %v9254, 1
    %v9256 = vadd.f32 %v9254, %v9255
    %v9257 = vadd.f32 %v9128, %v9129
    %v9258 = vrot.slane %v9257, 4
    %v9259 = vadd.f32 %v9257, %v9258
    %v9260 = vrot.slane %v9259, 2
    %v9261 = vadd.f32 %v9259, %v9260
    %v9262 = vrot.slane %v9261, 1
    %v9263 = vadd.f32 %v9261, %v9262
    %v9264 = vadd.f32 %v9130, %v9131
    %v9265 = vrot.slane %v9264, 4
    %v9266 = vadd.f32 %v9264, %v9265
    %v9267 = vrot.slane %v9266, 2
    %v9268 = vadd.f32 %v9266, %v9267
    %v9269 = vrot.slane %v9268, 1
    %v9270 = vadd.f32 %v9268, %v9269
    %v9271 = vadd.f32 %v9132, %v9133
    %v9272 = vrot.slane %v9271, 4
    %v9273 = vadd.f32 %v9271, %v9272
    %v9274 = vrot.slane %v9273, 2
    %v9275 = vadd.f32 %v9273, %v9274
    %v9276 = vrot.slane %v9275, 1
    %v9277 = vadd.f32 %v9275, %v9276
    %v9278 = vadd.f32 %v9134, %v9135
    %v9279 = vrot.slane %v9278, 4
    %v9280 = vadd.f32 %v9278, %v9279
    %v9281 = vrot.slane %v9280, 2
    %v9282 = vadd.f32 %v9280, %v9281
    %v9283 = vrot.slane %v9282, 1
    %v9284 = vadd.f32 %v9282, %v9283
    %v9285 = vadd.f32 %v9136, %v9137
    %v9286 = vrot.slane %v9285, 4
    %v9287 = vadd.f32 %v9285, %v9286
    %v9288 = vrot.slane %v9287, 2
    %v9289 = vadd.f32 %v9287, %v9288
    %v9290 = vrot.slane %v9289, 1
    %v9291 = vadd.f32 %v9289, %v9290
    %v9292 = vadd.f32 %v9138, %v9139
    %v9293 = vrot.slane %v9292, 4
    %v9294 = vadd.f32 %v9292, %v9293
    %v9295 = vrot.slane %v9294, 2
    %v9296 = vadd.f32 %v9294, %v9295
    %v9297 = vrot.slane %v9296, 1
    %v9298 = vadd.f32 %v9296, %v9297
    %v9299 = vadd.f32 %v9140, %v9141
    %v9300 = vrot.slane %v9299, 4
    %v9301 = vadd.f32 %v9299, %v9300
    %v9302 = vrot.slane %v9301, 2
    %v9303 = vadd.f32 %v9301, %v9302
    %v9304 = vrot.slane %v9303, 1
    %v9305 = vadd.f32 %v9303, %v9304
    %v9306 = vadd.f32 %v9142, %v9143
    %v9307 = vrot.slane %v9306, 4
    %v9308 = vadd.f32 %v9306, %v9307
    %v9309 = vrot.slane %v9308, 2
    %v9310 = vadd.f32 %v9308, %v9309
    %v9311 = vrot.slane %v9310, 1
    %v9312 = vadd.f32 %v9310, %v9311
    %v9313 = vadd.f32 %v9144, %v9145
    %v9314 = vrot.slane %v9313, 4
    %v9315 = vadd.f32 %v9313, %v9314
    %v9316 = vrot.slane %v9315, 2
    %v9317 = vadd.f32 %v9315, %v9316
    %v9318 = vrot.slane %v9317, 1
    %v9319 = vadd.f32 %v9317, %v9318
    %v9320 = vadd.f32 %v9146, %v9147
    %v9321 = vrot.slane %v9320, 4
    %v9322 = vadd.f32 %v9320, %v9321
    %v9323 = vrot.slane %v9322, 2
    %v9324 = vadd.f32 %v9322, %v9323
    %v9325 = vrot.slane %v9324, 1
    %v9326 = vadd.f32 %v9324, %v9325
    %v9327 = vadd.f32 %v9148, %v9149
    %v9328 = vrot.slane %v9327, 4
    %v9329 = vadd.f32 %v9327, %v9328
    %v9330 = vrot.slane %v9329, 2
    %v9331 = vadd.f32 %v9329, %v9330
    %v9332 = vrot.slane %v9331, 1
    %v9333 = vadd.f32 %v9331, %v9332
    %v9334 = vadd.f32 %v9150, %v9151
    %v9335 = vrot.slane %v9334, 4
    %v9336 = vadd.f32 %v9334, %v9335
    %v9337 = vrot.slane %v9336, 2
    %v9338 = vadd.f32 %v9336, %v9337
    %v9339 = vrot.slane %v9338, 1
    %v9340 = vadd.f32 %v9338, %v9339
    %v9341 = vadd.f32 %v9152, %v9153
    %v9342 = vrot.slane %v9341, 4
    %v9343 = vadd.f32 %v9341, %v9342
    %v9344 = vrot.slane %v9343, 2
    %v9345 = vadd.f32 %v9343, %v9344
    %v9346 = vrot.slane %v9345, 1
    %v9347 = vadd.f32 %v9345, %v9346
    %v9348 = vadd.f32 %v9154, %v9155
    %v9349 = vrot.slane %v9348, 4
    %v9350 = vadd.f32 %v9348, %v9349
    %v9351 = vrot.slane %v9350, 2
    %v9352 = vadd.f32 %v9350, %v9351
    %v9353 = vrot.slane %v9352, 1
    %v9354 = vadd.f32 %v9352, %v9353
    %v9355 = vadd.f32 %v9156, %v9157
    %v9356 = vrot.slane %v9355, 4
    %v9357 = vadd.f32 %v9355, %v9356
    %v9358 = vrot.slane %v9357, 2
    %v9359 = vadd.f32 %v9357, %v9358
    %v9360 = vrot.slane %v9359, 1
    %v9361 = vadd.f32 %v9359, %v9360
    %v9362 = vadd.f32 %v9158, %v9159
    %v9363 = vrot.slane %v9362, 4
    %v9364 = vadd.f32 %v9362, %v9363
    %v9365 = vrot.slane %v9364, 2
    %v9366 = vadd.f32 %v9364, %v9365
    %v9367 = vrot.slane %v9366, 1
    %v9368 = vadd.f32 %v9366, %v9367
    %v9369 = vadd.f32 %v9160, %v9161
    %v9370 = vrot.slane %v9369, 4
    %v9371 = vadd.f32 %v9369, %v9370
    %v9372 = vrot.slane %v9371, 2
    %v9373 = vadd.f32 %v9371, %v9372
    %v9374 = vrot.slane %v9373, 1
    %v9375 = vadd.f32 %v9373, %v9374
    %v9376 = vadd.f32 %v9162, %v9163
    %v9377 = vrot.slane %v9376, 4
    %v9378 = vadd.f32 %v9376, %v9377
    %v9379 = vrot.slane %v9378, 2
    %v9380 = vadd.f32 %v9378, %v9379
    %v9381 = vrot.slane %v9380, 1
    %v9382 = vadd.f32 %v9380, %v9381
    %v9383 = vadd.f32 %v9164, %v9165
    %v9384 = vrot.slane %v9383, 4
    %v9385 = vadd.f32 %v9383, %v9384
    %v9386 = vrot.slane %v9385, 2
    %v9387 = vadd.f32 %v9385, %v9386
    %v9388 = vrot.slane %v9387, 1
    %v9389 = vadd.f32 %v9387, %v9388
    %v9390 = vld [vmem:[#allocation4 + $0x15] sm:$0x1]
    %v9391 = vperm.slane %v9390, 0
    %v9392 = vmul.f32 %v9172, %v9391
    %v9393 = vmul.f32 %v9179, %v9391
    %v9394 = vmul.f32 %v9186, %v9391
    %v9395 = vmul.f32 %v9193, %v9391
    %v9396 = vmul.f32 %v9200, %v9391
    %v9397 = vmul.f32 %v9207, %v9391
    %v9398 = vmul.f32 %v9214, %v9391
    %v9399 = vmul.f32 %v9221, %v9391
    %v9400 = vmul.f32 %v9228, %v9391
    %v9401 = vmul.f32 %v9235, %v9391
    %v9402 = vmul.f32 %v9242, %v9391
    %v9403 = vmul.f32 %v9249, %v9391
    %v9404 = vmul.f32 %v9256, %v9391
    %v9405 = vmul.f32 %v9263, %v9391
    %v9406 = vmul.f32 %v9270, %v9391
    %v9407 = vmul.f32 %v9277, %v9391
    %v9408 = vmul.f32 %v9284, %v9391
    %v9409 = vmul.f32 %v9291, %v9391
    %v9410 = vmul.f32 %v9298, %v9391
    %v9411 = vmul.f32 %v9305, %v9391
    %v9412 = vmul.f32 %v9312, %v9391
    %v9413 = vmul.f32 %v9319, %v9391
    %v9414 = vmul.f32 %v9326, %v9391
    %v9415 = vmul.f32 %v9333, %v9391
    %v9416 = vmul.f32 %v9340, %v9391
    %v9417 = vmul.f32 %v9347, %v9391
    %v9418 = vmul.f32 %v9354, %v9391
    %v9419 = vmul.f32 %v9361, %v9391
    %v9420 = vmul.f32 %v9368, %v9391
    %v9421 = vmul.f32 %v9375, %v9391
    %v9422 = vmul.f32 %v9382, %v9391
    %v9423 = vmul.f32 %v9389, %v9391
    %v9424 = vld [vmem:[#allocation4 + $0x16] sm:$0x1]
    %v9425 = vperm.slane %v9424, 0
    %v9426 = vadd.f32 %v9392, %v9425
    %v9427 = vadd.f32 %v9393, %v9425
    %v9428 = vadd.f32 %v9394, %v9425
    %v9429 = vadd.f32 %v9395, %v9425
    %v9430 = vadd.f32 %v9396, %v9425
    %v9431 = vadd.f32 %v9397, %v9425
    %v9432 = vadd.f32 %v9398, %v9425
    %v9433 = vadd.f32 %v9399, %v9425
    %v9434 = vadd.f32 %v9400, %v9425
    %v9435 = vadd.f32 %v9401, %v9425
    %v9436 = vadd.f32 %v9402, %v9425
    %v9437 = vadd.f32 %v9403, %v9425
    %v9438 = vadd.f32 %v9404, %v9425
    %v9439 = vadd.f32 %v9405, %v9425
    %v9440 = vadd.f32 %v9406, %v9425
    %v9441 = vadd.f32 %v9407, %v9425
    %v9442 = vadd.f32 %v9408, %v9425
    %v9443 = vadd.f32 %v9409, %v9425
    %v9444 = vadd.f32 %v9410, %v9425
    %v9445 = vadd.f32 %v9411, %v9425
    %v9446 = vadd.f32 %v9412, %v9425
    %v9447 = vadd.f32 %v9413, %v9425
    %v9448 = vadd.f32 %v9414, %v9425
    %v9449 = vadd.f32 %v9415, %v9425
    %v9450 = vadd.f32 %v9416, %v9425
    %v9451 = vadd.f32 %v9417, %v9425
    %v9452 = vadd.f32 %v9418, %v9425
    %v9453 = vadd.f32 %v9419, %v9425
    %v9454 = vadd.f32 %v9420, %v9425
    %v9455 = vadd.f32 %v9421, %v9425
    %v9456 = vadd.f32 %v9422, %v9425
    %v9457 = vadd.f32 %v9423, %v9425
    %v9458 = vadd.f32 %v9426, %v7335
    %v9459 = vadd.f32 %v9427, %v7336
    %v9460 = vadd.f32 %v9428, %v7337
    %v9461 = vadd.f32 %v9429, %v7338
    %v9462 = vadd.f32 %v9430, %v7339
    %v9463 = vadd.f32 %v9431, %v7340
    %v9464 = vadd.f32 %v9432, %v7341
    %v9465 = vadd.f32 %v9433, %v7342
    %v9466 = vadd.f32 %v9434, %v7343
    %v9467 = vadd.f32 %v9435, %v7344
    %v9468 = vadd.f32 %v9436, %v7345
    %v9469 = vadd.f32 %v9437, %v7346
    %v9470 = vadd.f32 %v9438, %v7347
    %v9471 = vadd.f32 %v9439, %v7348
    %v9472 = vadd.f32 %v9440, %v7349
    %v9473 = vadd.f32 %v9441, %v7350
    %v9474 = vadd.f32 %v9442, %v7351
    %v9475 = vadd.f32 %v9443, %v7352
    %v9476 = vadd.f32 %v9444, %v7353
    %v9477 = vadd.f32 %v9445, %v7354
    %v9478 = vadd.f32 %v9446, %v7355
    %v9479 = vadd.f32 %v9447, %v7356
    %v9480 = vadd.f32 %v9448, %v7357
    %v9481 = vadd.f32 %v9449, %v7358
    %v9482 = vadd.f32 %v9450, %v7359
    %v9483 = vadd.f32 %v9451, %v7360
    %v9484 = vadd.f32 %v9452, %v7361
    %v9485 = vadd.f32 %v9453, %v7362
    %v9486 = vadd.f32 %v9454, %v7363
    %v9487 = vadd.f32 %v9455, %v7364
    %v9488 = vadd.f32 %v9456, %v7365
    %v9489 = vadd.f32 %v9457, %v7366
    %v9490 = vmax.f32 %v9458, 0.0
    %v9491 = vmax.f32 %v9459, 0.0
    %v9492 = vmax.f32 %v9460, 0.0
    %v9493 = vmax.f32 %v9461, 0.0
    %v9494 = vmax.f32 %v9462, 0.0
    %v9495 = vmax.f32 %v9463, 0.0
    %v9496 = vmax.f32 %v9464, 0.0
    %v9497 = vmax.f32 %v9465, 0.0
    %v9498 = vmax.f32 %v9466, 0.0
    %v9499 = vmax.f32 %v9467, 0.0
    %v9500 = vmax.f32 %v9468, 0.0
    %v9501 = vmax.f32 %v9469, 0.0
    %v9502 = vmax.f32 %v9470, 0.0
    %v9503 = vmax.f32 %v9471, 0.0
    %v9504 = vmax.f32 %v9472, 0.0
    %v9505 = vmax.f32 %v9473, 0.0
    %v9506 = vmax.f32 %v9474, 0.0
    %v9507 = vmax.f32 %v9475, 0.0
    %v9508 = vmax.f32 %v9476, 0.0
    %v9509 = vmax.f32 %v9477, 0.0
    %v9510 = vmax.f32 %v9478, 0.0
    %v9511 = vmax.f32 %v9479, 0.0
    %v9512 = vmax.f32 %v9480, 0.0
    %v9513 = vmax.f32 %v9481, 0.0
    %v9514 = vmax.f32 %v9482, 0.0
    %v9515 = vmax.f32 %v9483, 0.0
    %v9516 = vmax.f32 %v9484, 0.0
    %v9517 = vmax.f32 %v9485, 0.0
    %v9518 = vmax.f32 %v9486, 0.0
    %v9519 = vmax.f32 %v9487, 0.0
    %v9520 = vmax.f32 %v9488, 0.0
    %v9521 = vmax.f32 %v9489, 0.0
    %v9522 = vld [vmem:[%s3] sm:$0x3]
    %v9555 = vrot.slane %v9491, 7
    %v9556 = vsel %vm3116, %v9555, %v9490
    %v9557 = vrot.slane %v9492, 6
    %v9558 = vsel %vm3119, %v9557, %v9556
    %v9559 = vrot.slane %v9493, 5
    %v9560 = vsel %vm3122, %v9559, %v9558
    %v9561 = vrot.slane %v9494, 4
    %v9562 = vsel %vm3125, %v9561, %v9560
    %v9563 = vrot.slane %v9495, 3
    %v9564 = vsel %vm3128, %v9563, %v9562
    %v9565 = vrot.slane %v9496, 2
    %v9566 = vsel %vm3131, %v9565, %v9564
    %v9567 = vrot.slane %v9497, 1
    %v9568 = vsel %vm3134, %v9567, %v9566
    %v9569 = vrot.slane %v9499, 7
    %v9570 = vsel %vm3116, %v9569, %v9498
    %v9571 = vrot.slane %v9500, 6
    %v9572 = vsel %vm3119, %v9571, %v9570
    %v9573 = vrot.slane %v9501, 5
    %v9574 = vsel %vm3122, %v9573, %v9572
    %v9575 = vrot.slane %v9502, 4
    %v9576 = vsel %vm3125, %v9575, %v9574
    %v9577 = vrot.slane %v9503, 3
    %v9578 = vsel %vm3128, %v9577, %v9576
    %v9579 = vrot.slane %v9504, 2
    %v9580 = vsel %vm3131, %v9579, %v9578
    %v9581 = vrot.slane %v9505, 1
    %v9582 = vsel %vm3134, %v9581, %v9580
    %v9583 = vrot.slane %v9507, 7
    %v9584 = vsel %vm3116, %v9583, %v9506
    %v9585 = vrot.slane %v9508, 6
    %v9586 = vsel %vm3119, %v9585, %v9584
    %v9587 = vrot.slane %v9509, 5
    %v9588 = vsel %vm3122, %v9587, %v9586
    %v9589 = vrot.slane %v9510, 4
    %v9590 = vsel %vm3125, %v9589, %v9588
    %v9591 = vrot.slane %v9511, 3
    %v9592 = vsel %vm3128, %v9591, %v9590
    %v9593 = vrot.slane %v9512, 2
    %v9594 = vsel %vm3131, %v9593, %v9592
    %v9595 = vrot.slane %v9513, 1
    %v9596 = vsel %vm3134, %v9595, %v9594
    %v9597 = vrot.slane %v9515, 7
    %v9598 = vsel %vm3116, %v9597, %v9514
    %v9599 = vrot.slane %v9516, 6
    %v9600 = vsel %vm3119, %v9599, %v9598
    %v9601 = vrot.slane %v9517, 5
    %v9602 = vsel %vm3122, %v9601, %v9600
    %v9603 = vrot.slane %v9518, 4
    %v9604 = vsel %vm3125, %v9603, %v9602
    %v9605 = vrot.slane %v9519, 3
    %v9606 = vsel %vm3128, %v9605, %v9604
    %v9607 = vrot.slane %v9520, 2
    %v9608 = vsel %vm3131, %v9607, %v9606
    %v9609 = vrot.slane %v9521, 1
    %v9610 = vsel %vm3134, %v9609, %v9608
    %v9615 = vadd.f32 %v9568, %v9582
    %v9616 = vrot.slane %v9615, 4
    %v9617 = vadd.f32 %v9615, %v9616
    %v9618 = vrot.slane %v9617, 2
    %v9619 = vadd.f32 %v9617, %v9618
    %v9620 = vrot.slane %v9619, 1
    %v9621 = vadd.f32 %v9619, %v9620
    %v9622 = vadd.f32 %v9596, %v9610
    %v9623 = vrot.slane %v9622, 4
    %v9624 = vadd.f32 %v9622, %v9623
    %v9625 = vrot.slane %v9624, 2
    %v9626 = vadd.f32 %v9624, %v9625
    %v9627 = vrot.slane %v9626, 1
    %v9628 = vadd.f32 %v9626, %v9627
    %v9629 = vrcp.pop 16.0
    %v9630 = vmul.f32 16.0, %v9629
    %v9631 = vsub.f32 1.0, %v9630
    %v9632 = vmul.f32 %v9629, %v9631
    %v9633 = vadd.f32 %v9629, %v9632
    %vm9634 = vweird.f32 %v9629
    %v9635 = vsel %vm9634, %v9629, %v9633
    %v9636 = vmul.f32 %v9621, %v9635
    %v9637 = vmul.f32 %v9628, %v9635
    %v9638 = vld [vmem:[#allocation9] sm:$0xff]
    %v9639 = vld [vmem:[#allocation4 + $0x17] sm:$0x1]
    %v9640 = vperm.slane %v9639, 0
    %vm9641 = vcmask 64512
    %v9643 = vsel %vm9641, %v9522, 0
    %9645 = vmatpush.msra.mxu0 0.0
    %9646 = vmatpush.msra.mxu0 0.0
    %9647 = vmatpush.msra.mxu0 0.0
    %9648 = vmatpush.msra.mxu0 0.0
    %9649 = vmatpush.msra.mxu0 0.0
    %9650 = vmatpush.msra.mxu0 0.0
    %9651 = vmatpush.msra.mxu0 0.0
    %9652 = vmatpush.msra.mxu0 0.0
    %9653 = vmatpush.msra.mxu0 0.0
    %9654 = vmatpush.msra.mxu0 0.0
    %9655 = vmatpush.msra.mxu0 0.0
    %9656 = vmatpush.msra.mxu0 0.0
    %9657 = vmatpush.msra.mxu0 0.0
    %9658 = vmatpush.msra.mxu0 0.0
    %9659 = vmatpush.msra.mxu0 0.0
    %9660 = vmatpush.msra.mxu0 %v9638
    %9661 = vmatmul.f32.gmra.mxu0 %v9643
    %v9662 = vpop.f32.mrf.mxu0
    %v9663 = vadd.f32 %v9640, %v9662
    %9664 = vdwg.mxu0
    %v9665 = vmax.f32 %v9663, 0.0
    %v9666 = vld [vmem:[#allocation9 + $0x8] sm:$0xff]
    %v9667 = vld [vmem:[#allocation9 + $0x10] sm:$0xff]
    %v9668 = vld [vmem:[#allocation9 + $0x18] sm:$0xff]
    %v9669 = vld [vmem:[#allocation9 + $0x20] sm:$0xff]
    %v9670 = vld [vmem:[#allocation9 + $0x28] sm:$0xff]
    %v9671 = vld [vmem:[#allocation9 + $0x30] sm:$0xff]
    %v9672 = vld [vmem:[#allocation9 + $0x38] sm:$0xff]
    %v9673 = vld [vmem:[#allocation9 + $0x40] sm:$0xff]
    %v9674 = vld [vmem:[#allocation9 + $0x48] sm:$0xff]
    %v9675 = vld [vmem:[#allocation9 + $0x50] sm:$0xff]
    %v9676 = vld [vmem:[#allocation9 + $0x58] sm:$0xff]
    %v9677 = vld [vmem:[#allocation9 + $0x60] sm:$0xff]
    %v9678 = vld [vmem:[#allocation9 + $0x68] sm:$0xff]
    %v9679 = vld [vmem:[#allocation9 + $0x70] sm:$0xff]
    %v9680 = vld [vmem:[#allocation9 + $0x78] sm:$0xff]
    %v9681 = vld [vmem:[#allocation9 + $0x80] sm:$0xff]
    %v9682 = vld [vmem:[#allocation4 + $0x18] sm:$0x1]
    %v9683 = vperm.slane %v9682, 0
    %9684 = vmatpush.msra.mxu0 %v9681
    %9685 = vmatpush.msra.mxu0 %v9680
    %9686 = vmatpush.msra.mxu0 %v9679
    %9687 = vmatpush.msra.mxu0 %v9678
    %9688 = vmatpush.msra.mxu0 %v9677
    %9689 = vmatpush.msra.mxu0 %v9676
    %9690 = vmatpush.msra.mxu0 %v9675
    %9691 = vmatpush.msra.mxu0 %v9674
    %9692 = vmatpush.msra.mxu0 %v9673
    %9693 = vmatpush.msra.mxu0 %v9672
    %9694 = vmatpush.msra.mxu0 %v9671
    %9695 = vmatpush.msra.mxu0 %v9670
    %9696 = vmatpush.msra.mxu0 %v9669
    %9697 = vmatpush.msra.mxu0 %v9668
    %9698 = vmatpush.msra.mxu0 %v9667
    %9699 = vmatpush.msra.mxu0 %v9666
    %9700 = vmatmul.f32.gmra.mxu0 %v9665
    %v9701 = vpop.f32.mrf.mxu0
    %v9702 = vadd.f32 %v9683, %v9701
    %9703 = vdwg.mxu0
    %v9704 = vmax.f32 %v9702, 0.0
    %v9705 = vld [vmem:[#allocation9 + $0x88] sm:$0xff]
    %v9706 = vld [vmem:[#allocation9 + $0x90] sm:$0xff]
    %v9707 = vld [vmem:[#allocation9 + $0x98] sm:$0xff]
    %v9708 = vld [vmem:[#allocation9 + $0xa0] sm:$0xff]
    %v9709 = vld [vmem:[#allocation9 + $0xa8] sm:$0xff]
    %v9710 = vld [vmem:[#allocation9 + $0xb0] sm:$0xff]
    %v9711 = vld [vmem:[#allocation9 + $0xb8] sm:$0xff]
    %v9712 = vld [vmem:[#allocation9 + $0xc0] sm:$0xff]
    %v9713 = vld [vmem:[#allocation9 + $0xc8] sm:$0xff]
    %v9714 = vld [vmem:[#allocation9 + $0xd0] sm:$0xff]
    %v9715 = vld [vmem:[#allocation9 + $0xd8] sm:$0xff]
    %v9716 = vld [vmem:[#allocation9 + $0xe0] sm:$0xff]
    %v9717 = vld [vmem:[#allocation9 + $0xe8] sm:$0xff]
    %v9718 = vld [vmem:[#allocation9 + $0xf0] sm:$0xff]
    %v9719 = vld [vmem:[#allocation9 + $0xf8] sm:$0xff]
    %v9720 = vld [vmem:[#allocation9 + $0x100] sm:$0xff]
    %v9721 = vld [vmem:[#allocation9 + $0x108] sm:$0xff]
    %v9722 = vld [vmem:[#allocation9 + $0x110] sm:$0xff]
    %v9723 = vld [vmem:[#allocation9 + $0x118] sm:$0xff]
    %v9724 = vld [vmem:[#allocation9 + $0x120] sm:$0xff]
    %v9725 = vld [vmem:[#allocation9 + $0x128] sm:$0xff]
    %v9726 = vld [vmem:[#allocation9 + $0x130] sm:$0xff]
    %v9727 = vld [vmem:[#allocation9 + $0x138] sm:$0xff]
    %v9728 = vld [vmem:[#allocation9 + $0x140] sm:$0xff]
    %v9729 = vld [vmem:[#allocation9 + $0x148] sm:$0xff]
    %v9730 = vld [vmem:[#allocation9 + $0x150] sm:$0xff]
    %v9731 = vld [vmem:[#allocation9 + $0x158] sm:$0xff]
    %v9732 = vld [vmem:[#allocation9 + $0x160] sm:$0xff]
    %v9733 = vld [vmem:[#allocation9 + $0x168] sm:$0xff]
    %v9734 = vld [vmem:[#allocation9 + $0x170] sm:$0xff]
    %v9735 = vld [vmem:[#allocation9 + $0x178] sm:$0xff]
    %v9736 = vld [vmem:[#allocation9 + $0x180] sm:$0xff]
    %9737 = vmatpush.msra.mxu0 %v9736
    %9738 = vmatpush.msra.mxu0 %v9735
    %9739 = vmatpush.msra.mxu0 %v9734
    %9740 = vmatpush.msra.mxu0 %v9733
    %9741 = vmatpush.msra.mxu0 %v9732
    %9742 = vmatpush.msra.mxu0 %v9731
    %9743 = vmatpush.msra.mxu0 %v9730
    %9744 = vmatpush.msra.mxu0 %v9729
    %9745 = vmatpush.msra.mxu0 %v9728
    %9746 = vmatpush.msra.mxu0 %v9727
    %9747 = vmatpush.msra.mxu0 %v9726
    %9748 = vmatpush.msra.mxu0 %v9725
    %9749 = vmatpush.msra.mxu0 %v9724
    %9750 = vmatpush.msra.mxu0 %v9723
    %9751 = vmatpush.msra.mxu0 %v9722
    %9752 = vmatpush.msra.mxu0 %v9721
    %9753 = vmatmul.f32.gmra.mxu0 %v9704
    %v9754 = vpop.f32.mrf.mxu0
    %v9755 = vadd.f32 0.0, %v9754
    %9756 = vdwg.mxu0
    %v9759 = vrot.slane %v9637, 7
    %v9760 = vsel %vm3116, %v9759, %v9636
    %9762 = vmatpush.msra.mxu0 %v9720
    %9763 = vmatpush.msra.mxu0 %v9719
    %9764 = vmatpush.msra.mxu0 %v9718
    %9765 = vmatpush.msra.mxu0 %v9717
    %9766 = vmatpush.msra.mxu0 %v9716
    %9767 = vmatpush.msra.mxu0 %v9715
    %9768 = vmatpush.msra.mxu0 %v9714
    %9769 = vmatpush.msra.mxu0 %v9713
    %9770 = vmatpush.msra.mxu0 %v9712
    %9771 = vmatpush.msra.mxu0 %v9711
    %9772 = vmatpush.msra.mxu0 %v9710
    %9773 = vmatpush.msra.mxu0 %v9709
    %9774 = vmatpush.msra.mxu0 %v9708
    %9775 = vmatpush.msra.mxu0 %v9707
    %9776 = vmatpush.msra.mxu0 %v9706
    %9777 = vmatpush.msra.mxu0 %v9705
    %9778 = vmatmul.f32.gmra.mxu0 %v9760
    %v9779 = vpop.f32.mrf.mxu0
    %v9780 = vadd.f32 %v9755, %v9779
    %9781 = vdwg.mxu0
    %v9782 = vld [vmem:[#allocation4 + $0x19] sm:$0x1]
    %v9783 = vperm.slane %v9782, 0
    %v9784 = vadd.f32 %v9780, %v9783
    %v9785 = vmax.f32 %v9784, 0.0
    %v9786 = vld [vmem:[#allocation9 + $0x188] sm:$0xff]
    %v9787 = vld [vmem:[#allocation9 + $0x190] sm:$0xff]
    %v9788 = vld [vmem:[#allocation9 + $0x198] sm:$0xff]
    %v9789 = vld [vmem:[#allocation9 + $0x1a0] sm:$0xff]
    %v9790 = vld [vmem:[#allocation9 + $0x1a8] sm:$0xff]
    %v9791 = vld [vmem:[#allocation9 + $0x1b0] sm:$0xff]
    %v9792 = vld [vmem:[#allocation9 + $0x1b8] sm:$0xff]
    %v9793 = vld [vmem:[#allocation9 + $0x1c0] sm:$0xff]
    %v9794 = vld [vmem:[#allocation9 + $0x1c8] sm:$0xff]
    %v9795 = vld [vmem:[#allocation9 + $0x1d0] sm:$0xff]
    %v9796 = vld [vmem:[#allocation9 + $0x1d8] sm:$0xff]
    %v9797 = vld [vmem:[#allocation9 + $0x1e0] sm:$0xff]
    %v9798 = vld [vmem:[#allocation9 + $0x1e8] sm:$0xff]
    %v9799 = vld [vmem:[#allocation9 + $0x1f0] sm:$0xff]
    %v9800 = vld [vmem:[#allocation9 + $0x1f8] sm:$0xff]
    %v9801 = vld [vmem:[#allocation9 + $0x200] sm:$0xff]
    %v9802 = vld [vmem:[#allocation4 + $0x1a] sm:$0x1]
    %v9803 = vperm.slane %v9802, 0
    %9804 = vmatpush.msra.mxu0 %v9801
    %9805 = vmatpush.msra.mxu0 %v9800
    %9806 = vmatpush.msra.mxu0 %v9799
    %9807 = vmatpush.msra.mxu0 %v9798
    %9808 = vmatpush.msra.mxu0 %v9797
    %9809 = vmatpush.msra.mxu0 %v9796
    %9810 = vmatpush.msra.mxu0 %v9795
    %9811 = vmatpush.msra.mxu0 %v9794
    %9812 = vmatpush.msra.mxu0 %v9793
    %9813 = vmatpush.msra.mxu0 %v9792
    %9814 = vmatpush.msra.mxu0 %v9791
    %9815 = vmatpush.msra.mxu0 %v9790
    %9816 = vmatpush.msra.mxu0 %v9789
    %9817 = vmatpush.msra.mxu0 %v9788
    %9818 = vmatpush.msra.mxu0 %v9787
    %9819 = vmatpush.msra.mxu0 %v9786
    %9820 = vmatmul.f32.gmra.mxu0 %v9785
    %v9821 = vpop.f32.mrf.mxu0
    %v9822 = vadd.f32 %v9803, %v9821
    %9823 = vdwg.mxu0
    %v9824 = vmax.f32 %v9822, 0.0
    %v9825 = vld [vmem:[#allocation4 + $0x1b] sm:$0x1]
    %v9826 = vperm.slane %v9825, 0
    %v9827 = vmul.f32 %v9824, %v9826
    %vm9828 = vcmask 1041408
    %v9829 = vsel %vm9828, %v9827, 0.0
    %9830 = vadd.xlane.f32.xlu0 %v9829
    %v9831 = vpop.xlane.xlu0 %9830
    %v9832 = vld [vmem:[#allocation4 + $0x1c] sm:$0x1]
    %v9833 = vperm.slane %v9832, 0
    %v9834 = vadd.f32 %v9831, %v9833
    %vm9835 = vcmask 1024
    %9836 = vst.msk [vmem:[%s8] sm:$0x3] %vm9835, %v9834
    // Predicated region
    $region54: #{forward.1} parent=1 // pred_check
      _
    $region55: #{forward.1} parent=1 // pred_check_branch
      %9838 = sbr.rel (0) target = $region57
    $region56: #{forward.1} parent=1 // pred_region
      _
    $region57: #{forward.1} parent=1 // pred_fallthru
      _
    // Predicated region
    $region58: #{forward.1} parent=1 // pred_check
      _
    $region59: #{forward.1} parent=1 // pred_check_branch
      %9840 = sbr.rel (0) target = $region61
    $region60: #{forward.1} parent=1 // pred_region
      _
    $region61: #{forward.1} parent=1 // pred_fallthru
      _
    %9841 = vsyncpa [#allocation3], 1
    %9842 = vsyncpa [#allocation5], 1
    %9843 = vsyncpa [#allocation8], 1

</llo_original>
